<compile_context>
chip_gen: v7x
topology: tpu7x:2x2x1
jax: 0.10.0
libtpu: 0.0.40
codegen_flags: <defaults>
</compile_context>

<pallas_src>
import functools

import jax
import jax.numpy as jnp
from jax.experimental import pallas as pl
from jax.experimental.pallas import tpu as pltpu

# TODO(synk): the pytorch3d point rasterizer (projection + z-sorted per-pixel point
# selection) has no clean Pallas equivalent; its fragment outputs (idx, zbuf, dists)
# are taken as inputs here.

_EPS = 1e-10  # NormWeightedCompositor weight-sum clamp


def _round_up(x, m):
    return (x + m - 1) // m * m


def _composite_kernel(idx_ref, dists_ref, feat_ref, img_ref, *,
                      k, p_pad, p_chunk, inv_r2):
    """One (batch, HW-tile) block: normalized weighted-sum compositing."""
    idx = idx_ref[0]                       # (tile_hw, K) int32, -1 marks empty slots
    d2 = dists_ref[0]                      # (tile_hw, K) f32 squared distances
    tile_hw = idx.shape[0]
    c = img_ref.shape[-1]

    # weights = 1 - dists / r^2 ; entries with idx < 0 are skipped by the compositor,
    # realized by zeroing their weight.
    valid = idx >= 0
    w = jnp.where(valid, 1.0 - d2 * inv_r2, 0.0)                  # (tile_hw, K)

    # Deferred normalization: only the (tile_hw, 1) reciprocal is computed here (EUP
    # seed + one Newton step for ~f32 accuracy); it is applied once to the (tile_hw, C)
    # accumulator at the end instead of scaling every (tile_hw, K) weight.
    w_sum = jnp.maximum(jnp.sum(w, axis=1, keepdims=True), _EPS)  # (tile_hw, 1)
    inv = pl.reciprocal(w_sum, approx=True)
    inv = inv * (2.0 - w_sum * inv)                               # Newton refine

    # Gather-free compositing:  img[hw, c] = sum_k w[hw, k] * feat[idx[hw, k], c]
    # Per-k one-hot matmuls accumulate on the MXU (the K-sum rides the idle MXU slot
    # instead of K VALU add passes), chunked over P so the live one-hot is
    # (tile_hw, p_chunk) no matter how many points are packed.
    # TODO(synk): for very large point clouds, stream feature chunks via a third
    # ("arbitrary") grid axis instead of holding the full (P_pad, C) table in VMEM.
    acc = jnp.zeros((tile_hw, c), jnp.float32)
    for pc in range(p_pad // p_chunk):
        p0 = pc * p_chunk
        iota_p = jax.lax.broadcasted_iota(jnp.int32, (tile_hw, p_chunk), 1) + p0
        feat_chunk = feat_ref[pl.ds(p0, p_chunk), :]              # (p_chunk, C)
        for kk in range(k):                                       # K small & static
            onehot = jnp.where(idx[:, kk:kk + 1] == iota_p,
                               w[:, kk:kk + 1], 0.0)              # (tile_hw, p_chunk)
            acc = acc + jnp.dot(onehot, feat_chunk,
                                preferred_element_type=jnp.float32)

    # TODO(synk): on v6e/v7x the one-hot / feature matmul operands could be bf16
    # (native MXU path, half the VALU/vreg traffic) at ~1e-3 output error; kept f32
    # to hold the 1e-4 reference tolerance and stay fast on v5e.
    img_ref[0] = acc * inv                                        # (tile_hw, C) NHWC


def _depth_kernel(z_ref, depth_ref, *, hw_total):
    """Per-batch background(-1)-aware mean centering of zbuf[..., 0]."""
    z = z_ref[0]                                    # (rows, 128): sublane/lane dense
    bg = z == -1.0
    n_bg = jnp.sum(bg.astype(jnp.float32))          # torch.sum(depth_0)
    d_sum = jnp.sum(z) + n_bg                       # pads (-1, counted as bg) cancel
    denom = jnp.maximum(hw_total - n_bg, 1.0)       # guard: all-background image
    d_mean = d_sum / denom
    depth_ref[0] = jnp.where(bg, -1.0, z - d_mean)  # re-mark bg as -1


def _vmem_limit_bytes(tile_hw, p_pad, p_chunk):
    lane = 128
    tile_b = tile_hw * lane * 4                      # K / C lane-padded tile footprint
    need = (2 * 2 * tile_b                           # idx + dists, double buffered
            + 2 * tile_b                             # output tile, double buffered
            + 2 * p_pad * lane * 4                   # feature table
            + tile_hw * p_chunk * 4                  # one-hot scratch
            + 6 * tile_b)                            # w / iota / misc temporaries
    # 4x headroom, clamped to stay comfortable on every generation (v7x: 64 MiB VMEM).
    return int(min(40 * 1024 * 1024, max(16 * 1024 * 1024, 4 * need)))


def points_renderer_with_depth(idx, dists, zbuf, features, radius,
                               with_depth=False, max_tile_hw=512, p_chunk=128):
    """idx/dists/zbuf: (N, H, W, K); features: (P, C).  Returns NHWC images."""
    n, h, w, k = idx.shape
    p, c = features.shape
    hw = h * w

    tile_hw = max(128, min(_round_up(hw, 128), _round_up(max_tile_hw, 128)))
    hw_pad = _round_up(hw, tile_hw)                  # pad instead of one giant block
    p_pad = _round_up(p, p_chunk)

    # Free reshapes only (no HBM transpose traffic on the big fragment arrays).
    idx2 = idx.reshape(n, hw, k).astype(jnp.int32)
    dists2 = dists.reshape(n, hw, k).astype(jnp.float32)
    if hw_pad != hw:
        idx2 = jnp.pad(idx2, ((0, 0), (0, hw_pad - hw), (0, 0)), constant_values=-1)
        dists2 = jnp.pad(dists2, ((0, 0), (0, hw_pad - hw), (0, 0)))
    feat = features.astype(jnp.float32)
    if p_pad != p:
        feat = jnp.pad(feat, ((0, p_pad - p), (0, 0)))  # zero rows are never selected

    grid = (n, hw_pad // tile_hw)                    # both parallel: v7x 2-TC sharding
    comp = functools.partial(_composite_kernel, k=k, p_pad=p_pad, p_chunk=p_chunk,
                             inv_r2=float(1.0 / (radius * radius)))

    img = pl.pallas_call(
        comp,
        out_shape=jax.ShapeDtypeStruct((n, hw_pad, c), jnp.float32),
        grid=grid,
        in_specs=[
            pl.BlockSpec((1, tile_hw, k), lambda b, t: (b, t, 0)),   # idx
            pl.BlockSpec((1, tile_hw, k), lambda b, t: (b, t, 0)),   # dists
            pl.BlockSpec((p_pad, c), lambda b, t: (0, 0)),           # features
        ],
        out_specs=pl.BlockSpec((1, tile_hw, c), lambda b, t: (b, t, 0)),
        compiler_params=pltpu.CompilerParams(
            dimension_semantics=("parallel", "parallel"),
            vmem_limit_bytes=_vmem_limit_bytes(tile_hw, p_pad, p_chunk)),
    )(idx2, dists2, feat)

    images = img[:, :hw, :].reshape(n, h, w, c)      # already NHWC: no transpose

    if with_depth:
        # Depth branch is its own tiny kernel so the compositing kernel carries no
        # extra output stream when with_depth=False.  (rows, 128) blocks keep >= 8
        # sublanes dense; -1 padding is neutral for the bg-aware mean.
        hw_pad_d = _round_up(hw, 8 * 128)
        z0 = zbuf[..., 0].reshape(n, hw).astype(jnp.float32)
        if hw_pad_d != hw:
            z0 = jnp.pad(z0, ((0, 0), (0, hw_pad_d - hw)), constant_values=-1.0)
        rows = hw_pad_d // 128
        z0 = z0.reshape(n, rows, 128)
        depth = pl.pallas_call(
            functools.partial(_depth_kernel, hw_total=float(hw_pad_d)),
            out_shape=jax.ShapeDtypeStruct((n, rows, 128), jnp.float32),
            grid=(n,),
            in_specs=[pl.BlockSpec((1, rows, 128), lambda b: (b, 0, 0))],
            out_specs=pl.BlockSpec((1, rows, 128), lambda b: (b, 0, 0)),
            compiler_params=pltpu.CompilerParams(
                dimension_semantics=("parallel",)),
        )(z0)
        depth = depth.reshape(n, hw_pad_d)[:, :hw].reshape(n, h, w, 1)
        images = jnp.concatenate([images, depth], axis=-1)
    return images


def _reference(idx, dists, zbuf, feats, radius, with_depth):
    """Pure-JAX reference mirroring the PyTorch module's semantics."""
    depth = zbuf[..., 0]
    _, h, w = depth.shape
    bg = depth == -1.0
    n_bg = jnp.sum(bg, axis=(1, 2)).astype(jnp.float32)
    d_sum = jnp.sum(depth, axis=(1, 2)) + n_bg
    d_mean = d_sum / (h * w - n_bg)
    depth = jnp.where(bg, -1.0, depth - d_mean[:, None, None])

    wgt = 1.0 - dists / (radius * radius)
    valid = idx >= 0
    wgt = jnp.where(valid, wgt, 0.0)
    w_sum = jnp.maximum(jnp.sum(wgt, axis=-1, keepdims=True), _EPS)
    w_norm = wgt / w_sum
    gathered = feats[jnp.clip(idx, 0, None)]                       # (N,H,W,K,C)
    gathered = jnp.where(valid[..., None], gathered, 0.0)
    images = jnp.sum(w_norm[..., None] * gathered, axis=3)         # (N,H,W,C)
    if with_depth:
        images = jnp.concatenate([images, depth[..., None]], axis=-1)
    return images


def _make_inputs(key, n, h, w, k, p, c, radius):
    k_idx, k_drop, k_z, k_d, k_f = jax.random.split(key, 5)
    idx = jax.random.randint(k_idx, (n, h, w, k), 0, p, dtype=jnp.int32)
    empty = jax.random.bernoulli(k_drop, 0.3, (n, h, w, k))
    idx = jnp.where(empty, -1, idx)                                 # -1 = empty slot
    zvals = jax.random.uniform(k_z, (n, h, w, k), minval=0.5, maxval=2.0)
    zbuf = jnp.where(idx < 0, -1.0, zvals).astype(jnp.float32)
    dvals = jax.random.uniform(k_d, (n, h, w, k), maxval=radius * radius)
    dists = jnp.where(idx < 0, -1.0, dvals).astype(jnp.float32)
    features = jax.random.normal(k_f, (p, c), dtype=jnp.float32)
    return idx, dists, zbuf, features


if __name__ == "__main__":
    key = jax.random.PRNGKey(0)
    key1, key2 = jax.random.split(key)

    # Case 1: tile-aligned image, with_depth True and False.
    N, H, W, K, P, C, RADIUS = 2, 32, 32, 8, 64, 4, 0.05
    idx, dists, zbuf, features = _make_inputs(key1, N, H, W, K, P, C, RADIUS)

    out = points_renderer_with_depth(idx, dists, zbuf, features, RADIUS,
                                     with_depth=True)
    out = jax.block_until_ready(out)
    ref = _reference(idx, dists, zbuf, features, RADIUS, with_depth=True)
    assert out.shape == (N, H, W, C + 1), out.shape
    assert jnp.allclose(out, ref, atol=1e-4, rtol=1e-4), \
        float(jnp.max(jnp.abs(out - ref)))

    out_nd = points_renderer_with_depth(idx, dists, zbuf, features, RADIUS,
                                        with_depth=False)
    out_nd = jax.block_until_ready(out_nd)
    ref_nd = _reference(idx, dists, zbuf, features, RADIUS, with_depth=False)
    assert out_nd.shape == (N, H, W, C), out_nd.shape
    assert jnp.allclose(out_nd, ref_nd, atol=1e-4, rtol=1e-4), \
        float(jnp.max(jnp.abs(out_nd - ref_nd)))

    # Case 2: non-128-multiple HW and non-128-multiple P exercise the padding path.
    N2, H2, W2, K2, P2, C2, R2 = 2, 20, 21, 8, 50, 3, 0.07
    idx2, dists2, zbuf2, feats2 = _make_inputs(key2, N2, H2, W2, K2, P2, C2, R2)
    out2 = points_renderer_with_depth(idx2, dists2, zbuf2, feats2, R2,
                                      with_depth=True)
    out2 = jax.block_until_ready(out2)
    ref2 = _reference(idx2, dists2, zbuf2, feats2, R2, with_depth=True)
    assert out2.shape == (N2, H2, W2, C2 + 1), out2.shape
    assert jnp.allclose(out2, ref2, atol=1e-4, rtol=1e-4), \
        float(jnp.max(jnp.abs(out2 - ref2)))

    print("KERNEL_OK")
</pallas_src>

<mosaic_0001>
module attributes {stable_mosaic.version = 11 : i64} {
  func.func @_composite_kernel(%arg0: i32, %arg1: i32, %arg2: memref<1x512x8xi32, #tpu.memory_space<vmem>>, %arg3: memref<1x512x8xf32, #tpu.memory_space<vmem>>, %arg4: memref<128x4xf32, #tpu.memory_space<vmem>>, %arg5: memref<1x512x4xf32, #tpu.memory_space<vmem>>) attributes {dimension_semantics = [#tpu.dimension_semantics<parallel>, #tpu.dimension_semantics<parallel>], iteration_bounds = array<i64: 2, 2>, scalar_prefetch = 0 : i64, scratch_operands = 0 : i64, tpu.core_type = #tpu.core_type<tc>, window_params = [{transform_indices = @transform_0, window_bounds = array<i64: 1, 512, 8>}, {transform_indices = @transform_1, window_bounds = array<i64: 1, 512, 8>}, {pipeline_mode = #tpu.pipeline_mode<synchronous>, transform_indices = @transform_2, window_bounds = array<i64: 128, 4>}, {transform_indices = @transform_3, window_bounds = array<i64: 1, 512, 4>}]} {
    %c0 = arith.constant 0 : index
    %c0_0 = arith.constant 0 : index
    %c0_1 = arith.constant 0 : index
    %0 = vector.load %arg2[%c0, %c0_0, %c0_1] : memref<1x512x8xi32, #tpu.memory_space<vmem>>, vector<1x512x8xi32>
    %1 = vector.shape_cast %0 : vector<1x512x8xi32> to vector<512x8xi32>
    %c0_2 = arith.constant 0 : index
    %c0_3 = arith.constant 0 : index
    %c0_4 = arith.constant 0 : index
    %2 = vector.load %arg3[%c0_2, %c0_3, %c0_4] : memref<1x512x8xf32, #tpu.memory_space<vmem>>, vector<1x512x8xf32>
    %3 = vector.shape_cast %2 : vector<1x512x8xf32> to vector<512x8xf32>
    %c0_i32 = arith.constant 0 : i32
    %4 = vector.broadcast %c0_i32 : i32 to vector<512x8xi32>
    %5 = arith.cmpi sge, %1, %4 : vector<512x8xi32>
    %cst = arith.constant 4.000000e+02 : f32
    %6 = vector.broadcast %cst : f32 to vector<512x8xf32>
    %7 = arith.mulf %3, %6 : vector<512x8xf32>
    %cst_5 = arith.constant 1.000000e+00 : f32
    %8 = vector.broadcast %cst_5 : f32 to vector<512x8xf32>
    %9 = arith.subf %8, %7 : vector<512x8xf32>
    %cst_6 = arith.constant 0.000000e+00 : f32
    %10 = vector.broadcast %cst_6 : f32 to vector<512x8xf32>
    %11 = arith.select %5, %9, %10 : vector<512x8xi1>, vector<512x8xf32>
    %cst_7 = arith.constant dense<0.000000e+00> : vector<512xf32>
    %12 = vector.multi_reduction <add>, %11, %cst_7 [1] : vector<512x8xf32> to vector<512xf32>
    %13 = vector.shape_cast %12 : vector<512xf32> to vector<512x1xf32>
    %cst_8 = arith.constant 1.000000e-10 : f32
    %14 = vector.broadcast %cst_8 : f32 to vector<512x1xf32>
    %15 = arith.maximumf %13, %14 : vector<512x1xf32>
    %16 = tpu.reciprocal %15 {approx = true} : vector<512x1xf32> -> vector<512x1xf32>
    %17 = arith.mulf %15, %16 : vector<512x1xf32>
    %cst_9 = arith.constant 2.000000e+00 : f32
    %18 = vector.broadcast %cst_9 : f32 to vector<512x1xf32>
    %19 = arith.subf %18, %17 : vector<512x1xf32>
    %20 = arith.mulf %16, %19 : vector<512x1xf32>
    %cst_10 = arith.constant 0.000000e+00 : f32
    %21 = vector.broadcast %cst_10 : f32 to vector<512x4xf32>
    %22 = tpu.iota {dimensions = array<i32: 1>} : vector<512x128xi32>
    %c0_i32_11 = arith.constant 0 : i32
    %23 = vector.broadcast %c0_i32_11 : i32 to vector<512x128xi32>
    %24 = arith.addi %22, %23 : vector<512x128xi32>
    %c0_12 = arith.constant 0 : index
    %c0_13 = arith.constant 0 : index
    %25 = vector.load %arg4[%c0_12, %c0_13] : memref<128x4xf32, #tpu.memory_space<vmem>>, vector<128x4xf32>
    %26 = vector.extract_strided_slice %1 {offsets = [0, 0], sizes = [512, 1], strides = [1, 1]} : vector<512x8xi32> to vector<512x1xi32>
    %27 = vector.broadcast %26 : vector<512x1xi32> to vector<512x128xi32>
    %28 = arith.cmpi eq, %27, %24 : vector<512x128xi32>
    %29 = vector.extract_strided_slice %11 {offsets = [0, 0], sizes = [512, 1], strides = [1, 1]} : vector<512x8xf32> to vector<512x1xf32>
    %cst_14 = arith.constant 0.000000e+00 : f32
    %30 = vector.shape_cast %29 : vector<512x1xf32> to vector<512x1xf32>
    %31 = vector.broadcast %30 : vector<512x1xf32> to vector<512x128xf32>
    %32 = vector.broadcast %cst_14 : f32 to vector<512x128xf32>
    %33 = arith.select %28, %31, %32 : vector<512x128xi1>, vector<512x128xf32>
    %cst_15 = arith.constant dense<0.000000e+00> : vector<512x4xf32>
    %34 = tpu.matmul %33, %25, %cst_15 {dimension_numbers = #tpu.dot_dimension_numbers<[1], [0], [0], [1], [0, 0, 1, 1], [], []>} : vector<512x128xf32>, vector<128x4xf32>, vector<512x4xf32> -> vector<512x4xf32>
    %35 = arith.addf %21, %34 : vector<512x4xf32>
    %36 = vector.extract_strided_slice %1 {offsets = [0, 1], sizes = [512, 1], strides = [1, 1]} : vector<512x8xi32> to vector<512x1xi32>
    %37 = vector.broadcast %36 : vector<512x1xi32> to vector<512x128xi32>
    %38 = arith.cmpi eq, %37, %24 : vector<512x128xi32>
    %39 = vector.extract_strided_slice %11 {offsets = [0, 1], sizes = [512, 1], strides = [1, 1]} : vector<512x8xf32> to vector<512x1xf32>
    %cst_16 = arith.constant 0.000000e+00 : f32
    %40 = vector.shape_cast %39 : vector<512x1xf32> to vector<512x1xf32>
    %41 = vector.broadcast %40 : vector<512x1xf32> to vector<512x128xf32>
    %42 = vector.broadcast %cst_16 : f32 to vector<512x128xf32>
    %43 = arith.select %38, %41, %42 : vector<512x128xi1>, vector<512x128xf32>
    %cst_17 = arith.constant dense<0.000000e+00> : vector<512x4xf32>
    %44 = tpu.matmul %43, %25, %cst_17 {dimension_numbers = #tpu.dot_dimension_numbers<[1], [0], [0], [1], [0, 0, 1, 1], [], []>} : vector<512x128xf32>, vector<128x4xf32>, vector<512x4xf32> -> vector<512x4xf32>
    %45 = arith.addf %35, %44 : vector<512x4xf32>
    %46 = vector.extract_strided_slice %1 {offsets = [0, 2], sizes = [512, 1], strides = [1, 1]} : vector<512x8xi32> to vector<512x1xi32>
    %47 = vector.broadcast %46 : vector<512x1xi32> to vector<512x128xi32>
    %48 = arith.cmpi eq, %47, %24 : vector<512x128xi32>
    %49 = vector.extract_strided_slice %11 {offsets = [0, 2], sizes = [512, 1], strides = [1, 1]} : vector<512x8xf32> to vector<512x1xf32>
    %cst_18 = arith.constant 0.000000e+00 : f32
    %50 = vector.shape_cast %49 : vector<512x1xf32> to vector<512x1xf32>
    %51 = vector.broadcast %50 : vector<512x1xf32> to vector<512x128xf32>
    %52 = vector.broadcast %cst_18 : f32 to vector<512x128xf32>
    %53 = arith.select %48, %51, %52 : vector<512x128xi1>, vector<512x128xf32>
    %cst_19 = arith.constant dense<0.000000e+00> : vector<512x4xf32>
    %54 = tpu.matmul %53, %25, %cst_19 {dimension_numbers = #tpu.dot_dimension_numbers<[1], [0], [0], [1], [0, 0, 1, 1], [], []>} : vector<512x128xf32>, vector<128x4xf32>, vector<512x4xf32> -> vector<512x4xf32>
    %55 = arith.addf %45, %54 : vector<512x4xf32>
    %56 = vector.extract_strided_slice %1 {offsets = [0, 3], sizes = [512, 1], strides = [1, 1]} : vector<512x8xi32> to vector<512x1xi32>
    %57 = vector.broadcast %56 : vector<512x1xi32> to vector<512x128xi32>
    %58 = arith.cmpi eq, %57, %24 : vector<512x128xi32>
    %59 = vector.extract_strided_slice %11 {offsets = [0, 3], sizes = [512, 1], strides = [1, 1]} : vector<512x8xf32> to vector<512x1xf32>
    %cst_20 = arith.constant 0.000000e+00 : f32
    %60 = vector.shape_cast %59 : vector<512x1xf32> to vector<512x1xf32>
    %61 = vector.broadcast %60 : vector<512x1xf32> to vector<512x128xf32>
    %62 = vector.broadcast %cst_20 : f32 to vector<512x128xf32>
    %63 = arith.select %58, %61, %62 : vector<512x128xi1>, vector<512x128xf32>
    %cst_21 = arith.constant dense<0.000000e+00> : vector<512x4xf32>
    %64 = tpu.matmul %63, %25, %cst_21 {dimension_numbers = #tpu.dot_dimension_numbers<[1], [0], [0], [1], [0, 0, 1, 1], [], []>} : vector<512x128xf32>, vector<128x4xf32>, vector<512x4xf32> -> vector<512x4xf32>
    %65 = arith.addf %55, %64 : vector<512x4xf32>
    %66 = vector.extract_strided_slice %1 {offsets = [0, 4], sizes = [512, 1], strides = [1, 1]} : vector<512x8xi32> to vector<512x1xi32>
    %67 = vector.broadcast %66 : vector<512x1xi32> to vector<512x128xi32>
    %68 = arith.cmpi eq, %67, %24 : vector<512x128xi32>
    %69 = vector.extract_strided_slice %11 {offsets = [0, 4], sizes = [512, 1], strides = [1, 1]} : vector<512x8xf32> to vector<512x1xf32>
    %cst_22 = arith.constant 0.000000e+00 : f32
    %70 = vector.shape_cast %69 : vector<512x1xf32> to vector<512x1xf32>
    %71 = vector.broadcast %70 : vector<512x1xf32> to vector<512x128xf32>
    %72 = vector.broadcast %cst_22 : f32 to vector<512x128xf32>
    %73 = arith.select %68, %71, %72 : vector<512x128xi1>, vector<512x128xf32>
    %cst_23 = arith.constant dense<0.000000e+00> : vector<512x4xf32>
    %74 = tpu.matmul %73, %25, %cst_23 {dimension_numbers = #tpu.dot_dimension_numbers<[1], [0], [0], [1], [0, 0, 1, 1], [], []>} : vector<512x128xf32>, vector<128x4xf32>, vector<512x4xf32> -> vector<512x4xf32>
    %75 = arith.addf %65, %74 : vector<512x4xf32>
    %76 = vector.extract_strided_slice %1 {offsets = [0, 5], sizes = [512, 1], strides = [1, 1]} : vector<512x8xi32> to vector<512x1xi32>
    %77 = vector.broadcast %76 : vector<512x1xi32> to vector<512x128xi32>
    %78 = arith.cmpi eq, %77, %24 : vector<512x128xi32>
    %79 = vector.extract_strided_slice %11 {offsets = [0, 5], sizes = [512, 1], strides = [1, 1]} : vector<512x8xf32> to vector<512x1xf32>
    %cst_24 = arith.constant 0.000000e+00 : f32
    %80 = vector.shape_cast %79 : vector<512x1xf32> to vector<512x1xf32>
    %81 = vector.broadcast %80 : vector<512x1xf32> to vector<512x128xf32>
    %82 = vector.broadcast %cst_24 : f32 to vector<512x128xf32>
    %83 = arith.select %78, %81, %82 : vector<512x128xi1>, vector<512x128xf32>
    %cst_25 = arith.constant dense<0.000000e+00> : vector<512x4xf32>
    %84 = tpu.matmul %83, %25, %cst_25 {dimension_numbers = #tpu.dot_dimension_numbers<[1], [0], [0], [1], [0, 0, 1, 1], [], []>} : vector<512x128xf32>, vector<128x4xf32>, vector<512x4xf32> -> vector<512x4xf32>
    %85 = arith.addf %75, %84 : vector<512x4xf32>
    %86 = vector.extract_strided_slice %1 {offsets = [0, 6], sizes = [512, 1], strides = [1, 1]} : vector<512x8xi32> to vector<512x1xi32>
    %87 = vector.broadcast %86 : vector<512x1xi32> to vector<512x128xi32>
    %88 = arith.cmpi eq, %87, %24 : vector<512x128xi32>
    %89 = vector.extract_strided_slice %11 {offsets = [0, 6], sizes = [512, 1], strides = [1, 1]} : vector<512x8xf32> to vector<512x1xf32>
    %cst_26 = arith.constant 0.000000e+00 : f32
    %90 = vector.shape_cast %89 : vector<512x1xf32> to vector<512x1xf32>
    %91 = vector.broadcast %90 : vector<512x1xf32> to vector<512x128xf32>
    %92 = vector.broadcast %cst_26 : f32 to vector<512x128xf32>
    %93 = arith.select %88, %91, %92 : vector<512x128xi1>, vector<512x128xf32>
    %cst_27 = arith.constant dense<0.000000e+00> : vector<512x4xf32>
    %94 = tpu.matmul %93, %25, %cst_27 {dimension_numbers = #tpu.dot_dimension_numbers<[1], [0], [0], [1], [0, 0, 1, 1], [], []>} : vector<512x128xf32>, vector<128x4xf32>, vector<512x4xf32> -> vector<512x4xf32>
    %95 = arith.addf %85, %94 : vector<512x4xf32>
    %96 = vector.extract_strided_slice %1 {offsets = [0, 7], sizes = [512, 1], strides = [1, 1]} : vector<512x8xi32> to vector<512x1xi32>
    %97 = vector.broadcast %96 : vector<512x1xi32> to vector<512x128xi32>
    %98 = arith.cmpi eq, %97, %24 : vector<512x128xi32>
    %99 = vector.extract_strided_slice %11 {offsets = [0, 7], sizes = [512, 1], strides = [1, 1]} : vector<512x8xf32> to vector<512x1xf32>
    %cst_28 = arith.constant 0.000000e+00 : f32
    %100 = vector.shape_cast %99 : vector<512x1xf32> to vector<512x1xf32>
    %101 = vector.broadcast %100 : vector<512x1xf32> to vector<512x128xf32>
    %102 = vector.broadcast %cst_28 : f32 to vector<512x128xf32>
    %103 = arith.select %98, %101, %102 : vector<512x128xi1>, vector<512x128xf32>
    %cst_29 = arith.constant dense<0.000000e+00> : vector<512x4xf32>
    %104 = tpu.matmul %103, %25, %cst_29 {dimension_numbers = #tpu.dot_dimension_numbers<[1], [0], [0], [1], [0, 0, 1, 1], [], []>} : vector<512x128xf32>, vector<128x4xf32>, vector<512x4xf32> -> vector<512x4xf32>
    %105 = arith.addf %95, %104 : vector<512x4xf32>
    %106 = vector.broadcast %20 : vector<512x1xf32> to vector<512x4xf32>
    %107 = arith.mulf %105, %106 : vector<512x4xf32>
    %c0_30 = arith.constant 0 : index
    %c0_31 = arith.constant 0 : index
    %c0_32 = arith.constant 0 : index
    %108 = vector.load %arg5[%c0_30, %c0_31, %c0_32] : memref<1x512x4xf32, #tpu.memory_space<vmem>>, vector<1x512x4xf32>
    %109 = vector.shape_cast %108 : vector<1x512x4xf32> to vector<512x4xf32>
    %110 = vector.shape_cast %107 : vector<512x4xf32> to vector<1x512x4xf32>
    tpu.vector_store %arg5[%c0_30, %c0_31, %c0_32], %110 {strides = array<i32>} : memref<1x512x4xf32, #tpu.memory_space<vmem>>, vector<1x512x4xf32>,
    return
  }
  func.func @transform_0(%arg0: i32, %arg1: i32) -> (i32, i32, i32) {
    %c0_i32 = arith.constant 0 : i32
    %c0_i32_0 = arith.constant 0 : i32
    return %arg0, %arg1, %c0_i32 : i32, i32, i32
  }
  func.func @transform_1(%arg0: i32, %arg1: i32) -> (i32, i32, i32) {
    %c0_i32 = arith.constant 0 : i32
    %c0_i32_0 = arith.constant 0 : i32
    return %arg0, %arg1, %c0_i32 : i32, i32, i32
  }
  func.func @transform_2(%arg0: i32, %arg1: i32) -> (i32, i32) {
    %c0_i32 = arith.constant 0 : i32
    %c0_i32_0 = arith.constant 0 : i32
    %c0_i32_1 = arith.constant 0 : i32
    return %c0_i32, %c0_i32_0 : i32, i32
  }
  func.func @transform_3(%arg0: i32, %arg1: i32) -> (i32, i32, i32) {
    %c0_i32 = arith.constant 0 : i32
    %c0_i32_0 = arith.constant 0 : i32
    return %arg0, %arg1, %c0_i32 : i32, i32, i32
  }
}

</mosaic_0001>

<llo_original>
// kernel: tpu_custom_call.1
$region0: #{tpu_custom_call.1}
  #allocation0 [shape = 'u32[]', space=smem, size = 0x4, offset = 0x4, fixed_abs, tag = 'smem constant byte address 0x4 - core index']
  #allocation1 [shape = 'u32[144,128]{1,0:T(1,128)}', space=vmem, size = 0x12000, scoped, tag = 'internal scratch']
  %s0 = inlined_call_operand.vmem [shape: s32[2,1024,8], index: 0, kind: input, shape index: {}]
  %s1 = inlined_call_operand.vmem [shape: f32[2,1024,8], index: 1, kind: input, shape index: {}]
  %s2 = inlined_call_operand.vmem [shape: f32[128,4], index: 2, kind: input, shape index: {}]
  %s3 = inlined_call_operand.vmem [shape: f32[2,1024,4], index: 3, kind: output, shape index: {}]
  %s4 = sld [smem:[#allocation0]]
  $region45: #{tpu_custom_call.1} parent=0
    _
  %s6 = ssub.s32 1, %s4
  %s7 = scalar_select 0, %s6, %s4
  loop: start=0, step=1, limit=6
  $region2: #{tpu_custom_call.1} parent=0 // loop_pre_header
    _
  $region3: #{tpu_custom_call.1} parent=0 // loop_header
    %s9 = sphi 0, %s13
    %p10 = scmp.ge.s32.totalorder %s9, 6
    %s16 = sphi 0, %s28
    %s17 = sphi 0, %s24
    %s18 = sphi 0, %s16
    %s19 = sphi 0, %s17
    %s20 = sphi 0, %s18
    %s21 = sphi 0, %s19
    %s33 = sphi 0, %s35
    %s36 = sphi 0, %s33
    %s37 = sphi 0, %s36
    %s53 = sphi 0, %s37
    %s61 = sphi 0, %s63
    %s64 = sphi 0, %s61
    %s65 = sphi 0, %s64
    %s81 = sphi 0, %s65
    %s85 = sphi 0, %s85
    %s87 = sphi 0, %s85
    %s88 = sphi 0, %s87
    %s102 = sphi 0, %s88
    %s110 = sphi 0, %s112
    %s113 = sphi 0, %s110
    %s114 = sphi 0, %s113
    %s130 = sphi 0, %s114
  $region4: #{tpu_custom_call.1} parent=0 // loop_header_branch
    %12 = sbr.rel (%p10) target = $region8
  $region5: #{tpu_custom_call.1} parent=0 // loop_body
    %s14 = ssub.s32 %s9, 1
    %s15 = ssub.s32 %s9, 2
    %s22 = sadd.s32 1, %s17
    %p23 = scmp.ge.s32.totalorder %s22, 2
    %s24 = scalar_select %p23, 0, %s22
    %s25 = sadd.s32 1, %s16
    %s26 = scalar_select %p23, %s25, %s16
    %p27 = scmp.ge.s32.totalorder %s26, 2
    %s28 = scalar_select %p27, 0, %s26
    %s29 = ssub.s32 %s16, %s28
    %s30 = ssub.s32 %s17, %s24
    %s31 = sor.u32 %s29, %s30
    %p32 = scmp.eq.s32.totalorder %s31, 0
    %s34 = sadd.s32 %s33, 1
    %s35 = scalar_select %p32, %s33, %s34
    %p38 = pneg %p32
    %p39 = scmp.eq.s32.totalorder %s9, 3
    %p40 = por %p38, %p39
    %p41 = scmp.ne.s32.totalorder %s33, %s36
    %p42 = scmp.eq.s32.totalorder %s9, 0
    %p43 = por %p41, %p42
    %p44 = scmp.ne.s32.totalorder %s33, %s36
    %p45 = scmp.eq.s32.totalorder %s14, 3
    %p46 = por %p44, %p45
    %p47 = scmp.ne.s32.totalorder %s36, %s37
    %p48 = scmp.eq.s32.totalorder %s14, 0
    %p49 = por %p47, %p48
    %p50 = scmp.ne.s32.totalorder %s36, %s37
    %p51 = scmp.eq.s32.totalorder %s15, 3
    %p52 = por %p50, %p51
    %p54 = scmp.ne.s32.totalorder %s37, %s53
    %p55 = scmp.eq.s32.totalorder %s15, 0
    %p56 = por %p54, %p55
    %s57 = ssub.s32 %s16, %s28
    %s58 = ssub.s32 %s17, %s24
    %s59 = sor.u32 %s57, %s58
    %p60 = scmp.eq.s32.totalorder %s59, 0
    %s62 = sadd.s32 %s61, 1
    %s63 = scalar_select %p60, %s61, %s62
    %p66 = pneg %p60
    %p67 = scmp.eq.s32.totalorder %s9, 3
    %p68 = por %p66, %p67
    %p69 = scmp.ne.s32.totalorder %s61, %s64
    %p70 = scmp.eq.s32.totalorder %s9, 0
    %p71 = por %p69, %p70
    %p72 = scmp.ne.s32.totalorder %s61, %s64
    %p73 = scmp.eq.s32.totalorder %s14, 3
    %p74 = por %p72, %p73
    %p75 = scmp.ne.s32.totalorder %s64, %s65
    %p76 = scmp.eq.s32.totalorder %s14, 0
    %p77 = por %p75, %p76
    %p78 = scmp.ne.s32.totalorder %s64, %s65
    %p79 = scmp.eq.s32.totalorder %s15, 3
    %p80 = por %p78, %p79
    %p82 = scmp.ne.s32.totalorder %s65, %s81
    %p83 = scmp.eq.s32.totalorder %s15, 0
    %p84 = por %p82, %p83
    %s86 = sadd.s32 %s85, 1
    %p89 = scmp.eq.s32.totalorder %s9, 3
    %p90 = scmp.ne.s32.totalorder %s85, %s87
    %p91 = scmp.eq.s32.totalorder %s9, 0
    %p92 = por %p90, %p91
    %p93 = scmp.ne.s32.totalorder %s85, %s87
    %p94 = scmp.eq.s32.totalorder %s14, 3
    %p95 = por %p93, %p94
    %p96 = scmp.ne.s32.totalorder %s87, %s88
    %p97 = scmp.eq.s32.totalorder %s14, 0
    %p98 = por %p96, %p97
    %p99 = scmp.ne.s32.totalorder %s87, %s88
    %p100 = scmp.eq.s32.totalorder %s15, 3
    %p101 = por %p99, %p100
    %p103 = scmp.ne.s32.totalorder %s88, %s102
    %p104 = scmp.eq.s32.totalorder %s15, 0
    %p105 = por %p103, %p104
    %s106 = ssub.s32 %s16, %s28
    %s107 = ssub.s32 %s17, %s24
    %s108 = sor.u32 %s106, %s107
    %p109 = scmp.eq.s32.totalorder %s108, 0
    %s111 = sadd.s32 %s110, 1
    %s112 = scalar_select %p109, %s110, %s111
    %p115 = pneg %p109
    %p116 = scmp.eq.s32.totalorder %s9, 3
    %p117 = por %p115, %p116
    %p118 = scmp.ne.s32.totalorder %s110, %s113
    %p119 = scmp.eq.s32.totalorder %s9, 0
    %p120 = por %p118, %p119
    %p121 = scmp.ne.s32.totalorder %s110, %s113
    %p122 = scmp.eq.s32.totalorder %s14, 3
    %p123 = por %p121, %p122
    %p124 = scmp.ne.s32.totalorder %s113, %s114
    %p125 = scmp.eq.s32.totalorder %s14, 0
    %p126 = por %p124, %p125
    %p127 = scmp.ne.s32.totalorder %s113, %s114
    %p128 = scmp.eq.s32.totalorder %s15, 3
    %p129 = por %p127, %p128
    %p131 = scmp.ne.s32.totalorder %s114, %s130
    %p132 = scmp.eq.s32.totalorder %s15, 0
    %p133 = por %p131, %p132
    %p134 = scmp.le.s32.totalorder 1, %s9
    %p135 = scmp.lt.s32.totalorder %s9, 5
    %p136 = pnand %p134, %p135
    %p137 = pneg %p136
    // Predicated region
    $region9: #{tpu_custom_call.1} parent=5 // pred_check
      _
    $region10: #{tpu_custom_call.1} parent=5 // pred_check_branch
      %139 = sbr.rel (%p136) target = $region12
    $region11: #{tpu_custom_call.1} parent=5 // pred_region
      %s140 = ssub.s32 %s9, 1
      // Predicated region
      $region13: #{tpu_custom_call.1} parent=11 // pred_check
        %p141 = pneg %p98
      $region14: #{tpu_custom_call.1} parent=11 // pred_check_branch
        %143 = sbr.rel (%p141) target = $region16
      $region15: #{tpu_custom_call.1} parent=11 // pred_region
        _
      $region16: #{tpu_custom_call.1} parent=11 // pred_fallthru
        _
    $region12: #{tpu_custom_call.1} parent=5 // pred_fallthru
      _
    %p144 = scmp.lt.s32.totalorder %s9, 4
    // Predicated region
    $region17: #{tpu_custom_call.1} parent=5 // pred_check
      %p145 = pneg %p144
    $region18: #{tpu_custom_call.1} parent=5 // pred_check_branch
      %147 = sbr.rel (%p145) target = $region20
    $region19: #{tpu_custom_call.1} parent=5 // pred_region
      // Predicated region
      $region21: #{tpu_custom_call.1} parent=19 // pred_check
        %p148 = pneg %p43
      $region22: #{tpu_custom_call.1} parent=19 // pred_check_branch
        %150 = sbr.rel (%p148) target = $region24
      $region23: #{tpu_custom_call.1} parent=19 // pred_region
        %s151 = smul.u32 64, %s17
        %p152 = scmp.lt.s32.totalorder %s16, 1
        %s153 = scalar_select %p152, %s16, 1
        %p154 = scmp.lt.s32.totalorder %s151, 127
        %s155 = scalar_select %p154, %s151, 127
        %s156 = smul.addr %s153, 128
        %s157 = sadd.s32 %s155, %s156
        %s158 = smul.addr %s157, 8
        %s159 = scalar_lea.vmem %s0, %s158
        %s160 = smul.u32 64, %s17
      $region24: #{tpu_custom_call.1} parent=19 // pred_fallthru
        _
      // Predicated region
      $region25: #{tpu_custom_call.1} parent=19 // pred_check
        %p161 = pneg %p71
      $region26: #{tpu_custom_call.1} parent=19 // pred_check_branch
        %163 = sbr.rel (%p161) target = $region28
      $region27: #{tpu_custom_call.1} parent=19 // pred_region
        %s164 = smul.u32 64, %s17
        %p165 = scmp.lt.s32.totalorder %s16, 1
        %s166 = scalar_select %p165, %s16, 1
        %p167 = scmp.lt.s32.totalorder %s164, 127
        %s168 = scalar_select %p167, %s164, 127
        %s169 = smul.addr %s166, 128
        %s170 = sadd.s32 %s168, %s169
        %s171 = smul.addr %s170, 8
        %s172 = scalar_lea.vmem %s1, %s171
        %s173 = smul.u32 64, %s17
      $region28: #{tpu_custom_call.1} parent=19 // pred_fallthru
        _
    $region20: #{tpu_custom_call.1} parent=5 // pred_fallthru
      _
    %p174 = scmp.le.s32.totalorder 1, %s9
    %p175 = scmp.lt.s32.totalorder %s9, 5
    %p176 = pnand %p174, %p175
    %p177 = pneg %p176
    // Predicated region
    $region29: #{tpu_custom_call.1} parent=5 // pred_check
      _
    $region30: #{tpu_custom_call.1} parent=5 // pred_check_branch
      %179 = sbr.rel (%p176) target = $region32
    $region31: #{tpu_custom_call.1} parent=5 // pred_region
      %s180 = ssub.s32 %s9, 1
      %s181 = smul.u32 64, %s19
      %p182 = scmp.lt.s32.totalorder %s18, 1
      %s183 = scalar_select %p182, %s18, 1
      %p184 = scmp.lt.s32.totalorder %s181, 127
      %s185 = scalar_select %p184, %s181, 127
      %s186 = smul.addr %s183, 128
      %s187 = sadd.s32 %s185, %s186
      %s188 = smul.addr %s187, 8
      %s189 = scalar_lea.vmem %s0, %s188
      %p190 = pneg %p49
      %p191 = pneg %p46
      %s192 = smul.u32 64, %s19
      %p193 = scmp.lt.s32.totalorder %s18, 1
      %s194 = scalar_select %p193, %s18, 1
      %p195 = scmp.lt.s32.totalorder %s192, 127
      %s196 = scalar_select %p195, %s192, 127
      %s197 = smul.addr %s194, 128
      %s198 = sadd.s32 %s196, %s197
      %s199 = smul.addr %s198, 8
      %s200 = scalar_lea.vmem %s1, %s199
      %p201 = pneg %p77
      %p202 = pneg %p74
      %p203 = pneg %p98
      %p204 = pneg %p95
      %p205 = pneg %p126
      %p206 = pneg %p123
      %s207 = smul.u32 64, %s19
      %p208 = scmp.lt.s32.totalorder %s18, 1
      %s209 = scalar_select %p208, %s18, 1
      %p210 = scmp.lt.s32.totalorder %s207, 127
      %s211 = scalar_select %p210, %s207, 127
      %s212 = smul.addr %s209, 128
      %s213 = sadd.s32 %s211, %s212
      %s214 = smul.addr %s213, 8
      %s215 = scalar_lea.vmem %s3, %s214
      %s216 = smul.u32 64, %s19
      %p217 = scmp.lt.s32.totalorder %s18, 1
      %s218 = scalar_select %p217, %s18, 1
      %p219 = scmp.lt.s32.totalorder %s216, 127
      %s220 = scalar_select %p219, %s216, 127
      %s221 = smul.addr %s218, 128
      %s222 = sadd.s32 %s220, %s221
      %s223 = smul.addr %s222, 8
      %s224 = scalar_lea.vmem %s0, %s223
      %s225 = smul.u32 64, %s19
      %s226 = smul.u32 64, %s19
      %p227 = scmp.lt.s32.totalorder %s18, 1
      %s228 = scalar_select %p227, %s18, 1
      %p229 = scmp.lt.s32.totalorder %s226, 127
      %s230 = scalar_select %p229, %s226, 127
      %s231 = smul.addr %s228, 128
      %s232 = sadd.s32 %s230, %s231
      %s233 = smul.addr %s232, 8
      %s234 = scalar_lea.vmem %s1, %s233
      %s235 = smul.u32 64, %s19
      %s236 = smul.u32 64, %s19
      %p237 = scmp.lt.s32.totalorder %s18, 1
      %s238 = scalar_select %p237, %s18, 1
      %p239 = scmp.lt.s32.totalorder %s236, 127
      %s240 = scalar_select %p239, %s236, 127
      %s241 = smul.addr %s238, 128
      %s242 = sadd.s32 %s240, %s241
      %s243 = smul.addr %s242, 8
      %s244 = scalar_lea.vmem %s3, %s243
      %s245 = smul.u32 64, %s19
      %v246 = vld [vmem:[%s224] sm:$0xff]
      %v247 = vld [vmem:[%s224 + $0x8] sm:$0xff]
      %v248 = vld [vmem:[%s224 + $0x10] sm:$0xff]
      %v249 = vld [vmem:[%s224 + $0x18] sm:$0xff]
      %v250 = vld [vmem:[%s224 + $0x20] sm:$0xff]
      %v251 = vld [vmem:[%s224 + $0x28] sm:$0xff]
      %v252 = vld [vmem:[%s224 + $0x30] sm:$0xff]
      %v253 = vld [vmem:[%s224 + $0x38] sm:$0xff]
      %v254 = vld [vmem:[%s224 + $0x40] sm:$0xff]
      %v255 = vld [vmem:[%s224 + $0x48] sm:$0xff]
      %v256 = vld [vmem:[%s224 + $0x50] sm:$0xff]
      %v257 = vld [vmem:[%s224 + $0x58] sm:$0xff]
      %v258 = vld [vmem:[%s224 + $0x60] sm:$0xff]
      %v259 = vld [vmem:[%s224 + $0x68] sm:$0xff]
      %v260 = vld [vmem:[%s224 + $0x70] sm:$0xff]
      %v261 = vld [vmem:[%s224 + $0x78] sm:$0xff]
      %v262 = vld [vmem:[%s224 + $0x80] sm:$0xff]
      %v263 = vld [vmem:[%s224 + $0x88] sm:$0xff]
      %v264 = vld [vmem:[%s224 + $0x90] sm:$0xff]
      %v265 = vld [vmem:[%s224 + $0x98] sm:$0xff]
      %v266 = vld [vmem:[%s224 + $0xa0] sm:$0xff]
      %v267 = vld [vmem:[%s224 + $0xa8] sm:$0xff]
      %v268 = vld [vmem:[%s224 + $0xb0] sm:$0xff]
      %v269 = vld [vmem:[%s224 + $0xb8] sm:$0xff]
      %v270 = vld [vmem:[%s224 + $0xc0] sm:$0xff]
      %v271 = vld [vmem:[%s224 + $0xc8] sm:$0xff]
      %v272 = vld [vmem:[%s224 + $0xd0] sm:$0xff]
      %v273 = vld [vmem:[%s224 + $0xd8] sm:$0xff]
      %v274 = vld [vmem:[%s224 + $0xe0] sm:$0xff]
      %v275 = vld [vmem:[%s224 + $0xe8] sm:$0xff]
      %v276 = vld [vmem:[%s224 + $0xf0] sm:$0xff]
      %v277 = vld [vmem:[%s224 + $0xf8] sm:$0xff]
      %v278 = vld [vmem:[%s224 + $0x100] sm:$0xff]
      %v279 = vld [vmem:[%s224 + $0x108] sm:$0xff]
      %v280 = vld [vmem:[%s224 + $0x110] sm:$0xff]
      %v281 = vld [vmem:[%s224 + $0x118] sm:$0xff]
      %v282 = vld [vmem:[%s224 + $0x120] sm:$0xff]
      %v283 = vld [vmem:[%s224 + $0x128] sm:$0xff]
      %v284 = vld [vmem:[%s224 + $0x130] sm:$0xff]
      %v285 = vld [vmem:[%s224 + $0x138] sm:$0xff]
      %v286 = vld [vmem:[%s224 + $0x140] sm:$0xff]
      %v287 = vld [vmem:[%s224 + $0x148] sm:$0xff]
      %v288 = vld [vmem:[%s224 + $0x150] sm:$0xff]
      %v289 = vld [vmem:[%s224 + $0x158] sm:$0xff]
      %v290 = vld [vmem:[%s224 + $0x160] sm:$0xff]
      %v291 = vld [vmem:[%s224 + $0x168] sm:$0xff]
      %v292 = vld [vmem:[%s224 + $0x170] sm:$0xff]
      %v293 = vld [vmem:[%s224 + $0x178] sm:$0xff]
      %v294 = vld [vmem:[%s224 + $0x180] sm:$0xff]
      %v295 = vld [vmem:[%s224 + $0x188] sm:$0xff]
      %v296 = vld [vmem:[%s224 + $0x190] sm:$0xff]
      %v297 = vld [vmem:[%s224 + $0x198] sm:$0xff]
      %v298 = vld [vmem:[%s224 + $0x1a0] sm:$0xff]
      %v299 = vld [vmem:[%s224 + $0x1a8] sm:$0xff]
      %v300 = vld [vmem:[%s224 + $0x1b0] sm:$0xff]
      %v301 = vld [vmem:[%s224 + $0x1b8] sm:$0xff]
      %v302 = vld [vmem:[%s224 + $0x1c0] sm:$0xff]
      %v303 = vld [vmem:[%s224 + $0x1c8] sm:$0xff]
      %v304 = vld [vmem:[%s224 + $0x1d0] sm:$0xff]
      %v305 = vld [vmem:[%s224 + $0x1d8] sm:$0xff]
      %v306 = vld [vmem:[%s224 + $0x1e0] sm:$0xff]
      %v307 = vld [vmem:[%s224 + $0x1e8] sm:$0xff]
      %v308 = vld [vmem:[%s224 + $0x1f0] sm:$0xff]
      %v309 = vld [vmem:[%s224 + $0x1f8] sm:$0xff]
      %v310 = vld [vmem:[%s234] sm:$0xff]
      %v311 = vld [vmem:[%s234 + $0x8] sm:$0xff]
      %v312 = vld [vmem:[%s234 + $0x10] sm:$0xff]
      %v313 = vld [vmem:[%s234 + $0x18] sm:$0xff]
      %v314 = vld [vmem:[%s234 + $0x20] sm:$0xff]
      %v315 = vld [vmem:[%s234 + $0x28] sm:$0xff]
      %v316 = vld [vmem:[%s234 + $0x30] sm:$0xff]
      %v317 = vld [vmem:[%s234 + $0x38] sm:$0xff]
      %v318 = vld [vmem:[%s234 + $0x40] sm:$0xff]
      %v319 = vld [vmem:[%s234 + $0x48] sm:$0xff]
      %v320 = vld [vmem:[%s234 + $0x50] sm:$0xff]
      %v321 = vld [vmem:[%s234 + $0x58] sm:$0xff]
      %v322 = vld [vmem:[%s234 + $0x60] sm:$0xff]
      %v323 = vld [vmem:[%s234 + $0x68] sm:$0xff]
      %v324 = vld [vmem:[%s234 + $0x70] sm:$0xff]
      %v325 = vld [vmem:[%s234 + $0x78] sm:$0xff]
      %v326 = vld [vmem:[%s234 + $0x80] sm:$0xff]
      %v327 = vld [vmem:[%s234 + $0x88] sm:$0xff]
      %v328 = vld [vmem:[%s234 + $0x90] sm:$0xff]
      %v329 = vld [vmem:[%s234 + $0x98] sm:$0xff]
      %v330 = vld [vmem:[%s234 + $0xa0] sm:$0xff]
      %v331 = vld [vmem:[%s234 + $0xa8] sm:$0xff]
      %v332 = vld [vmem:[%s234 + $0xb0] sm:$0xff]
      %v333 = vld [vmem:[%s234 + $0xb8] sm:$0xff]
      %v334 = vld [vmem:[%s234 + $0xc0] sm:$0xff]
      %v335 = vld [vmem:[%s234 + $0xc8] sm:$0xff]
      %v336 = vld [vmem:[%s234 + $0xd0] sm:$0xff]
      %v337 = vld [vmem:[%s234 + $0xd8] sm:$0xff]
      %v338 = vld [vmem:[%s234 + $0xe0] sm:$0xff]
      %v339 = vld [vmem:[%s234 + $0xe8] sm:$0xff]
      %v340 = vld [vmem:[%s234 + $0xf0] sm:$0xff]
      %v341 = vld [vmem:[%s234 + $0xf8] sm:$0xff]
      %v342 = vld [vmem:[%s234 + $0x100] sm:$0xff]
      %v343 = vld [vmem:[%s234 + $0x108] sm:$0xff]
      %v344 = vld [vmem:[%s234 + $0x110] sm:$0xff]
      %v345 = vld [vmem:[%s234 + $0x118] sm:$0xff]
      %v346 = vld [vmem:[%s234 + $0x120] sm:$0xff]
      %v347 = vld [vmem:[%s234 + $0x128] sm:$0xff]
      %v348 = vld [vmem:[%s234 + $0x130] sm:$0xff]
      %v349 = vld [vmem:[%s234 + $0x138] sm:$0xff]
      %v350 = vld [vmem:[%s234 + $0x140] sm:$0xff]
      %v351 = vld [vmem:[%s234 + $0x148] sm:$0xff]
      %v352 = vld [vmem:[%s234 + $0x150] sm:$0xff]
      %v353 = vld [vmem:[%s234 + $0x158] sm:$0xff]
      %v354 = vld [vmem:[%s234 + $0x160] sm:$0xff]
      %v355 = vld [vmem:[%s234 + $0x168] sm:$0xff]
      %v356 = vld [vmem:[%s234 + $0x170] sm:$0xff]
      %v357 = vld [vmem:[%s234 + $0x178] sm:$0xff]
      %v358 = vld [vmem:[%s234 + $0x180] sm:$0xff]
      %v359 = vld [vmem:[%s234 + $0x188] sm:$0xff]
      %v360 = vld [vmem:[%s234 + $0x190] sm:$0xff]
      %v361 = vld [vmem:[%s234 + $0x198] sm:$0xff]
      %v362 = vld [vmem:[%s234 + $0x1a0] sm:$0xff]
      %v363 = vld [vmem:[%s234 + $0x1a8] sm:$0xff]
      %v364 = vld [vmem:[%s234 + $0x1b0] sm:$0xff]
      %v365 = vld [vmem:[%s234 + $0x1b8] sm:$0xff]
      %v366 = vld [vmem:[%s234 + $0x1c0] sm:$0xff]
      %v367 = vld [vmem:[%s234 + $0x1c8] sm:$0xff]
      %v368 = vld [vmem:[%s234 + $0x1d0] sm:$0xff]
      %v369 = vld [vmem:[%s234 + $0x1d8] sm:$0xff]
      %v370 = vld [vmem:[%s234 + $0x1e0] sm:$0xff]
      %v371 = vld [vmem:[%s234 + $0x1e8] sm:$0xff]
      %v372 = vld [vmem:[%s234 + $0x1f0] sm:$0xff]
      %v373 = vld [vmem:[%s234 + $0x1f8] sm:$0xff]
      %vm374 = vcmp.ge.s32.totalorder %v246, 0
      %vm375 = vcmp.ge.s32.totalorder %v247, 0
      %vm376 = vcmp.ge.s32.totalorder %v248, 0
      %vm377 = vcmp.ge.s32.totalorder %v249, 0
      %vm378 = vcmp.ge.s32.totalorder %v250, 0
      %vm379 = vcmp.ge.s32.totalorder %v251, 0
      %vm380 = vcmp.ge.s32.totalorder %v252, 0
      %vm381 = vcmp.ge.s32.totalorder %v253, 0
      %vm382 = vcmp.ge.s32.totalorder %v254, 0
      %vm383 = vcmp.ge.s32.totalorder %v255, 0
      %vm384 = vcmp.ge.s32.totalorder %v256, 0
      %vm385 = vcmp.ge.s32.totalorder %v257, 0
      %vm386 = vcmp.ge.s32.totalorder %v258, 0
      %vm387 = vcmp.ge.s32.totalorder %v259, 0
      %vm388 = vcmp.ge.s32.totalorder %v260, 0
      %vm389 = vcmp.ge.s32.totalorder %v261, 0
      %vm390 = vcmp.ge.s32.totalorder %v262, 0
      %vm391 = vcmp.ge.s32.totalorder %v263, 0
      %vm392 = vcmp.ge.s32.totalorder %v264, 0
      %vm393 = vcmp.ge.s32.totalorder %v265, 0
      %vm394 = vcmp.ge.s32.totalorder %v266, 0
      %vm395 = vcmp.ge.s32.totalorder %v267, 0
      %vm396 = vcmp.ge.s32.totalorder %v268, 0
      %vm397 = vcmp.ge.s32.totalorder %v269, 0
      %vm398 = vcmp.ge.s32.totalorder %v270, 0
      %vm399 = vcmp.ge.s32.totalorder %v271, 0
      %vm400 = vcmp.ge.s32.totalorder %v272, 0
      %vm401 = vcmp.ge.s32.totalorder %v273, 0
      %vm402 = vcmp.ge.s32.totalorder %v274, 0
      %vm403 = vcmp.ge.s32.totalorder %v275, 0
      %vm404 = vcmp.ge.s32.totalorder %v276, 0
      %vm405 = vcmp.ge.s32.totalorder %v277, 0
      %vm406 = vcmp.ge.s32.totalorder %v278, 0
      %vm407 = vcmp.ge.s32.totalorder %v279, 0
      %vm408 = vcmp.ge.s32.totalorder %v280, 0
      %vm409 = vcmp.ge.s32.totalorder %v281, 0
      %vm410 = vcmp.ge.s32.totalorder %v282, 0
      %vm411 = vcmp.ge.s32.totalorder %v283, 0
      %vm412 = vcmp.ge.s32.totalorder %v284, 0
      %vm413 = vcmp.ge.s32.totalorder %v285, 0
      %vm414 = vcmp.ge.s32.totalorder %v286, 0
      %vm415 = vcmp.ge.s32.totalorder %v287, 0
      %vm416 = vcmp.ge.s32.totalorder %v288, 0
      %vm417 = vcmp.ge.s32.totalorder %v289, 0
      %vm418 = vcmp.ge.s32.totalorder %v290, 0
      %vm419 = vcmp.ge.s32.totalorder %v291, 0
      %vm420 = vcmp.ge.s32.totalorder %v292, 0
      %vm421 = vcmp.ge.s32.totalorder %v293, 0
      %vm422 = vcmp.ge.s32.totalorder %v294, 0
      %vm423 = vcmp.ge.s32.totalorder %v295, 0
      %vm424 = vcmp.ge.s32.totalorder %v296, 0
      %vm425 = vcmp.ge.s32.totalorder %v297, 0
      %vm426 = vcmp.ge.s32.totalorder %v298, 0
      %vm427 = vcmp.ge.s32.totalorder %v299, 0
      %vm428 = vcmp.ge.s32.totalorder %v300, 0
      %vm429 = vcmp.ge.s32.totalorder %v301, 0
      %vm430 = vcmp.ge.s32.totalorder %v302, 0
      %vm431 = vcmp.ge.s32.totalorder %v303, 0
      %vm432 = vcmp.ge.s32.totalorder %v304, 0
      %vm433 = vcmp.ge.s32.totalorder %v305, 0
      %vm434 = vcmp.ge.s32.totalorder %v306, 0
      %vm435 = vcmp.ge.s32.totalorder %v307, 0
      %vm436 = vcmp.ge.s32.totalorder %v308, 0
      %vm437 = vcmp.ge.s32.totalorder %v309, 0
      %v438 = vmul.f32 %v310, 400.0
      %v439 = vmul.f32 %v311, 400.0
      %v440 = vmul.f32 %v312, 400.0
      %v441 = vmul.f32 %v313, 400.0
      %v442 = vmul.f32 %v314, 400.0
      %v443 = vmul.f32 %v315, 400.0
      %v444 = vmul.f32 %v316, 400.0
      %v445 = vmul.f32 %v317, 400.0
      %v446 = vmul.f32 %v318, 400.0
      %v447 = vmul.f32 %v319, 400.0
      %v448 = vmul.f32 %v320, 400.0
      %v449 = vmul.f32 %v321, 400.0
      %v450 = vmul.f32 %v322, 400.0
      %v451 = vmul.f32 %v323, 400.0
      %v452 = vmul.f32 %v324, 400.0
      %v453 = vmul.f32 %v325, 400.0
      %v454 = vmul.f32 %v326, 400.0
      %v455 = vmul.f32 %v327, 400.0
      %v456 = vmul.f32 %v328, 400.0
      %v457 = vmul.f32 %v329, 400.0
      %v458 = vmul.f32 %v330, 400.0
      %v459 = vmul.f32 %v331, 400.0
      %v460 = vmul.f32 %v332, 400.0
      %v461 = vmul.f32 %v333, 400.0
      %v462 = vmul.f32 %v334, 400.0
      %v463 = vmul.f32 %v335, 400.0
      %v464 = vmul.f32 %v336, 400.0
      %v465 = vmul.f32 %v337, 400.0
      %v466 = vmul.f32 %v338, 400.0
      %v467 = vmul.f32 %v339, 400.0
      %v468 = vmul.f32 %v340, 400.0
      %v469 = vmul.f32 %v341, 400.0
      %v470 = vmul.f32 %v342, 400.0
      %v471 = vmul.f32 %v343, 400.0
      %v472 = vmul.f32 %v344, 400.0
      %v473 = vmul.f32 %v345, 400.0
      %v474 = vmul.f32 %v346, 400.0
      %v475 = vmul.f32 %v347, 400.0
      %v476 = vmul.f32 %v348, 400.0
      %v477 = vmul.f32 %v349, 400.0
      %v478 = vmul.f32 %v350, 400.0
      %v479 = vmul.f32 %v351, 400.0
      %v480 = vmul.f32 %v352, 400.0
      %v481 = vmul.f32 %v353, 400.0
      %v482 = vmul.f32 %v354, 400.0
      %v483 = vmul.f32 %v355, 400.0
      %v484 = vmul.f32 %v356, 400.0
      %v485 = vmul.f32 %v357, 400.0
      %v486 = vmul.f32 %v358, 400.0
      %v487 = vmul.f32 %v359, 400.0
      %v488 = vmul.f32 %v360, 400.0
      %v489 = vmul.f32 %v361, 400.0
      %v490 = vmul.f32 %v362, 400.0
      %v491 = vmul.f32 %v363, 400.0
      %v492 = vmul.f32 %v364, 400.0
      %v493 = vmul.f32 %v365, 400.0
      %v494 = vmul.f32 %v366, 400.0
      %v495 = vmul.f32 %v367, 400.0
      %v496 = vmul.f32 %v368, 400.0
      %v497 = vmul.f32 %v369, 400.0
      %v498 = vmul.f32 %v370, 400.0
      %v499 = vmul.f32 %v371, 400.0
      %v500 = vmul.f32 %v372, 400.0
      %v501 = vmul.f32 %v373, 400.0
      %v502 = vsub.f32 1.0, %v438
      %v503 = vsub.f32 1.0, %v439
      %v504 = vsub.f32 1.0, %v440
      %v505 = vsub.f32 1.0, %v441
      %v506 = vsub.f32 1.0, %v442
      %v507 = vsub.f32 1.0, %v443
      %v508 = vsub.f32 1.0, %v444
      %v509 = vsub.f32 1.0, %v445
      %v510 = vsub.f32 1.0, %v446
      %v511 = vsub.f32 1.0, %v447
      %v512 = vsub.f32 1.0, %v448
      %v513 = vsub.f32 1.0, %v449
      %v514 = vsub.f32 1.0, %v450
      %v515 = vsub.f32 1.0, %v451
      %v516 = vsub.f32 1.0, %v452
      %v517 = vsub.f32 1.0, %v453
      %v518 = vsub.f32 1.0, %v454
      %v519 = vsub.f32 1.0, %v455
      %v520 = vsub.f32 1.0, %v456
      %v521 = vsub.f32 1.0, %v457
      %v522 = vsub.f32 1.0, %v458
      %v523 = vsub.f32 1.0, %v459
      %v524 = vsub.f32 1.0, %v460
      %v525 = vsub.f32 1.0, %v461
      %v526 = vsub.f32 1.0, %v462
      %v527 = vsub.f32 1.0, %v463
      %v528 = vsub.f32 1.0, %v464
      %v529 = vsub.f32 1.0, %v465
      %v530 = vsub.f32 1.0, %v466
      %v531 = vsub.f32 1.0, %v467
      %v532 = vsub.f32 1.0, %v468
      %v533 = vsub.f32 1.0, %v469
      %v534 = vsub.f32 1.0, %v470
      %v535 = vsub.f32 1.0, %v471
      %v536 = vsub.f32 1.0, %v472
      %v537 = vsub.f32 1.0, %v473
      %v538 = vsub.f32 1.0, %v474
      %v539 = vsub.f32 1.0, %v475
      %v540 = vsub.f32 1.0, %v476
      %v541 = vsub.f32 1.0, %v477
      %v542 = vsub.f32 1.0, %v478
      %v543 = vsub.f32 1.0, %v479
      %v544 = vsub.f32 1.0, %v480
      %v545 = vsub.f32 1.0, %v481
      %v546 = vsub.f32 1.0, %v482
      %v547 = vsub.f32 1.0, %v483
      %v548 = vsub.f32 1.0, %v484
      %v549 = vsub.f32 1.0, %v485
      %v550 = vsub.f32 1.0, %v486
      %v551 = vsub.f32 1.0, %v487
      %v552 = vsub.f32 1.0, %v488
      %v553 = vsub.f32 1.0, %v489
      %v554 = vsub.f32 1.0, %v490
      %v555 = vsub.f32 1.0, %v491
      %v556 = vsub.f32 1.0, %v492
      %v557 = vsub.f32 1.0, %v493
      %v558 = vsub.f32 1.0, %v494
      %v559 = vsub.f32 1.0, %v495
      %v560 = vsub.f32 1.0, %v496
      %v561 = vsub.f32 1.0, %v497
      %v562 = vsub.f32 1.0, %v498
      %v563 = vsub.f32 1.0, %v499
      %v564 = vsub.f32 1.0, %v500
      %v565 = vsub.f32 1.0, %v501
      %v566 = vsel %vm374, %v502, 0.0
      %v567 = vsel %vm375, %v503, 0.0
      %v568 = vsel %vm376, %v504, 0.0
      %v569 = vsel %vm377, %v505, 0.0
      %v570 = vsel %vm378, %v506, 0.0
      %v571 = vsel %vm379, %v507, 0.0
      %v572 = vsel %vm380, %v508, 0.0
      %v573 = vsel %vm381, %v509, 0.0
      %v574 = vsel %vm382, %v510, 0.0
      %v575 = vsel %vm383, %v511, 0.0
      %v576 = vsel %vm384, %v512, 0.0
      %v577 = vsel %vm385, %v513, 0.0
      %v578 = vsel %vm386, %v514, 0.0
      %v579 = vsel %vm387, %v515, 0.0
      %v580 = vsel %vm388, %v516, 0.0
      %v581 = vsel %vm389, %v517, 0.0
      %v582 = vsel %vm390, %v518, 0.0
      %v583 = vsel %vm391, %v519, 0.0
      %v584 = vsel %vm392, %v520, 0.0
      %v585 = vsel %vm393, %v521, 0.0
      %v586 = vsel %vm394, %v522, 0.0
      %v587 = vsel %vm395, %v523, 0.0
      %v588 = vsel %vm396, %v524, 0.0
      %v589 = vsel %vm397, %v525, 0.0
      %v590 = vsel %vm398, %v526, 0.0
      %v591 = vsel %vm399, %v527, 0.0
      %v592 = vsel %vm400, %v528, 0.0
      %v593 = vsel %vm401, %v529, 0.0
      %v594 = vsel %vm402, %v530, 0.0
      %v595 = vsel %vm403, %v531, 0.0
      %v596 = vsel %vm404, %v532, 0.0
      %v597 = vsel %vm405, %v533, 0.0
      %v598 = vsel %vm406, %v534, 0.0
      %v599 = vsel %vm407, %v535, 0.0
      %v600 = vsel %vm408, %v536, 0.0
      %v601 = vsel %vm409, %v537, 0.0
      %v602 = vsel %vm410, %v538, 0.0
      %v603 = vsel %vm411, %v539, 0.0
      %v604 = vsel %vm412, %v540, 0.0
      %v605 = vsel %vm413, %v541, 0.0
      %v606 = vsel %vm414, %v542, 0.0
      %v607 = vsel %vm415, %v543, 0.0
      %v608 = vsel %vm416, %v544, 0.0
      %v609 = vsel %vm417, %v545, 0.0
      %v610 = vsel %vm418, %v546, 0.0
      %v611 = vsel %vm419, %v547, 0.0
      %v612 = vsel %vm420, %v548, 0.0
      %v613 = vsel %vm421, %v549, 0.0
      %v614 = vsel %vm422, %v550, 0.0
      %v615 = vsel %vm423, %v551, 0.0
      %v616 = vsel %vm424, %v552, 0.0
      %v617 = vsel %vm425, %v553, 0.0
      %v618 = vsel %vm426, %v554, 0.0
      %v619 = vsel %vm427, %v555, 0.0
      %v620 = vsel %vm428, %v556, 0.0
      %v621 = vsel %vm429, %v557, 0.0
      %v622 = vsel %vm430, %v558, 0.0
      %v623 = vsel %vm431, %v559, 0.0
      %v624 = vsel %vm432, %v560, 0.0
      %v625 = vsel %vm433, %v561, 0.0
      %v626 = vsel %vm434, %v562, 0.0
      %v627 = vsel %vm435, %v563, 0.0
      %v628 = vsel %vm436, %v564, 0.0
      %v629 = vsel %vm437, %v565, 0.0
      %vm630 = vcmask 64512
      %v631 = vsel %vm630, %v566, 0.0
      %632 = vadd.xlane.f32.xlu0 %v631
      %v633 = vpop.xlane.xlu0 %632
      %v634 = vsel %vm630, %v567, 0.0
      %635 = vadd.xlane.f32.xlu0 %v634
      %v636 = vpop.xlane.xlu0 %635
      %v637 = vsel %vm630, %v568, 0.0
      %638 = vadd.xlane.f32.xlu0 %v637
      %v639 = vpop.xlane.xlu0 %638
      %v640 = vsel %vm630, %v569, 0.0
      %641 = vadd.xlane.f32.xlu0 %v640
      %v642 = vpop.xlane.xlu0 %641
      %v643 = vsel %vm630, %v570, 0.0
      %644 = vadd.xlane.f32.xlu0 %v643
      %v645 = vpop.xlane.xlu0 %644
      %v646 = vsel %vm630, %v571, 0.0
      %647 = vadd.xlane.f32.xlu0 %v646
      %v648 = vpop.xlane.xlu0 %647
      %v649 = vsel %vm630, %v572, 0.0
      %650 = vadd.xlane.f32.xlu0 %v649
      %v651 = vpop.xlane.xlu0 %650
      %v652 = vsel %vm630, %v573, 0.0
      %653 = vadd.xlane.f32.xlu0 %v652
      %v654 = vpop.xlane.xlu0 %653
      %v655 = vsel %vm630, %v574, 0.0
      %656 = vadd.xlane.f32.xlu0 %v655
      %v657 = vpop.xlane.xlu0 %656
      %v658 = vsel %vm630, %v575, 0.0
      %659 = vadd.xlane.f32.xlu0 %v658
      %v660 = vpop.xlane.xlu0 %659
      %v661 = vsel %vm630, %v576, 0.0
      %662 = vadd.xlane.f32.xlu0 %v661
      %v663 = vpop.xlane.xlu0 %662
      %v664 = vsel %vm630, %v577, 0.0
      %665 = vadd.xlane.f32.xlu0 %v664
      %v666 = vpop.xlane.xlu0 %665
      %v667 = vsel %vm630, %v578, 0.0
      %668 = vadd.xlane.f32.xlu0 %v667
      %v669 = vpop.xlane.xlu0 %668
      %v670 = vsel %vm630, %v579, 0.0
      %671 = vadd.xlane.f32.xlu0 %v670
      %v672 = vpop.xlane.xlu0 %671
      %v673 = vsel %vm630, %v580, 0.0
      %674 = vadd.xlane.f32.xlu0 %v673
      %v675 = vpop.xlane.xlu0 %674
      %v676 = vsel %vm630, %v581, 0.0
      %677 = vadd.xlane.f32.xlu0 %v676
      %v678 = vpop.xlane.xlu0 %677
      %v679 = vsel %vm630, %v582, 0.0
      %680 = vadd.xlane.f32.xlu0 %v679
      %v681 = vpop.xlane.xlu0 %680
      %v682 = vsel %vm630, %v583, 0.0
      %683 = vadd.xlane.f32.xlu0 %v682
      %v684 = vpop.xlane.xlu0 %683
      %v685 = vsel %vm630, %v584, 0.0
      %686 = vadd.xlane.f32.xlu0 %v685
      %v687 = vpop.xlane.xlu0 %686
      %v688 = vsel %vm630, %v585, 0.0
      %689 = vadd.xlane.f32.xlu0 %v688
      %v690 = vpop.xlane.xlu0 %689
      %v691 = vsel %vm630, %v586, 0.0
      %692 = vadd.xlane.f32.xlu0 %v691
      %v693 = vpop.xlane.xlu0 %692
      %v694 = vsel %vm630, %v587, 0.0
      %695 = vadd.xlane.f32.xlu0 %v694
      %v696 = vpop.xlane.xlu0 %695
      %v697 = vsel %vm630, %v588, 0.0
      %698 = vadd.xlane.f32.xlu0 %v697
      %v699 = vpop.xlane.xlu0 %698
      %v700 = vsel %vm630, %v589, 0.0
      %701 = vadd.xlane.f32.xlu0 %v700
      %v702 = vpop.xlane.xlu0 %701
      %v703 = vsel %vm630, %v590, 0.0
      %704 = vadd.xlane.f32.xlu0 %v703
      %v705 = vpop.xlane.xlu0 %704
      %v706 = vsel %vm630, %v591, 0.0
      %707 = vadd.xlane.f32.xlu0 %v706
      %v708 = vpop.xlane.xlu0 %707
      %v709 = vsel %vm630, %v592, 0.0
      %710 = vadd.xlane.f32.xlu0 %v709
      %v711 = vpop.xlane.xlu0 %710
      %v712 = vsel %vm630, %v593, 0.0
      %713 = vadd.xlane.f32.xlu0 %v712
      %v714 = vpop.xlane.xlu0 %713
      %v715 = vsel %vm630, %v594, 0.0
      %716 = vadd.xlane.f32.xlu0 %v715
      %v717 = vpop.xlane.xlu0 %716
      %v718 = vsel %vm630, %v595, 0.0
      %719 = vadd.xlane.f32.xlu0 %v718
      %v720 = vpop.xlane.xlu0 %719
      %v721 = vsel %vm630, %v596, 0.0
      %722 = vadd.xlane.f32.xlu0 %v721
      %v723 = vpop.xlane.xlu0 %722
      %v724 = vsel %vm630, %v597, 0.0
      %725 = vadd.xlane.f32.xlu0 %v724
      %v726 = vpop.xlane.xlu0 %725
      %v727 = vsel %vm630, %v598, 0.0
      %728 = vadd.xlane.f32.xlu0 %v727
      %v729 = vpop.xlane.xlu0 %728
      %v730 = vsel %vm630, %v599, 0.0
      %731 = vadd.xlane.f32.xlu0 %v730
      %v732 = vpop.xlane.xlu0 %731
      %v733 = vsel %vm630, %v600, 0.0
      %734 = vadd.xlane.f32.xlu0 %v733
      %v735 = vpop.xlane.xlu0 %734
      %v736 = vsel %vm630, %v601, 0.0
      %737 = vadd.xlane.f32.xlu0 %v736
      %v738 = vpop.xlane.xlu0 %737
      %v739 = vsel %vm630, %v602, 0.0
      %740 = vadd.xlane.f32.xlu0 %v739
      %v741 = vpop.xlane.xlu0 %740
      %v742 = vsel %vm630, %v603, 0.0
      %743 = vadd.xlane.f32.xlu0 %v742
      %v744 = vpop.xlane.xlu0 %743
      %v745 = vsel %vm630, %v604, 0.0
      %746 = vadd.xlane.f32.xlu0 %v745
      %v747 = vpop.xlane.xlu0 %746
      %v748 = vsel %vm630, %v605, 0.0
      %749 = vadd.xlane.f32.xlu0 %v748
      %v750 = vpop.xlane.xlu0 %749
      %v751 = vsel %vm630, %v606, 0.0
      %752 = vadd.xlane.f32.xlu0 %v751
      %v753 = vpop.xlane.xlu0 %752
      %v754 = vsel %vm630, %v607, 0.0
      %755 = vadd.xlane.f32.xlu0 %v754
      %v756 = vpop.xlane.xlu0 %755
      %v757 = vsel %vm630, %v608, 0.0
      %758 = vadd.xlane.f32.xlu0 %v757
      %v759 = vpop.xlane.xlu0 %758
      %v760 = vsel %vm630, %v609, 0.0
      %761 = vadd.xlane.f32.xlu0 %v760
      %v762 = vpop.xlane.xlu0 %761
      %v763 = vsel %vm630, %v610, 0.0
      %764 = vadd.xlane.f32.xlu0 %v763
      %v765 = vpop.xlane.xlu0 %764
      %v766 = vsel %vm630, %v611, 0.0
      %767 = vadd.xlane.f32.xlu0 %v766
      %v768 = vpop.xlane.xlu0 %767
      %v769 = vsel %vm630, %v612, 0.0
      %770 = vadd.xlane.f32.xlu0 %v769
      %v771 = vpop.xlane.xlu0 %770
      %v772 = vsel %vm630, %v613, 0.0
      %773 = vadd.xlane.f32.xlu0 %v772
      %v774 = vpop.xlane.xlu0 %773
      %v775 = vsel %vm630, %v614, 0.0
      %776 = vadd.xlane.f32.xlu0 %v775
      %v777 = vpop.xlane.xlu0 %776
      %v778 = vsel %vm630, %v615, 0.0
      %779 = vadd.xlane.f32.xlu0 %v778
      %v780 = vpop.xlane.xlu0 %779
      %v781 = vsel %vm630, %v616, 0.0
      %782 = vadd.xlane.f32.xlu0 %v781
      %v783 = vpop.xlane.xlu0 %782
      %v784 = vsel %vm630, %v617, 0.0
      %785 = vadd.xlane.f32.xlu0 %v784
      %v786 = vpop.xlane.xlu0 %785
      %v787 = vsel %vm630, %v618, 0.0
      %788 = vadd.xlane.f32.xlu0 %v787
      %v789 = vpop.xlane.xlu0 %788
      %v790 = vsel %vm630, %v619, 0.0
      %791 = vadd.xlane.f32.xlu0 %v790
      %v792 = vpop.xlane.xlu0 %791
      %v793 = vsel %vm630, %v620, 0.0
      %794 = vadd.xlane.f32.xlu0 %v793
      %v795 = vpop.xlane.xlu0 %794
      %v796 = vsel %vm630, %v621, 0.0
      %797 = vadd.xlane.f32.xlu0 %v796
      %v798 = vpop.xlane.xlu0 %797
      %v799 = vsel %vm630, %v622, 0.0
      %800 = vadd.xlane.f32.xlu0 %v799
      %v801 = vpop.xlane.xlu0 %800
      %v802 = vsel %vm630, %v623, 0.0
      %803 = vadd.xlane.f32.xlu0 %v802
      %v804 = vpop.xlane.xlu0 %803
      %v805 = vsel %vm630, %v624, 0.0
      %806 = vadd.xlane.f32.xlu0 %v805
      %v807 = vpop.xlane.xlu0 %806
      %v808 = vsel %vm630, %v625, 0.0
      %809 = vadd.xlane.f32.xlu0 %v808
      %v810 = vpop.xlane.xlu0 %809
      %v811 = vsel %vm630, %v626, 0.0
      %812 = vadd.xlane.f32.xlu0 %v811
      %v813 = vpop.xlane.xlu0 %812
      %v814 = vsel %vm630, %v627, 0.0
      %815 = vadd.xlane.f32.xlu0 %v814
      %v816 = vpop.xlane.xlu0 %815
      %v817 = vsel %vm630, %v628, 0.0
      %818 = vadd.xlane.f32.xlu0 %v817
      %v819 = vpop.xlane.xlu0 %818
      %v820 = vsel %vm630, %v629, 0.0
      %821 = vadd.xlane.f32.xlu0 %v820
      %v822 = vpop.xlane.xlu0 %821
      %v823 = vmax.f32 %v633, 1e-10
      %v824 = vmax.f32 %v636, 1e-10
      %v825 = vmax.f32 %v639, 1e-10
      %v826 = vmax.f32 %v642, 1e-10
      %v827 = vmax.f32 %v645, 1e-10
      %v828 = vmax.f32 %v648, 1e-10
      %v829 = vmax.f32 %v651, 1e-10
      %v830 = vmax.f32 %v654, 1e-10
      %v831 = vmax.f32 %v657, 1e-10
      %v832 = vmax.f32 %v660, 1e-10
      %v833 = vmax.f32 %v663, 1e-10
      %v834 = vmax.f32 %v666, 1e-10
      %v835 = vmax.f32 %v669, 1e-10
      %v836 = vmax.f32 %v672, 1e-10
      %v837 = vmax.f32 %v675, 1e-10
      %v838 = vmax.f32 %v678, 1e-10
      %v839 = vmax.f32 %v681, 1e-10
      %v840 = vmax.f32 %v684, 1e-10
      %v841 = vmax.f32 %v687, 1e-10
      %v842 = vmax.f32 %v690, 1e-10
      %v843 = vmax.f32 %v693, 1e-10
      %v844 = vmax.f32 %v696, 1e-10
      %v845 = vmax.f32 %v699, 1e-10
      %v846 = vmax.f32 %v702, 1e-10
      %v847 = vmax.f32 %v705, 1e-10
      %v848 = vmax.f32 %v708, 1e-10
      %v849 = vmax.f32 %v711, 1e-10
      %v850 = vmax.f32 %v714, 1e-10
      %v851 = vmax.f32 %v717, 1e-10
      %v852 = vmax.f32 %v720, 1e-10
      %v853 = vmax.f32 %v723, 1e-10
      %v854 = vmax.f32 %v726, 1e-10
      %v855 = vmax.f32 %v729, 1e-10
      %v856 = vmax.f32 %v732, 1e-10
      %v857 = vmax.f32 %v735, 1e-10
      %v858 = vmax.f32 %v738, 1e-10
      %v859 = vmax.f32 %v741, 1e-10
      %v860 = vmax.f32 %v744, 1e-10
      %v861 = vmax.f32 %v747, 1e-10
      %v862 = vmax.f32 %v750, 1e-10
      %v863 = vmax.f32 %v753, 1e-10
      %v864 = vmax.f32 %v756, 1e-10
      %v865 = vmax.f32 %v759, 1e-10
      %v866 = vmax.f32 %v762, 1e-10
      %v867 = vmax.f32 %v765, 1e-10
      %v868 = vmax.f32 %v768, 1e-10
      %v869 = vmax.f32 %v771, 1e-10
      %v870 = vmax.f32 %v774, 1e-10
      %v871 = vmax.f32 %v777, 1e-10
      %v872 = vmax.f32 %v780, 1e-10
      %v873 = vmax.f32 %v783, 1e-10
      %v874 = vmax.f32 %v786, 1e-10
      %v875 = vmax.f32 %v789, 1e-10
      %v876 = vmax.f32 %v792, 1e-10
      %v877 = vmax.f32 %v795, 1e-10
      %v878 = vmax.f32 %v798, 1e-10
      %v879 = vmax.f32 %v801, 1e-10
      %v880 = vmax.f32 %v804, 1e-10
      %v881 = vmax.f32 %v807, 1e-10
      %v882 = vmax.f32 %v810, 1e-10
      %v883 = vmax.f32 %v813, 1e-10
      %v884 = vmax.f32 %v816, 1e-10
      %v885 = vmax.f32 %v819, 1e-10
      %v886 = vmax.f32 %v822, 1e-10
      %v887 = vrcp.pop %v823
      %v888 = vrcp.pop %v824
      %v889 = vrcp.pop %v825
      %v890 = vrcp.pop %v826
      %v891 = vrcp.pop %v827
      %v892 = vrcp.pop %v828
      %v893 = vrcp.pop %v829
      %v894 = vrcp.pop %v830
      %v895 = vrcp.pop %v831
      %v896 = vrcp.pop %v832
      %v897 = vrcp.pop %v833
      %v898 = vrcp.pop %v834
      %v899 = vrcp.pop %v835
      %v900 = vrcp.pop %v836
      %v901 = vrcp.pop %v837
      %v902 = vrcp.pop %v838
      %v903 = vrcp.pop %v839
      %v904 = vrcp.pop %v840
      %v905 = vrcp.pop %v841
      %v906 = vrcp.pop %v842
      %v907 = vrcp.pop %v843
      %v908 = vrcp.pop %v844
      %v909 = vrcp.pop %v845
      %v910 = vrcp.pop %v846
      %v911 = vrcp.pop %v847
      %v912 = vrcp.pop %v848
      %v913 = vrcp.pop %v849
      %v914 = vrcp.pop %v850
      %v915 = vrcp.pop %v851
      %v916 = vrcp.pop %v852
      %v917 = vrcp.pop %v853
      %v918 = vrcp.pop %v854
      %v919 = vrcp.pop %v855
      %v920 = vrcp.pop %v856
      %v921 = vrcp.pop %v857
      %v922 = vrcp.pop %v858
      %v923 = vrcp.pop %v859
      %v924 = vrcp.pop %v860
      %v925 = vrcp.pop %v861
      %v926 = vrcp.pop %v862
      %v927 = vrcp.pop %v863
      %v928 = vrcp.pop %v864
      %v929 = vrcp.pop %v865
      %v930 = vrcp.pop %v866
      %v931 = vrcp.pop %v867
      %v932 = vrcp.pop %v868
      %v933 = vrcp.pop %v869
      %v934 = vrcp.pop %v870
      %v935 = vrcp.pop %v871
      %v936 = vrcp.pop %v872
      %v937 = vrcp.pop %v873
      %v938 = vrcp.pop %v874
      %v939 = vrcp.pop %v875
      %v940 = vrcp.pop %v876
      %v941 = vrcp.pop %v877
      %v942 = vrcp.pop %v878
      %v943 = vrcp.pop %v879
      %v944 = vrcp.pop %v880
      %v945 = vrcp.pop %v881
      %v946 = vrcp.pop %v882
      %v947 = vrcp.pop %v883
      %v948 = vrcp.pop %v884
      %v949 = vrcp.pop %v885
      %v950 = vrcp.pop %v886
      %v951 = vmul.f32 %v823, %v887
      %v952 = vmul.f32 %v824, %v888
      %v953 = vmul.f32 %v825, %v889
      %v954 = vmul.f32 %v826, %v890
      %v955 = vmul.f32 %v827, %v891
      %v956 = vmul.f32 %v828, %v892
      %v957 = vmul.f32 %v829, %v893
      %v958 = vmul.f32 %v830, %v894
      %v959 = vmul.f32 %v831, %v895
      %v960 = vmul.f32 %v832, %v896
      %v961 = vmul.f32 %v833, %v897
      %v962 = vmul.f32 %v834, %v898
      %v963 = vmul.f32 %v835, %v899
      %v964 = vmul.f32 %v836, %v900
      %v965 = vmul.f32 %v837, %v901
      %v966 = vmul.f32 %v838, %v902
      %v967 = vmul.f32 %v839, %v903
      %v968 = vmul.f32 %v840, %v904
      %v969 = vmul.f32 %v841, %v905
      %v970 = vmul.f32 %v842, %v906
      %v971 = vmul.f32 %v843, %v907
      %v972 = vmul.f32 %v844, %v908
      %v973 = vmul.f32 %v845, %v909
      %v974 = vmul.f32 %v846, %v910
      %v975 = vmul.f32 %v847, %v911
      %v976 = vmul.f32 %v848, %v912
      %v977 = vmul.f32 %v849, %v913
      %v978 = vmul.f32 %v850, %v914
      %v979 = vmul.f32 %v851, %v915
      %v980 = vmul.f32 %v852, %v916
      %v981 = vmul.f32 %v853, %v917
      %v982 = vmul.f32 %v854, %v918
      %v983 = vmul.f32 %v855, %v919
      %v984 = vmul.f32 %v856, %v920
      %v985 = vmul.f32 %v857, %v921
      %v986 = vmul.f32 %v858, %v922
      %v987 = vmul.f32 %v859, %v923
      %v988 = vmul.f32 %v860, %v924
      %v989 = vmul.f32 %v861, %v925
      %v990 = vmul.f32 %v862, %v926
      %v991 = vmul.f32 %v863, %v927
      %v992 = vmul.f32 %v864, %v928
      %v993 = vmul.f32 %v865, %v929
      %v994 = vmul.f32 %v866, %v930
      %v995 = vmul.f32 %v867, %v931
      %v996 = vmul.f32 %v868, %v932
      %v997 = vmul.f32 %v869, %v933
      %v998 = vmul.f32 %v870, %v934
      %v999 = vmul.f32 %v871, %v935
      %v1000 = vmul.f32 %v872, %v936
      %v1001 = vmul.f32 %v873, %v937
      %v1002 = vmul.f32 %v874, %v938
      %v1003 = vmul.f32 %v875, %v939
      %v1004 = vmul.f32 %v876, %v940
      %v1005 = vmul.f32 %v877, %v941
      %v1006 = vmul.f32 %v878, %v942
      %v1007 = vmul.f32 %v879, %v943
      %v1008 = vmul.f32 %v880, %v944
      %v1009 = vmul.f32 %v881, %v945
      %v1010 = vmul.f32 %v882, %v946
      %v1011 = vmul.f32 %v883, %v947
      %v1012 = vmul.f32 %v884, %v948
      %v1013 = vmul.f32 %v885, %v949
      %v1014 = vmul.f32 %v886, %v950
      %v1015 = vsub.f32 2.0, %v951
      %v1016 = vsub.f32 2.0, %v952
      %v1017 = vsub.f32 2.0, %v953
      %v1018 = vsub.f32 2.0, %v954
      %v1019 = vsub.f32 2.0, %v955
      %v1020 = vsub.f32 2.0, %v956
      %v1021 = vsub.f32 2.0, %v957
      %v1022 = vsub.f32 2.0, %v958
      %v1023 = vsub.f32 2.0, %v959
      %v1024 = vsub.f32 2.0, %v960
      %v1025 = vsub.f32 2.0, %v961
      %v1026 = vsub.f32 2.0, %v962
      %v1027 = vsub.f32 2.0, %v963
      %v1028 = vsub.f32 2.0, %v964
      %v1029 = vsub.f32 2.0, %v965
      %v1030 = vsub.f32 2.0, %v966
      %v1031 = vsub.f32 2.0, %v967
      %v1032 = vsub.f32 2.0, %v968
      %v1033 = vsub.f32 2.0, %v969
      %v1034 = vsub.f32 2.0, %v970
      %v1035 = vsub.f32 2.0, %v971
      %v1036 = vsub.f32 2.0, %v972
      %v1037 = vsub.f32 2.0, %v973
      %v1038 = vsub.f32 2.0, %v974
      %v1039 = vsub.f32 2.0, %v975
      %v1040 = vsub.f32 2.0, %v976
      %v1041 = vsub.f32 2.0, %v977
      %v1042 = vsub.f32 2.0, %v978
      %v1043 = vsub.f32 2.0, %v979
      %v1044 = vsub.f32 2.0, %v980
      %v1045 = vsub.f32 2.0, %v981
      %v1046 = vsub.f32 2.0, %v982
      %v1047 = vsub.f32 2.0, %v983
      %v1048 = vsub.f32 2.0, %v984
      %v1049 = vsub.f32 2.0, %v985
      %v1050 = vsub.f32 2.0, %v986
      %v1051 = vsub.f32 2.0, %v987
      %v1052 = vsub.f32 2.0, %v988
      %v1053 = vsub.f32 2.0, %v989
      %v1054 = vsub.f32 2.0, %v990
      %v1055 = vsub.f32 2.0, %v991
      %v1056 = vsub.f32 2.0, %v992
      %v1057 = vsub.f32 2.0, %v993
      %v1058 = vsub.f32 2.0, %v994
      %v1059 = vsub.f32 2.0, %v995
      %v1060 = vsub.f32 2.0, %v996
      %v1061 = vsub.f32 2.0, %v997
      %v1062 = vsub.f32 2.0, %v998
      %v1063 = vsub.f32 2.0, %v999
      %v1064 = vsub.f32 2.0, %v1000
      %v1065 = vsub.f32 2.0, %v1001
      %v1066 = vsub.f32 2.0, %v1002
      %v1067 = vsub.f32 2.0, %v1003
      %v1068 = vsub.f32 2.0, %v1004
      %v1069 = vsub.f32 2.0, %v1005
      %v1070 = vsub.f32 2.0, %v1006
      %v1071 = vsub.f32 2.0, %v1007
      %v1072 = vsub.f32 2.0, %v1008
      %v1073 = vsub.f32 2.0, %v1009
      %v1074 = vsub.f32 2.0, %v1010
      %v1075 = vsub.f32 2.0, %v1011
      %v1076 = vsub.f32 2.0, %v1012
      %v1077 = vsub.f32 2.0, %v1013
      %v1078 = vsub.f32 2.0, %v1014
      %v1079 = vmul.f32 %v887, %v1015
      %v1080 = vmul.f32 %v888, %v1016
      %v1081 = vmul.f32 %v889, %v1017
      %v1082 = vmul.f32 %v890, %v1018
      %v1083 = vmul.f32 %v891, %v1019
      %v1084 = vmul.f32 %v892, %v1020
      %v1085 = vmul.f32 %v893, %v1021
      %v1086 = vmul.f32 %v894, %v1022
      %v1087 = vmul.f32 %v895, %v1023
      %v1088 = vmul.f32 %v896, %v1024
      %v1089 = vmul.f32 %v897, %v1025
      %v1090 = vmul.f32 %v898, %v1026
      %v1091 = vmul.f32 %v899, %v1027
      %v1092 = vmul.f32 %v900, %v1028
      %v1093 = vmul.f32 %v901, %v1029
      %v1094 = vmul.f32 %v902, %v1030
      %v1095 = vmul.f32 %v903, %v1031
      %v1096 = vmul.f32 %v904, %v1032
      %v1097 = vmul.f32 %v905, %v1033
      %v1098 = vmul.f32 %v906, %v1034
      %v1099 = vmul.f32 %v907, %v1035
      %v1100 = vmul.f32 %v908, %v1036
      %v1101 = vmul.f32 %v909, %v1037
      %v1102 = vmul.f32 %v910, %v1038
      %v1103 = vmul.f32 %v911, %v1039
      %v1104 = vmul.f32 %v912, %v1040
      %v1105 = vmul.f32 %v913, %v1041
      %v1106 = vmul.f32 %v914, %v1042
      %v1107 = vmul.f32 %v915, %v1043
      %v1108 = vmul.f32 %v916, %v1044
      %v1109 = vmul.f32 %v917, %v1045
      %v1110 = vmul.f32 %v918, %v1046
      %v1111 = vmul.f32 %v919, %v1047
      %v1112 = vmul.f32 %v920, %v1048
      %v1113 = vmul.f32 %v921, %v1049
      %v1114 = vmul.f32 %v922, %v1050
      %v1115 = vmul.f32 %v923, %v1051
      %v1116 = vmul.f32 %v924, %v1052
      %v1117 = vmul.f32 %v925, %v1053
      %v1118 = vmul.f32 %v926, %v1054
      %v1119 = vmul.f32 %v927, %v1055
      %v1120 = vmul.f32 %v928, %v1056
      %v1121 = vmul.f32 %v929, %v1057
      %v1122 = vmul.f32 %v930, %v1058
      %v1123 = vmul.f32 %v931, %v1059
      %v1124 = vmul.f32 %v932, %v1060
      %v1125 = vmul.f32 %v933, %v1061
      %v1126 = vmul.f32 %v934, %v1062
      %v1127 = vmul.f32 %v935, %v1063
      %v1128 = vmul.f32 %v936, %v1064
      %v1129 = vmul.f32 %v937, %v1065
      %v1130 = vmul.f32 %v938, %v1066
      %v1131 = vmul.f32 %v939, %v1067
      %v1132 = vmul.f32 %v940, %v1068
      %v1133 = vmul.f32 %v941, %v1069
      %v1134 = vmul.f32 %v942, %v1070
      %v1135 = vmul.f32 %v943, %v1071
      %v1136 = vmul.f32 %v944, %v1072
      %v1137 = vmul.f32 %v945, %v1073
      %v1138 = vmul.f32 %v946, %v1074
      %v1139 = vmul.f32 %v947, %v1075
      %v1140 = vmul.f32 %v948, %v1076
      %v1141 = vmul.f32 %v949, %v1077
      %v1142 = vmul.f32 %v950, %v1078
      %v1143 = vlaneseq
      %v1144 = vand.u32 %v1143, 127
      %v1145 = vld [vmem:[%s2] sm:$0xff]
      %v1146 = vld [vmem:[%s2 + $0x8] sm:$0xff]
      %v1147 = vld [vmem:[%s2 + $0x10] sm:$0xff]
      %v1148 = vld [vmem:[%s2 + $0x18] sm:$0xff]
      %v1149 = vld [vmem:[%s2 + $0x20] sm:$0xff]
      %v1150 = vld [vmem:[%s2 + $0x28] sm:$0xff]
      %v1151 = vld [vmem:[%s2 + $0x30] sm:$0xff]
      %v1152 = vld [vmem:[%s2 + $0x38] sm:$0xff]
      %v1153 = vld [vmem:[%s2 + $0x40] sm:$0xff]
      %v1154 = vld [vmem:[%s2 + $0x48] sm:$0xff]
      %v1155 = vld [vmem:[%s2 + $0x50] sm:$0xff]
      %v1156 = vld [vmem:[%s2 + $0x58] sm:$0xff]
      %v1157 = vld [vmem:[%s2 + $0x60] sm:$0xff]
      %v1158 = vld [vmem:[%s2 + $0x68] sm:$0xff]
      %v1159 = vld [vmem:[%s2 + $0x70] sm:$0xff]
      %v1160 = vld [vmem:[%s2 + $0x78] sm:$0xff]
      %1161 = vset.pattern.permute.xlu0 0
      %1162 = vperm.xlu0 %1161, %v246
      %v1163 = vpop.permute.xlu0 %1162
      %1164 = vset.pattern.permute.xlu0 0
      %1165 = vperm.xlu0 %1164, %v247
      %v1166 = vpop.permute.xlu0 %1165
      %1167 = vset.pattern.permute.xlu0 0
      %1168 = vperm.xlu0 %1167, %v248
      %v1169 = vpop.permute.xlu0 %1168
      %1170 = vset.pattern.permute.xlu0 0
      %1171 = vperm.xlu0 %1170, %v249
      %v1172 = vpop.permute.xlu0 %1171
      %1173 = vset.pattern.permute.xlu0 0
      %1174 = vperm.xlu0 %1173, %v250
      %v1175 = vpop.permute.xlu0 %1174
      %1176 = vset.pattern.permute.xlu0 0
      %1177 = vperm.xlu0 %1176, %v251
      %v1178 = vpop.permute.xlu0 %1177
      %1179 = vset.pattern.permute.xlu0 0
      %1180 = vperm.xlu0 %1179, %v252
      %v1181 = vpop.permute.xlu0 %1180
      %1182 = vset.pattern.permute.xlu0 0
      %1183 = vperm.xlu0 %1182, %v253
      %v1184 = vpop.permute.xlu0 %1183
      %1185 = vset.pattern.permute.xlu0 0
      %1186 = vperm.xlu0 %1185, %v254
      %v1187 = vpop.permute.xlu0 %1186
      %1188 = vset.pattern.permute.xlu0 0
      %1189 = vperm.xlu0 %1188, %v255
      %v1190 = vpop.permute.xlu0 %1189
      %1191 = vset.pattern.permute.xlu0 0
      %1192 = vperm.xlu0 %1191, %v256
      %v1193 = vpop.permute.xlu0 %1192
      %1194 = vset.pattern.permute.xlu0 0
      %1195 = vperm.xlu0 %1194, %v257
      %v1196 = vpop.permute.xlu0 %1195
      %1197 = vset.pattern.permute.xlu0 0
      %1198 = vperm.xlu0 %1197, %v258
      %v1199 = vpop.permute.xlu0 %1198
      %1200 = vset.pattern.permute.xlu0 0
      %1201 = vperm.xlu0 %1200, %v259
      %v1202 = vpop.permute.xlu0 %1201
      %1203 = vset.pattern.permute.xlu0 0
      %1204 = vperm.xlu0 %1203, %v260
      %v1205 = vpop.permute.xlu0 %1204
      %1206 = vset.pattern.permute.xlu0 0
      %1207 = vperm.xlu0 %1206, %v261
      %v1208 = vpop.permute.xlu0 %1207
      %1209 = vset.pattern.permute.xlu0 0
      %1210 = vperm.xlu0 %1209, %v262
      %v1211 = vpop.permute.xlu0 %1210
      %1212 = vset.pattern.permute.xlu0 0
      %1213 = vperm.xlu0 %1212, %v263
      %v1214 = vpop.permute.xlu0 %1213
      %1215 = vset.pattern.permute.xlu0 0
      %1216 = vperm.xlu0 %1215, %v264
      %v1217 = vpop.permute.xlu0 %1216
      %1218 = vset.pattern.permute.xlu0 0
      %1219 = vperm.xlu0 %1218, %v265
      %v1220 = vpop.permute.xlu0 %1219
      %1221 = vset.pattern.permute.xlu0 0
      %1222 = vperm.xlu0 %1221, %v266
      %v1223 = vpop.permute.xlu0 %1222
      %1224 = vset.pattern.permute.xlu0 0
      %1225 = vperm.xlu0 %1224, %v267
      %v1226 = vpop.permute.xlu0 %1225
      %1227 = vset.pattern.permute.xlu0 0
      %1228 = vperm.xlu0 %1227, %v268
      %v1229 = vpop.permute.xlu0 %1228
      %1230 = vset.pattern.permute.xlu0 0
      %1231 = vperm.xlu0 %1230, %v269
      %v1232 = vpop.permute.xlu0 %1231
      %1233 = vset.pattern.permute.xlu0 0
      %1234 = vperm.xlu0 %1233, %v270
      %v1235 = vpop.permute.xlu0 %1234
      %1236 = vset.pattern.permute.xlu0 0
      %1237 = vperm.xlu0 %1236, %v271
      %v1238 = vpop.permute.xlu0 %1237
      %1239 = vset.pattern.permute.xlu0 0
      %1240 = vperm.xlu0 %1239, %v272
      %v1241 = vpop.permute.xlu0 %1240
      %1242 = vset.pattern.permute.xlu0 0
      %1243 = vperm.xlu0 %1242, %v273
      %v1244 = vpop.permute.xlu0 %1243
      %1245 = vset.pattern.permute.xlu0 0
      %1246 = vperm.xlu0 %1245, %v274
      %v1247 = vpop.permute.xlu0 %1246
      %1248 = vset.pattern.permute.xlu0 0
      %1249 = vperm.xlu0 %1248, %v275
      %v1250 = vpop.permute.xlu0 %1249
      %1251 = vset.pattern.permute.xlu0 0
      %1252 = vperm.xlu0 %1251, %v276
      %v1253 = vpop.permute.xlu0 %1252
      %1254 = vset.pattern.permute.xlu0 0
      %1255 = vperm.xlu0 %1254, %v277
      %v1256 = vpop.permute.xlu0 %1255
      %1257 = vset.pattern.permute.xlu0 0
      %1258 = vperm.xlu0 %1257, %v278
      %v1259 = vpop.permute.xlu0 %1258
      %1260 = vset.pattern.permute.xlu0 0
      %1261 = vperm.xlu0 %1260, %v279
      %v1262 = vpop.permute.xlu0 %1261
      %1263 = vset.pattern.permute.xlu0 0
      %1264 = vperm.xlu0 %1263, %v280
      %v1265 = vpop.permute.xlu0 %1264
      %1266 = vset.pattern.permute.xlu0 0
      %1267 = vperm.xlu0 %1266, %v281
      %v1268 = vpop.permute.xlu0 %1267
      %1269 = vset.pattern.permute.xlu0 0
      %1270 = vperm.xlu0 %1269, %v282
      %v1271 = vpop.permute.xlu0 %1270
      %1272 = vset.pattern.permute.xlu0 0
      %1273 = vperm.xlu0 %1272, %v283
      %v1274 = vpop.permute.xlu0 %1273
      %1275 = vset.pattern.permute.xlu0 0
      %1276 = vperm.xlu0 %1275, %v284
      %v1277 = vpop.permute.xlu0 %1276
      %1278 = vset.pattern.permute.xlu0 0
      %1279 = vperm.xlu0 %1278, %v285
      %v1280 = vpop.permute.xlu0 %1279
      %1281 = vset.pattern.permute.xlu0 0
      %1282 = vperm.xlu0 %1281, %v286
      %v1283 = vpop.permute.xlu0 %1282
      %1284 = vset.pattern.permute.xlu0 0
      %1285 = vperm.xlu0 %1284, %v287
      %v1286 = vpop.permute.xlu0 %1285
      %1287 = vset.pattern.permute.xlu0 0
      %1288 = vperm.xlu0 %1287, %v288
      %v1289 = vpop.permute.xlu0 %1288
      %1290 = vset.pattern.permute.xlu0 0
      %1291 = vperm.xlu0 %1290, %v289
      %v1292 = vpop.permute.xlu0 %1291
      %1293 = vset.pattern.permute.xlu0 0
      %1294 = vperm.xlu0 %1293, %v290
      %v1295 = vpop.permute.xlu0 %1294
      %1296 = vset.pattern.permute.xlu0 0
      %1297 = vperm.xlu0 %1296, %v291
      %v1298 = vpop.permute.xlu0 %1297
      %1299 = vset.pattern.permute.xlu0 0
      %1300 = vperm.xlu0 %1299, %v292
      %v1301 = vpop.permute.xlu0 %1300
      %1302 = vset.pattern.permute.xlu0 0
      %1303 = vperm.xlu0 %1302, %v293
      %v1304 = vpop.permute.xlu0 %1303
      %1305 = vset.pattern.permute.xlu0 0
      %1306 = vperm.xlu0 %1305, %v294
      %v1307 = vpop.permute.xlu0 %1306
      %1308 = vset.pattern.permute.xlu0 0
      %1309 = vperm.xlu0 %1308, %v295
      %v1310 = vpop.permute.xlu0 %1309
      %1311 = vset.pattern.permute.xlu0 0
      %1312 = vperm.xlu0 %1311, %v296
      %v1313 = vpop.permute.xlu0 %1312
      %1314 = vset.pattern.permute.xlu0 0
      %1315 = vperm.xlu0 %1314, %v297
      %v1316 = vpop.permute.xlu0 %1315
      %1317 = vset.pattern.permute.xlu0 0
      %1318 = vperm.xlu0 %1317, %v298
      %v1319 = vpop.permute.xlu0 %1318
      %1320 = vset.pattern.permute.xlu0 0
      %1321 = vperm.xlu0 %1320, %v299
      %v1322 = vpop.permute.xlu0 %1321
      %1323 = vset.pattern.permute.xlu0 0
      %1324 = vperm.xlu0 %1323, %v300
      %v1325 = vpop.permute.xlu0 %1324
      %1326 = vset.pattern.permute.xlu0 0
      %1327 = vperm.xlu0 %1326, %v301
      %v1328 = vpop.permute.xlu0 %1327
      %1329 = vset.pattern.permute.xlu0 0
      %1330 = vperm.xlu0 %1329, %v302
      %v1331 = vpop.permute.xlu0 %1330
      %1332 = vset.pattern.permute.xlu0 0
      %1333 = vperm.xlu0 %1332, %v303
      %v1334 = vpop.permute.xlu0 %1333
      %1335 = vset.pattern.permute.xlu0 0
      %1336 = vperm.xlu0 %1335, %v304
      %v1337 = vpop.permute.xlu0 %1336
      %1338 = vset.pattern.permute.xlu0 0
      %1339 = vperm.xlu0 %1338, %v305
      %v1340 = vpop.permute.xlu0 %1339
      %1341 = vset.pattern.permute.xlu0 0
      %1342 = vperm.xlu0 %1341, %v306
      %v1343 = vpop.permute.xlu0 %1342
      %1344 = vset.pattern.permute.xlu0 0
      %1345 = vperm.xlu0 %1344, %v307
      %v1346 = vpop.permute.xlu0 %1345
      %1347 = vset.pattern.permute.xlu0 0
      %1348 = vperm.xlu0 %1347, %v308
      %v1349 = vpop.permute.xlu0 %1348
      %1350 = vset.pattern.permute.xlu0 0
      %1351 = vperm.xlu0 %1350, %v309
      %v1352 = vpop.permute.xlu0 %1351
      %vm1353 = vcmp.eq.s32.totalorder %v1163, %v1144
      %vm1354 = vcmp.eq.s32.totalorder %v1166, %v1144
      %vm1355 = vcmp.eq.s32.totalorder %v1169, %v1144
      %vm1356 = vcmp.eq.s32.totalorder %v1172, %v1144
      %vm1357 = vcmp.eq.s32.totalorder %v1175, %v1144
      %vm1358 = vcmp.eq.s32.totalorder %v1178, %v1144
      %vm1359 = vcmp.eq.s32.totalorder %v1181, %v1144
      %vm1360 = vcmp.eq.s32.totalorder %v1184, %v1144
      %vm1361 = vcmp.eq.s32.totalorder %v1187, %v1144
      %vm1362 = vcmp.eq.s32.totalorder %v1190, %v1144
      %vm1363 = vcmp.eq.s32.totalorder %v1193, %v1144
      %vm1364 = vcmp.eq.s32.totalorder %v1196, %v1144
      %vm1365 = vcmp.eq.s32.totalorder %v1199, %v1144
      %vm1366 = vcmp.eq.s32.totalorder %v1202, %v1144
      %vm1367 = vcmp.eq.s32.totalorder %v1205, %v1144
      %vm1368 = vcmp.eq.s32.totalorder %v1208, %v1144
      %vm1369 = vcmp.eq.s32.totalorder %v1211, %v1144
      %vm1370 = vcmp.eq.s32.totalorder %v1214, %v1144
      %vm1371 = vcmp.eq.s32.totalorder %v1217, %v1144
      %vm1372 = vcmp.eq.s32.totalorder %v1220, %v1144
      %vm1373 = vcmp.eq.s32.totalorder %v1223, %v1144
      %vm1374 = vcmp.eq.s32.totalorder %v1226, %v1144
      %vm1375 = vcmp.eq.s32.totalorder %v1229, %v1144
      %vm1376 = vcmp.eq.s32.totalorder %v1232, %v1144
      %vm1377 = vcmp.eq.s32.totalorder %v1235, %v1144
      %vm1378 = vcmp.eq.s32.totalorder %v1238, %v1144
      %vm1379 = vcmp.eq.s32.totalorder %v1241, %v1144
      %vm1380 = vcmp.eq.s32.totalorder %v1244, %v1144
      %vm1381 = vcmp.eq.s32.totalorder %v1247, %v1144
      %vm1382 = vcmp.eq.s32.totalorder %v1250, %v1144
      %vm1383 = vcmp.eq.s32.totalorder %v1253, %v1144
      %vm1384 = vcmp.eq.s32.totalorder %v1256, %v1144
      %vm1385 = vcmp.eq.s32.totalorder %v1259, %v1144
      %vm1386 = vcmp.eq.s32.totalorder %v1262, %v1144
      %vm1387 = vcmp.eq.s32.totalorder %v1265, %v1144
      %vm1388 = vcmp.eq.s32.totalorder %v1268, %v1144
      %vm1389 = vcmp.eq.s32.totalorder %v1271, %v1144
      %vm1390 = vcmp.eq.s32.totalorder %v1274, %v1144
      %vm1391 = vcmp.eq.s32.totalorder %v1277, %v1144
      %vm1392 = vcmp.eq.s32.totalorder %v1280, %v1144
      %vm1393 = vcmp.eq.s32.totalorder %v1283, %v1144
      %vm1394 = vcmp.eq.s32.totalorder %v1286, %v1144
      %vm1395 = vcmp.eq.s32.totalorder %v1289, %v1144
      %vm1396 = vcmp.eq.s32.totalorder %v1292, %v1144
      %vm1397 = vcmp.eq.s32.totalorder %v1295, %v1144
      %vm1398 = vcmp.eq.s32.totalorder %v1298, %v1144
      %vm1399 = vcmp.eq.s32.totalorder %v1301, %v1144
      %vm1400 = vcmp.eq.s32.totalorder %v1304, %v1144
      %vm1401 = vcmp.eq.s32.totalorder %v1307, %v1144
      %vm1402 = vcmp.eq.s32.totalorder %v1310, %v1144
      %vm1403 = vcmp.eq.s32.totalorder %v1313, %v1144
      %vm1404 = vcmp.eq.s32.totalorder %v1316, %v1144
      %vm1405 = vcmp.eq.s32.totalorder %v1319, %v1144
      %vm1406 = vcmp.eq.s32.totalorder %v1322, %v1144
      %vm1407 = vcmp.eq.s32.totalorder %v1325, %v1144
      %vm1408 = vcmp.eq.s32.totalorder %v1328, %v1144
      %vm1409 = vcmp.eq.s32.totalorder %v1331, %v1144
      %vm1410 = vcmp.eq.s32.totalorder %v1334, %v1144
      %vm1411 = vcmp.eq.s32.totalorder %v1337, %v1144
      %vm1412 = vcmp.eq.s32.totalorder %v1340, %v1144
      %vm1413 = vcmp.eq.s32.totalorder %v1343, %v1144
      %vm1414 = vcmp.eq.s32.totalorder %v1346, %v1144
      %vm1415 = vcmp.eq.s32.totalorder %v1349, %v1144
      %vm1416 = vcmp.eq.s32.totalorder %v1352, %v1144
      %1418 = vset.pattern.permute.xlu0 0
      %1419 = vperm.xlu0 %1418, %v566
      %v1420 = vpop.permute.xlu0 %1419
      %1423 = vset.pattern.permute.xlu0 0
      %1424 = vperm.xlu0 %1423, %v567
      %v1425 = vpop.permute.xlu0 %1424
      %1428 = vset.pattern.permute.xlu0 0
      %1429 = vperm.xlu0 %1428, %v568
      %v1430 = vpop.permute.xlu0 %1429
      %1433 = vset.pattern.permute.xlu0 0
      %1434 = vperm.xlu0 %1433, %v569
      %v1435 = vpop.permute.xlu0 %1434
      %1438 = vset.pattern.permute.xlu0 0
      %1439 = vperm.xlu0 %1438, %v570
      %v1440 = vpop.permute.xlu0 %1439
      %1443 = vset.pattern.permute.xlu0 0
      %1444 = vperm.xlu0 %1443, %v571
      %v1445 = vpop.permute.xlu0 %1444
      %1448 = vset.pattern.permute.xlu0 0
      %1449 = vperm.xlu0 %1448, %v572
      %v1450 = vpop.permute.xlu0 %1449
      %1453 = vset.pattern.permute.xlu0 0
      %1454 = vperm.xlu0 %1453, %v573
      %v1455 = vpop.permute.xlu0 %1454
      %1458 = vset.pattern.permute.xlu0 0
      %1459 = vperm.xlu0 %1458, %v574
      %v1460 = vpop.permute.xlu0 %1459
      %1463 = vset.pattern.permute.xlu0 0
      %1464 = vperm.xlu0 %1463, %v575
      %v1465 = vpop.permute.xlu0 %1464
      %1468 = vset.pattern.permute.xlu0 0
      %1469 = vperm.xlu0 %1468, %v576
      %v1470 = vpop.permute.xlu0 %1469
      %1473 = vset.pattern.permute.xlu0 0
      %1474 = vperm.xlu0 %1473, %v577
      %v1475 = vpop.permute.xlu0 %1474
      %1478 = vset.pattern.permute.xlu0 0
      %1479 = vperm.xlu0 %1478, %v578
      %v1480 = vpop.permute.xlu0 %1479
      %1483 = vset.pattern.permute.xlu0 0
      %1484 = vperm.xlu0 %1483, %v579
      %v1485 = vpop.permute.xlu0 %1484
      %1488 = vset.pattern.permute.xlu0 0
      %1489 = vperm.xlu0 %1488, %v580
      %v1490 = vpop.permute.xlu0 %1489
      %1493 = vset.pattern.permute.xlu0 0
      %1494 = vperm.xlu0 %1493, %v581
      %v1495 = vpop.permute.xlu0 %1494
      %1498 = vset.pattern.permute.xlu0 0
      %1499 = vperm.xlu0 %1498, %v582
      %v1500 = vpop.permute.xlu0 %1499
      %1503 = vset.pattern.permute.xlu0 0
      %1504 = vperm.xlu0 %1503, %v583
      %v1505 = vpop.permute.xlu0 %1504
      %1508 = vset.pattern.permute.xlu0 0
      %1509 = vperm.xlu0 %1508, %v584
      %v1510 = vpop.permute.xlu0 %1509
      %1513 = vset.pattern.permute.xlu0 0
      %1514 = vperm.xlu0 %1513, %v585
      %v1515 = vpop.permute.xlu0 %1514
      %1518 = vset.pattern.permute.xlu0 0
      %1519 = vperm.xlu0 %1518, %v586
      %v1520 = vpop.permute.xlu0 %1519
      %1523 = vset.pattern.permute.xlu0 0
      %1524 = vperm.xlu0 %1523, %v587
      %v1525 = vpop.permute.xlu0 %1524
      %1528 = vset.pattern.permute.xlu0 0
      %1529 = vperm.xlu0 %1528, %v588
      %v1530 = vpop.permute.xlu0 %1529
      %1533 = vset.pattern.permute.xlu0 0
      %1534 = vperm.xlu0 %1533, %v589
      %v1535 = vpop.permute.xlu0 %1534
      %1538 = vset.pattern.permute.xlu0 0
      %1539 = vperm.xlu0 %1538, %v590
      %v1540 = vpop.permute.xlu0 %1539
      %1543 = vset.pattern.permute.xlu0 0
      %1544 = vperm.xlu0 %1543, %v591
      %v1545 = vpop.permute.xlu0 %1544
      %1548 = vset.pattern.permute.xlu0 0
      %1549 = vperm.xlu0 %1548, %v592
      %v1550 = vpop.permute.xlu0 %1549
      %1553 = vset.pattern.permute.xlu0 0
      %1554 = vperm.xlu0 %1553, %v593
      %v1555 = vpop.permute.xlu0 %1554
      %1558 = vset.pattern.permute.xlu0 0
      %1559 = vperm.xlu0 %1558, %v594
      %v1560 = vpop.permute.xlu0 %1559
      %1563 = vset.pattern.permute.xlu0 0
      %1564 = vperm.xlu0 %1563, %v595
      %v1565 = vpop.permute.xlu0 %1564
      %1568 = vset.pattern.permute.xlu0 0
      %1569 = vperm.xlu0 %1568, %v596
      %v1570 = vpop.permute.xlu0 %1569
      %1573 = vset.pattern.permute.xlu0 0
      %1574 = vperm.xlu0 %1573, %v597
      %v1575 = vpop.permute.xlu0 %1574
      %1578 = vset.pattern.permute.xlu0 0
      %1579 = vperm.xlu0 %1578, %v598
      %v1580 = vpop.permute.xlu0 %1579
      %1583 = vset.pattern.permute.xlu0 0
      %1584 = vperm.xlu0 %1583, %v599
      %v1585 = vpop.permute.xlu0 %1584
      %1588 = vset.pattern.permute.xlu0 0
      %1589 = vperm.xlu0 %1588, %v600
      %v1590 = vpop.permute.xlu0 %1589
      %1593 = vset.pattern.permute.xlu0 0
      %1594 = vperm.xlu0 %1593, %v601
      %v1595 = vpop.permute.xlu0 %1594
      %1598 = vset.pattern.permute.xlu0 0
      %1599 = vperm.xlu0 %1598, %v602
      %v1600 = vpop.permute.xlu0 %1599
      %1603 = vset.pattern.permute.xlu0 0
      %1604 = vperm.xlu0 %1603, %v603
      %v1605 = vpop.permute.xlu0 %1604
      %1608 = vset.pattern.permute.xlu0 0
      %1609 = vperm.xlu0 %1608, %v604
      %v1610 = vpop.permute.xlu0 %1609
      %1613 = vset.pattern.permute.xlu0 0
      %1614 = vperm.xlu0 %1613, %v605
      %v1615 = vpop.permute.xlu0 %1614
      %1618 = vset.pattern.permute.xlu0 0
      %1619 = vperm.xlu0 %1618, %v606
      %v1620 = vpop.permute.xlu0 %1619
      %1623 = vset.pattern.permute.xlu0 0
      %1624 = vperm.xlu0 %1623, %v607
      %v1625 = vpop.permute.xlu0 %1624
      %1628 = vset.pattern.permute.xlu0 0
      %1629 = vperm.xlu0 %1628, %v608
      %v1630 = vpop.permute.xlu0 %1629
      %1633 = vset.pattern.permute.xlu0 0
      %1634 = vperm.xlu0 %1633, %v609
      %v1635 = vpop.permute.xlu0 %1634
      %1638 = vset.pattern.permute.xlu0 0
      %1639 = vperm.xlu0 %1638, %v610
      %v1640 = vpop.permute.xlu0 %1639
      %1643 = vset.pattern.permute.xlu0 0
      %1644 = vperm.xlu0 %1643, %v611
      %v1645 = vpop.permute.xlu0 %1644
      %1648 = vset.pattern.permute.xlu0 0
      %1649 = vperm.xlu0 %1648, %v612
      %v1650 = vpop.permute.xlu0 %1649
      %1653 = vset.pattern.permute.xlu0 0
      %1654 = vperm.xlu0 %1653, %v613
      %v1655 = vpop.permute.xlu0 %1654
      %1658 = vset.pattern.permute.xlu0 0
      %1659 = vperm.xlu0 %1658, %v614
      %v1660 = vpop.permute.xlu0 %1659
      %1663 = vset.pattern.permute.xlu0 0
      %1664 = vperm.xlu0 %1663, %v615
      %v1665 = vpop.permute.xlu0 %1664
      %1668 = vset.pattern.permute.xlu0 0
      %1669 = vperm.xlu0 %1668, %v616
      %v1670 = vpop.permute.xlu0 %1669
      %1673 = vset.pattern.permute.xlu0 0
      %1674 = vperm.xlu0 %1673, %v617
      %v1675 = vpop.permute.xlu0 %1674
      %1678 = vset.pattern.permute.xlu0 0
      %1679 = vperm.xlu0 %1678, %v618
      %v1680 = vpop.permute.xlu0 %1679
      %1683 = vset.pattern.permute.xlu0 0
      %1684 = vperm.xlu0 %1683, %v619
      %v1685 = vpop.permute.xlu0 %1684
      %1688 = vset.pattern.permute.xlu0 0
      %1689 = vperm.xlu0 %1688, %v620
      %v1690 = vpop.permute.xlu0 %1689
      %1693 = vset.pattern.permute.xlu0 0
      %1694 = vperm.xlu0 %1693, %v621
      %v1695 = vpop.permute.xlu0 %1694
      %1698 = vset.pattern.permute.xlu0 0
      %1699 = vperm.xlu0 %1698, %v622
      %v1700 = vpop.permute.xlu0 %1699
      %1703 = vset.pattern.permute.xlu0 0
      %1704 = vperm.xlu0 %1703, %v623
      %v1705 = vpop.permute.xlu0 %1704
      %1708 = vset.pattern.permute.xlu0 0
      %1709 = vperm.xlu0 %1708, %v624
      %v1710 = vpop.permute.xlu0 %1709
      %1713 = vset.pattern.permute.xlu0 0
      %1714 = vperm.xlu0 %1713, %v625
      %v1715 = vpop.permute.xlu0 %1714
      %1718 = vset.pattern.permute.xlu0 0
      %1719 = vperm.xlu0 %1718, %v626
      %v1720 = vpop.permute.xlu0 %1719
      %1723 = vset.pattern.permute.xlu0 0
      %1724 = vperm.xlu0 %1723, %v627
      %v1725 = vpop.permute.xlu0 %1724
      %1728 = vset.pattern.permute.xlu0 0
      %1729 = vperm.xlu0 %1728, %v628
      %v1730 = vpop.permute.xlu0 %1729
      %1733 = vset.pattern.permute.xlu0 0
      %1734 = vperm.xlu0 %1733, %v629
      %v1735 = vpop.permute.xlu0 %1734
      %v1737 = vsel %vm1353, %v1420, 0.0
      %v1738 = vsel %vm1354, %v1425, 0.0
      %v1739 = vsel %vm1355, %v1430, 0.0
      %v1740 = vsel %vm1356, %v1435, 0.0
      %v1741 = vsel %vm1357, %v1440, 0.0
      %v1742 = vsel %vm1358, %v1445, 0.0
      %v1743 = vsel %vm1359, %v1450, 0.0
      %v1744 = vsel %vm1360, %v1455, 0.0
      %v1745 = vsel %vm1361, %v1460, 0.0
      %v1746 = vsel %vm1362, %v1465, 0.0
      %v1747 = vsel %vm1363, %v1470, 0.0
      %v1748 = vsel %vm1364, %v1475, 0.0
      %v1749 = vsel %vm1365, %v1480, 0.0
      %v1750 = vsel %vm1366, %v1485, 0.0
      %v1751 = vsel %vm1367, %v1490, 0.0
      %v1752 = vsel %vm1368, %v1495, 0.0
      %v1753 = vsel %vm1369, %v1500, 0.0
      %v1754 = vsel %vm1370, %v1505, 0.0
      %v1755 = vsel %vm1371, %v1510, 0.0
      %v1756 = vsel %vm1372, %v1515, 0.0
      %v1757 = vsel %vm1373, %v1520, 0.0
      %v1758 = vsel %vm1374, %v1525, 0.0
      %v1759 = vsel %vm1375, %v1530, 0.0
      %v1760 = vsel %vm1376, %v1535, 0.0
      %v1761 = vsel %vm1377, %v1540, 0.0
      %v1762 = vsel %vm1378, %v1545, 0.0
      %v1763 = vsel %vm1379, %v1550, 0.0
      %v1764 = vsel %vm1380, %v1555, 0.0
      %v1765 = vsel %vm1381, %v1560, 0.0
      %v1766 = vsel %vm1382, %v1565, 0.0
      %v1767 = vsel %vm1383, %v1570, 0.0
      %v1768 = vsel %vm1384, %v1575, 0.0
      %v1769 = vsel %vm1385, %v1580, 0.0
      %v1770 = vsel %vm1386, %v1585, 0.0
      %v1771 = vsel %vm1387, %v1590, 0.0
      %v1772 = vsel %vm1388, %v1595, 0.0
      %v1773 = vsel %vm1389, %v1600, 0.0
      %v1774 = vsel %vm1390, %v1605, 0.0
      %v1775 = vsel %vm1391, %v1610, 0.0
      %v1776 = vsel %vm1392, %v1615, 0.0
      %v1777 = vsel %vm1393, %v1620, 0.0
      %v1778 = vsel %vm1394, %v1625, 0.0
      %v1779 = vsel %vm1395, %v1630, 0.0
      %v1780 = vsel %vm1396, %v1635, 0.0
      %v1781 = vsel %vm1397, %v1640, 0.0
      %v1782 = vsel %vm1398, %v1645, 0.0
      %v1783 = vsel %vm1399, %v1650, 0.0
      %v1784 = vsel %vm1400, %v1655, 0.0
      %v1785 = vsel %vm1401, %v1660, 0.0
      %v1786 = vsel %vm1402, %v1665, 0.0
      %v1787 = vsel %vm1403, %v1670, 0.0
      %v1788 = vsel %vm1404, %v1675, 0.0
      %v1789 = vsel %vm1405, %v1680, 0.0
      %v1790 = vsel %vm1406, %v1685, 0.0
      %v1791 = vsel %vm1407, %v1690, 0.0
      %v1792 = vsel %vm1408, %v1695, 0.0
      %v1793 = vsel %vm1409, %v1700, 0.0
      %v1794 = vsel %vm1410, %v1705, 0.0
      %v1795 = vsel %vm1411, %v1710, 0.0
      %v1796 = vsel %vm1412, %v1715, 0.0
      %v1797 = vsel %vm1413, %v1720, 0.0
      %v1798 = vsel %vm1414, %v1725, 0.0
      %v1799 = vsel %vm1415, %v1730, 0.0
      %v1800 = vsel %vm1416, %v1735, 0.0
      %1801 = vset.pattern.permute.xlu0 1
      %1802 = vperm.xlu0 %1801, %v246
      %v1803 = vpop.permute.xlu0 %1802
      %1804 = vset.pattern.permute.xlu0 1
      %1805 = vperm.xlu0 %1804, %v247
      %v1806 = vpop.permute.xlu0 %1805
      %1807 = vset.pattern.permute.xlu0 1
      %1808 = vperm.xlu0 %1807, %v248
      %v1809 = vpop.permute.xlu0 %1808
      %1810 = vset.pattern.permute.xlu0 1
      %1811 = vperm.xlu0 %1810, %v249
      %v1812 = vpop.permute.xlu0 %1811
      %1813 = vset.pattern.permute.xlu0 1
      %1814 = vperm.xlu0 %1813, %v250
      %v1815 = vpop.permute.xlu0 %1814
      %1816 = vset.pattern.permute.xlu0 1
      %1817 = vperm.xlu0 %1816, %v251
      %v1818 = vpop.permute.xlu0 %1817
      %1819 = vset.pattern.permute.xlu0 1
      %1820 = vperm.xlu0 %1819, %v252
      %v1821 = vpop.permute.xlu0 %1820
      %1822 = vset.pattern.permute.xlu0 1
      %1823 = vperm.xlu0 %1822, %v253
      %v1824 = vpop.permute.xlu0 %1823
      %1825 = vset.pattern.permute.xlu0 1
      %1826 = vperm.xlu0 %1825, %v254
      %v1827 = vpop.permute.xlu0 %1826
      %1828 = vset.pattern.permute.xlu0 1
      %1829 = vperm.xlu0 %1828, %v255
      %v1830 = vpop.permute.xlu0 %1829
      %1831 = vset.pattern.permute.xlu0 1
      %1832 = vperm.xlu0 %1831, %v256
      %v1833 = vpop.permute.xlu0 %1832
      %1834 = vset.pattern.permute.xlu0 1
      %1835 = vperm.xlu0 %1834, %v257
      %v1836 = vpop.permute.xlu0 %1835
      %1837 = vset.pattern.permute.xlu0 1
      %1838 = vperm.xlu0 %1837, %v258
      %v1839 = vpop.permute.xlu0 %1838
      %1840 = vset.pattern.permute.xlu0 1
      %1841 = vperm.xlu0 %1840, %v259
      %v1842 = vpop.permute.xlu0 %1841
      %1843 = vset.pattern.permute.xlu0 1
      %1844 = vperm.xlu0 %1843, %v260
      %v1845 = vpop.permute.xlu0 %1844
      %1846 = vset.pattern.permute.xlu0 1
      %1847 = vperm.xlu0 %1846, %v261
      %v1848 = vpop.permute.xlu0 %1847
      %1849 = vset.pattern.permute.xlu0 1
      %1850 = vperm.xlu0 %1849, %v262
      %v1851 = vpop.permute.xlu0 %1850
      %1852 = vset.pattern.permute.xlu0 1
      %1853 = vperm.xlu0 %1852, %v263
      %v1854 = vpop.permute.xlu0 %1853
      %1855 = vset.pattern.permute.xlu0 1
      %1856 = vperm.xlu0 %1855, %v264
      %v1857 = vpop.permute.xlu0 %1856
      %1858 = vset.pattern.permute.xlu0 1
      %1859 = vperm.xlu0 %1858, %v265
      %v1860 = vpop.permute.xlu0 %1859
      %1861 = vset.pattern.permute.xlu0 1
      %1862 = vperm.xlu0 %1861, %v266
      %v1863 = vpop.permute.xlu0 %1862
      %1864 = vset.pattern.permute.xlu0 1
      %1865 = vperm.xlu0 %1864, %v267
      %v1866 = vpop.permute.xlu0 %1865
      %1867 = vset.pattern.permute.xlu0 1
      %1868 = vperm.xlu0 %1867, %v268
      %v1869 = vpop.permute.xlu0 %1868
      %1870 = vset.pattern.permute.xlu0 1
      %1871 = vperm.xlu0 %1870, %v269
      %v1872 = vpop.permute.xlu0 %1871
      %1873 = vset.pattern.permute.xlu0 1
      %1874 = vperm.xlu0 %1873, %v270
      %v1875 = vpop.permute.xlu0 %1874
      %1876 = vset.pattern.permute.xlu0 1
      %1877 = vperm.xlu0 %1876, %v271
      %v1878 = vpop.permute.xlu0 %1877
      %1879 = vset.pattern.permute.xlu0 1
      %1880 = vperm.xlu0 %1879, %v272
      %v1881 = vpop.permute.xlu0 %1880
      %1882 = vset.pattern.permute.xlu0 1
      %1883 = vperm.xlu0 %1882, %v273
      %v1884 = vpop.permute.xlu0 %1883
      %1885 = vset.pattern.permute.xlu0 1
      %1886 = vperm.xlu0 %1885, %v274
      %v1887 = vpop.permute.xlu0 %1886
      %1888 = vset.pattern.permute.xlu0 1
      %1889 = vperm.xlu0 %1888, %v275
      %v1890 = vpop.permute.xlu0 %1889
      %1891 = vset.pattern.permute.xlu0 1
      %1892 = vperm.xlu0 %1891, %v276
      %v1893 = vpop.permute.xlu0 %1892
      %1894 = vset.pattern.permute.xlu0 1
      %1895 = vperm.xlu0 %1894, %v277
      %v1896 = vpop.permute.xlu0 %1895
      %1897 = vset.pattern.permute.xlu0 1
      %1898 = vperm.xlu0 %1897, %v278
      %v1899 = vpop.permute.xlu0 %1898
      %1900 = vset.pattern.permute.xlu0 1
      %1901 = vperm.xlu0 %1900, %v279
      %v1902 = vpop.permute.xlu0 %1901
      %1903 = vset.pattern.permute.xlu0 1
      %1904 = vperm.xlu0 %1903, %v280
      %v1905 = vpop.permute.xlu0 %1904
      %1906 = vset.pattern.permute.xlu0 1
      %1907 = vperm.xlu0 %1906, %v281
      %v1908 = vpop.permute.xlu0 %1907
      %1909 = vset.pattern.permute.xlu0 1
      %1910 = vperm.xlu0 %1909, %v282
      %v1911 = vpop.permute.xlu0 %1910
      %1912 = vset.pattern.permute.xlu0 1
      %1913 = vperm.xlu0 %1912, %v283
      %v1914 = vpop.permute.xlu0 %1913
      %1915 = vset.pattern.permute.xlu0 1
      %1916 = vperm.xlu0 %1915, %v284
      %v1917 = vpop.permute.xlu0 %1916
      %1918 = vset.pattern.permute.xlu0 1
      %1919 = vperm.xlu0 %1918, %v285
      %v1920 = vpop.permute.xlu0 %1919
      %1921 = vset.pattern.permute.xlu0 1
      %1922 = vperm.xlu0 %1921, %v286
      %v1923 = vpop.permute.xlu0 %1922
      %1924 = vset.pattern.permute.xlu0 1
      %1925 = vperm.xlu0 %1924, %v287
      %v1926 = vpop.permute.xlu0 %1925
      %1927 = vset.pattern.permute.xlu0 1
      %1928 = vperm.xlu0 %1927, %v288
      %v1929 = vpop.permute.xlu0 %1928
      %1930 = vset.pattern.permute.xlu0 1
      %1931 = vperm.xlu0 %1930, %v289
      %v1932 = vpop.permute.xlu0 %1931
      %1933 = vset.pattern.permute.xlu0 1
      %1934 = vperm.xlu0 %1933, %v290
      %v1935 = vpop.permute.xlu0 %1934
      %1936 = vset.pattern.permute.xlu0 1
      %1937 = vperm.xlu0 %1936, %v291
      %v1938 = vpop.permute.xlu0 %1937
      %1939 = vset.pattern.permute.xlu0 1
      %1940 = vperm.xlu0 %1939, %v292
      %v1941 = vpop.permute.xlu0 %1940
      %1942 = vset.pattern.permute.xlu0 1
      %1943 = vperm.xlu0 %1942, %v293
      %v1944 = vpop.permute.xlu0 %1943
      %1945 = vset.pattern.permute.xlu0 1
      %1946 = vperm.xlu0 %1945, %v294
      %v1947 = vpop.permute.xlu0 %1946
      %1948 = vset.pattern.permute.xlu0 1
      %1949 = vperm.xlu0 %1948, %v295
      %v1950 = vpop.permute.xlu0 %1949
      %1951 = vset.pattern.permute.xlu0 1
      %1952 = vperm.xlu0 %1951, %v296
      %v1953 = vpop.permute.xlu0 %1952
      %1954 = vset.pattern.permute.xlu0 1
      %1955 = vperm.xlu0 %1954, %v297
      %v1956 = vpop.permute.xlu0 %1955
      %1957 = vset.pattern.permute.xlu0 1
      %1958 = vperm.xlu0 %1957, %v298
      %v1959 = vpop.permute.xlu0 %1958
      %1960 = vset.pattern.permute.xlu0 1
      %1961 = vperm.xlu0 %1960, %v299
      %v1962 = vpop.permute.xlu0 %1961
      %1963 = vset.pattern.permute.xlu0 1
      %1964 = vperm.xlu0 %1963, %v300
      %v1965 = vpop.permute.xlu0 %1964
      %1966 = vset.pattern.permute.xlu0 1
      %1967 = vperm.xlu0 %1966, %v301
      %v1968 = vpop.permute.xlu0 %1967
      %1969 = vset.pattern.permute.xlu0 1
      %1970 = vperm.xlu0 %1969, %v302
      %v1971 = vpop.permute.xlu0 %1970
      %1972 = vset.pattern.permute.xlu0 1
      %1973 = vperm.xlu0 %1972, %v303
      %v1974 = vpop.permute.xlu0 %1973
      %1975 = vset.pattern.permute.xlu0 1
      %1976 = vperm.xlu0 %1975, %v304
      %v1977 = vpop.permute.xlu0 %1976
      %1978 = vset.pattern.permute.xlu0 1
      %1979 = vperm.xlu0 %1978, %v305
      %v1980 = vpop.permute.xlu0 %1979
      %1981 = vset.pattern.permute.xlu0 1
      %1982 = vperm.xlu0 %1981, %v306
      %v1983 = vpop.permute.xlu0 %1982
      %1984 = vset.pattern.permute.xlu0 1
      %1985 = vperm.xlu0 %1984, %v307
      %v1986 = vpop.permute.xlu0 %1985
      %1987 = vset.pattern.permute.xlu0 1
      %1988 = vperm.xlu0 %1987, %v308
      %v1989 = vpop.permute.xlu0 %1988
      %1990 = vset.pattern.permute.xlu0 1
      %1991 = vperm.xlu0 %1990, %v309
      %v1992 = vpop.permute.xlu0 %1991
      %vm1993 = vcmp.eq.s32.totalorder %v1803, %v1144
      %vm1994 = vcmp.eq.s32.totalorder %v1806, %v1144
      %vm1995 = vcmp.eq.s32.totalorder %v1809, %v1144
      %vm1996 = vcmp.eq.s32.totalorder %v1812, %v1144
      %vm1997 = vcmp.eq.s32.totalorder %v1815, %v1144
      %vm1998 = vcmp.eq.s32.totalorder %v1818, %v1144
      %vm1999 = vcmp.eq.s32.totalorder %v1821, %v1144
      %vm2000 = vcmp.eq.s32.totalorder %v1824, %v1144
      %vm2001 = vcmp.eq.s32.totalorder %v1827, %v1144
      %vm2002 = vcmp.eq.s32.totalorder %v1830, %v1144
      %vm2003 = vcmp.eq.s32.totalorder %v1833, %v1144
      %vm2004 = vcmp.eq.s32.totalorder %v1836, %v1144
      %vm2005 = vcmp.eq.s32.totalorder %v1839, %v1144
      %vm2006 = vcmp.eq.s32.totalorder %v1842, %v1144
      %vm2007 = vcmp.eq.s32.totalorder %v1845, %v1144
      %vm2008 = vcmp.eq.s32.totalorder %v1848, %v1144
      %vm2009 = vcmp.eq.s32.totalorder %v1851, %v1144
      %vm2010 = vcmp.eq.s32.totalorder %v1854, %v1144
      %vm2011 = vcmp.eq.s32.totalorder %v1857, %v1144
      %vm2012 = vcmp.eq.s32.totalorder %v1860, %v1144
      %vm2013 = vcmp.eq.s32.totalorder %v1863, %v1144
      %vm2014 = vcmp.eq.s32.totalorder %v1866, %v1144
      %vm2015 = vcmp.eq.s32.totalorder %v1869, %v1144
      %vm2016 = vcmp.eq.s32.totalorder %v1872, %v1144
      %vm2017 = vcmp.eq.s32.totalorder %v1875, %v1144
      %vm2018 = vcmp.eq.s32.totalorder %v1878, %v1144
      %vm2019 = vcmp.eq.s32.totalorder %v1881, %v1144
      %vm2020 = vcmp.eq.s32.totalorder %v1884, %v1144
      %vm2021 = vcmp.eq.s32.totalorder %v1887, %v1144
      %vm2022 = vcmp.eq.s32.totalorder %v1890, %v1144
      %vm2023 = vcmp.eq.s32.totalorder %v1893, %v1144
      %vm2024 = vcmp.eq.s32.totalorder %v1896, %v1144
      %vm2025 = vcmp.eq.s32.totalorder %v1899, %v1144
      %vm2026 = vcmp.eq.s32.totalorder %v1902, %v1144
      %vm2027 = vcmp.eq.s32.totalorder %v1905, %v1144
      %vm2028 = vcmp.eq.s32.totalorder %v1908, %v1144
      %vm2029 = vcmp.eq.s32.totalorder %v1911, %v1144
      %vm2030 = vcmp.eq.s32.totalorder %v1914, %v1144
      %vm2031 = vcmp.eq.s32.totalorder %v1917, %v1144
      %vm2032 = vcmp.eq.s32.totalorder %v1920, %v1144
      %vm2033 = vcmp.eq.s32.totalorder %v1923, %v1144
      %vm2034 = vcmp.eq.s32.totalorder %v1926, %v1144
      %vm2035 = vcmp.eq.s32.totalorder %v1929, %v1144
      %vm2036 = vcmp.eq.s32.totalorder %v1932, %v1144
      %vm2037 = vcmp.eq.s32.totalorder %v1935, %v1144
      %vm2038 = vcmp.eq.s32.totalorder %v1938, %v1144
      %vm2039 = vcmp.eq.s32.totalorder %v1941, %v1144
      %vm2040 = vcmp.eq.s32.totalorder %v1944, %v1144
      %vm2041 = vcmp.eq.s32.totalorder %v1947, %v1144
      %vm2042 = vcmp.eq.s32.totalorder %v1950, %v1144
      %vm2043 = vcmp.eq.s32.totalorder %v1953, %v1144
      %vm2044 = vcmp.eq.s32.totalorder %v1956, %v1144
      %vm2045 = vcmp.eq.s32.totalorder %v1959, %v1144
      %vm2046 = vcmp.eq.s32.totalorder %v1962, %v1144
      %vm2047 = vcmp.eq.s32.totalorder %v1965, %v1144
      %vm2048 = vcmp.eq.s32.totalorder %v1968, %v1144
      %vm2049 = vcmp.eq.s32.totalorder %v1971, %v1144
      %vm2050 = vcmp.eq.s32.totalorder %v1974, %v1144
      %vm2051 = vcmp.eq.s32.totalorder %v1977, %v1144
      %vm2052 = vcmp.eq.s32.totalorder %v1980, %v1144
      %vm2053 = vcmp.eq.s32.totalorder %v1983, %v1144
      %vm2054 = vcmp.eq.s32.totalorder %v1986, %v1144
      %vm2055 = vcmp.eq.s32.totalorder %v1989, %v1144
      %vm2056 = vcmp.eq.s32.totalorder %v1992, %v1144
      %2057 = vset.pattern.permute.xlu0 1
      %2058 = vperm.xlu0 %2057, %v566
      %v2059 = vpop.permute.xlu0 %2058
      %2061 = vset.pattern.permute.xlu0 1
      %2062 = vperm.xlu0 %2061, %v567
      %v2063 = vpop.permute.xlu0 %2062
      %2065 = vset.pattern.permute.xlu0 1
      %2066 = vperm.xlu0 %2065, %v568
      %v2067 = vpop.permute.xlu0 %2066
      %2069 = vset.pattern.permute.xlu0 1
      %2070 = vperm.xlu0 %2069, %v569
      %v2071 = vpop.permute.xlu0 %2070
      %2073 = vset.pattern.permute.xlu0 1
      %2074 = vperm.xlu0 %2073, %v570
      %v2075 = vpop.permute.xlu0 %2074
      %2077 = vset.pattern.permute.xlu0 1
      %2078 = vperm.xlu0 %2077, %v571
      %v2079 = vpop.permute.xlu0 %2078
      %2081 = vset.pattern.permute.xlu0 1
      %2082 = vperm.xlu0 %2081, %v572
      %v2083 = vpop.permute.xlu0 %2082
      %2085 = vset.pattern.permute.xlu0 1
      %2086 = vperm.xlu0 %2085, %v573
      %v2087 = vpop.permute.xlu0 %2086
      %2089 = vset.pattern.permute.xlu0 1
      %2090 = vperm.xlu0 %2089, %v574
      %v2091 = vpop.permute.xlu0 %2090
      %2093 = vset.pattern.permute.xlu0 1
      %2094 = vperm.xlu0 %2093, %v575
      %v2095 = vpop.permute.xlu0 %2094
      %2097 = vset.pattern.permute.xlu0 1
      %2098 = vperm.xlu0 %2097, %v576
      %v2099 = vpop.permute.xlu0 %2098
      %2101 = vset.pattern.permute.xlu0 1
      %2102 = vperm.xlu0 %2101, %v577
      %v2103 = vpop.permute.xlu0 %2102
      %2105 = vset.pattern.permute.xlu0 1
      %2106 = vperm.xlu0 %2105, %v578
      %v2107 = vpop.permute.xlu0 %2106
      %2109 = vset.pattern.permute.xlu0 1
      %2110 = vperm.xlu0 %2109, %v579
      %v2111 = vpop.permute.xlu0 %2110
      %2113 = vset.pattern.permute.xlu0 1
      %2114 = vperm.xlu0 %2113, %v580
      %v2115 = vpop.permute.xlu0 %2114
      %2117 = vset.pattern.permute.xlu0 1
      %2118 = vperm.xlu0 %2117, %v581
      %v2119 = vpop.permute.xlu0 %2118
      %2121 = vset.pattern.permute.xlu0 1
      %2122 = vperm.xlu0 %2121, %v582
      %v2123 = vpop.permute.xlu0 %2122
      %2125 = vset.pattern.permute.xlu0 1
      %2126 = vperm.xlu0 %2125, %v583
      %v2127 = vpop.permute.xlu0 %2126
      %2129 = vset.pattern.permute.xlu0 1
      %2130 = vperm.xlu0 %2129, %v584
      %v2131 = vpop.permute.xlu0 %2130
      %2133 = vset.pattern.permute.xlu0 1
      %2134 = vperm.xlu0 %2133, %v585
      %v2135 = vpop.permute.xlu0 %2134
      %2137 = vset.pattern.permute.xlu0 1
      %2138 = vperm.xlu0 %2137, %v586
      %v2139 = vpop.permute.xlu0 %2138
      %2141 = vset.pattern.permute.xlu0 1
      %2142 = vperm.xlu0 %2141, %v587
      %v2143 = vpop.permute.xlu0 %2142
      %2145 = vset.pattern.permute.xlu0 1
      %2146 = vperm.xlu0 %2145, %v588
      %v2147 = vpop.permute.xlu0 %2146
      %2149 = vset.pattern.permute.xlu0 1
      %2150 = vperm.xlu0 %2149, %v589
      %v2151 = vpop.permute.xlu0 %2150
      %2153 = vset.pattern.permute.xlu0 1
      %2154 = vperm.xlu0 %2153, %v590
      %v2155 = vpop.permute.xlu0 %2154
      %2157 = vset.pattern.permute.xlu0 1
      %2158 = vperm.xlu0 %2157, %v591
      %v2159 = vpop.permute.xlu0 %2158
      %2161 = vset.pattern.permute.xlu0 1
      %2162 = vperm.xlu0 %2161, %v592
      %v2163 = vpop.permute.xlu0 %2162
      %2165 = vset.pattern.permute.xlu0 1
      %2166 = vperm.xlu0 %2165, %v593
      %v2167 = vpop.permute.xlu0 %2166
      %2169 = vset.pattern.permute.xlu0 1
      %2170 = vperm.xlu0 %2169, %v594
      %v2171 = vpop.permute.xlu0 %2170
      %2173 = vset.pattern.permute.xlu0 1
      %2174 = vperm.xlu0 %2173, %v595
      %v2175 = vpop.permute.xlu0 %2174
      %2177 = vset.pattern.permute.xlu0 1
      %2178 = vperm.xlu0 %2177, %v596
      %v2179 = vpop.permute.xlu0 %2178
      %2181 = vset.pattern.permute.xlu0 1
      %2182 = vperm.xlu0 %2181, %v597
      %v2183 = vpop.permute.xlu0 %2182
      %2185 = vset.pattern.permute.xlu0 1
      %2186 = vperm.xlu0 %2185, %v598
      %v2187 = vpop.permute.xlu0 %2186
      %2189 = vset.pattern.permute.xlu0 1
      %2190 = vperm.xlu0 %2189, %v599
      %v2191 = vpop.permute.xlu0 %2190
      %2193 = vset.pattern.permute.xlu0 1
      %2194 = vperm.xlu0 %2193, %v600
      %v2195 = vpop.permute.xlu0 %2194
      %2197 = vset.pattern.permute.xlu0 1
      %2198 = vperm.xlu0 %2197, %v601
      %v2199 = vpop.permute.xlu0 %2198
      %2201 = vset.pattern.permute.xlu0 1
      %2202 = vperm.xlu0 %2201, %v602
      %v2203 = vpop.permute.xlu0 %2202
      %2205 = vset.pattern.permute.xlu0 1
      %2206 = vperm.xlu0 %2205, %v603
      %v2207 = vpop.permute.xlu0 %2206
      %2209 = vset.pattern.permute.xlu0 1
      %2210 = vperm.xlu0 %2209, %v604
      %v2211 = vpop.permute.xlu0 %2210
      %2213 = vset.pattern.permute.xlu0 1
      %2214 = vperm.xlu0 %2213, %v605
      %v2215 = vpop.permute.xlu0 %2214
      %2217 = vset.pattern.permute.xlu0 1
      %2218 = vperm.xlu0 %2217, %v606
      %v2219 = vpop.permute.xlu0 %2218
      %2221 = vset.pattern.permute.xlu0 1
      %2222 = vperm.xlu0 %2221, %v607
      %v2223 = vpop.permute.xlu0 %2222
      %2225 = vset.pattern.permute.xlu0 1
      %2226 = vperm.xlu0 %2225, %v608
      %v2227 = vpop.permute.xlu0 %2226
      %2229 = vset.pattern.permute.xlu0 1
      %2230 = vperm.xlu0 %2229, %v609
      %v2231 = vpop.permute.xlu0 %2230
      %2233 = vset.pattern.permute.xlu0 1
      %2234 = vperm.xlu0 %2233, %v610
      %v2235 = vpop.permute.xlu0 %2234
      %2237 = vset.pattern.permute.xlu0 1
      %2238 = vperm.xlu0 %2237, %v611
      %v2239 = vpop.permute.xlu0 %2238
      %2241 = vset.pattern.permute.xlu0 1
      %2242 = vperm.xlu0 %2241, %v612
      %v2243 = vpop.permute.xlu0 %2242
      %2245 = vset.pattern.permute.xlu0 1
      %2246 = vperm.xlu0 %2245, %v613
      %v2247 = vpop.permute.xlu0 %2246
      %2249 = vset.pattern.permute.xlu0 1
      %2250 = vperm.xlu0 %2249, %v614
      %v2251 = vpop.permute.xlu0 %2250
      %2253 = vset.pattern.permute.xlu0 1
      %2254 = vperm.xlu0 %2253, %v615
      %v2255 = vpop.permute.xlu0 %2254
      %2257 = vset.pattern.permute.xlu0 1
      %2258 = vperm.xlu0 %2257, %v616
      %v2259 = vpop.permute.xlu0 %2258
      %2261 = vset.pattern.permute.xlu0 1
      %2262 = vperm.xlu0 %2261, %v617
      %v2263 = vpop.permute.xlu0 %2262
      %2265 = vset.pattern.permute.xlu0 1
      %2266 = vperm.xlu0 %2265, %v618
      %v2267 = vpop.permute.xlu0 %2266
      %2269 = vset.pattern.permute.xlu0 1
      %2270 = vperm.xlu0 %2269, %v619
      %v2271 = vpop.permute.xlu0 %2270
      %2273 = vset.pattern.permute.xlu0 1
      %2274 = vperm.xlu0 %2273, %v620
      %v2275 = vpop.permute.xlu0 %2274
      %2277 = vset.pattern.permute.xlu0 1
      %2278 = vperm.xlu0 %2277, %v621
      %v2279 = vpop.permute.xlu0 %2278
      %2281 = vset.pattern.permute.xlu0 1
      %2282 = vperm.xlu0 %2281, %v622
      %v2283 = vpop.permute.xlu0 %2282
      %2285 = vset.pattern.permute.xlu0 1
      %2286 = vperm.xlu0 %2285, %v623
      %v2287 = vpop.permute.xlu0 %2286
      %2289 = vset.pattern.permute.xlu0 1
      %2290 = vperm.xlu0 %2289, %v624
      %v2291 = vpop.permute.xlu0 %2290
      %2293 = vset.pattern.permute.xlu0 1
      %2294 = vperm.xlu0 %2293, %v625
      %v2295 = vpop.permute.xlu0 %2294
      %2297 = vset.pattern.permute.xlu0 1
      %2298 = vperm.xlu0 %2297, %v626
      %v2299 = vpop.permute.xlu0 %2298
      %2301 = vset.pattern.permute.xlu0 1
      %2302 = vperm.xlu0 %2301, %v627
      %v2303 = vpop.permute.xlu0 %2302
      %2305 = vset.pattern.permute.xlu0 1
      %2306 = vperm.xlu0 %2305, %v628
      %v2307 = vpop.permute.xlu0 %2306
      %2309 = vset.pattern.permute.xlu0 1
      %2310 = vperm.xlu0 %2309, %v629
      %v2311 = vpop.permute.xlu0 %2310
      %v2313 = vsel %vm1993, %v2059, 0.0
      %v2314 = vsel %vm1994, %v2063, 0.0
      %v2315 = vsel %vm1995, %v2067, 0.0
      %v2316 = vsel %vm1996, %v2071, 0.0
      %v2317 = vsel %vm1997, %v2075, 0.0
      %v2318 = vsel %vm1998, %v2079, 0.0
      %v2319 = vsel %vm1999, %v2083, 0.0
      %v2320 = vsel %vm2000, %v2087, 0.0
      %v2321 = vsel %vm2001, %v2091, 0.0
      %v2322 = vsel %vm2002, %v2095, 0.0
      %v2323 = vsel %vm2003, %v2099, 0.0
      %v2324 = vsel %vm2004, %v2103, 0.0
      %v2325 = vsel %vm2005, %v2107, 0.0
      %v2326 = vsel %vm2006, %v2111, 0.0
      %v2327 = vsel %vm2007, %v2115, 0.0
      %v2328 = vsel %vm2008, %v2119, 0.0
      %v2329 = vsel %vm2009, %v2123, 0.0
      %v2330 = vsel %vm2010, %v2127, 0.0
      %v2331 = vsel %vm2011, %v2131, 0.0
      %v2332 = vsel %vm2012, %v2135, 0.0
      %v2333 = vsel %vm2013, %v2139, 0.0
      %v2334 = vsel %vm2014, %v2143, 0.0
      %v2335 = vsel %vm2015, %v2147, 0.0
      %v2336 = vsel %vm2016, %v2151, 0.0
      %v2337 = vsel %vm2017, %v2155, 0.0
      %v2338 = vsel %vm2018, %v2159, 0.0
      %v2339 = vsel %vm2019, %v2163, 0.0
      %v2340 = vsel %vm2020, %v2167, 0.0
      %v2341 = vsel %vm2021, %v2171, 0.0
      %v2342 = vsel %vm2022, %v2175, 0.0
      %v2343 = vsel %vm2023, %v2179, 0.0
      %v2344 = vsel %vm2024, %v2183, 0.0
      %v2345 = vsel %vm2025, %v2187, 0.0
      %v2346 = vsel %vm2026, %v2191, 0.0
      %v2347 = vsel %vm2027, %v2195, 0.0
      %v2348 = vsel %vm2028, %v2199, 0.0
      %v2349 = vsel %vm2029, %v2203, 0.0
      %v2350 = vsel %vm2030, %v2207, 0.0
      %v2351 = vsel %vm2031, %v2211, 0.0
      %v2352 = vsel %vm2032, %v2215, 0.0
      %v2353 = vsel %vm2033, %v2219, 0.0
      %v2354 = vsel %vm2034, %v2223, 0.0
      %v2355 = vsel %vm2035, %v2227, 0.0
      %v2356 = vsel %vm2036, %v2231, 0.0
      %v2357 = vsel %vm2037, %v2235, 0.0
      %v2358 = vsel %vm2038, %v2239, 0.0
      %v2359 = vsel %vm2039, %v2243, 0.0
      %v2360 = vsel %vm2040, %v2247, 0.0
      %v2361 = vsel %vm2041, %v2251, 0.0
      %v2362 = vsel %vm2042, %v2255, 0.0
      %v2363 = vsel %vm2043, %v2259, 0.0
      %v2364 = vsel %vm2044, %v2263, 0.0
      %v2365 = vsel %vm2045, %v2267, 0.0
      %v2366 = vsel %vm2046, %v2271, 0.0
      %v2367 = vsel %vm2047, %v2275, 0.0
      %v2368 = vsel %vm2048, %v2279, 0.0
      %v2369 = vsel %vm2049, %v2283, 0.0
      %v2370 = vsel %vm2050, %v2287, 0.0
      %v2371 = vsel %vm2051, %v2291, 0.0
      %v2372 = vsel %vm2052, %v2295, 0.0
      %v2373 = vsel %vm2053, %v2299, 0.0
      %v2374 = vsel %vm2054, %v2303, 0.0
      %v2375 = vsel %vm2055, %v2307, 0.0
      %v2376 = vsel %vm2056, %v2311, 0.0
      %2377 = vmatprep.subr.mxu0 0.0
      %2378 = vmatpush1.msra.mxu0 %v1145
      %2379 = vmatprep.subr.mxu0 0.0
      %2380 = vmatpush1.msra.mxu0 %v1146
      %2381 = vmatprep.subr.mxu0 0.0
      %2382 = vmatpush1.msra.mxu0 %v1147
      %2383 = vmatprep.subr.mxu0 0.0
      %2384 = vmatpush1.msra.mxu0 %v1148
      %2385 = vmatprep.subr.mxu0 0.0
      %2386 = vmatpush1.msra.mxu0 %v1149
      %2387 = vmatprep.subr.mxu0 0.0
      %2388 = vmatpush1.msra.mxu0 %v1150
      %2389 = vmatprep.subr.mxu0 0.0
      %2390 = vmatpush1.msra.mxu0 %v1151
      %2391 = vmatprep.subr.mxu0 0.0
      %2392 = vmatpush1.msra.mxu0 %v1152
      %2393 = vmatprep.subr.mxu0 0.0
      %2394 = vmatpush1.msra.mxu0 %v1153
      %2395 = vmatprep.subr.mxu0 0.0
      %2396 = vmatpush1.msra.mxu0 %v1154
      %2397 = vmatprep.subr.mxu0 0.0
      %2398 = vmatpush1.msra.mxu0 %v1155
      %2399 = vmatprep.subr.mxu0 0.0
      %2400 = vmatpush1.msra.mxu0 %v1156
      %2401 = vmatprep.subr.mxu0 0.0
      %2402 = vmatpush1.msra.mxu0 %v1157
      %2403 = vmatprep.subr.mxu0 0.0
      %2404 = vmatpush1.msra.mxu0 %v1158
      %2405 = vmatprep.subr.mxu0 0.0
      %2406 = vmatpush1.msra.mxu0 %v1159
      %2407 = vmatprep.subr.mxu0 0.0
      %2408 = vmatpush1.msra.mxu0 %v1160
      %2409 = vmatprep.subr.mxu0 0.0
      %2410 = vmatpush1.msra.mxu0 0.0
      %2411 = vmatprep.subr.mxu0 0.0
      %2412 = vmatpush1.msra.mxu0 0.0
      %2413 = vmatprep.subr.mxu0 0.0
      %2414 = vmatpush1.msra.mxu0 0.0
      %2415 = vmatprep.subr.mxu0 0.0
      %2416 = vmatpush1.msra.mxu0 0.0
      %2417 = vmatprep.subr.mxu0 0.0
      %2418 = vmatpush1.msra.mxu0 0.0
      %2419 = vmatprep.subr.mxu0 0.0
      %2420 = vmatpush1.msra.mxu0 0.0
      %2421 = vmatprep.subr.mxu0 0.0
      %2422 = vmatpush1.msra.mxu0 0.0
      %2423 = vmatprep.subr.mxu0 0.0
      %2424 = vmatpush1.msra.mxu0 0.0
      %2425 = vmatprep.subr.mxu0 0.0
      %2426 = vmatpush1.msra.mxu0 0.0
      %2427 = vmatprep.subr.mxu0 0.0
      %2428 = vmatpush1.msra.mxu0 0.0
      %2429 = vmatprep.subr.mxu0 0.0
      %2430 = vmatpush1.msra.mxu0 0.0
      %2431 = vmatprep.subr.mxu0 0.0
      %2432 = vmatpush1.msra.mxu0 0.0
      %2433 = vmatprep.subr.mxu0 0.0
      %2434 = vmatpush1.msra.mxu0 0.0
      %2435 = vmatprep.subr.mxu0 0.0
      %2436 = vmatpush1.msra.mxu0 0.0
      %2437 = vmatprep.subr.mxu0 0.0
      %2438 = vmatpush1.msra.mxu0 0.0
      %2439 = vmatprep.subr.mxu0 0.0
      %2440 = vmatpush1.msra.mxu0 0.0
      %2441 = vmatprep.mubr.f32.mxu0 0.0
      %2442 = vmatmul.mubr.f32.gmra.mrb[0].mxu0 %v2313
      %v2443 = vpop.f32.mrb[0].mxu0
      %v2444 = vadd.f32 0.0, %v2443
      %v2445 = vpop.f32.mrb[0].mxu0
      %2446 = vmatprep.mubr.f32.mxu0 0.0
      %2447 = vmatmul.mubr.f32.gmra.mrb[0].mxu0 %v2314
      %v2448 = vpop.f32.mrb[0].mxu0
      %v2449 = vadd.f32 0.0, %v2448
      %v2450 = vpop.f32.mrb[0].mxu0
      %2451 = vmatprep.mubr.f32.mxu0 0.0
      %2452 = vmatmul.mubr.f32.gmra.mrb[0].mxu0 %v2315
      %v2453 = vpop.f32.mrb[0].mxu0
      %v2454 = vadd.f32 0.0, %v2453
      %v2455 = vpop.f32.mrb[0].mxu0
      %2456 = vmatprep.mubr.f32.mxu0 0.0
      %2457 = vmatmul.mubr.f32.gmra.mrb[0].mxu0 %v2316
      %v2458 = vpop.f32.mrb[0].mxu0
      %v2459 = vadd.f32 0.0, %v2458
      %v2460 = vpop.f32.mrb[0].mxu0
      %2461 = vmatprep.mubr.f32.mxu0 0.0
      %2462 = vmatmul.mubr.f32.gmra.mrb[0].mxu0 %v2317
      %v2463 = vpop.f32.mrb[0].mxu0
      %v2464 = vadd.f32 0.0, %v2463
      %v2465 = vpop.f32.mrb[0].mxu0
      %2466 = vmatprep.mubr.f32.mxu0 0.0
      %2467 = vmatmul.mubr.f32.gmra.mrb[0].mxu0 %v2318
      %v2468 = vpop.f32.mrb[0].mxu0
      %v2469 = vadd.f32 0.0, %v2468
      %v2470 = vpop.f32.mrb[0].mxu0
      %2471 = vmatprep.mubr.f32.mxu0 0.0
      %2472 = vmatmul.mubr.f32.gmra.mrb[0].mxu0 %v2319
      %v2473 = vpop.f32.mrb[0].mxu0
      %v2474 = vadd.f32 0.0, %v2473
      %v2475 = vpop.f32.mrb[0].mxu0
      %2476 = vmatprep.mubr.f32.mxu0 0.0
      %2477 = vmatmul.mubr.f32.gmra.mrb[0].mxu0 %v2320
      %v2478 = vpop.f32.mrb[0].mxu0
      %v2479 = vadd.f32 0.0, %v2478
      %v2480 = vpop.f32.mrb[0].mxu0
      %2481 = vmatprep.mubr.f32.mxu0 0.0
      %2482 = vmatmul.mubr.f32.gmra.mrb[0].mxu0 %v2321
      %v2483 = vpop.f32.mrb[0].mxu0
      %v2484 = vadd.f32 0.0, %v2483
      %v2485 = vpop.f32.mrb[0].mxu0
      %2486 = vmatprep.mubr.f32.mxu0 0.0
      %2487 = vmatmul.mubr.f32.gmra.mrb[0].mxu0 %v2322
      %v2488 = vpop.f32.mrb[0].mxu0
      %v2489 = vadd.f32 0.0, %v2488
      %v2490 = vpop.f32.mrb[0].mxu0
      %2491 = vmatprep.mubr.f32.mxu0 0.0
      %2492 = vmatmul.mubr.f32.gmra.mrb[0].mxu0 %v2323
      %v2493 = vpop.f32.mrb[0].mxu0
      %v2494 = vadd.f32 0.0, %v2493
      %v2495 = vpop.f32.mrb[0].mxu0
      %2496 = vmatprep.mubr.f32.mxu0 0.0
      %2497 = vmatmul.mubr.f32.gmra.mrb[0].mxu0 %v2324
      %v2498 = vpop.f32.mrb[0].mxu0
      %v2499 = vadd.f32 0.0, %v2498
      %v2500 = vpop.f32.mrb[0].mxu0
      %2501 = vmatprep.mubr.f32.mxu0 0.0
      %2502 = vmatmul.mubr.f32.gmra.mrb[0].mxu0 %v2325
      %v2503 = vpop.f32.mrb[0].mxu0
      %v2504 = vadd.f32 0.0, %v2503
      %v2505 = vpop.f32.mrb[0].mxu0
      %2506 = vmatprep.mubr.f32.mxu0 0.0
      %2507 = vmatmul.mubr.f32.gmra.mrb[0].mxu0 %v2326
      %v2508 = vpop.f32.mrb[0].mxu0
      %v2509 = vadd.f32 0.0, %v2508
      %v2510 = vpop.f32.mrb[0].mxu0
      %2511 = vmatprep.mubr.f32.mxu0 0.0
      %2512 = vmatmul.mubr.f32.gmra.mrb[0].mxu0 %v2327
      %v2513 = vpop.f32.mrb[0].mxu0
      %v2514 = vadd.f32 0.0, %v2513
      %v2515 = vpop.f32.mrb[0].mxu0
      %2516 = vmatprep.mubr.f32.mxu0 0.0
      %2517 = vmatmul.mubr.f32.gmra.mrb[0].mxu0 %v2328
      %v2518 = vpop.f32.mrb[0].mxu0
      %v2519 = vadd.f32 0.0, %v2518
      %v2520 = vpop.f32.mrb[0].mxu0
      %2521 = vmatprep.mubr.f32.mxu0 0.0
      %2522 = vmatmul.mubr.f32.gmra.mrb[0].mxu0 %v2329
      %v2523 = vpop.f32.mrb[0].mxu0
      %v2524 = vadd.f32 0.0, %v2523
      %v2525 = vpop.f32.mrb[0].mxu0
      %2526 = vmatprep.mubr.f32.mxu0 0.0
      %2527 = vmatmul.mubr.f32.gmra.mrb[0].mxu0 %v2330
      %v2528 = vpop.f32.mrb[0].mxu0
      %v2529 = vadd.f32 0.0, %v2528
      %v2530 = vpop.f32.mrb[0].mxu0
      %2531 = vmatprep.mubr.f32.mxu0 0.0
      %2532 = vmatmul.mubr.f32.gmra.mrb[0].mxu0 %v2331
      %v2533 = vpop.f32.mrb[0].mxu0
      %v2534 = vadd.f32 0.0, %v2533
      %v2535 = vpop.f32.mrb[0].mxu0
      %2536 = vmatprep.mubr.f32.mxu0 0.0
      %2537 = vmatmul.mubr.f32.gmra.mrb[0].mxu0 %v2332
      %v2538 = vpop.f32.mrb[0].mxu0
      %v2539 = vadd.f32 0.0, %v2538
      %v2540 = vpop.f32.mrb[0].mxu0
      %2541 = vmatprep.mubr.f32.mxu0 0.0
      %2542 = vmatmul.mubr.f32.gmra.mrb[0].mxu0 %v2333
      %v2543 = vpop.f32.mrb[0].mxu0
      %v2544 = vadd.f32 0.0, %v2543
      %v2545 = vpop.f32.mrb[0].mxu0
      %2546 = vmatprep.mubr.f32.mxu0 0.0
      %2547 = vmatmul.mubr.f32.gmra.mrb[0].mxu0 %v2334
      %v2548 = vpop.f32.mrb[0].mxu0
      %v2549 = vadd.f32 0.0, %v2548
      %v2550 = vpop.f32.mrb[0].mxu0
      %2551 = vmatprep.mubr.f32.mxu0 0.0
      %2552 = vmatmul.mubr.f32.gmra.mrb[0].mxu0 %v2335
      %v2553 = vpop.f32.mrb[0].mxu0
      %v2554 = vadd.f32 0.0, %v2553
      %v2555 = vpop.f32.mrb[0].mxu0
      %2556 = vmatprep.mubr.f32.mxu0 0.0
      %2557 = vmatmul.mubr.f32.gmra.mrb[0].mxu0 %v2336
      %v2558 = vpop.f32.mrb[0].mxu0
      %v2559 = vadd.f32 0.0, %v2558
      %v2560 = vpop.f32.mrb[0].mxu0
      %2561 = vmatprep.mubr.f32.mxu0 0.0
      %2562 = vmatmul.mubr.f32.gmra.mrb[0].mxu0 %v2337
      %v2563 = vpop.f32.mrb[0].mxu0
      %v2564 = vadd.f32 0.0, %v2563
      %v2565 = vpop.f32.mrb[0].mxu0
      %2566 = vmatprep.mubr.f32.mxu0 0.0
      %2567 = vmatmul.mubr.f32.gmra.mrb[0].mxu0 %v2338
      %v2568 = vpop.f32.mrb[0].mxu0
      %v2569 = vadd.f32 0.0, %v2568
      %v2570 = vpop.f32.mrb[0].mxu0
      %2571 = vmatprep.mubr.f32.mxu0 0.0
      %2572 = vmatmul.mubr.f32.gmra.mrb[0].mxu0 %v2339
      %v2573 = vpop.f32.mrb[0].mxu0
      %v2574 = vadd.f32 0.0, %v2573
      %v2575 = vpop.f32.mrb[0].mxu0
      %2576 = vmatprep.mubr.f32.mxu0 0.0
      %2577 = vmatmul.mubr.f32.gmra.mrb[0].mxu0 %v2340
      %v2578 = vpop.f32.mrb[0].mxu0
      %v2579 = vadd.f32 0.0, %v2578
      %v2580 = vpop.f32.mrb[0].mxu0
      %2581 = vmatprep.mubr.f32.mxu0 0.0
      %2582 = vmatmul.mubr.f32.gmra.mrb[0].mxu0 %v2341
      %v2583 = vpop.f32.mrb[0].mxu0
      %v2584 = vadd.f32 0.0, %v2583
      %v2585 = vpop.f32.mrb[0].mxu0
      %2586 = vmatprep.mubr.f32.mxu0 0.0
      %2587 = vmatmul.mubr.f32.gmra.mrb[0].mxu0 %v2342
      %v2588 = vpop.f32.mrb[0].mxu0
      %v2589 = vadd.f32 0.0, %v2588
      %v2590 = vpop.f32.mrb[0].mxu0
      %2591 = vmatprep.mubr.f32.mxu0 0.0
      %2592 = vmatmul.mubr.f32.gmra.mrb[0].mxu0 %v2343
      %v2593 = vpop.f32.mrb[0].mxu0
      %v2594 = vadd.f32 0.0, %v2593
      %v2595 = vpop.f32.mrb[0].mxu0
      %2596 = vmatprep.mubr.f32.mxu0 0.0
      %2597 = vmatmul.mubr.f32.gmra.mrb[0].mxu0 %v2344
      %v2598 = vpop.f32.mrb[0].mxu0
      %v2599 = vadd.f32 0.0, %v2598
      %v2600 = vpop.f32.mrb[0].mxu0
      %2601 = vmatprep.mubr.f32.mxu0 0.0
      %2602 = vmatmul.mubr.f32.gmra.mrb[0].mxu0 %v2345
      %v2603 = vpop.f32.mrb[0].mxu0
      %v2604 = vadd.f32 0.0, %v2603
      %v2605 = vpop.f32.mrb[0].mxu0
      %2606 = vmatprep.mubr.f32.mxu0 0.0
      %2607 = vmatmul.mubr.f32.gmra.mrb[0].mxu0 %v2346
      %v2608 = vpop.f32.mrb[0].mxu0
      %v2609 = vadd.f32 0.0, %v2608
      %v2610 = vpop.f32.mrb[0].mxu0
      %2611 = vmatprep.mubr.f32.mxu0 0.0
      %2612 = vmatmul.mubr.f32.gmra.mrb[0].mxu0 %v2347
      %v2613 = vpop.f32.mrb[0].mxu0
      %v2614 = vadd.f32 0.0, %v2613
      %v2615 = vpop.f32.mrb[0].mxu0
      %2616 = vmatprep.mubr.f32.mxu0 0.0
      %2617 = vmatmul.mubr.f32.gmra.mrb[0].mxu0 %v2348
      %v2618 = vpop.f32.mrb[0].mxu0
      %v2619 = vadd.f32 0.0, %v2618
      %v2620 = vpop.f32.mrb[0].mxu0
      %2621 = vmatprep.mubr.f32.mxu0 0.0
      %2622 = vmatmul.mubr.f32.gmra.mrb[0].mxu0 %v2349
      %v2623 = vpop.f32.mrb[0].mxu0
      %v2624 = vadd.f32 0.0, %v2623
      %v2625 = vpop.f32.mrb[0].mxu0
      %2626 = vmatprep.mubr.f32.mxu0 0.0
      %2627 = vmatmul.mubr.f32.gmra.mrb[0].mxu0 %v2350
      %v2628 = vpop.f32.mrb[0].mxu0
      %v2629 = vadd.f32 0.0, %v2628
      %v2630 = vpop.f32.mrb[0].mxu0
      %2631 = vmatprep.mubr.f32.mxu0 0.0
      %2632 = vmatmul.mubr.f32.gmra.mrb[0].mxu0 %v2351
      %v2633 = vpop.f32.mrb[0].mxu0
      %v2634 = vadd.f32 0.0, %v2633
      %v2635 = vpop.f32.mrb[0].mxu0
      %2636 = vmatprep.mubr.f32.mxu0 0.0
      %2637 = vmatmul.mubr.f32.gmra.mrb[0].mxu0 %v2352
      %v2638 = vpop.f32.mrb[0].mxu0
      %v2639 = vadd.f32 0.0, %v2638
      %v2640 = vpop.f32.mrb[0].mxu0
      %2641 = vmatprep.mubr.f32.mxu0 0.0
      %2642 = vmatmul.mubr.f32.gmra.mrb[0].mxu0 %v2353
      %v2643 = vpop.f32.mrb[0].mxu0
      %v2644 = vadd.f32 0.0, %v2643
      %v2645 = vpop.f32.mrb[0].mxu0
      %2646 = vmatprep.mubr.f32.mxu0 0.0
      %2647 = vmatmul.mubr.f32.gmra.mrb[0].mxu0 %v2354
      %v2648 = vpop.f32.mrb[0].mxu0
      %v2649 = vadd.f32 0.0, %v2648
      %v2650 = vpop.f32.mrb[0].mxu0
      %2651 = vmatprep.mubr.f32.mxu0 0.0
      %2652 = vmatmul.mubr.f32.gmra.mrb[0].mxu0 %v2355
      %v2653 = vpop.f32.mrb[0].mxu0
      %v2654 = vadd.f32 0.0, %v2653
      %v2655 = vpop.f32.mrb[0].mxu0
      %2656 = vmatprep.mubr.f32.mxu0 0.0
      %2657 = vmatmul.mubr.f32.gmra.mrb[0].mxu0 %v2356
      %v2658 = vpop.f32.mrb[0].mxu0
      %v2659 = vadd.f32 0.0, %v2658
      %v2660 = vpop.f32.mrb[0].mxu0
      %2661 = vmatprep.mubr.f32.mxu0 0.0
      %2662 = vmatmul.mubr.f32.gmra.mrb[0].mxu0 %v2357
      %v2663 = vpop.f32.mrb[0].mxu0
      %v2664 = vadd.f32 0.0, %v2663
      %v2665 = vpop.f32.mrb[0].mxu0
      %2666 = vmatprep.mubr.f32.mxu0 0.0
      %2667 = vmatmul.mubr.f32.gmra.mrb[0].mxu0 %v2358
      %v2668 = vpop.f32.mrb[0].mxu0
      %v2669 = vadd.f32 0.0, %v2668
      %v2670 = vpop.f32.mrb[0].mxu0
      %2671 = vmatprep.mubr.f32.mxu0 0.0
      %2672 = vmatmul.mubr.f32.gmra.mrb[0].mxu0 %v2359
      %v2673 = vpop.f32.mrb[0].mxu0
      %v2674 = vadd.f32 0.0, %v2673
      %v2675 = vpop.f32.mrb[0].mxu0
      %2676 = vmatprep.mubr.f32.mxu0 0.0
      %2677 = vmatmul.mubr.f32.gmra.mrb[0].mxu0 %v2360
      %v2678 = vpop.f32.mrb[0].mxu0
      %v2679 = vadd.f32 0.0, %v2678
      %v2680 = vpop.f32.mrb[0].mxu0
      %2681 = vmatprep.mubr.f32.mxu0 0.0
      %2682 = vmatmul.mubr.f32.gmra.mrb[0].mxu0 %v2361
      %v2683 = vpop.f32.mrb[0].mxu0
      %v2684 = vadd.f32 0.0, %v2683
      %v2685 = vpop.f32.mrb[0].mxu0
      %2686 = vmatprep.mubr.f32.mxu0 0.0
      %2687 = vmatmul.mubr.f32.gmra.mrb[0].mxu0 %v2362
      %v2688 = vpop.f32.mrb[0].mxu0
      %v2689 = vadd.f32 0.0, %v2688
      %v2690 = vpop.f32.mrb[0].mxu0
      %2691 = vmatprep.mubr.f32.mxu0 0.0
      %2692 = vmatmul.mubr.f32.gmra.mrb[0].mxu0 %v2363
      %v2693 = vpop.f32.mrb[0].mxu0
      %v2694 = vadd.f32 0.0, %v2693
      %v2695 = vpop.f32.mrb[0].mxu0
      %2696 = vmatprep.mubr.f32.mxu0 0.0
      %2697 = vmatmul.mubr.f32.gmra.mrb[0].mxu0 %v2364
      %v2698 = vpop.f32.mrb[0].mxu0
      %v2699 = vadd.f32 0.0, %v2698
      %v2700 = vpop.f32.mrb[0].mxu0
      %2701 = vmatprep.mubr.f32.mxu0 0.0
      %2702 = vmatmul.mubr.f32.gmra.mrb[0].mxu0 %v2365
      %v2703 = vpop.f32.mrb[0].mxu0
      %v2704 = vadd.f32 0.0, %v2703
      %v2705 = vpop.f32.mrb[0].mxu0
      %2706 = vmatprep.mubr.f32.mxu0 0.0
      %2707 = vmatmul.mubr.f32.gmra.mrb[0].mxu0 %v2366
      %v2708 = vpop.f32.mrb[0].mxu0
      %v2709 = vadd.f32 0.0, %v2708
      %v2710 = vpop.f32.mrb[0].mxu0
      %2711 = vmatprep.mubr.f32.mxu0 0.0
      %2712 = vmatmul.mubr.f32.gmra.mrb[0].mxu0 %v2367
      %v2713 = vpop.f32.mrb[0].mxu0
      %v2714 = vadd.f32 0.0, %v2713
      %v2715 = vpop.f32.mrb[0].mxu0
      %2716 = vmatprep.mubr.f32.mxu0 0.0
      %2717 = vmatmul.mubr.f32.gmra.mrb[0].mxu0 %v2368
      %v2718 = vpop.f32.mrb[0].mxu0
      %v2719 = vadd.f32 0.0, %v2718
      %v2720 = vpop.f32.mrb[0].mxu0
      %2721 = vmatprep.mubr.f32.mxu0 0.0
      %2722 = vmatmul.mubr.f32.gmra.mrb[0].mxu0 %v2369
      %v2723 = vpop.f32.mrb[0].mxu0
      %v2724 = vadd.f32 0.0, %v2723
      %v2725 = vpop.f32.mrb[0].mxu0
      %2726 = vmatprep.mubr.f32.mxu0 0.0
      %2727 = vmatmul.mubr.f32.gmra.mrb[0].mxu0 %v2370
      %v2728 = vpop.f32.mrb[0].mxu0
      %v2729 = vadd.f32 0.0, %v2728
      %v2730 = vpop.f32.mrb[0].mxu0
      %2731 = vmatprep.mubr.f32.mxu0 0.0
      %2732 = vmatmul.mubr.f32.gmra.mrb[0].mxu0 %v2371
      %v2733 = vpop.f32.mrb[0].mxu0
      %v2734 = vadd.f32 0.0, %v2733
      %v2735 = vpop.f32.mrb[0].mxu0
      %2736 = vmatprep.mubr.f32.mxu0 0.0
      %2737 = vmatmul.mubr.f32.gmra.mrb[0].mxu0 %v2372
      %v2738 = vpop.f32.mrb[0].mxu0
      %v2739 = vadd.f32 0.0, %v2738
      %v2740 = vpop.f32.mrb[0].mxu0
      %2741 = vmatprep.mubr.f32.mxu0 0.0
      %2742 = vmatmul.mubr.f32.gmra.mrb[0].mxu0 %v2373
      %v2743 = vpop.f32.mrb[0].mxu0
      %v2744 = vadd.f32 0.0, %v2743
      %v2745 = vpop.f32.mrb[0].mxu0
      %2746 = vmatprep.mubr.f32.mxu0 0.0
      %2747 = vmatmul.mubr.f32.gmra.mrb[0].mxu0 %v2374
      %v2748 = vpop.f32.mrb[0].mxu0
      %v2749 = vadd.f32 0.0, %v2748
      %v2750 = vpop.f32.mrb[0].mxu0
      %2751 = vmatprep.mubr.f32.mxu0 0.0
      %2752 = vmatmul.mubr.f32.gmra.mrb[0].mxu0 %v2375
      %v2753 = vpop.f32.mrb[0].mxu0
      %v2754 = vadd.f32 0.0, %v2753
      %v2755 = vpop.f32.mrb[0].mxu0
      %2756 = vmatprep.mubr.f32.mxu0 0.0
      %2757 = vmatmul.mubr.f32.gmra.mrb[0].mxu0 %v2376
      %v2758 = vpop.f32.mrb[0].mxu0
      %v2759 = vadd.f32 0.0, %v2758
      %v2760 = vpop.f32.mrb[0].mxu0
      %2761 = vdwg.mxu0
      %2762 = vmatprep.subr.mxu0 0.0
      %2763 = vmatpush1.msra.mxu0 %v1145
      %2764 = vmatprep.subr.mxu0 0.0
      %2765 = vmatpush1.msra.mxu0 %v1146
      %2766 = vmatprep.subr.mxu0 0.0
      %2767 = vmatpush1.msra.mxu0 %v1147
      %2768 = vmatprep.subr.mxu0 0.0
      %2769 = vmatpush1.msra.mxu0 %v1148
      %2770 = vmatprep.subr.mxu0 0.0
      %2771 = vmatpush1.msra.mxu0 %v1149
      %2772 = vmatprep.subr.mxu0 0.0
      %2773 = vmatpush1.msra.mxu0 %v1150
      %2774 = vmatprep.subr.mxu0 0.0
      %2775 = vmatpush1.msra.mxu0 %v1151
      %2776 = vmatprep.subr.mxu0 0.0
      %2777 = vmatpush1.msra.mxu0 %v1152
      %2778 = vmatprep.subr.mxu0 0.0
      %2779 = vmatpush1.msra.mxu0 %v1153
      %2780 = vmatprep.subr.mxu0 0.0
      %2781 = vmatpush1.msra.mxu0 %v1154
      %2782 = vmatprep.subr.mxu0 0.0
      %2783 = vmatpush1.msra.mxu0 %v1155
      %2784 = vmatprep.subr.mxu0 0.0
      %2785 = vmatpush1.msra.mxu0 %v1156
      %2786 = vmatprep.subr.mxu0 0.0
      %2787 = vmatpush1.msra.mxu0 %v1157
      %2788 = vmatprep.subr.mxu0 0.0
      %2789 = vmatpush1.msra.mxu0 %v1158
      %2790 = vmatprep.subr.mxu0 0.0
      %2791 = vmatpush1.msra.mxu0 %v1159
      %2792 = vmatprep.subr.mxu0 0.0
      %2793 = vmatpush1.msra.mxu0 %v1160
      %2794 = vmatprep.subr.mxu0 0.0
      %2795 = vmatpush1.msra.mxu0 0.0
      %2796 = vmatprep.subr.mxu0 0.0
      %2797 = vmatpush1.msra.mxu0 0.0
      %2798 = vmatprep.subr.mxu0 0.0
      %2799 = vmatpush1.msra.mxu0 0.0
      %2800 = vmatprep.subr.mxu0 0.0
      %2801 = vmatpush1.msra.mxu0 0.0
      %2802 = vmatprep.subr.mxu0 0.0
      %2803 = vmatpush1.msra.mxu0 0.0
      %2804 = vmatprep.subr.mxu0 0.0
      %2805 = vmatpush1.msra.mxu0 0.0
      %2806 = vmatprep.subr.mxu0 0.0
      %2807 = vmatpush1.msra.mxu0 0.0
      %2808 = vmatprep.subr.mxu0 0.0
      %2809 = vmatpush1.msra.mxu0 0.0
      %2810 = vmatprep.subr.mxu0 0.0
      %2811 = vmatpush1.msra.mxu0 0.0
      %2812 = vmatprep.subr.mxu0 0.0
      %2813 = vmatpush1.msra.mxu0 0.0
      %2814 = vmatprep.subr.mxu0 0.0
      %2815 = vmatpush1.msra.mxu0 0.0
      %2816 = vmatprep.subr.mxu0 0.0
      %2817 = vmatpush1.msra.mxu0 0.0
      %2818 = vmatprep.subr.mxu0 0.0
      %2819 = vmatpush1.msra.mxu0 0.0
      %2820 = vmatprep.subr.mxu0 0.0
      %2821 = vmatpush1.msra.mxu0 0.0
      %2822 = vmatprep.subr.mxu0 0.0
      %2823 = vmatpush1.msra.mxu0 0.0
      %2824 = vmatprep.subr.mxu0 0.0
      %2825 = vmatpush1.msra.mxu0 0.0
      %2826 = vmatprep.mubr.f32.mxu0 0.0
      %2827 = vmatmul.mubr.f32.gmra.mrb[0].mxu0 %v1737
      %v2828 = vpop.f32.mrb[0].mxu0
      %v2829 = vadd.f32 %v2444, %v2828
      %v2830 = vpop.f32.mrb[0].mxu0
      %2831 = vmatprep.mubr.f32.mxu0 0.0
      %2832 = vmatmul.mubr.f32.gmra.mrb[0].mxu0 %v1738
      %v2833 = vpop.f32.mrb[0].mxu0
      %v2834 = vadd.f32 %v2449, %v2833
      %v2835 = vpop.f32.mrb[0].mxu0
      %2836 = vmatprep.mubr.f32.mxu0 0.0
      %2837 = vmatmul.mubr.f32.gmra.mrb[0].mxu0 %v1739
      %v2838 = vpop.f32.mrb[0].mxu0
      %v2839 = vadd.f32 %v2454, %v2838
      %v2840 = vpop.f32.mrb[0].mxu0
      %2841 = vmatprep.mubr.f32.mxu0 0.0
      %2842 = vmatmul.mubr.f32.gmra.mrb[0].mxu0 %v1740
      %v2843 = vpop.f32.mrb[0].mxu0
      %v2844 = vadd.f32 %v2459, %v2843
      %v2845 = vpop.f32.mrb[0].mxu0
      %2846 = vmatprep.mubr.f32.mxu0 0.0
      %2847 = vmatmul.mubr.f32.gmra.mrb[0].mxu0 %v1741
      %v2848 = vpop.f32.mrb[0].mxu0
      %v2849 = vadd.f32 %v2464, %v2848
      %v2850 = vpop.f32.mrb[0].mxu0
      %2851 = vmatprep.mubr.f32.mxu0 0.0
      %2852 = vmatmul.mubr.f32.gmra.mrb[0].mxu0 %v1742
      %v2853 = vpop.f32.mrb[0].mxu0
      %v2854 = vadd.f32 %v2469, %v2853
      %v2855 = vpop.f32.mrb[0].mxu0
      %2856 = vmatprep.mubr.f32.mxu0 0.0
      %2857 = vmatmul.mubr.f32.gmra.mrb[0].mxu0 %v1743
      %v2858 = vpop.f32.mrb[0].mxu0
      %v2859 = vadd.f32 %v2474, %v2858
      %v2860 = vpop.f32.mrb[0].mxu0
      %2861 = vmatprep.mubr.f32.mxu0 0.0
      %2862 = vmatmul.mubr.f32.gmra.mrb[0].mxu0 %v1744
      %v2863 = vpop.f32.mrb[0].mxu0
      %v2864 = vadd.f32 %v2479, %v2863
      %v2865 = vpop.f32.mrb[0].mxu0
      %2866 = vmatprep.mubr.f32.mxu0 0.0
      %2867 = vmatmul.mubr.f32.gmra.mrb[0].mxu0 %v1745
      %v2868 = vpop.f32.mrb[0].mxu0
      %v2869 = vadd.f32 %v2484, %v2868
      %v2870 = vpop.f32.mrb[0].mxu0
      %2871 = vmatprep.mubr.f32.mxu0 0.0
      %2872 = vmatmul.mubr.f32.gmra.mrb[0].mxu0 %v1746
      %v2873 = vpop.f32.mrb[0].mxu0
      %v2874 = vadd.f32 %v2489, %v2873
      %v2875 = vpop.f32.mrb[0].mxu0
      %2876 = vmatprep.mubr.f32.mxu0 0.0
      %2877 = vmatmul.mubr.f32.gmra.mrb[0].mxu0 %v1747
      %v2878 = vpop.f32.mrb[0].mxu0
      %v2879 = vadd.f32 %v2494, %v2878
      %v2880 = vpop.f32.mrb[0].mxu0
      %2881 = vmatprep.mubr.f32.mxu0 0.0
      %2882 = vmatmul.mubr.f32.gmra.mrb[0].mxu0 %v1748
      %v2883 = vpop.f32.mrb[0].mxu0
      %v2884 = vadd.f32 %v2499, %v2883
      %v2885 = vpop.f32.mrb[0].mxu0
      %2886 = vmatprep.mubr.f32.mxu0 0.0
      %2887 = vmatmul.mubr.f32.gmra.mrb[0].mxu0 %v1749
      %v2888 = vpop.f32.mrb[0].mxu0
      %v2889 = vadd.f32 %v2504, %v2888
      %v2890 = vpop.f32.mrb[0].mxu0
      %2891 = vmatprep.mubr.f32.mxu0 0.0
      %2892 = vmatmul.mubr.f32.gmra.mrb[0].mxu0 %v1750
      %v2893 = vpop.f32.mrb[0].mxu0
      %v2894 = vadd.f32 %v2509, %v2893
      %v2895 = vpop.f32.mrb[0].mxu0
      %2896 = vmatprep.mubr.f32.mxu0 0.0
      %2897 = vmatmul.mubr.f32.gmra.mrb[0].mxu0 %v1751
      %v2898 = vpop.f32.mrb[0].mxu0
      %v2899 = vadd.f32 %v2514, %v2898
      %v2900 = vpop.f32.mrb[0].mxu0
      %2901 = vmatprep.mubr.f32.mxu0 0.0
      %2902 = vmatmul.mubr.f32.gmra.mrb[0].mxu0 %v1752
      %v2903 = vpop.f32.mrb[0].mxu0
      %v2904 = vadd.f32 %v2519, %v2903
      %v2905 = vpop.f32.mrb[0].mxu0
      %2906 = vmatprep.mubr.f32.mxu0 0.0
      %2907 = vmatmul.mubr.f32.gmra.mrb[0].mxu0 %v1753
      %v2908 = vpop.f32.mrb[0].mxu0
      %v2909 = vadd.f32 %v2524, %v2908
      %v2910 = vpop.f32.mrb[0].mxu0
      %2911 = vmatprep.mubr.f32.mxu0 0.0
      %2912 = vmatmul.mubr.f32.gmra.mrb[0].mxu0 %v1754
      %v2913 = vpop.f32.mrb[0].mxu0
      %v2914 = vadd.f32 %v2529, %v2913
      %v2915 = vpop.f32.mrb[0].mxu0
      %2916 = vmatprep.mubr.f32.mxu0 0.0
      %2917 = vmatmul.mubr.f32.gmra.mrb[0].mxu0 %v1755
      %v2918 = vpop.f32.mrb[0].mxu0
      %v2919 = vadd.f32 %v2534, %v2918
      %v2920 = vpop.f32.mrb[0].mxu0
      %2921 = vmatprep.mubr.f32.mxu0 0.0
      %2922 = vmatmul.mubr.f32.gmra.mrb[0].mxu0 %v1756
      %v2923 = vpop.f32.mrb[0].mxu0
      %v2924 = vadd.f32 %v2539, %v2923
      %v2925 = vpop.f32.mrb[0].mxu0
      %2926 = vmatprep.mubr.f32.mxu0 0.0
      %2927 = vmatmul.mubr.f32.gmra.mrb[0].mxu0 %v1757
      %v2928 = vpop.f32.mrb[0].mxu0
      %v2929 = vadd.f32 %v2544, %v2928
      %v2930 = vpop.f32.mrb[0].mxu0
      %2931 = vmatprep.mubr.f32.mxu0 0.0
      %2932 = vmatmul.mubr.f32.gmra.mrb[0].mxu0 %v1758
      %v2933 = vpop.f32.mrb[0].mxu0
      %v2934 = vadd.f32 %v2549, %v2933
      %v2935 = vpop.f32.mrb[0].mxu0
      %2936 = vmatprep.mubr.f32.mxu0 0.0
      %2937 = vmatmul.mubr.f32.gmra.mrb[0].mxu0 %v1759
      %v2938 = vpop.f32.mrb[0].mxu0
      %v2939 = vadd.f32 %v2554, %v2938
      %v2940 = vpop.f32.mrb[0].mxu0
      %2941 = vmatprep.mubr.f32.mxu0 0.0
      %2942 = vmatmul.mubr.f32.gmra.mrb[0].mxu0 %v1760
      %v2943 = vpop.f32.mrb[0].mxu0
      %v2944 = vadd.f32 %v2559, %v2943
      %v2945 = vpop.f32.mrb[0].mxu0
      %2946 = vmatprep.mubr.f32.mxu0 0.0
      %2947 = vmatmul.mubr.f32.gmra.mrb[0].mxu0 %v1761
      %v2948 = vpop.f32.mrb[0].mxu0
      %v2949 = vadd.f32 %v2564, %v2948
      %v2950 = vpop.f32.mrb[0].mxu0
      %2951 = vmatprep.mubr.f32.mxu0 0.0
      %2952 = vmatmul.mubr.f32.gmra.mrb[0].mxu0 %v1762
      %v2953 = vpop.f32.mrb[0].mxu0
      %v2954 = vadd.f32 %v2569, %v2953
      %v2955 = vpop.f32.mrb[0].mxu0
      %2956 = vmatprep.mubr.f32.mxu0 0.0
      %2957 = vmatmul.mubr.f32.gmra.mrb[0].mxu0 %v1763
      %v2958 = vpop.f32.mrb[0].mxu0
      %v2959 = vadd.f32 %v2574, %v2958
      %v2960 = vpop.f32.mrb[0].mxu0
      %2961 = vmatprep.mubr.f32.mxu0 0.0
      %2962 = vmatmul.mubr.f32.gmra.mrb[0].mxu0 %v1764
      %v2963 = vpop.f32.mrb[0].mxu0
      %v2964 = vadd.f32 %v2579, %v2963
      %v2965 = vpop.f32.mrb[0].mxu0
      %2966 = vmatprep.mubr.f32.mxu0 0.0
      %2967 = vmatmul.mubr.f32.gmra.mrb[0].mxu0 %v1765
      %v2968 = vpop.f32.mrb[0].mxu0
      %v2969 = vadd.f32 %v2584, %v2968
      %v2970 = vpop.f32.mrb[0].mxu0
      %2971 = vmatprep.mubr.f32.mxu0 0.0
      %2972 = vmatmul.mubr.f32.gmra.mrb[0].mxu0 %v1766
      %v2973 = vpop.f32.mrb[0].mxu0
      %v2974 = vadd.f32 %v2589, %v2973
      %v2975 = vpop.f32.mrb[0].mxu0
      %2976 = vmatprep.mubr.f32.mxu0 0.0
      %2977 = vmatmul.mubr.f32.gmra.mrb[0].mxu0 %v1767
      %v2978 = vpop.f32.mrb[0].mxu0
      %v2979 = vadd.f32 %v2594, %v2978
      %v2980 = vpop.f32.mrb[0].mxu0
      %2981 = vmatprep.mubr.f32.mxu0 0.0
      %2982 = vmatmul.mubr.f32.gmra.mrb[0].mxu0 %v1768
      %v2983 = vpop.f32.mrb[0].mxu0
      %v2984 = vadd.f32 %v2599, %v2983
      %v2985 = vpop.f32.mrb[0].mxu0
      %2986 = vmatprep.mubr.f32.mxu0 0.0
      %2987 = vmatmul.mubr.f32.gmra.mrb[0].mxu0 %v1769
      %v2988 = vpop.f32.mrb[0].mxu0
      %v2989 = vadd.f32 %v2604, %v2988
      %v2990 = vpop.f32.mrb[0].mxu0
      %2991 = vmatprep.mubr.f32.mxu0 0.0
      %2992 = vmatmul.mubr.f32.gmra.mrb[0].mxu0 %v1770
      %v2993 = vpop.f32.mrb[0].mxu0
      %v2994 = vadd.f32 %v2609, %v2993
      %v2995 = vpop.f32.mrb[0].mxu0
      %2996 = vmatprep.mubr.f32.mxu0 0.0
      %2997 = vmatmul.mubr.f32.gmra.mrb[0].mxu0 %v1771
      %v2998 = vpop.f32.mrb[0].mxu0
      %v2999 = vadd.f32 %v2614, %v2998
      %v3000 = vpop.f32.mrb[0].mxu0
      %3001 = vmatprep.mubr.f32.mxu0 0.0
      %3002 = vmatmul.mubr.f32.gmra.mrb[0].mxu0 %v1772
      %v3003 = vpop.f32.mrb[0].mxu0
      %v3004 = vadd.f32 %v2619, %v3003
      %v3005 = vpop.f32.mrb[0].mxu0
      %3006 = vmatprep.mubr.f32.mxu0 0.0
      %3007 = vmatmul.mubr.f32.gmra.mrb[0].mxu0 %v1773
      %v3008 = vpop.f32.mrb[0].mxu0
      %v3009 = vadd.f32 %v2624, %v3008
      %v3010 = vpop.f32.mrb[0].mxu0
      %3011 = vmatprep.mubr.f32.mxu0 0.0
      %3012 = vmatmul.mubr.f32.gmra.mrb[0].mxu0 %v1774
      %v3013 = vpop.f32.mrb[0].mxu0
      %v3014 = vadd.f32 %v2629, %v3013
      %v3015 = vpop.f32.mrb[0].mxu0
      %3016 = vmatprep.mubr.f32.mxu0 0.0
      %3017 = vmatmul.mubr.f32.gmra.mrb[0].mxu0 %v1775
      %v3018 = vpop.f32.mrb[0].mxu0
      %v3019 = vadd.f32 %v2634, %v3018
      %v3020 = vpop.f32.mrb[0].mxu0
      %3021 = vmatprep.mubr.f32.mxu0 0.0
      %3022 = vmatmul.mubr.f32.gmra.mrb[0].mxu0 %v1776
      %v3023 = vpop.f32.mrb[0].mxu0
      %v3024 = vadd.f32 %v2639, %v3023
      %v3025 = vpop.f32.mrb[0].mxu0
      %3026 = vmatprep.mubr.f32.mxu0 0.0
      %3027 = vmatmul.mubr.f32.gmra.mrb[0].mxu0 %v1777
      %v3028 = vpop.f32.mrb[0].mxu0
      %v3029 = vadd.f32 %v2644, %v3028
      %v3030 = vpop.f32.mrb[0].mxu0
      %3031 = vmatprep.mubr.f32.mxu0 0.0
      %3032 = vmatmul.mubr.f32.gmra.mrb[0].mxu0 %v1778
      %v3033 = vpop.f32.mrb[0].mxu0
      %v3034 = vadd.f32 %v2649, %v3033
      %v3035 = vpop.f32.mrb[0].mxu0
      %3036 = vmatprep.mubr.f32.mxu0 0.0
      %3037 = vmatmul.mubr.f32.gmra.mrb[0].mxu0 %v1779
      %v3038 = vpop.f32.mrb[0].mxu0
      %v3039 = vadd.f32 %v2654, %v3038
      %v3040 = vpop.f32.mrb[0].mxu0
      %3041 = vmatprep.mubr.f32.mxu0 0.0
      %3042 = vmatmul.mubr.f32.gmra.mrb[0].mxu0 %v1780
      %v3043 = vpop.f32.mrb[0].mxu0
      %v3044 = vadd.f32 %v2659, %v3043
      %v3045 = vpop.f32.mrb[0].mxu0
      %3046 = vmatprep.mubr.f32.mxu0 0.0
      %3047 = vmatmul.mubr.f32.gmra.mrb[0].mxu0 %v1781
      %v3048 = vpop.f32.mrb[0].mxu0
      %v3049 = vadd.f32 %v2664, %v3048
      %v3050 = vpop.f32.mrb[0].mxu0
      %3051 = vmatprep.mubr.f32.mxu0 0.0
      %3052 = vmatmul.mubr.f32.gmra.mrb[0].mxu0 %v1782
      %v3053 = vpop.f32.mrb[0].mxu0
      %v3054 = vadd.f32 %v2669, %v3053
      %v3055 = vpop.f32.mrb[0].mxu0
      %3056 = vmatprep.mubr.f32.mxu0 0.0
      %3057 = vmatmul.mubr.f32.gmra.mrb[0].mxu0 %v1783
      %v3058 = vpop.f32.mrb[0].mxu0
      %v3059 = vadd.f32 %v2674, %v3058
      %v3060 = vpop.f32.mrb[0].mxu0
      %3061 = vmatprep.mubr.f32.mxu0 0.0
      %3062 = vmatmul.mubr.f32.gmra.mrb[0].mxu0 %v1784
      %v3063 = vpop.f32.mrb[0].mxu0
      %v3064 = vadd.f32 %v2679, %v3063
      %v3065 = vpop.f32.mrb[0].mxu0
      %3066 = vmatprep.mubr.f32.mxu0 0.0
      %3067 = vmatmul.mubr.f32.gmra.mrb[0].mxu0 %v1785
      %v3068 = vpop.f32.mrb[0].mxu0
      %v3069 = vadd.f32 %v2684, %v3068
      %v3070 = vpop.f32.mrb[0].mxu0
      %3071 = vmatprep.mubr.f32.mxu0 0.0
      %3072 = vmatmul.mubr.f32.gmra.mrb[0].mxu0 %v1786
      %v3073 = vpop.f32.mrb[0].mxu0
      %v3074 = vadd.f32 %v2689, %v3073
      %v3075 = vpop.f32.mrb[0].mxu0
      %3076 = vmatprep.mubr.f32.mxu0 0.0
      %3077 = vmatmul.mubr.f32.gmra.mrb[0].mxu0 %v1787
      %v3078 = vpop.f32.mrb[0].mxu0
      %v3079 = vadd.f32 %v2694, %v3078
      %v3080 = vpop.f32.mrb[0].mxu0
      %3081 = vmatprep.mubr.f32.mxu0 0.0
      %3082 = vmatmul.mubr.f32.gmra.mrb[0].mxu0 %v1788
      %v3083 = vpop.f32.mrb[0].mxu0
      %v3084 = vadd.f32 %v2699, %v3083
      %v3085 = vpop.f32.mrb[0].mxu0
      %3086 = vmatprep.mubr.f32.mxu0 0.0
      %3087 = vmatmul.mubr.f32.gmra.mrb[0].mxu0 %v1789
      %v3088 = vpop.f32.mrb[0].mxu0
      %v3089 = vadd.f32 %v2704, %v3088
      %v3090 = vpop.f32.mrb[0].mxu0
      %3091 = vmatprep.mubr.f32.mxu0 0.0
      %3092 = vmatmul.mubr.f32.gmra.mrb[0].mxu0 %v1790
      %v3093 = vpop.f32.mrb[0].mxu0
      %v3094 = vadd.f32 %v2709, %v3093
      %v3095 = vpop.f32.mrb[0].mxu0
      %3096 = vmatprep.mubr.f32.mxu0 0.0
      %3097 = vmatmul.mubr.f32.gmra.mrb[0].mxu0 %v1791
      %v3098 = vpop.f32.mrb[0].mxu0
      %v3099 = vadd.f32 %v2714, %v3098
      %v3100 = vpop.f32.mrb[0].mxu0
      %3101 = vmatprep.mubr.f32.mxu0 0.0
      %3102 = vmatmul.mubr.f32.gmra.mrb[0].mxu0 %v1792
      %v3103 = vpop.f32.mrb[0].mxu0
      %v3104 = vadd.f32 %v2719, %v3103
      %v3105 = vpop.f32.mrb[0].mxu0
      %3106 = vmatprep.mubr.f32.mxu0 0.0
      %3107 = vmatmul.mubr.f32.gmra.mrb[0].mxu0 %v1793
      %v3108 = vpop.f32.mrb[0].mxu0
      %v3109 = vadd.f32 %v2724, %v3108
      %v3110 = vpop.f32.mrb[0].mxu0
      %3111 = vmatprep.mubr.f32.mxu0 0.0
      %3112 = vmatmul.mubr.f32.gmra.mrb[0].mxu0 %v1794
      %v3113 = vpop.f32.mrb[0].mxu0
      %v3114 = vadd.f32 %v2729, %v3113
      %v3115 = vpop.f32.mrb[0].mxu0
      %3116 = vmatprep.mubr.f32.mxu0 0.0
      %3117 = vmatmul.mubr.f32.gmra.mrb[0].mxu0 %v1795
      %v3118 = vpop.f32.mrb[0].mxu0
      %v3119 = vadd.f32 %v2734, %v3118
      %v3120 = vpop.f32.mrb[0].mxu0
      %3121 = vmatprep.mubr.f32.mxu0 0.0
      %3122 = vmatmul.mubr.f32.gmra.mrb[0].mxu0 %v1796
      %v3123 = vpop.f32.mrb[0].mxu0
      %v3124 = vadd.f32 %v2739, %v3123
      %v3125 = vpop.f32.mrb[0].mxu0
      %3126 = vmatprep.mubr.f32.mxu0 0.0
      %3127 = vmatmul.mubr.f32.gmra.mrb[0].mxu0 %v1797
      %v3128 = vpop.f32.mrb[0].mxu0
      %v3129 = vadd.f32 %v2744, %v3128
      %v3130 = vpop.f32.mrb[0].mxu0
      %3131 = vmatprep.mubr.f32.mxu0 0.0
      %3132 = vmatmul.mubr.f32.gmra.mrb[0].mxu0 %v1798
      %v3133 = vpop.f32.mrb[0].mxu0
      %v3134 = vadd.f32 %v2749, %v3133
      %v3135 = vpop.f32.mrb[0].mxu0
      %3136 = vmatprep.mubr.f32.mxu0 0.0
      %3137 = vmatmul.mubr.f32.gmra.mrb[0].mxu0 %v1799
      %v3138 = vpop.f32.mrb[0].mxu0
      %v3139 = vadd.f32 %v2754, %v3138
      %v3140 = vpop.f32.mrb[0].mxu0
      %3141 = vmatprep.mubr.f32.mxu0 0.0
      %3142 = vmatmul.mubr.f32.gmra.mrb[0].mxu0 %v1800
      %v3143 = vpop.f32.mrb[0].mxu0
      %v3144 = vadd.f32 %v2759, %v3143
      %v3145 = vpop.f32.mrb[0].mxu0
      %3146 = vdwg.mxu0
      %3147 = vset.pattern.permute.xlu0 2
      %3148 = vperm.xlu0 %3147, %v246
      %v3149 = vpop.permute.xlu0 %3148
      %3150 = vset.pattern.permute.xlu0 2
      %3151 = vperm.xlu0 %3150, %v247
      %v3152 = vpop.permute.xlu0 %3151
      %3153 = vset.pattern.permute.xlu0 2
      %3154 = vperm.xlu0 %3153, %v248
      %v3155 = vpop.permute.xlu0 %3154
      %3156 = vset.pattern.permute.xlu0 2
      %3157 = vperm.xlu0 %3156, %v249
      %v3158 = vpop.permute.xlu0 %3157
      %3159 = vset.pattern.permute.xlu0 2
      %3160 = vperm.xlu0 %3159, %v250
      %v3161 = vpop.permute.xlu0 %3160
      %3162 = vset.pattern.permute.xlu0 2
      %3163 = vperm.xlu0 %3162, %v251
      %v3164 = vpop.permute.xlu0 %3163
      %3165 = vset.pattern.permute.xlu0 2
      %3166 = vperm.xlu0 %3165, %v252
      %v3167 = vpop.permute.xlu0 %3166
      %3168 = vset.pattern.permute.xlu0 2
      %3169 = vperm.xlu0 %3168, %v253
      %v3170 = vpop.permute.xlu0 %3169
      %3171 = vset.pattern.permute.xlu0 2
      %3172 = vperm.xlu0 %3171, %v254
      %v3173 = vpop.permute.xlu0 %3172
      %3174 = vset.pattern.permute.xlu0 2
      %3175 = vperm.xlu0 %3174, %v255
      %v3176 = vpop.permute.xlu0 %3175
      %3177 = vset.pattern.permute.xlu0 2
      %3178 = vperm.xlu0 %3177, %v256
      %v3179 = vpop.permute.xlu0 %3178
      %3180 = vset.pattern.permute.xlu0 2
      %3181 = vperm.xlu0 %3180, %v257
      %v3182 = vpop.permute.xlu0 %3181
      %3183 = vset.pattern.permute.xlu0 2
      %3184 = vperm.xlu0 %3183, %v258
      %v3185 = vpop.permute.xlu0 %3184
      %3186 = vset.pattern.permute.xlu0 2
      %3187 = vperm.xlu0 %3186, %v259
      %v3188 = vpop.permute.xlu0 %3187
      %3189 = vset.pattern.permute.xlu0 2
      %3190 = vperm.xlu0 %3189, %v260
      %v3191 = vpop.permute.xlu0 %3190
      %3192 = vset.pattern.permute.xlu0 2
      %3193 = vperm.xlu0 %3192, %v261
      %v3194 = vpop.permute.xlu0 %3193
      %3195 = vset.pattern.permute.xlu0 2
      %3196 = vperm.xlu0 %3195, %v262
      %v3197 = vpop.permute.xlu0 %3196
      %3198 = vset.pattern.permute.xlu0 2
      %3199 = vperm.xlu0 %3198, %v263
      %v3200 = vpop.permute.xlu0 %3199
      %3201 = vset.pattern.permute.xlu0 2
      %3202 = vperm.xlu0 %3201, %v264
      %v3203 = vpop.permute.xlu0 %3202
      %3204 = vset.pattern.permute.xlu0 2
      %3205 = vperm.xlu0 %3204, %v265
      %v3206 = vpop.permute.xlu0 %3205
      %3207 = vset.pattern.permute.xlu0 2
      %3208 = vperm.xlu0 %3207, %v266
      %v3209 = vpop.permute.xlu0 %3208
      %3210 = vset.pattern.permute.xlu0 2
      %3211 = vperm.xlu0 %3210, %v267
      %v3212 = vpop.permute.xlu0 %3211
      %3213 = vset.pattern.permute.xlu0 2
      %3214 = vperm.xlu0 %3213, %v268
      %v3215 = vpop.permute.xlu0 %3214
      %3216 = vset.pattern.permute.xlu0 2
      %3217 = vperm.xlu0 %3216, %v269
      %v3218 = vpop.permute.xlu0 %3217
      %3219 = vset.pattern.permute.xlu0 2
      %3220 = vperm.xlu0 %3219, %v270
      %v3221 = vpop.permute.xlu0 %3220
      %3222 = vset.pattern.permute.xlu0 2
      %3223 = vperm.xlu0 %3222, %v271
      %v3224 = vpop.permute.xlu0 %3223
      %3225 = vset.pattern.permute.xlu0 2
      %3226 = vperm.xlu0 %3225, %v272
      %v3227 = vpop.permute.xlu0 %3226
      %3228 = vset.pattern.permute.xlu0 2
      %3229 = vperm.xlu0 %3228, %v273
      %v3230 = vpop.permute.xlu0 %3229
      %3231 = vset.pattern.permute.xlu0 2
      %3232 = vperm.xlu0 %3231, %v274
      %v3233 = vpop.permute.xlu0 %3232
      %3234 = vset.pattern.permute.xlu0 2
      %3235 = vperm.xlu0 %3234, %v275
      %v3236 = vpop.permute.xlu0 %3235
      %3237 = vset.pattern.permute.xlu0 2
      %3238 = vperm.xlu0 %3237, %v276
      %v3239 = vpop.permute.xlu0 %3238
      %3240 = vset.pattern.permute.xlu0 2
      %3241 = vperm.xlu0 %3240, %v277
      %v3242 = vpop.permute.xlu0 %3241
      %3243 = vset.pattern.permute.xlu0 2
      %3244 = vperm.xlu0 %3243, %v278
      %v3245 = vpop.permute.xlu0 %3244
      %3246 = vset.pattern.permute.xlu0 2
      %3247 = vperm.xlu0 %3246, %v279
      %v3248 = vpop.permute.xlu0 %3247
      %3249 = vset.pattern.permute.xlu0 2
      %3250 = vperm.xlu0 %3249, %v280
      %v3251 = vpop.permute.xlu0 %3250
      %3252 = vset.pattern.permute.xlu0 2
      %3253 = vperm.xlu0 %3252, %v281
      %v3254 = vpop.permute.xlu0 %3253
      %3255 = vset.pattern.permute.xlu0 2
      %3256 = vperm.xlu0 %3255, %v282
      %v3257 = vpop.permute.xlu0 %3256
      %3258 = vset.pattern.permute.xlu0 2
      %3259 = vperm.xlu0 %3258, %v283
      %v3260 = vpop.permute.xlu0 %3259
      %3261 = vset.pattern.permute.xlu0 2
      %3262 = vperm.xlu0 %3261, %v284
      %v3263 = vpop.permute.xlu0 %3262
      %3264 = vset.pattern.permute.xlu0 2
      %3265 = vperm.xlu0 %3264, %v285
      %v3266 = vpop.permute.xlu0 %3265
      %3267 = vset.pattern.permute.xlu0 2
      %3268 = vperm.xlu0 %3267, %v286
      %v3269 = vpop.permute.xlu0 %3268
      %3270 = vset.pattern.permute.xlu0 2
      %3271 = vperm.xlu0 %3270, %v287
      %v3272 = vpop.permute.xlu0 %3271
      %3273 = vset.pattern.permute.xlu0 2
      %3274 = vperm.xlu0 %3273, %v288
      %v3275 = vpop.permute.xlu0 %3274
      %3276 = vset.pattern.permute.xlu0 2
      %3277 = vperm.xlu0 %3276, %v289
      %v3278 = vpop.permute.xlu0 %3277
      %3279 = vset.pattern.permute.xlu0 2
      %3280 = vperm.xlu0 %3279, %v290
      %v3281 = vpop.permute.xlu0 %3280
      %3282 = vset.pattern.permute.xlu0 2
      %3283 = vperm.xlu0 %3282, %v291
      %v3284 = vpop.permute.xlu0 %3283
      %3285 = vset.pattern.permute.xlu0 2
      %3286 = vperm.xlu0 %3285, %v292
      %v3287 = vpop.permute.xlu0 %3286
      %3288 = vset.pattern.permute.xlu0 2
      %3289 = vperm.xlu0 %3288, %v293
      %v3290 = vpop.permute.xlu0 %3289
      %3291 = vset.pattern.permute.xlu0 2
      %3292 = vperm.xlu0 %3291, %v294
      %v3293 = vpop.permute.xlu0 %3292
      %3294 = vset.pattern.permute.xlu0 2
      %3295 = vperm.xlu0 %3294, %v295
      %v3296 = vpop.permute.xlu0 %3295
      %3297 = vset.pattern.permute.xlu0 2
      %3298 = vperm.xlu0 %3297, %v296
      %v3299 = vpop.permute.xlu0 %3298
      %3300 = vset.pattern.permute.xlu0 2
      %3301 = vperm.xlu0 %3300, %v297
      %v3302 = vpop.permute.xlu0 %3301
      %3303 = vset.pattern.permute.xlu0 2
      %3304 = vperm.xlu0 %3303, %v298
      %v3305 = vpop.permute.xlu0 %3304
      %3306 = vset.pattern.permute.xlu0 2
      %3307 = vperm.xlu0 %3306, %v299
      %v3308 = vpop.permute.xlu0 %3307
      %3309 = vset.pattern.permute.xlu0 2
      %3310 = vperm.xlu0 %3309, %v300
      %v3311 = vpop.permute.xlu0 %3310
      %3312 = vset.pattern.permute.xlu0 2
      %3313 = vperm.xlu0 %3312, %v301
      %v3314 = vpop.permute.xlu0 %3313
      %3315 = vset.pattern.permute.xlu0 2
      %3316 = vperm.xlu0 %3315, %v302
      %v3317 = vpop.permute.xlu0 %3316
      %3318 = vset.pattern.permute.xlu0 2
      %3319 = vperm.xlu0 %3318, %v303
      %v3320 = vpop.permute.xlu0 %3319
      %3321 = vset.pattern.permute.xlu0 2
      %3322 = vperm.xlu0 %3321, %v304
      %v3323 = vpop.permute.xlu0 %3322
      %3324 = vset.pattern.permute.xlu0 2
      %3325 = vperm.xlu0 %3324, %v305
      %v3326 = vpop.permute.xlu0 %3325
      %3327 = vset.pattern.permute.xlu0 2
      %3328 = vperm.xlu0 %3327, %v306
      %v3329 = vpop.permute.xlu0 %3328
      %3330 = vset.pattern.permute.xlu0 2
      %3331 = vperm.xlu0 %3330, %v307
      %v3332 = vpop.permute.xlu0 %3331
      %3333 = vset.pattern.permute.xlu0 2
      %3334 = vperm.xlu0 %3333, %v308
      %v3335 = vpop.permute.xlu0 %3334
      %3336 = vset.pattern.permute.xlu0 2
      %3337 = vperm.xlu0 %3336, %v309
      %v3338 = vpop.permute.xlu0 %3337
      %vm3339 = vcmp.eq.s32.totalorder %v3149, %v1144
      %vm3340 = vcmp.eq.s32.totalorder %v3152, %v1144
      %vm3341 = vcmp.eq.s32.totalorder %v3155, %v1144
      %vm3342 = vcmp.eq.s32.totalorder %v3158, %v1144
      %vm3343 = vcmp.eq.s32.totalorder %v3161, %v1144
      %vm3344 = vcmp.eq.s32.totalorder %v3164, %v1144
      %vm3345 = vcmp.eq.s32.totalorder %v3167, %v1144
      %vm3346 = vcmp.eq.s32.totalorder %v3170, %v1144
      %vm3347 = vcmp.eq.s32.totalorder %v3173, %v1144
      %vm3348 = vcmp.eq.s32.totalorder %v3176, %v1144
      %vm3349 = vcmp.eq.s32.totalorder %v3179, %v1144
      %vm3350 = vcmp.eq.s32.totalorder %v3182, %v1144
      %vm3351 = vcmp.eq.s32.totalorder %v3185, %v1144
      %vm3352 = vcmp.eq.s32.totalorder %v3188, %v1144
      %vm3353 = vcmp.eq.s32.totalorder %v3191, %v1144
      %vm3354 = vcmp.eq.s32.totalorder %v3194, %v1144
      %vm3355 = vcmp.eq.s32.totalorder %v3197, %v1144
      %vm3356 = vcmp.eq.s32.totalorder %v3200, %v1144
      %vm3357 = vcmp.eq.s32.totalorder %v3203, %v1144
      %vm3358 = vcmp.eq.s32.totalorder %v3206, %v1144
      %vm3359 = vcmp.eq.s32.totalorder %v3209, %v1144
      %vm3360 = vcmp.eq.s32.totalorder %v3212, %v1144
      %vm3361 = vcmp.eq.s32.totalorder %v3215, %v1144
      %vm3362 = vcmp.eq.s32.totalorder %v3218, %v1144
      %vm3363 = vcmp.eq.s32.totalorder %v3221, %v1144
      %vm3364 = vcmp.eq.s32.totalorder %v3224, %v1144
      %vm3365 = vcmp.eq.s32.totalorder %v3227, %v1144
      %vm3366 = vcmp.eq.s32.totalorder %v3230, %v1144
      %vm3367 = vcmp.eq.s32.totalorder %v3233, %v1144
      %vm3368 = vcmp.eq.s32.totalorder %v3236, %v1144
      %vm3369 = vcmp.eq.s32.totalorder %v3239, %v1144
      %vm3370 = vcmp.eq.s32.totalorder %v3242, %v1144
      %vm3371 = vcmp.eq.s32.totalorder %v3245, %v1144
      %vm3372 = vcmp.eq.s32.totalorder %v3248, %v1144
      %vm3373 = vcmp.eq.s32.totalorder %v3251, %v1144
      %vm3374 = vcmp.eq.s32.totalorder %v3254, %v1144
      %vm3375 = vcmp.eq.s32.totalorder %v3257, %v1144
      %vm3376 = vcmp.eq.s32.totalorder %v3260, %v1144
      %vm3377 = vcmp.eq.s32.totalorder %v3263, %v1144
      %vm3378 = vcmp.eq.s32.totalorder %v3266, %v1144
      %vm3379 = vcmp.eq.s32.totalorder %v3269, %v1144
      %vm3380 = vcmp.eq.s32.totalorder %v3272, %v1144
      %vm3381 = vcmp.eq.s32.totalorder %v3275, %v1144
      %vm3382 = vcmp.eq.s32.totalorder %v3278, %v1144
      %vm3383 = vcmp.eq.s32.totalorder %v3281, %v1144
      %vm3384 = vcmp.eq.s32.totalorder %v3284, %v1144
      %vm3385 = vcmp.eq.s32.totalorder %v3287, %v1144
      %vm3386 = vcmp.eq.s32.totalorder %v3290, %v1144
      %vm3387 = vcmp.eq.s32.totalorder %v3293, %v1144
      %vm3388 = vcmp.eq.s32.totalorder %v3296, %v1144
      %vm3389 = vcmp.eq.s32.totalorder %v3299, %v1144
      %vm3390 = vcmp.eq.s32.totalorder %v3302, %v1144
      %vm3391 = vcmp.eq.s32.totalorder %v3305, %v1144
      %vm3392 = vcmp.eq.s32.totalorder %v3308, %v1144
      %vm3393 = vcmp.eq.s32.totalorder %v3311, %v1144
      %vm3394 = vcmp.eq.s32.totalorder %v3314, %v1144
      %vm3395 = vcmp.eq.s32.totalorder %v3317, %v1144
      %vm3396 = vcmp.eq.s32.totalorder %v3320, %v1144
      %vm3397 = vcmp.eq.s32.totalorder %v3323, %v1144
      %vm3398 = vcmp.eq.s32.totalorder %v3326, %v1144
      %vm3399 = vcmp.eq.s32.totalorder %v3329, %v1144
      %vm3400 = vcmp.eq.s32.totalorder %v3332, %v1144
      %vm3401 = vcmp.eq.s32.totalorder %v3335, %v1144
      %vm3402 = vcmp.eq.s32.totalorder %v3338, %v1144
      %3403 = vset.pattern.permute.xlu0 2
      %3404 = vperm.xlu0 %3403, %v566
      %v3405 = vpop.permute.xlu0 %3404
      %3407 = vset.pattern.permute.xlu0 2
      %3408 = vperm.xlu0 %3407, %v567
      %v3409 = vpop.permute.xlu0 %3408
      %3411 = vset.pattern.permute.xlu0 2
      %3412 = vperm.xlu0 %3411, %v568
      %v3413 = vpop.permute.xlu0 %3412
      %3415 = vset.pattern.permute.xlu0 2
      %3416 = vperm.xlu0 %3415, %v569
      %v3417 = vpop.permute.xlu0 %3416
      %3419 = vset.pattern.permute.xlu0 2
      %3420 = vperm.xlu0 %3419, %v570
      %v3421 = vpop.permute.xlu0 %3420
      %3423 = vset.pattern.permute.xlu0 2
      %3424 = vperm.xlu0 %3423, %v571
      %v3425 = vpop.permute.xlu0 %3424
      %3427 = vset.pattern.permute.xlu0 2
      %3428 = vperm.xlu0 %3427, %v572
      %v3429 = vpop.permute.xlu0 %3428
      %3431 = vset.pattern.permute.xlu0 2
      %3432 = vperm.xlu0 %3431, %v573
      %v3433 = vpop.permute.xlu0 %3432
      %3435 = vset.pattern.permute.xlu0 2
      %3436 = vperm.xlu0 %3435, %v574
      %v3437 = vpop.permute.xlu0 %3436
      %3439 = vset.pattern.permute.xlu0 2
      %3440 = vperm.xlu0 %3439, %v575
      %v3441 = vpop.permute.xlu0 %3440
      %3443 = vset.pattern.permute.xlu0 2
      %3444 = vperm.xlu0 %3443, %v576
      %v3445 = vpop.permute.xlu0 %3444
      %3447 = vset.pattern.permute.xlu0 2
      %3448 = vperm.xlu0 %3447, %v577
      %v3449 = vpop.permute.xlu0 %3448
      %3451 = vset.pattern.permute.xlu0 2
      %3452 = vperm.xlu0 %3451, %v578
      %v3453 = vpop.permute.xlu0 %3452
      %3455 = vset.pattern.permute.xlu0 2
      %3456 = vperm.xlu0 %3455, %v579
      %v3457 = vpop.permute.xlu0 %3456
      %3459 = vset.pattern.permute.xlu0 2
      %3460 = vperm.xlu0 %3459, %v580
      %v3461 = vpop.permute.xlu0 %3460
      %3463 = vset.pattern.permute.xlu0 2
      %3464 = vperm.xlu0 %3463, %v581
      %v3465 = vpop.permute.xlu0 %3464
      %3467 = vset.pattern.permute.xlu0 2
      %3468 = vperm.xlu0 %3467, %v582
      %v3469 = vpop.permute.xlu0 %3468
      %3471 = vset.pattern.permute.xlu0 2
      %3472 = vperm.xlu0 %3471, %v583
      %v3473 = vpop.permute.xlu0 %3472
      %3475 = vset.pattern.permute.xlu0 2
      %3476 = vperm.xlu0 %3475, %v584
      %v3477 = vpop.permute.xlu0 %3476
      %3479 = vset.pattern.permute.xlu0 2
      %3480 = vperm.xlu0 %3479, %v585
      %v3481 = vpop.permute.xlu0 %3480
      %3483 = vset.pattern.permute.xlu0 2
      %3484 = vperm.xlu0 %3483, %v586
      %v3485 = vpop.permute.xlu0 %3484
      %3487 = vset.pattern.permute.xlu0 2
      %3488 = vperm.xlu0 %3487, %v587
      %v3489 = vpop.permute.xlu0 %3488
      %3491 = vset.pattern.permute.xlu0 2
      %3492 = vperm.xlu0 %3491, %v588
      %v3493 = vpop.permute.xlu0 %3492
      %3495 = vset.pattern.permute.xlu0 2
      %3496 = vperm.xlu0 %3495, %v589
      %v3497 = vpop.permute.xlu0 %3496
      %3499 = vset.pattern.permute.xlu0 2
      %3500 = vperm.xlu0 %3499, %v590
      %v3501 = vpop.permute.xlu0 %3500
      %3503 = vset.pattern.permute.xlu0 2
      %3504 = vperm.xlu0 %3503, %v591
      %v3505 = vpop.permute.xlu0 %3504
      %3507 = vset.pattern.permute.xlu0 2
      %3508 = vperm.xlu0 %3507, %v592
      %v3509 = vpop.permute.xlu0 %3508
      %3511 = vset.pattern.permute.xlu0 2
      %3512 = vperm.xlu0 %3511, %v593
      %v3513 = vpop.permute.xlu0 %3512
      %3515 = vset.pattern.permute.xlu0 2
      %3516 = vperm.xlu0 %3515, %v594
      %v3517 = vpop.permute.xlu0 %3516
      %3519 = vset.pattern.permute.xlu0 2
      %3520 = vperm.xlu0 %3519, %v595
      %v3521 = vpop.permute.xlu0 %3520
      %3523 = vset.pattern.permute.xlu0 2
      %3524 = vperm.xlu0 %3523, %v596
      %v3525 = vpop.permute.xlu0 %3524
      %3527 = vset.pattern.permute.xlu0 2
      %3528 = vperm.xlu0 %3527, %v597
      %v3529 = vpop.permute.xlu0 %3528
      %3531 = vset.pattern.permute.xlu0 2
      %3532 = vperm.xlu0 %3531, %v598
      %v3533 = vpop.permute.xlu0 %3532
      %3535 = vset.pattern.permute.xlu0 2
      %3536 = vperm.xlu0 %3535, %v599
      %v3537 = vpop.permute.xlu0 %3536
      %3539 = vset.pattern.permute.xlu0 2
      %3540 = vperm.xlu0 %3539, %v600
      %v3541 = vpop.permute.xlu0 %3540
      %3543 = vset.pattern.permute.xlu0 2
      %3544 = vperm.xlu0 %3543, %v601
      %v3545 = vpop.permute.xlu0 %3544
      %3547 = vset.pattern.permute.xlu0 2
      %3548 = vperm.xlu0 %3547, %v602
      %v3549 = vpop.permute.xlu0 %3548
      %3551 = vset.pattern.permute.xlu0 2
      %3552 = vperm.xlu0 %3551, %v603
      %v3553 = vpop.permute.xlu0 %3552
      %3555 = vset.pattern.permute.xlu0 2
      %3556 = vperm.xlu0 %3555, %v604
      %v3557 = vpop.permute.xlu0 %3556
      %3559 = vset.pattern.permute.xlu0 2
      %3560 = vperm.xlu0 %3559, %v605
      %v3561 = vpop.permute.xlu0 %3560
      %3563 = vset.pattern.permute.xlu0 2
      %3564 = vperm.xlu0 %3563, %v606
      %v3565 = vpop.permute.xlu0 %3564
      %3567 = vset.pattern.permute.xlu0 2
      %3568 = vperm.xlu0 %3567, %v607
      %v3569 = vpop.permute.xlu0 %3568
      %3571 = vset.pattern.permute.xlu0 2
      %3572 = vperm.xlu0 %3571, %v608
      %v3573 = vpop.permute.xlu0 %3572
      %3575 = vset.pattern.permute.xlu0 2
      %3576 = vperm.xlu0 %3575, %v609
      %v3577 = vpop.permute.xlu0 %3576
      %3579 = vset.pattern.permute.xlu0 2
      %3580 = vperm.xlu0 %3579, %v610
      %v3581 = vpop.permute.xlu0 %3580
      %3583 = vset.pattern.permute.xlu0 2
      %3584 = vperm.xlu0 %3583, %v611
      %v3585 = vpop.permute.xlu0 %3584
      %3587 = vset.pattern.permute.xlu0 2
      %3588 = vperm.xlu0 %3587, %v612
      %v3589 = vpop.permute.xlu0 %3588
      %3591 = vset.pattern.permute.xlu0 2
      %3592 = vperm.xlu0 %3591, %v613
      %v3593 = vpop.permute.xlu0 %3592
      %3595 = vset.pattern.permute.xlu0 2
      %3596 = vperm.xlu0 %3595, %v614
      %v3597 = vpop.permute.xlu0 %3596
      %3599 = vset.pattern.permute.xlu0 2
      %3600 = vperm.xlu0 %3599, %v615
      %v3601 = vpop.permute.xlu0 %3600
      %3603 = vset.pattern.permute.xlu0 2
      %3604 = vperm.xlu0 %3603, %v616
      %v3605 = vpop.permute.xlu0 %3604
      %3607 = vset.pattern.permute.xlu0 2
      %3608 = vperm.xlu0 %3607, %v617
      %v3609 = vpop.permute.xlu0 %3608
      %3611 = vset.pattern.permute.xlu0 2
      %3612 = vperm.xlu0 %3611, %v618
      %v3613 = vpop.permute.xlu0 %3612
      %3615 = vset.pattern.permute.xlu0 2
      %3616 = vperm.xlu0 %3615, %v619
      %v3617 = vpop.permute.xlu0 %3616
      %3619 = vset.pattern.permute.xlu0 2
      %3620 = vperm.xlu0 %3619, %v620
      %v3621 = vpop.permute.xlu0 %3620
      %3623 = vset.pattern.permute.xlu0 2
      %3624 = vperm.xlu0 %3623, %v621
      %v3625 = vpop.permute.xlu0 %3624
      %3627 = vset.pattern.permute.xlu0 2
      %3628 = vperm.xlu0 %3627, %v622
      %v3629 = vpop.permute.xlu0 %3628
      %3631 = vset.pattern.permute.xlu0 2
      %3632 = vperm.xlu0 %3631, %v623
      %v3633 = vpop.permute.xlu0 %3632
      %3635 = vset.pattern.permute.xlu0 2
      %3636 = vperm.xlu0 %3635, %v624
      %v3637 = vpop.permute.xlu0 %3636
      %3639 = vset.pattern.permute.xlu0 2
      %3640 = vperm.xlu0 %3639, %v625
      %v3641 = vpop.permute.xlu0 %3640
      %3643 = vset.pattern.permute.xlu0 2
      %3644 = vperm.xlu0 %3643, %v626
      %v3645 = vpop.permute.xlu0 %3644
      %3647 = vset.pattern.permute.xlu0 2
      %3648 = vperm.xlu0 %3647, %v627
      %v3649 = vpop.permute.xlu0 %3648
      %3651 = vset.pattern.permute.xlu0 2
      %3652 = vperm.xlu0 %3651, %v628
      %v3653 = vpop.permute.xlu0 %3652
      %3655 = vset.pattern.permute.xlu0 2
      %3656 = vperm.xlu0 %3655, %v629
      %v3657 = vpop.permute.xlu0 %3656
      %v3659 = vsel %vm3339, %v3405, 0.0
      %v3660 = vsel %vm3340, %v3409, 0.0
      %v3661 = vsel %vm3341, %v3413, 0.0
      %v3662 = vsel %vm3342, %v3417, 0.0
      %v3663 = vsel %vm3343, %v3421, 0.0
      %v3664 = vsel %vm3344, %v3425, 0.0
      %v3665 = vsel %vm3345, %v3429, 0.0
      %v3666 = vsel %vm3346, %v3433, 0.0
      %v3667 = vsel %vm3347, %v3437, 0.0
      %v3668 = vsel %vm3348, %v3441, 0.0
      %v3669 = vsel %vm3349, %v3445, 0.0
      %v3670 = vsel %vm3350, %v3449, 0.0
      %v3671 = vsel %vm3351, %v3453, 0.0
      %v3672 = vsel %vm3352, %v3457, 0.0
      %v3673 = vsel %vm3353, %v3461, 0.0
      %v3674 = vsel %vm3354, %v3465, 0.0
      %v3675 = vsel %vm3355, %v3469, 0.0
      %v3676 = vsel %vm3356, %v3473, 0.0
      %v3677 = vsel %vm3357, %v3477, 0.0
      %v3678 = vsel %vm3358, %v3481, 0.0
      %v3679 = vsel %vm3359, %v3485, 0.0
      %v3680 = vsel %vm3360, %v3489, 0.0
      %v3681 = vsel %vm3361, %v3493, 0.0
      %v3682 = vsel %vm3362, %v3497, 0.0
      %v3683 = vsel %vm3363, %v3501, 0.0
      %v3684 = vsel %vm3364, %v3505, 0.0
      %v3685 = vsel %vm3365, %v3509, 0.0
      %v3686 = vsel %vm3366, %v3513, 0.0
      %v3687 = vsel %vm3367, %v3517, 0.0
      %v3688 = vsel %vm3368, %v3521, 0.0
      %v3689 = vsel %vm3369, %v3525, 0.0
      %v3690 = vsel %vm3370, %v3529, 0.0
      %v3691 = vsel %vm3371, %v3533, 0.0
      %v3692 = vsel %vm3372, %v3537, 0.0
      %v3693 = vsel %vm3373, %v3541, 0.0
      %v3694 = vsel %vm3374, %v3545, 0.0
      %v3695 = vsel %vm3375, %v3549, 0.0
      %v3696 = vsel %vm3376, %v3553, 0.0
      %v3697 = vsel %vm3377, %v3557, 0.0
      %v3698 = vsel %vm3378, %v3561, 0.0
      %v3699 = vsel %vm3379, %v3565, 0.0
      %v3700 = vsel %vm3380, %v3569, 0.0
      %v3701 = vsel %vm3381, %v3573, 0.0
      %v3702 = vsel %vm3382, %v3577, 0.0
      %v3703 = vsel %vm3383, %v3581, 0.0
      %v3704 = vsel %vm3384, %v3585, 0.0
      %v3705 = vsel %vm3385, %v3589, 0.0
      %v3706 = vsel %vm3386, %v3593, 0.0
      %v3707 = vsel %vm3387, %v3597, 0.0
      %v3708 = vsel %vm3388, %v3601, 0.0
      %v3709 = vsel %vm3389, %v3605, 0.0
      %v3710 = vsel %vm3390, %v3609, 0.0
      %v3711 = vsel %vm3391, %v3613, 0.0
      %v3712 = vsel %vm3392, %v3617, 0.0
      %v3713 = vsel %vm3393, %v3621, 0.0
      %v3714 = vsel %vm3394, %v3625, 0.0
      %v3715 = vsel %vm3395, %v3629, 0.0
      %v3716 = vsel %vm3396, %v3633, 0.0
      %v3717 = vsel %vm3397, %v3637, 0.0
      %v3718 = vsel %vm3398, %v3641, 0.0
      %v3719 = vsel %vm3399, %v3645, 0.0
      %v3720 = vsel %vm3400, %v3649, 0.0
      %v3721 = vsel %vm3401, %v3653, 0.0
      %v3722 = vsel %vm3402, %v3657, 0.0
      %3723 = vmatprep.subr.mxu0 0.0
      %3724 = vmatpush1.msra.mxu0 %v1145
      %3725 = vmatprep.subr.mxu0 0.0
      %3726 = vmatpush1.msra.mxu0 %v1146
      %3727 = vmatprep.subr.mxu0 0.0
      %3728 = vmatpush1.msra.mxu0 %v1147
      %3729 = vmatprep.subr.mxu0 0.0
      %3730 = vmatpush1.msra.mxu0 %v1148
      %3731 = vmatprep.subr.mxu0 0.0
      %3732 = vmatpush1.msra.mxu0 %v1149
      %3733 = vmatprep.subr.mxu0 0.0
      %3734 = vmatpush1.msra.mxu0 %v1150
      %3735 = vmatprep.subr.mxu0 0.0
      %3736 = vmatpush1.msra.mxu0 %v1151
      %3737 = vmatprep.subr.mxu0 0.0
      %3738 = vmatpush1.msra.mxu0 %v1152
      %3739 = vmatprep.subr.mxu0 0.0
      %3740 = vmatpush1.msra.mxu0 %v1153
      %3741 = vmatprep.subr.mxu0 0.0
      %3742 = vmatpush1.msra.mxu0 %v1154
      %3743 = vmatprep.subr.mxu0 0.0
      %3744 = vmatpush1.msra.mxu0 %v1155
      %3745 = vmatprep.subr.mxu0 0.0
      %3746 = vmatpush1.msra.mxu0 %v1156
      %3747 = vmatprep.subr.mxu0 0.0
      %3748 = vmatpush1.msra.mxu0 %v1157
      %3749 = vmatprep.subr.mxu0 0.0
      %3750 = vmatpush1.msra.mxu0 %v1158
      %3751 = vmatprep.subr.mxu0 0.0
      %3752 = vmatpush1.msra.mxu0 %v1159
      %3753 = vmatprep.subr.mxu0 0.0
      %3754 = vmatpush1.msra.mxu0 %v1160
      %3755 = vmatprep.subr.mxu0 0.0
      %3756 = vmatpush1.msra.mxu0 0.0
      %3757 = vmatprep.subr.mxu0 0.0
      %3758 = vmatpush1.msra.mxu0 0.0
      %3759 = vmatprep.subr.mxu0 0.0
      %3760 = vmatpush1.msra.mxu0 0.0
      %3761 = vmatprep.subr.mxu0 0.0
      %3762 = vmatpush1.msra.mxu0 0.0
      %3763 = vmatprep.subr.mxu0 0.0
      %3764 = vmatpush1.msra.mxu0 0.0
      %3765 = vmatprep.subr.mxu0 0.0
      %3766 = vmatpush1.msra.mxu0 0.0
      %3767 = vmatprep.subr.mxu0 0.0
      %3768 = vmatpush1.msra.mxu0 0.0
      %3769 = vmatprep.subr.mxu0 0.0
      %3770 = vmatpush1.msra.mxu0 0.0
      %3771 = vmatprep.subr.mxu0 0.0
      %3772 = vmatpush1.msra.mxu0 0.0
      %3773 = vmatprep.subr.mxu0 0.0
      %3774 = vmatpush1.msra.mxu0 0.0
      %3775 = vmatprep.subr.mxu0 0.0
      %3776 = vmatpush1.msra.mxu0 0.0
      %3777 = vmatprep.subr.mxu0 0.0
      %3778 = vmatpush1.msra.mxu0 0.0
      %3779 = vmatprep.subr.mxu0 0.0
      %3780 = vmatpush1.msra.mxu0 0.0
      %3781 = vmatprep.subr.mxu0 0.0
      %3782 = vmatpush1.msra.mxu0 0.0
      %3783 = vmatprep.subr.mxu0 0.0
      %3784 = vmatpush1.msra.mxu0 0.0
      %3785 = vmatprep.subr.mxu0 0.0
      %3786 = vmatpush1.msra.mxu0 0.0
      %3787 = vmatprep.mubr.f32.mxu0 0.0
      %3788 = vmatmul.mubr.f32.gmra.mrb[0].mxu0 %v3659
      %v3789 = vpop.f32.mrb[0].mxu0
      %v3790 = vadd.f32 0.0, %v3789
      %v3791 = vpop.f32.mrb[0].mxu0
      %3792 = vmatprep.mubr.f32.mxu0 0.0
      %3793 = vmatmul.mubr.f32.gmra.mrb[0].mxu0 %v3660
      %v3794 = vpop.f32.mrb[0].mxu0
      %v3795 = vadd.f32 0.0, %v3794
      %v3796 = vpop.f32.mrb[0].mxu0
      %3797 = vmatprep.mubr.f32.mxu0 0.0
      %3798 = vmatmul.mubr.f32.gmra.mrb[0].mxu0 %v3661
      %v3799 = vpop.f32.mrb[0].mxu0
      %v3800 = vadd.f32 0.0, %v3799
      %v3801 = vpop.f32.mrb[0].mxu0
      %3802 = vmatprep.mubr.f32.mxu0 0.0
      %3803 = vmatmul.mubr.f32.gmra.mrb[0].mxu0 %v3662
      %v3804 = vpop.f32.mrb[0].mxu0
      %v3805 = vadd.f32 0.0, %v3804
      %v3806 = vpop.f32.mrb[0].mxu0
      %3807 = vmatprep.mubr.f32.mxu0 0.0
      %3808 = vmatmul.mubr.f32.gmra.mrb[0].mxu0 %v3663
      %v3809 = vpop.f32.mrb[0].mxu0
      %v3810 = vadd.f32 0.0, %v3809
      %v3811 = vpop.f32.mrb[0].mxu0
      %3812 = vmatprep.mubr.f32.mxu0 0.0
      %3813 = vmatmul.mubr.f32.gmra.mrb[0].mxu0 %v3664
      %v3814 = vpop.f32.mrb[0].mxu0
      %v3815 = vadd.f32 0.0, %v3814
      %v3816 = vpop.f32.mrb[0].mxu0
      %3817 = vmatprep.mubr.f32.mxu0 0.0
      %3818 = vmatmul.mubr.f32.gmra.mrb[0].mxu0 %v3665
      %v3819 = vpop.f32.mrb[0].mxu0
      %v3820 = vadd.f32 0.0, %v3819
      %v3821 = vpop.f32.mrb[0].mxu0
      %3822 = vmatprep.mubr.f32.mxu0 0.0
      %3823 = vmatmul.mubr.f32.gmra.mrb[0].mxu0 %v3666
      %v3824 = vpop.f32.mrb[0].mxu0
      %v3825 = vadd.f32 0.0, %v3824
      %v3826 = vpop.f32.mrb[0].mxu0
      %3827 = vmatprep.mubr.f32.mxu0 0.0
      %3828 = vmatmul.mubr.f32.gmra.mrb[0].mxu0 %v3667
      %v3829 = vpop.f32.mrb[0].mxu0
      %v3830 = vadd.f32 0.0, %v3829
      %v3831 = vpop.f32.mrb[0].mxu0
      %3832 = vmatprep.mubr.f32.mxu0 0.0
      %3833 = vmatmul.mubr.f32.gmra.mrb[0].mxu0 %v3668
      %v3834 = vpop.f32.mrb[0].mxu0
      %v3835 = vadd.f32 0.0, %v3834
      %v3836 = vpop.f32.mrb[0].mxu0
      %3837 = vmatprep.mubr.f32.mxu0 0.0
      %3838 = vmatmul.mubr.f32.gmra.mrb[0].mxu0 %v3669
      %v3839 = vpop.f32.mrb[0].mxu0
      %v3840 = vadd.f32 0.0, %v3839
      %v3841 = vpop.f32.mrb[0].mxu0
      %3842 = vmatprep.mubr.f32.mxu0 0.0
      %3843 = vmatmul.mubr.f32.gmra.mrb[0].mxu0 %v3670
      %v3844 = vpop.f32.mrb[0].mxu0
      %v3845 = vadd.f32 0.0, %v3844
      %v3846 = vpop.f32.mrb[0].mxu0
      %3847 = vmatprep.mubr.f32.mxu0 0.0
      %3848 = vmatmul.mubr.f32.gmra.mrb[0].mxu0 %v3671
      %v3849 = vpop.f32.mrb[0].mxu0
      %v3850 = vadd.f32 0.0, %v3849
      %v3851 = vpop.f32.mrb[0].mxu0
      %3852 = vmatprep.mubr.f32.mxu0 0.0
      %3853 = vmatmul.mubr.f32.gmra.mrb[0].mxu0 %v3672
      %v3854 = vpop.f32.mrb[0].mxu0
      %v3855 = vadd.f32 0.0, %v3854
      %v3856 = vpop.f32.mrb[0].mxu0
      %3857 = vmatprep.mubr.f32.mxu0 0.0
      %3858 = vmatmul.mubr.f32.gmra.mrb[0].mxu0 %v3673
      %v3859 = vpop.f32.mrb[0].mxu0
      %v3860 = vadd.f32 0.0, %v3859
      %v3861 = vpop.f32.mrb[0].mxu0
      %3862 = vmatprep.mubr.f32.mxu0 0.0
      %3863 = vmatmul.mubr.f32.gmra.mrb[0].mxu0 %v3674
      %v3864 = vpop.f32.mrb[0].mxu0
      %v3865 = vadd.f32 0.0, %v3864
      %v3866 = vpop.f32.mrb[0].mxu0
      %3867 = vmatprep.mubr.f32.mxu0 0.0
      %3868 = vmatmul.mubr.f32.gmra.mrb[0].mxu0 %v3675
      %v3869 = vpop.f32.mrb[0].mxu0
      %v3870 = vadd.f32 0.0, %v3869
      %v3871 = vpop.f32.mrb[0].mxu0
      %3872 = vmatprep.mubr.f32.mxu0 0.0
      %3873 = vmatmul.mubr.f32.gmra.mrb[0].mxu0 %v3676
      %v3874 = vpop.f32.mrb[0].mxu0
      %v3875 = vadd.f32 0.0, %v3874
      %v3876 = vpop.f32.mrb[0].mxu0
      %3877 = vmatprep.mubr.f32.mxu0 0.0
      %3878 = vmatmul.mubr.f32.gmra.mrb[0].mxu0 %v3677
      %v3879 = vpop.f32.mrb[0].mxu0
      %v3880 = vadd.f32 0.0, %v3879
      %v3881 = vpop.f32.mrb[0].mxu0
      %3882 = vmatprep.mubr.f32.mxu0 0.0
      %3883 = vmatmul.mubr.f32.gmra.mrb[0].mxu0 %v3678
      %v3884 = vpop.f32.mrb[0].mxu0
      %v3885 = vadd.f32 0.0, %v3884
      %v3886 = vpop.f32.mrb[0].mxu0
      %3887 = vmatprep.mubr.f32.mxu0 0.0
      %3888 = vmatmul.mubr.f32.gmra.mrb[0].mxu0 %v3679
      %v3889 = vpop.f32.mrb[0].mxu0
      %v3890 = vadd.f32 0.0, %v3889
      %v3891 = vpop.f32.mrb[0].mxu0
      %3892 = vmatprep.mubr.f32.mxu0 0.0
      %3893 = vmatmul.mubr.f32.gmra.mrb[0].mxu0 %v3680
      %v3894 = vpop.f32.mrb[0].mxu0
      %v3895 = vadd.f32 0.0, %v3894
      %v3896 = vpop.f32.mrb[0].mxu0
      %3897 = vmatprep.mubr.f32.mxu0 0.0
      %3898 = vmatmul.mubr.f32.gmra.mrb[0].mxu0 %v3681
      %v3899 = vpop.f32.mrb[0].mxu0
      %v3900 = vadd.f32 0.0, %v3899
      %v3901 = vpop.f32.mrb[0].mxu0
      %3902 = vmatprep.mubr.f32.mxu0 0.0
      %3903 = vmatmul.mubr.f32.gmra.mrb[0].mxu0 %v3682
      %v3904 = vpop.f32.mrb[0].mxu0
      %v3905 = vadd.f32 0.0, %v3904
      %v3906 = vpop.f32.mrb[0].mxu0
      %3907 = vmatprep.mubr.f32.mxu0 0.0
      %3908 = vmatmul.mubr.f32.gmra.mrb[0].mxu0 %v3683
      %v3909 = vpop.f32.mrb[0].mxu0
      %v3910 = vadd.f32 0.0, %v3909
      %v3911 = vpop.f32.mrb[0].mxu0
      %3912 = vmatprep.mubr.f32.mxu0 0.0
      %3913 = vmatmul.mubr.f32.gmra.mrb[0].mxu0 %v3684
      %v3914 = vpop.f32.mrb[0].mxu0
      %v3915 = vadd.f32 0.0, %v3914
      %v3916 = vpop.f32.mrb[0].mxu0
      %3917 = vmatprep.mubr.f32.mxu0 0.0
      %3918 = vmatmul.mubr.f32.gmra.mrb[0].mxu0 %v3685
      %v3919 = vpop.f32.mrb[0].mxu0
      %v3920 = vadd.f32 0.0, %v3919
      %v3921 = vpop.f32.mrb[0].mxu0
      %3922 = vmatprep.mubr.f32.mxu0 0.0
      %3923 = vmatmul.mubr.f32.gmra.mrb[0].mxu0 %v3686
      %v3924 = vpop.f32.mrb[0].mxu0
      %v3925 = vadd.f32 0.0, %v3924
      %v3926 = vpop.f32.mrb[0].mxu0
      %3927 = vmatprep.mubr.f32.mxu0 0.0
      %3928 = vmatmul.mubr.f32.gmra.mrb[0].mxu0 %v3687
      %v3929 = vpop.f32.mrb[0].mxu0
      %v3930 = vadd.f32 0.0, %v3929
      %v3931 = vpop.f32.mrb[0].mxu0
      %3932 = vmatprep.mubr.f32.mxu0 0.0
      %3933 = vmatmul.mubr.f32.gmra.mrb[0].mxu0 %v3688
      %v3934 = vpop.f32.mrb[0].mxu0
      %v3935 = vadd.f32 0.0, %v3934
      %v3936 = vpop.f32.mrb[0].mxu0
      %3937 = vmatprep.mubr.f32.mxu0 0.0
      %3938 = vmatmul.mubr.f32.gmra.mrb[0].mxu0 %v3689
      %v3939 = vpop.f32.mrb[0].mxu0
      %v3940 = vadd.f32 0.0, %v3939
      %v3941 = vpop.f32.mrb[0].mxu0
      %3942 = vmatprep.mubr.f32.mxu0 0.0
      %3943 = vmatmul.mubr.f32.gmra.mrb[0].mxu0 %v3690
      %v3944 = vpop.f32.mrb[0].mxu0
      %v3945 = vadd.f32 0.0, %v3944
      %v3946 = vpop.f32.mrb[0].mxu0
      %3947 = vmatprep.mubr.f32.mxu0 0.0
      %3948 = vmatmul.mubr.f32.gmra.mrb[0].mxu0 %v3691
      %v3949 = vpop.f32.mrb[0].mxu0
      %v3950 = vadd.f32 0.0, %v3949
      %v3951 = vpop.f32.mrb[0].mxu0
      %3952 = vmatprep.mubr.f32.mxu0 0.0
      %3953 = vmatmul.mubr.f32.gmra.mrb[0].mxu0 %v3692
      %v3954 = vpop.f32.mrb[0].mxu0
      %v3955 = vadd.f32 0.0, %v3954
      %v3956 = vpop.f32.mrb[0].mxu0
      %3957 = vmatprep.mubr.f32.mxu0 0.0
      %3958 = vmatmul.mubr.f32.gmra.mrb[0].mxu0 %v3693
      %v3959 = vpop.f32.mrb[0].mxu0
      %v3960 = vadd.f32 0.0, %v3959
      %v3961 = vpop.f32.mrb[0].mxu0
      %3962 = vmatprep.mubr.f32.mxu0 0.0
      %3963 = vmatmul.mubr.f32.gmra.mrb[0].mxu0 %v3694
      %v3964 = vpop.f32.mrb[0].mxu0
      %v3965 = vadd.f32 0.0, %v3964
      %v3966 = vpop.f32.mrb[0].mxu0
      %3967 = vmatprep.mubr.f32.mxu0 0.0
      %3968 = vmatmul.mubr.f32.gmra.mrb[0].mxu0 %v3695
      %v3969 = vpop.f32.mrb[0].mxu0
      %v3970 = vadd.f32 0.0, %v3969
      %v3971 = vpop.f32.mrb[0].mxu0
      %3972 = vmatprep.mubr.f32.mxu0 0.0
      %3973 = vmatmul.mubr.f32.gmra.mrb[0].mxu0 %v3696
      %v3974 = vpop.f32.mrb[0].mxu0
      %v3975 = vadd.f32 0.0, %v3974
      %v3976 = vpop.f32.mrb[0].mxu0
      %3977 = vmatprep.mubr.f32.mxu0 0.0
      %3978 = vmatmul.mubr.f32.gmra.mrb[0].mxu0 %v3697
      %v3979 = vpop.f32.mrb[0].mxu0
      %v3980 = vadd.f32 0.0, %v3979
      %v3981 = vpop.f32.mrb[0].mxu0
      %3982 = vmatprep.mubr.f32.mxu0 0.0
      %3983 = vmatmul.mubr.f32.gmra.mrb[0].mxu0 %v3698
      %v3984 = vpop.f32.mrb[0].mxu0
      %v3985 = vadd.f32 0.0, %v3984
      %v3986 = vpop.f32.mrb[0].mxu0
      %3987 = vmatprep.mubr.f32.mxu0 0.0
      %3988 = vmatmul.mubr.f32.gmra.mrb[0].mxu0 %v3699
      %v3989 = vpop.f32.mrb[0].mxu0
      %v3990 = vadd.f32 0.0, %v3989
      %v3991 = vpop.f32.mrb[0].mxu0
      %3992 = vmatprep.mubr.f32.mxu0 0.0
      %3993 = vmatmul.mubr.f32.gmra.mrb[0].mxu0 %v3700
      %v3994 = vpop.f32.mrb[0].mxu0
      %v3995 = vadd.f32 0.0, %v3994
      %v3996 = vpop.f32.mrb[0].mxu0
      %3997 = vmatprep.mubr.f32.mxu0 0.0
      %3998 = vmatmul.mubr.f32.gmra.mrb[0].mxu0 %v3701
      %v3999 = vpop.f32.mrb[0].mxu0
      %v4000 = vadd.f32 0.0, %v3999
      %v4001 = vpop.f32.mrb[0].mxu0
      %4002 = vmatprep.mubr.f32.mxu0 0.0
      %4003 = vmatmul.mubr.f32.gmra.mrb[0].mxu0 %v3702
      %v4004 = vpop.f32.mrb[0].mxu0
      %v4005 = vadd.f32 0.0, %v4004
      %v4006 = vpop.f32.mrb[0].mxu0
      %4007 = vmatprep.mubr.f32.mxu0 0.0
      %4008 = vmatmul.mubr.f32.gmra.mrb[0].mxu0 %v3703
      %v4009 = vpop.f32.mrb[0].mxu0
      %v4010 = vadd.f32 0.0, %v4009
      %v4011 = vpop.f32.mrb[0].mxu0
      %4012 = vmatprep.mubr.f32.mxu0 0.0
      %4013 = vmatmul.mubr.f32.gmra.mrb[0].mxu0 %v3704
      %v4014 = vpop.f32.mrb[0].mxu0
      %v4015 = vadd.f32 0.0, %v4014
      %v4016 = vpop.f32.mrb[0].mxu0
      %4017 = vmatprep.mubr.f32.mxu0 0.0
      %4018 = vmatmul.mubr.f32.gmra.mrb[0].mxu0 %v3705
      %v4019 = vpop.f32.mrb[0].mxu0
      %v4020 = vadd.f32 0.0, %v4019
      %v4021 = vpop.f32.mrb[0].mxu0
      %4022 = vmatprep.mubr.f32.mxu0 0.0
      %4023 = vmatmul.mubr.f32.gmra.mrb[0].mxu0 %v3706
      %v4024 = vpop.f32.mrb[0].mxu0
      %v4025 = vadd.f32 0.0, %v4024
      %v4026 = vpop.f32.mrb[0].mxu0
      %4027 = vmatprep.mubr.f32.mxu0 0.0
      %4028 = vmatmul.mubr.f32.gmra.mrb[0].mxu0 %v3707
      %v4029 = vpop.f32.mrb[0].mxu0
      %v4030 = vadd.f32 0.0, %v4029
      %v4031 = vpop.f32.mrb[0].mxu0
      %4032 = vmatprep.mubr.f32.mxu0 0.0
      %4033 = vmatmul.mubr.f32.gmra.mrb[0].mxu0 %v3708
      %v4034 = vpop.f32.mrb[0].mxu0
      %v4035 = vadd.f32 0.0, %v4034
      %v4036 = vpop.f32.mrb[0].mxu0
      %4037 = vmatprep.mubr.f32.mxu0 0.0
      %4038 = vmatmul.mubr.f32.gmra.mrb[0].mxu0 %v3709
      %v4039 = vpop.f32.mrb[0].mxu0
      %v4040 = vadd.f32 0.0, %v4039
      %v4041 = vpop.f32.mrb[0].mxu0
      %4042 = vmatprep.mubr.f32.mxu0 0.0
      %4043 = vmatmul.mubr.f32.gmra.mrb[0].mxu0 %v3710
      %v4044 = vpop.f32.mrb[0].mxu0
      %v4045 = vadd.f32 0.0, %v4044
      %v4046 = vpop.f32.mrb[0].mxu0
      %4047 = vmatprep.mubr.f32.mxu0 0.0
      %4048 = vmatmul.mubr.f32.gmra.mrb[0].mxu0 %v3711
      %v4049 = vpop.f32.mrb[0].mxu0
      %v4050 = vadd.f32 0.0, %v4049
      %v4051 = vpop.f32.mrb[0].mxu0
      %4052 = vmatprep.mubr.f32.mxu0 0.0
      %4053 = vmatmul.mubr.f32.gmra.mrb[0].mxu0 %v3712
      %v4054 = vpop.f32.mrb[0].mxu0
      %v4055 = vadd.f32 0.0, %v4054
      %v4056 = vpop.f32.mrb[0].mxu0
      %4057 = vmatprep.mubr.f32.mxu0 0.0
      %4058 = vmatmul.mubr.f32.gmra.mrb[0].mxu0 %v3713
      %v4059 = vpop.f32.mrb[0].mxu0
      %v4060 = vadd.f32 0.0, %v4059
      %v4061 = vpop.f32.mrb[0].mxu0
      %4062 = vmatprep.mubr.f32.mxu0 0.0
      %4063 = vmatmul.mubr.f32.gmra.mrb[0].mxu0 %v3714
      %v4064 = vpop.f32.mrb[0].mxu0
      %v4065 = vadd.f32 0.0, %v4064
      %v4066 = vpop.f32.mrb[0].mxu0
      %4067 = vmatprep.mubr.f32.mxu0 0.0
      %4068 = vmatmul.mubr.f32.gmra.mrb[0].mxu0 %v3715
      %v4069 = vpop.f32.mrb[0].mxu0
      %v4070 = vadd.f32 0.0, %v4069
      %v4071 = vpop.f32.mrb[0].mxu0
      %4072 = vmatprep.mubr.f32.mxu0 0.0
      %4073 = vmatmul.mubr.f32.gmra.mrb[0].mxu0 %v3716
      %v4074 = vpop.f32.mrb[0].mxu0
      %v4075 = vadd.f32 0.0, %v4074
      %v4076 = vpop.f32.mrb[0].mxu0
      %4077 = vmatprep.mubr.f32.mxu0 0.0
      %4078 = vmatmul.mubr.f32.gmra.mrb[0].mxu0 %v3717
      %v4079 = vpop.f32.mrb[0].mxu0
      %v4080 = vadd.f32 0.0, %v4079
      %v4081 = vpop.f32.mrb[0].mxu0
      %4082 = vmatprep.mubr.f32.mxu0 0.0
      %4083 = vmatmul.mubr.f32.gmra.mrb[0].mxu0 %v3718
      %v4084 = vpop.f32.mrb[0].mxu0
      %v4085 = vadd.f32 0.0, %v4084
      %v4086 = vpop.f32.mrb[0].mxu0
      %4087 = vmatprep.mubr.f32.mxu0 0.0
      %4088 = vmatmul.mubr.f32.gmra.mrb[0].mxu0 %v3719
      %v4089 = vpop.f32.mrb[0].mxu0
      %v4090 = vadd.f32 0.0, %v4089
      %v4091 = vpop.f32.mrb[0].mxu0
      %4092 = vmatprep.mubr.f32.mxu0 0.0
      %4093 = vmatmul.mubr.f32.gmra.mrb[0].mxu0 %v3720
      %v4094 = vpop.f32.mrb[0].mxu0
      %v4095 = vadd.f32 0.0, %v4094
      %v4096 = vpop.f32.mrb[0].mxu0
      %4097 = vmatprep.mubr.f32.mxu0 0.0
      %4098 = vmatmul.mubr.f32.gmra.mrb[0].mxu0 %v3721
      %v4099 = vpop.f32.mrb[0].mxu0
      %v4100 = vadd.f32 0.0, %v4099
      %v4101 = vpop.f32.mrb[0].mxu0
      %4102 = vmatprep.mubr.f32.mxu0 0.0
      %4103 = vmatmul.mubr.f32.gmra.mrb[0].mxu0 %v3722
      %v4104 = vpop.f32.mrb[0].mxu0
      %v4105 = vadd.f32 0.0, %v4104
      %v4106 = vpop.f32.mrb[0].mxu0
      %4107 = vdwg.mxu0
      %v4108 = vadd.f32 %v2829, %v3790
      %v4109 = vadd.f32 %v2834, %v3795
      %v4110 = vadd.f32 %v2839, %v3800
      %v4111 = vadd.f32 %v2844, %v3805
      %v4112 = vadd.f32 %v2849, %v3810
      %v4113 = vadd.f32 %v2854, %v3815
      %v4114 = vadd.f32 %v2859, %v3820
      %v4115 = vadd.f32 %v2864, %v3825
      %v4116 = vadd.f32 %v2869, %v3830
      %v4117 = vadd.f32 %v2874, %v3835
      %v4118 = vadd.f32 %v2879, %v3840
      %v4119 = vadd.f32 %v2884, %v3845
      %v4120 = vadd.f32 %v2889, %v3850
      %v4121 = vadd.f32 %v2894, %v3855
      %v4122 = vadd.f32 %v2899, %v3860
      %v4123 = vadd.f32 %v2904, %v3865
      %v4124 = vadd.f32 %v2909, %v3870
      %v4125 = vadd.f32 %v2914, %v3875
      %v4126 = vadd.f32 %v2919, %v3880
      %v4127 = vadd.f32 %v2924, %v3885
      %v4128 = vadd.f32 %v2929, %v3890
      %v4129 = vadd.f32 %v2934, %v3895
      %v4130 = vadd.f32 %v2939, %v3900
      %v4131 = vadd.f32 %v2944, %v3905
      %v4132 = vadd.f32 %v2949, %v3910
      %v4133 = vadd.f32 %v2954, %v3915
      %v4134 = vadd.f32 %v2959, %v3920
      %v4135 = vadd.f32 %v2964, %v3925
      %v4136 = vadd.f32 %v2969, %v3930
      %v4137 = vadd.f32 %v2974, %v3935
      %v4138 = vadd.f32 %v2979, %v3940
      %v4139 = vadd.f32 %v2984, %v3945
      %v4140 = vadd.f32 %v2989, %v3950
      %v4141 = vadd.f32 %v2994, %v3955
      %v4142 = vadd.f32 %v2999, %v3960
      %v4143 = vadd.f32 %v3004, %v3965
      %v4144 = vadd.f32 %v3009, %v3970
      %v4145 = vadd.f32 %v3014, %v3975
      %v4146 = vadd.f32 %v3019, %v3980
      %v4147 = vadd.f32 %v3024, %v3985
      %v4148 = vadd.f32 %v3029, %v3990
      %v4149 = vadd.f32 %v3034, %v3995
      %v4150 = vadd.f32 %v3039, %v4000
      %v4151 = vadd.f32 %v3044, %v4005
      %v4152 = vadd.f32 %v3049, %v4010
      %v4153 = vadd.f32 %v3054, %v4015
      %v4154 = vadd.f32 %v3059, %v4020
      %v4155 = vadd.f32 %v3064, %v4025
      %v4156 = vadd.f32 %v3069, %v4030
      %v4157 = vadd.f32 %v3074, %v4035
      %v4158 = vadd.f32 %v3079, %v4040
      %v4159 = vadd.f32 %v3084, %v4045
      %v4160 = vadd.f32 %v3089, %v4050
      %v4161 = vadd.f32 %v3094, %v4055
      %v4162 = vadd.f32 %v3099, %v4060
      %v4163 = vadd.f32 %v3104, %v4065
      %v4164 = vadd.f32 %v3109, %v4070
      %v4165 = vadd.f32 %v3114, %v4075
      %v4166 = vadd.f32 %v3119, %v4080
      %v4167 = vadd.f32 %v3124, %v4085
      %v4168 = vadd.f32 %v3129, %v4090
      %v4169 = vadd.f32 %v3134, %v4095
      %v4170 = vadd.f32 %v3139, %v4100
      %v4171 = vadd.f32 %v3144, %v4105
      %4172 = vset.pattern.permute.xlu0 3
      %4173 = vperm.xlu0 %4172, %v246
      %v4174 = vpop.permute.xlu0 %4173
      %4175 = vset.pattern.permute.xlu0 3
      %4176 = vperm.xlu0 %4175, %v247
      %v4177 = vpop.permute.xlu0 %4176
      %4178 = vset.pattern.permute.xlu0 3
      %4179 = vperm.xlu0 %4178, %v248
      %v4180 = vpop.permute.xlu0 %4179
      %4181 = vset.pattern.permute.xlu0 3
      %4182 = vperm.xlu0 %4181, %v249
      %v4183 = vpop.permute.xlu0 %4182
      %4184 = vset.pattern.permute.xlu0 3
      %4185 = vperm.xlu0 %4184, %v250
      %v4186 = vpop.permute.xlu0 %4185
      %4187 = vset.pattern.permute.xlu0 3
      %4188 = vperm.xlu0 %4187, %v251
      %v4189 = vpop.permute.xlu0 %4188
      %4190 = vset.pattern.permute.xlu0 3
      %4191 = vperm.xlu0 %4190, %v252
      %v4192 = vpop.permute.xlu0 %4191
      %4193 = vset.pattern.permute.xlu0 3
      %4194 = vperm.xlu0 %4193, %v253
      %v4195 = vpop.permute.xlu0 %4194
      %4196 = vset.pattern.permute.xlu0 3
      %4197 = vperm.xlu0 %4196, %v254
      %v4198 = vpop.permute.xlu0 %4197
      %4199 = vset.pattern.permute.xlu0 3
      %4200 = vperm.xlu0 %4199, %v255
      %v4201 = vpop.permute.xlu0 %4200
      %4202 = vset.pattern.permute.xlu0 3
      %4203 = vperm.xlu0 %4202, %v256
      %v4204 = vpop.permute.xlu0 %4203
      %4205 = vset.pattern.permute.xlu0 3
      %4206 = vperm.xlu0 %4205, %v257
      %v4207 = vpop.permute.xlu0 %4206
      %4208 = vset.pattern.permute.xlu0 3
      %4209 = vperm.xlu0 %4208, %v258
      %v4210 = vpop.permute.xlu0 %4209
      %4211 = vset.pattern.permute.xlu0 3
      %4212 = vperm.xlu0 %4211, %v259
      %v4213 = vpop.permute.xlu0 %4212
      %4214 = vset.pattern.permute.xlu0 3
      %4215 = vperm.xlu0 %4214, %v260
      %v4216 = vpop.permute.xlu0 %4215
      %4217 = vset.pattern.permute.xlu0 3
      %4218 = vperm.xlu0 %4217, %v261
      %v4219 = vpop.permute.xlu0 %4218
      %4220 = vset.pattern.permute.xlu0 3
      %4221 = vperm.xlu0 %4220, %v262
      %v4222 = vpop.permute.xlu0 %4221
      %4223 = vset.pattern.permute.xlu0 3
      %4224 = vperm.xlu0 %4223, %v263
      %v4225 = vpop.permute.xlu0 %4224
      %4226 = vset.pattern.permute.xlu0 3
      %4227 = vperm.xlu0 %4226, %v264
      %v4228 = vpop.permute.xlu0 %4227
      %4229 = vset.pattern.permute.xlu0 3
      %4230 = vperm.xlu0 %4229, %v265
      %v4231 = vpop.permute.xlu0 %4230
      %4232 = vset.pattern.permute.xlu0 3
      %4233 = vperm.xlu0 %4232, %v266
      %v4234 = vpop.permute.xlu0 %4233
      %4235 = vset.pattern.permute.xlu0 3
      %4236 = vperm.xlu0 %4235, %v267
      %v4237 = vpop.permute.xlu0 %4236
      %4238 = vset.pattern.permute.xlu0 3
      %4239 = vperm.xlu0 %4238, %v268
      %v4240 = vpop.permute.xlu0 %4239
      %4241 = vset.pattern.permute.xlu0 3
      %4242 = vperm.xlu0 %4241, %v269
      %v4243 = vpop.permute.xlu0 %4242
      %4244 = vset.pattern.permute.xlu0 3
      %4245 = vperm.xlu0 %4244, %v270
      %v4246 = vpop.permute.xlu0 %4245
      %4247 = vset.pattern.permute.xlu0 3
      %4248 = vperm.xlu0 %4247, %v271
      %v4249 = vpop.permute.xlu0 %4248
      %4250 = vset.pattern.permute.xlu0 3
      %4251 = vperm.xlu0 %4250, %v272
      %v4252 = vpop.permute.xlu0 %4251
      %4253 = vset.pattern.permute.xlu0 3
      %4254 = vperm.xlu0 %4253, %v273
      %v4255 = vpop.permute.xlu0 %4254
      %4256 = vset.pattern.permute.xlu0 3
      %4257 = vperm.xlu0 %4256, %v274
      %v4258 = vpop.permute.xlu0 %4257
      %4259 = vset.pattern.permute.xlu0 3
      %4260 = vperm.xlu0 %4259, %v275
      %v4261 = vpop.permute.xlu0 %4260
      %4262 = vset.pattern.permute.xlu0 3
      %4263 = vperm.xlu0 %4262, %v276
      %v4264 = vpop.permute.xlu0 %4263
      %4265 = vset.pattern.permute.xlu0 3
      %4266 = vperm.xlu0 %4265, %v277
      %v4267 = vpop.permute.xlu0 %4266
      %4268 = vset.pattern.permute.xlu0 3
      %4269 = vperm.xlu0 %4268, %v278
      %v4270 = vpop.permute.xlu0 %4269
      %4271 = vset.pattern.permute.xlu0 3
      %4272 = vperm.xlu0 %4271, %v279
      %v4273 = vpop.permute.xlu0 %4272
      %4274 = vset.pattern.permute.xlu0 3
      %4275 = vperm.xlu0 %4274, %v280
      %v4276 = vpop.permute.xlu0 %4275
      %4277 = vset.pattern.permute.xlu0 3
      %4278 = vperm.xlu0 %4277, %v281
      %v4279 = vpop.permute.xlu0 %4278
      %4280 = vset.pattern.permute.xlu0 3
      %4281 = vperm.xlu0 %4280, %v282
      %v4282 = vpop.permute.xlu0 %4281
      %4283 = vset.pattern.permute.xlu0 3
      %4284 = vperm.xlu0 %4283, %v283
      %v4285 = vpop.permute.xlu0 %4284
      %4286 = vset.pattern.permute.xlu0 3
      %4287 = vperm.xlu0 %4286, %v284
      %v4288 = vpop.permute.xlu0 %4287
      %4289 = vset.pattern.permute.xlu0 3
      %4290 = vperm.xlu0 %4289, %v285
      %v4291 = vpop.permute.xlu0 %4290
      %4292 = vset.pattern.permute.xlu0 3
      %4293 = vperm.xlu0 %4292, %v286
      %v4294 = vpop.permute.xlu0 %4293
      %4295 = vset.pattern.permute.xlu0 3
      %4296 = vperm.xlu0 %4295, %v287
      %v4297 = vpop.permute.xlu0 %4296
      %4298 = vset.pattern.permute.xlu0 3
      %4299 = vperm.xlu0 %4298, %v288
      %v4300 = vpop.permute.xlu0 %4299
      %4301 = vset.pattern.permute.xlu0 3
      %4302 = vperm.xlu0 %4301, %v289
      %v4303 = vpop.permute.xlu0 %4302
      %4304 = vset.pattern.permute.xlu0 3
      %4305 = vperm.xlu0 %4304, %v290
      %v4306 = vpop.permute.xlu0 %4305
      %4307 = vset.pattern.permute.xlu0 3
      %4308 = vperm.xlu0 %4307, %v291
      %v4309 = vpop.permute.xlu0 %4308
      %4310 = vset.pattern.permute.xlu0 3
      %4311 = vperm.xlu0 %4310, %v292
      %v4312 = vpop.permute.xlu0 %4311
      %4313 = vset.pattern.permute.xlu0 3
      %4314 = vperm.xlu0 %4313, %v293
      %v4315 = vpop.permute.xlu0 %4314
      %4316 = vset.pattern.permute.xlu0 3
      %4317 = vperm.xlu0 %4316, %v294
      %v4318 = vpop.permute.xlu0 %4317
      %4319 = vset.pattern.permute.xlu0 3
      %4320 = vperm.xlu0 %4319, %v295
      %v4321 = vpop.permute.xlu0 %4320
      %4322 = vset.pattern.permute.xlu0 3
      %4323 = vperm.xlu0 %4322, %v296
      %v4324 = vpop.permute.xlu0 %4323
      %4325 = vset.pattern.permute.xlu0 3
      %4326 = vperm.xlu0 %4325, %v297
      %v4327 = vpop.permute.xlu0 %4326
      %4328 = vset.pattern.permute.xlu0 3
      %4329 = vperm.xlu0 %4328, %v298
      %v4330 = vpop.permute.xlu0 %4329
      %4331 = vset.pattern.permute.xlu0 3
      %4332 = vperm.xlu0 %4331, %v299
      %v4333 = vpop.permute.xlu0 %4332
      %4334 = vset.pattern.permute.xlu0 3
      %4335 = vperm.xlu0 %4334, %v300
      %v4336 = vpop.permute.xlu0 %4335
      %4337 = vset.pattern.permute.xlu0 3
      %4338 = vperm.xlu0 %4337, %v301
      %v4339 = vpop.permute.xlu0 %4338
      %4340 = vset.pattern.permute.xlu0 3
      %4341 = vperm.xlu0 %4340, %v302
      %v4342 = vpop.permute.xlu0 %4341
      %4343 = vset.pattern.permute.xlu0 3
      %4344 = vperm.xlu0 %4343, %v303
      %v4345 = vpop.permute.xlu0 %4344
      %4346 = vset.pattern.permute.xlu0 3
      %4347 = vperm.xlu0 %4346, %v304
      %v4348 = vpop.permute.xlu0 %4347
      %4349 = vset.pattern.permute.xlu0 3
      %4350 = vperm.xlu0 %4349, %v305
      %v4351 = vpop.permute.xlu0 %4350
      %4352 = vset.pattern.permute.xlu0 3
      %4353 = vperm.xlu0 %4352, %v306
      %v4354 = vpop.permute.xlu0 %4353
      %4355 = vset.pattern.permute.xlu0 3
      %4356 = vperm.xlu0 %4355, %v307
      %v4357 = vpop.permute.xlu0 %4356
      %4358 = vset.pattern.permute.xlu0 3
      %4359 = vperm.xlu0 %4358, %v308
      %v4360 = vpop.permute.xlu0 %4359
      %4361 = vset.pattern.permute.xlu0 3
      %4362 = vperm.xlu0 %4361, %v309
      %v4363 = vpop.permute.xlu0 %4362
      %vm4364 = vcmp.eq.s32.totalorder %v4174, %v1144
      %vm4365 = vcmp.eq.s32.totalorder %v4177, %v1144
      %vm4366 = vcmp.eq.s32.totalorder %v4180, %v1144
      %vm4367 = vcmp.eq.s32.totalorder %v4183, %v1144
      %vm4368 = vcmp.eq.s32.totalorder %v4186, %v1144
      %vm4369 = vcmp.eq.s32.totalorder %v4189, %v1144
      %vm4370 = vcmp.eq.s32.totalorder %v4192, %v1144
      %vm4371 = vcmp.eq.s32.totalorder %v4195, %v1144
      %vm4372 = vcmp.eq.s32.totalorder %v4198, %v1144
      %vm4373 = vcmp.eq.s32.totalorder %v4201, %v1144
      %vm4374 = vcmp.eq.s32.totalorder %v4204, %v1144
      %vm4375 = vcmp.eq.s32.totalorder %v4207, %v1144
      %vm4376 = vcmp.eq.s32.totalorder %v4210, %v1144
      %vm4377 = vcmp.eq.s32.totalorder %v4213, %v1144
      %vm4378 = vcmp.eq.s32.totalorder %v4216, %v1144
      %vm4379 = vcmp.eq.s32.totalorder %v4219, %v1144
      %vm4380 = vcmp.eq.s32.totalorder %v4222, %v1144
      %vm4381 = vcmp.eq.s32.totalorder %v4225, %v1144
      %vm4382 = vcmp.eq.s32.totalorder %v4228, %v1144
      %vm4383 = vcmp.eq.s32.totalorder %v4231, %v1144
      %vm4384 = vcmp.eq.s32.totalorder %v4234, %v1144
      %vm4385 = vcmp.eq.s32.totalorder %v4237, %v1144
      %vm4386 = vcmp.eq.s32.totalorder %v4240, %v1144
      %vm4387 = vcmp.eq.s32.totalorder %v4243, %v1144
      %vm4388 = vcmp.eq.s32.totalorder %v4246, %v1144
      %vm4389 = vcmp.eq.s32.totalorder %v4249, %v1144
      %vm4390 = vcmp.eq.s32.totalorder %v4252, %v1144
      %vm4391 = vcmp.eq.s32.totalorder %v4255, %v1144
      %vm4392 = vcmp.eq.s32.totalorder %v4258, %v1144
      %vm4393 = vcmp.eq.s32.totalorder %v4261, %v1144
      %vm4394 = vcmp.eq.s32.totalorder %v4264, %v1144
      %vm4395 = vcmp.eq.s32.totalorder %v4267, %v1144
      %vm4396 = vcmp.eq.s32.totalorder %v4270, %v1144
      %vm4397 = vcmp.eq.s32.totalorder %v4273, %v1144
      %vm4398 = vcmp.eq.s32.totalorder %v4276, %v1144
      %vm4399 = vcmp.eq.s32.totalorder %v4279, %v1144
      %vm4400 = vcmp.eq.s32.totalorder %v4282, %v1144
      %vm4401 = vcmp.eq.s32.totalorder %v4285, %v1144
      %vm4402 = vcmp.eq.s32.totalorder %v4288, %v1144
      %vm4403 = vcmp.eq.s32.totalorder %v4291, %v1144
      %vm4404 = vcmp.eq.s32.totalorder %v4294, %v1144
      %vm4405 = vcmp.eq.s32.totalorder %v4297, %v1144
      %vm4406 = vcmp.eq.s32.totalorder %v4300, %v1144
      %vm4407 = vcmp.eq.s32.totalorder %v4303, %v1144
      %vm4408 = vcmp.eq.s32.totalorder %v4306, %v1144
      %vm4409 = vcmp.eq.s32.totalorder %v4309, %v1144
      %vm4410 = vcmp.eq.s32.totalorder %v4312, %v1144
      %vm4411 = vcmp.eq.s32.totalorder %v4315, %v1144
      %vm4412 = vcmp.eq.s32.totalorder %v4318, %v1144
      %vm4413 = vcmp.eq.s32.totalorder %v4321, %v1144
      %vm4414 = vcmp.eq.s32.totalorder %v4324, %v1144
      %vm4415 = vcmp.eq.s32.totalorder %v4327, %v1144
      %vm4416 = vcmp.eq.s32.totalorder %v4330, %v1144
      %vm4417 = vcmp.eq.s32.totalorder %v4333, %v1144
      %vm4418 = vcmp.eq.s32.totalorder %v4336, %v1144
      %vm4419 = vcmp.eq.s32.totalorder %v4339, %v1144
      %vm4420 = vcmp.eq.s32.totalorder %v4342, %v1144
      %vm4421 = vcmp.eq.s32.totalorder %v4345, %v1144
      %vm4422 = vcmp.eq.s32.totalorder %v4348, %v1144
      %vm4423 = vcmp.eq.s32.totalorder %v4351, %v1144
      %vm4424 = vcmp.eq.s32.totalorder %v4354, %v1144
      %vm4425 = vcmp.eq.s32.totalorder %v4357, %v1144
      %vm4426 = vcmp.eq.s32.totalorder %v4360, %v1144
      %vm4427 = vcmp.eq.s32.totalorder %v4363, %v1144
      %4428 = vset.pattern.permute.xlu0 3
      %4429 = vperm.xlu0 %4428, %v566
      %v4430 = vpop.permute.xlu0 %4429
      %4432 = vset.pattern.permute.xlu0 3
      %4433 = vperm.xlu0 %4432, %v567
      %v4434 = vpop.permute.xlu0 %4433
      %4436 = vset.pattern.permute.xlu0 3
      %4437 = vperm.xlu0 %4436, %v568
      %v4438 = vpop.permute.xlu0 %4437
      %4440 = vset.pattern.permute.xlu0 3
      %4441 = vperm.xlu0 %4440, %v569
      %v4442 = vpop.permute.xlu0 %4441
      %4444 = vset.pattern.permute.xlu0 3
      %4445 = vperm.xlu0 %4444, %v570
      %v4446 = vpop.permute.xlu0 %4445
      %4448 = vset.pattern.permute.xlu0 3
      %4449 = vperm.xlu0 %4448, %v571
      %v4450 = vpop.permute.xlu0 %4449
      %4452 = vset.pattern.permute.xlu0 3
      %4453 = vperm.xlu0 %4452, %v572
      %v4454 = vpop.permute.xlu0 %4453
      %4456 = vset.pattern.permute.xlu0 3
      %4457 = vperm.xlu0 %4456, %v573
      %v4458 = vpop.permute.xlu0 %4457
      %4460 = vset.pattern.permute.xlu0 3
      %4461 = vperm.xlu0 %4460, %v574
      %v4462 = vpop.permute.xlu0 %4461
      %4464 = vset.pattern.permute.xlu0 3
      %4465 = vperm.xlu0 %4464, %v575
      %v4466 = vpop.permute.xlu0 %4465
      %4468 = vset.pattern.permute.xlu0 3
      %4469 = vperm.xlu0 %4468, %v576
      %v4470 = vpop.permute.xlu0 %4469
      %4472 = vset.pattern.permute.xlu0 3
      %4473 = vperm.xlu0 %4472, %v577
      %v4474 = vpop.permute.xlu0 %4473
      %4476 = vset.pattern.permute.xlu0 3
      %4477 = vperm.xlu0 %4476, %v578
      %v4478 = vpop.permute.xlu0 %4477
      %4480 = vset.pattern.permute.xlu0 3
      %4481 = vperm.xlu0 %4480, %v579
      %v4482 = vpop.permute.xlu0 %4481
      %4484 = vset.pattern.permute.xlu0 3
      %4485 = vperm.xlu0 %4484, %v580
      %v4486 = vpop.permute.xlu0 %4485
      %4488 = vset.pattern.permute.xlu0 3
      %4489 = vperm.xlu0 %4488, %v581
      %v4490 = vpop.permute.xlu0 %4489
      %4492 = vset.pattern.permute.xlu0 3
      %4493 = vperm.xlu0 %4492, %v582
      %v4494 = vpop.permute.xlu0 %4493
      %4496 = vset.pattern.permute.xlu0 3
      %4497 = vperm.xlu0 %4496, %v583
      %v4498 = vpop.permute.xlu0 %4497
      %4500 = vset.pattern.permute.xlu0 3
      %4501 = vperm.xlu0 %4500, %v584
      %v4502 = vpop.permute.xlu0 %4501
      %4504 = vset.pattern.permute.xlu0 3
      %4505 = vperm.xlu0 %4504, %v585
      %v4506 = vpop.permute.xlu0 %4505
      %4508 = vset.pattern.permute.xlu0 3
      %4509 = vperm.xlu0 %4508, %v586
      %v4510 = vpop.permute.xlu0 %4509
      %4512 = vset.pattern.permute.xlu0 3
      %4513 = vperm.xlu0 %4512, %v587
      %v4514 = vpop.permute.xlu0 %4513
      %4516 = vset.pattern.permute.xlu0 3
      %4517 = vperm.xlu0 %4516, %v588
      %v4518 = vpop.permute.xlu0 %4517
      %4520 = vset.pattern.permute.xlu0 3
      %4521 = vperm.xlu0 %4520, %v589
      %v4522 = vpop.permute.xlu0 %4521
      %4524 = vset.pattern.permute.xlu0 3
      %4525 = vperm.xlu0 %4524, %v590
      %v4526 = vpop.permute.xlu0 %4525
      %4528 = vset.pattern.permute.xlu0 3
      %4529 = vperm.xlu0 %4528, %v591
      %v4530 = vpop.permute.xlu0 %4529
      %4532 = vset.pattern.permute.xlu0 3
      %4533 = vperm.xlu0 %4532, %v592
      %v4534 = vpop.permute.xlu0 %4533
      %4536 = vset.pattern.permute.xlu0 3
      %4537 = vperm.xlu0 %4536, %v593
      %v4538 = vpop.permute.xlu0 %4537
      %4540 = vset.pattern.permute.xlu0 3
      %4541 = vperm.xlu0 %4540, %v594
      %v4542 = vpop.permute.xlu0 %4541
      %4544 = vset.pattern.permute.xlu0 3
      %4545 = vperm.xlu0 %4544, %v595
      %v4546 = vpop.permute.xlu0 %4545
      %4548 = vset.pattern.permute.xlu0 3
      %4549 = vperm.xlu0 %4548, %v596
      %v4550 = vpop.permute.xlu0 %4549
      %4552 = vset.pattern.permute.xlu0 3
      %4553 = vperm.xlu0 %4552, %v597
      %v4554 = vpop.permute.xlu0 %4553
      %4556 = vset.pattern.permute.xlu0 3
      %4557 = vperm.xlu0 %4556, %v598
      %v4558 = vpop.permute.xlu0 %4557
      %4560 = vset.pattern.permute.xlu0 3
      %4561 = vperm.xlu0 %4560, %v599
      %v4562 = vpop.permute.xlu0 %4561
      %4564 = vset.pattern.permute.xlu0 3
      %4565 = vperm.xlu0 %4564, %v600
      %v4566 = vpop.permute.xlu0 %4565
      %4568 = vset.pattern.permute.xlu0 3
      %4569 = vperm.xlu0 %4568, %v601
      %v4570 = vpop.permute.xlu0 %4569
      %4572 = vset.pattern.permute.xlu0 3
      %4573 = vperm.xlu0 %4572, %v602
      %v4574 = vpop.permute.xlu0 %4573
      %4576 = vset.pattern.permute.xlu0 3
      %4577 = vperm.xlu0 %4576, %v603
      %v4578 = vpop.permute.xlu0 %4577
      %4580 = vset.pattern.permute.xlu0 3
      %4581 = vperm.xlu0 %4580, %v604
      %v4582 = vpop.permute.xlu0 %4581
      %4584 = vset.pattern.permute.xlu0 3
      %4585 = vperm.xlu0 %4584, %v605
      %v4586 = vpop.permute.xlu0 %4585
      %4588 = vset.pattern.permute.xlu0 3
      %4589 = vperm.xlu0 %4588, %v606
      %v4590 = vpop.permute.xlu0 %4589
      %4592 = vset.pattern.permute.xlu0 3
      %4593 = vperm.xlu0 %4592, %v607
      %v4594 = vpop.permute.xlu0 %4593
      %4596 = vset.pattern.permute.xlu0 3
      %4597 = vperm.xlu0 %4596, %v608
      %v4598 = vpop.permute.xlu0 %4597
      %4600 = vset.pattern.permute.xlu0 3
      %4601 = vperm.xlu0 %4600, %v609
      %v4602 = vpop.permute.xlu0 %4601
      %4604 = vset.pattern.permute.xlu0 3
      %4605 = vperm.xlu0 %4604, %v610
      %v4606 = vpop.permute.xlu0 %4605
      %4608 = vset.pattern.permute.xlu0 3
      %4609 = vperm.xlu0 %4608, %v611
      %v4610 = vpop.permute.xlu0 %4609
      %4612 = vset.pattern.permute.xlu0 3
      %4613 = vperm.xlu0 %4612, %v612
      %v4614 = vpop.permute.xlu0 %4613
      %4616 = vset.pattern.permute.xlu0 3
      %4617 = vperm.xlu0 %4616, %v613
      %v4618 = vpop.permute.xlu0 %4617
      %4620 = vset.pattern.permute.xlu0 3
      %4621 = vperm.xlu0 %4620, %v614
      %v4622 = vpop.permute.xlu0 %4621
      %4624 = vset.pattern.permute.xlu0 3
      %4625 = vperm.xlu0 %4624, %v615
      %v4626 = vpop.permute.xlu0 %4625
      %4628 = vset.pattern.permute.xlu0 3
      %4629 = vperm.xlu0 %4628, %v616
      %v4630 = vpop.permute.xlu0 %4629
      %4632 = vset.pattern.permute.xlu0 3
      %4633 = vperm.xlu0 %4632, %v617
      %v4634 = vpop.permute.xlu0 %4633
      %4636 = vset.pattern.permute.xlu0 3
      %4637 = vperm.xlu0 %4636, %v618
      %v4638 = vpop.permute.xlu0 %4637
      %4640 = vset.pattern.permute.xlu0 3
      %4641 = vperm.xlu0 %4640, %v619
      %v4642 = vpop.permute.xlu0 %4641
      %4644 = vset.pattern.permute.xlu0 3
      %4645 = vperm.xlu0 %4644, %v620
      %v4646 = vpop.permute.xlu0 %4645
      %4648 = vset.pattern.permute.xlu0 3
      %4649 = vperm.xlu0 %4648, %v621
      %v4650 = vpop.permute.xlu0 %4649
      %4652 = vset.pattern.permute.xlu0 3
      %4653 = vperm.xlu0 %4652, %v622
      %v4654 = vpop.permute.xlu0 %4653
      %4656 = vset.pattern.permute.xlu0 3
      %4657 = vperm.xlu0 %4656, %v623
      %v4658 = vpop.permute.xlu0 %4657
      %4660 = vset.pattern.permute.xlu0 3
      %4661 = vperm.xlu0 %4660, %v624
      %v4662 = vpop.permute.xlu0 %4661
      %4664 = vset.pattern.permute.xlu0 3
      %4665 = vperm.xlu0 %4664, %v625
      %v4666 = vpop.permute.xlu0 %4665
      %4668 = vset.pattern.permute.xlu0 3
      %4669 = vperm.xlu0 %4668, %v626
      %v4670 = vpop.permute.xlu0 %4669
      %4672 = vset.pattern.permute.xlu0 3
      %4673 = vperm.xlu0 %4672, %v627
      %v4674 = vpop.permute.xlu0 %4673
      %4676 = vset.pattern.permute.xlu0 3
      %4677 = vperm.xlu0 %4676, %v628
      %v4678 = vpop.permute.xlu0 %4677
      %4680 = vset.pattern.permute.xlu0 3
      %4681 = vperm.xlu0 %4680, %v629
      %v4682 = vpop.permute.xlu0 %4681
      %v4684 = vsel %vm4364, %v4430, 0.0
      %v4685 = vsel %vm4365, %v4434, 0.0
      %v4686 = vsel %vm4366, %v4438, 0.0
      %v4687 = vsel %vm4367, %v4442, 0.0
      %v4688 = vsel %vm4368, %v4446, 0.0
      %v4689 = vsel %vm4369, %v4450, 0.0
      %v4690 = vsel %vm4370, %v4454, 0.0
      %v4691 = vsel %vm4371, %v4458, 0.0
      %v4692 = vsel %vm4372, %v4462, 0.0
      %v4693 = vsel %vm4373, %v4466, 0.0
      %v4694 = vsel %vm4374, %v4470, 0.0
      %v4695 = vsel %vm4375, %v4474, 0.0
      %v4696 = vsel %vm4376, %v4478, 0.0
      %v4697 = vsel %vm4377, %v4482, 0.0
      %v4698 = vsel %vm4378, %v4486, 0.0
      %v4699 = vsel %vm4379, %v4490, 0.0
      %v4700 = vsel %vm4380, %v4494, 0.0
      %v4701 = vsel %vm4381, %v4498, 0.0
      %v4702 = vsel %vm4382, %v4502, 0.0
      %v4703 = vsel %vm4383, %v4506, 0.0
      %v4704 = vsel %vm4384, %v4510, 0.0
      %v4705 = vsel %vm4385, %v4514, 0.0
      %v4706 = vsel %vm4386, %v4518, 0.0
      %v4707 = vsel %vm4387, %v4522, 0.0
      %v4708 = vsel %vm4388, %v4526, 0.0
      %v4709 = vsel %vm4389, %v4530, 0.0
      %v4710 = vsel %vm4390, %v4534, 0.0
      %v4711 = vsel %vm4391, %v4538, 0.0
      %v4712 = vsel %vm4392, %v4542, 0.0
      %v4713 = vsel %vm4393, %v4546, 0.0
      %v4714 = vsel %vm4394, %v4550, 0.0
      %v4715 = vsel %vm4395, %v4554, 0.0
      %v4716 = vsel %vm4396, %v4558, 0.0
      %v4717 = vsel %vm4397, %v4562, 0.0
      %v4718 = vsel %vm4398, %v4566, 0.0
      %v4719 = vsel %vm4399, %v4570, 0.0
      %v4720 = vsel %vm4400, %v4574, 0.0
      %v4721 = vsel %vm4401, %v4578, 0.0
      %v4722 = vsel %vm4402, %v4582, 0.0
      %v4723 = vsel %vm4403, %v4586, 0.0
      %v4724 = vsel %vm4404, %v4590, 0.0
      %v4725 = vsel %vm4405, %v4594, 0.0
      %v4726 = vsel %vm4406, %v4598, 0.0
      %v4727 = vsel %vm4407, %v4602, 0.0
      %v4728 = vsel %vm4408, %v4606, 0.0
      %v4729 = vsel %vm4409, %v4610, 0.0
      %v4730 = vsel %vm4410, %v4614, 0.0
      %v4731 = vsel %vm4411, %v4618, 0.0
      %v4732 = vsel %vm4412, %v4622, 0.0
      %v4733 = vsel %vm4413, %v4626, 0.0
      %v4734 = vsel %vm4414, %v4630, 0.0
      %v4735 = vsel %vm4415, %v4634, 0.0
      %v4736 = vsel %vm4416, %v4638, 0.0
      %v4737 = vsel %vm4417, %v4642, 0.0
      %v4738 = vsel %vm4418, %v4646, 0.0
      %v4739 = vsel %vm4419, %v4650, 0.0
      %v4740 = vsel %vm4420, %v4654, 0.0
      %v4741 = vsel %vm4421, %v4658, 0.0
      %v4742 = vsel %vm4422, %v4662, 0.0
      %v4743 = vsel %vm4423, %v4666, 0.0
      %v4744 = vsel %vm4424, %v4670, 0.0
      %v4745 = vsel %vm4425, %v4674, 0.0
      %v4746 = vsel %vm4426, %v4678, 0.0
      %v4747 = vsel %vm4427, %v4682, 0.0
      %4748 = vmatprep.subr.mxu0 0.0
      %4749 = vmatpush1.msra.mxu0 %v1145
      %4750 = vmatprep.subr.mxu0 0.0
      %4751 = vmatpush1.msra.mxu0 %v1146
      %4752 = vmatprep.subr.mxu0 0.0
      %4753 = vmatpush1.msra.mxu0 %v1147
      %4754 = vmatprep.subr.mxu0 0.0
      %4755 = vmatpush1.msra.mxu0 %v1148
      %4756 = vmatprep.subr.mxu0 0.0
      %4757 = vmatpush1.msra.mxu0 %v1149
      %4758 = vmatprep.subr.mxu0 0.0
      %4759 = vmatpush1.msra.mxu0 %v1150
      %4760 = vmatprep.subr.mxu0 0.0
      %4761 = vmatpush1.msra.mxu0 %v1151
      %4762 = vmatprep.subr.mxu0 0.0
      %4763 = vmatpush1.msra.mxu0 %v1152
      %4764 = vmatprep.subr.mxu0 0.0
      %4765 = vmatpush1.msra.mxu0 %v1153
      %4766 = vmatprep.subr.mxu0 0.0
      %4767 = vmatpush1.msra.mxu0 %v1154
      %4768 = vmatprep.subr.mxu0 0.0
      %4769 = vmatpush1.msra.mxu0 %v1155
      %4770 = vmatprep.subr.mxu0 0.0
      %4771 = vmatpush1.msra.mxu0 %v1156
      %4772 = vmatprep.subr.mxu0 0.0
      %4773 = vmatpush1.msra.mxu0 %v1157
      %4774 = vmatprep.subr.mxu0 0.0
      %4775 = vmatpush1.msra.mxu0 %v1158
      %4776 = vmatprep.subr.mxu0 0.0
      %4777 = vmatpush1.msra.mxu0 %v1159
      %4778 = vmatprep.subr.mxu0 0.0
      %4779 = vmatpush1.msra.mxu0 %v1160
      %4780 = vmatprep.subr.mxu0 0.0
      %4781 = vmatpush1.msra.mxu0 0.0
      %4782 = vmatprep.subr.mxu0 0.0
      %4783 = vmatpush1.msra.mxu0 0.0
      %4784 = vmatprep.subr.mxu0 0.0
      %4785 = vmatpush1.msra.mxu0 0.0
      %4786 = vmatprep.subr.mxu0 0.0
      %4787 = vmatpush1.msra.mxu0 0.0
      %4788 = vmatprep.subr.mxu0 0.0
      %4789 = vmatpush1.msra.mxu0 0.0
      %4790 = vmatprep.subr.mxu0 0.0
      %4791 = vmatpush1.msra.mxu0 0.0
      %4792 = vmatprep.subr.mxu0 0.0
      %4793 = vmatpush1.msra.mxu0 0.0
      %4794 = vmatprep.subr.mxu0 0.0
      %4795 = vmatpush1.msra.mxu0 0.0
      %4796 = vmatprep.subr.mxu0 0.0
      %4797 = vmatpush1.msra.mxu0 0.0
      %4798 = vmatprep.subr.mxu0 0.0
      %4799 = vmatpush1.msra.mxu0 0.0
      %4800 = vmatprep.subr.mxu0 0.0
      %4801 = vmatpush1.msra.mxu0 0.0
      %4802 = vmatprep.subr.mxu0 0.0
      %4803 = vmatpush1.msra.mxu0 0.0
      %4804 = vmatprep.subr.mxu0 0.0
      %4805 = vmatpush1.msra.mxu0 0.0
      %4806 = vmatprep.subr.mxu0 0.0
      %4807 = vmatpush1.msra.mxu0 0.0
      %4808 = vmatprep.subr.mxu0 0.0
      %4809 = vmatpush1.msra.mxu0 0.0
      %4810 = vmatprep.subr.mxu0 0.0
      %4811 = vmatpush1.msra.mxu0 0.0
      %4812 = vmatprep.mubr.f32.mxu0 0.0
      %4813 = vmatmul.mubr.f32.gmra.mrb[0].mxu0 %v4684
      %v4814 = vpop.f32.mrb[0].mxu0
      %v4815 = vadd.f32 0.0, %v4814
      %v4816 = vpop.f32.mrb[0].mxu0
      %4817 = vmatprep.mubr.f32.mxu0 0.0
      %4818 = vmatmul.mubr.f32.gmra.mrb[0].mxu0 %v4685
      %v4819 = vpop.f32.mrb[0].mxu0
      %v4820 = vadd.f32 0.0, %v4819
      %v4821 = vpop.f32.mrb[0].mxu0
      %4822 = vmatprep.mubr.f32.mxu0 0.0
      %4823 = vmatmul.mubr.f32.gmra.mrb[0].mxu0 %v4686
      %v4824 = vpop.f32.mrb[0].mxu0
      %v4825 = vadd.f32 0.0, %v4824
      %v4826 = vpop.f32.mrb[0].mxu0
      %4827 = vmatprep.mubr.f32.mxu0 0.0
      %4828 = vmatmul.mubr.f32.gmra.mrb[0].mxu0 %v4687
      %v4829 = vpop.f32.mrb[0].mxu0
      %v4830 = vadd.f32 0.0, %v4829
      %v4831 = vpop.f32.mrb[0].mxu0
      %4832 = vmatprep.mubr.f32.mxu0 0.0
      %4833 = vmatmul.mubr.f32.gmra.mrb[0].mxu0 %v4688
      %v4834 = vpop.f32.mrb[0].mxu0
      %v4835 = vadd.f32 0.0, %v4834
      %v4836 = vpop.f32.mrb[0].mxu0
      %4837 = vmatprep.mubr.f32.mxu0 0.0
      %4838 = vmatmul.mubr.f32.gmra.mrb[0].mxu0 %v4689
      %v4839 = vpop.f32.mrb[0].mxu0
      %v4840 = vadd.f32 0.0, %v4839
      %v4841 = vpop.f32.mrb[0].mxu0
      %4842 = vmatprep.mubr.f32.mxu0 0.0
      %4843 = vmatmul.mubr.f32.gmra.mrb[0].mxu0 %v4690
      %v4844 = vpop.f32.mrb[0].mxu0
      %v4845 = vadd.f32 0.0, %v4844
      %v4846 = vpop.f32.mrb[0].mxu0
      %4847 = vmatprep.mubr.f32.mxu0 0.0
      %4848 = vmatmul.mubr.f32.gmra.mrb[0].mxu0 %v4691
      %v4849 = vpop.f32.mrb[0].mxu0
      %v4850 = vadd.f32 0.0, %v4849
      %v4851 = vpop.f32.mrb[0].mxu0
      %4852 = vmatprep.mubr.f32.mxu0 0.0
      %4853 = vmatmul.mubr.f32.gmra.mrb[0].mxu0 %v4692
      %v4854 = vpop.f32.mrb[0].mxu0
      %v4855 = vadd.f32 0.0, %v4854
      %v4856 = vpop.f32.mrb[0].mxu0
      %4857 = vmatprep.mubr.f32.mxu0 0.0
      %4858 = vmatmul.mubr.f32.gmra.mrb[0].mxu0 %v4693
      %v4859 = vpop.f32.mrb[0].mxu0
      %v4860 = vadd.f32 0.0, %v4859
      %v4861 = vpop.f32.mrb[0].mxu0
      %4862 = vmatprep.mubr.f32.mxu0 0.0
      %4863 = vmatmul.mubr.f32.gmra.mrb[0].mxu0 %v4694
      %v4864 = vpop.f32.mrb[0].mxu0
      %v4865 = vadd.f32 0.0, %v4864
      %v4866 = vpop.f32.mrb[0].mxu0
      %4867 = vmatprep.mubr.f32.mxu0 0.0
      %4868 = vmatmul.mubr.f32.gmra.mrb[0].mxu0 %v4695
      %v4869 = vpop.f32.mrb[0].mxu0
      %v4870 = vadd.f32 0.0, %v4869
      %v4871 = vpop.f32.mrb[0].mxu0
      %4872 = vmatprep.mubr.f32.mxu0 0.0
      %4873 = vmatmul.mubr.f32.gmra.mrb[0].mxu0 %v4696
      %v4874 = vpop.f32.mrb[0].mxu0
      %v4875 = vadd.f32 0.0, %v4874
      %v4876 = vpop.f32.mrb[0].mxu0
      %4877 = vmatprep.mubr.f32.mxu0 0.0
      %4878 = vmatmul.mubr.f32.gmra.mrb[0].mxu0 %v4697
      %v4879 = vpop.f32.mrb[0].mxu0
      %v4880 = vadd.f32 0.0, %v4879
      %v4881 = vpop.f32.mrb[0].mxu0
      %4882 = vmatprep.mubr.f32.mxu0 0.0
      %4883 = vmatmul.mubr.f32.gmra.mrb[0].mxu0 %v4698
      %v4884 = vpop.f32.mrb[0].mxu0
      %v4885 = vadd.f32 0.0, %v4884
      %v4886 = vpop.f32.mrb[0].mxu0
      %4887 = vmatprep.mubr.f32.mxu0 0.0
      %4888 = vmatmul.mubr.f32.gmra.mrb[0].mxu0 %v4699
      %v4889 = vpop.f32.mrb[0].mxu0
      %v4890 = vadd.f32 0.0, %v4889
      %v4891 = vpop.f32.mrb[0].mxu0
      %4892 = vmatprep.mubr.f32.mxu0 0.0
      %4893 = vmatmul.mubr.f32.gmra.mrb[0].mxu0 %v4700
      %v4894 = vpop.f32.mrb[0].mxu0
      %v4895 = vadd.f32 0.0, %v4894
      %v4896 = vpop.f32.mrb[0].mxu0
      %4897 = vmatprep.mubr.f32.mxu0 0.0
      %4898 = vmatmul.mubr.f32.gmra.mrb[0].mxu0 %v4701
      %v4899 = vpop.f32.mrb[0].mxu0
      %v4900 = vadd.f32 0.0, %v4899
      %v4901 = vpop.f32.mrb[0].mxu0
      %4902 = vmatprep.mubr.f32.mxu0 0.0
      %4903 = vmatmul.mubr.f32.gmra.mrb[0].mxu0 %v4702
      %v4904 = vpop.f32.mrb[0].mxu0
      %v4905 = vadd.f32 0.0, %v4904
      %v4906 = vpop.f32.mrb[0].mxu0
      %4907 = vmatprep.mubr.f32.mxu0 0.0
      %4908 = vmatmul.mubr.f32.gmra.mrb[0].mxu0 %v4703
      %v4909 = vpop.f32.mrb[0].mxu0
      %v4910 = vadd.f32 0.0, %v4909
      %v4911 = vpop.f32.mrb[0].mxu0
      %4912 = vmatprep.mubr.f32.mxu0 0.0
      %4913 = vmatmul.mubr.f32.gmra.mrb[0].mxu0 %v4704
      %v4914 = vpop.f32.mrb[0].mxu0
      %v4915 = vadd.f32 0.0, %v4914
      %v4916 = vpop.f32.mrb[0].mxu0
      %4917 = vmatprep.mubr.f32.mxu0 0.0
      %4918 = vmatmul.mubr.f32.gmra.mrb[0].mxu0 %v4705
      %v4919 = vpop.f32.mrb[0].mxu0
      %v4920 = vadd.f32 0.0, %v4919
      %v4921 = vpop.f32.mrb[0].mxu0
      %4922 = vmatprep.mubr.f32.mxu0 0.0
      %4923 = vmatmul.mubr.f32.gmra.mrb[0].mxu0 %v4706
      %v4924 = vpop.f32.mrb[0].mxu0
      %v4925 = vadd.f32 0.0, %v4924
      %v4926 = vpop.f32.mrb[0].mxu0
      %4927 = vmatprep.mubr.f32.mxu0 0.0
      %4928 = vmatmul.mubr.f32.gmra.mrb[0].mxu0 %v4707
      %v4929 = vpop.f32.mrb[0].mxu0
      %v4930 = vadd.f32 0.0, %v4929
      %v4931 = vpop.f32.mrb[0].mxu0
      %4932 = vmatprep.mubr.f32.mxu0 0.0
      %4933 = vmatmul.mubr.f32.gmra.mrb[0].mxu0 %v4708
      %v4934 = vpop.f32.mrb[0].mxu0
      %v4935 = vadd.f32 0.0, %v4934
      %v4936 = vpop.f32.mrb[0].mxu0
      %4937 = vmatprep.mubr.f32.mxu0 0.0
      %4938 = vmatmul.mubr.f32.gmra.mrb[0].mxu0 %v4709
      %v4939 = vpop.f32.mrb[0].mxu0
      %v4940 = vadd.f32 0.0, %v4939
      %v4941 = vpop.f32.mrb[0].mxu0
      %4942 = vmatprep.mubr.f32.mxu0 0.0
      %4943 = vmatmul.mubr.f32.gmra.mrb[0].mxu0 %v4710
      %v4944 = vpop.f32.mrb[0].mxu0
      %v4945 = vadd.f32 0.0, %v4944
      %v4946 = vpop.f32.mrb[0].mxu0
      %4947 = vmatprep.mubr.f32.mxu0 0.0
      %4948 = vmatmul.mubr.f32.gmra.mrb[0].mxu0 %v4711
      %v4949 = vpop.f32.mrb[0].mxu0
      %v4950 = vadd.f32 0.0, %v4949
      %v4951 = vpop.f32.mrb[0].mxu0
      %4952 = vmatprep.mubr.f32.mxu0 0.0
      %4953 = vmatmul.mubr.f32.gmra.mrb[0].mxu0 %v4712
      %v4954 = vpop.f32.mrb[0].mxu0
      %v4955 = vadd.f32 0.0, %v4954
      %v4956 = vpop.f32.mrb[0].mxu0
      %4957 = vmatprep.mubr.f32.mxu0 0.0
      %4958 = vmatmul.mubr.f32.gmra.mrb[0].mxu0 %v4713
      %v4959 = vpop.f32.mrb[0].mxu0
      %v4960 = vadd.f32 0.0, %v4959
      %v4961 = vpop.f32.mrb[0].mxu0
      %4962 = vmatprep.mubr.f32.mxu0 0.0
      %4963 = vmatmul.mubr.f32.gmra.mrb[0].mxu0 %v4714
      %v4964 = vpop.f32.mrb[0].mxu0
      %v4965 = vadd.f32 0.0, %v4964
      %v4966 = vpop.f32.mrb[0].mxu0
      %4967 = vmatprep.mubr.f32.mxu0 0.0
      %4968 = vmatmul.mubr.f32.gmra.mrb[0].mxu0 %v4715
      %v4969 = vpop.f32.mrb[0].mxu0
      %v4970 = vadd.f32 0.0, %v4969
      %v4971 = vpop.f32.mrb[0].mxu0
      %4972 = vmatprep.mubr.f32.mxu0 0.0
      %4973 = vmatmul.mubr.f32.gmra.mrb[0].mxu0 %v4716
      %v4974 = vpop.f32.mrb[0].mxu0
      %v4975 = vadd.f32 0.0, %v4974
      %v4976 = vpop.f32.mrb[0].mxu0
      %4977 = vmatprep.mubr.f32.mxu0 0.0
      %4978 = vmatmul.mubr.f32.gmra.mrb[0].mxu0 %v4717
      %v4979 = vpop.f32.mrb[0].mxu0
      %v4980 = vadd.f32 0.0, %v4979
      %v4981 = vpop.f32.mrb[0].mxu0
      %4982 = vmatprep.mubr.f32.mxu0 0.0
      %4983 = vmatmul.mubr.f32.gmra.mrb[0].mxu0 %v4718
      %v4984 = vpop.f32.mrb[0].mxu0
      %v4985 = vadd.f32 0.0, %v4984
      %v4986 = vpop.f32.mrb[0].mxu0
      %4987 = vmatprep.mubr.f32.mxu0 0.0
      %4988 = vmatmul.mubr.f32.gmra.mrb[0].mxu0 %v4719
      %v4989 = vpop.f32.mrb[0].mxu0
      %v4990 = vadd.f32 0.0, %v4989
      %v4991 = vpop.f32.mrb[0].mxu0
      %4992 = vmatprep.mubr.f32.mxu0 0.0
      %4993 = vmatmul.mubr.f32.gmra.mrb[0].mxu0 %v4720
      %v4994 = vpop.f32.mrb[0].mxu0
      %v4995 = vadd.f32 0.0, %v4994
      %v4996 = vpop.f32.mrb[0].mxu0
      %4997 = vmatprep.mubr.f32.mxu0 0.0
      %4998 = vmatmul.mubr.f32.gmra.mrb[0].mxu0 %v4721
      %v4999 = vpop.f32.mrb[0].mxu0
      %v5000 = vadd.f32 0.0, %v4999
      %v5001 = vpop.f32.mrb[0].mxu0
      %5002 = vmatprep.mubr.f32.mxu0 0.0
      %5003 = vmatmul.mubr.f32.gmra.mrb[0].mxu0 %v4722
      %v5004 = vpop.f32.mrb[0].mxu0
      %v5005 = vadd.f32 0.0, %v5004
      %v5006 = vpop.f32.mrb[0].mxu0
      %5007 = vmatprep.mubr.f32.mxu0 0.0
      %5008 = vmatmul.mubr.f32.gmra.mrb[0].mxu0 %v4723
      %v5009 = vpop.f32.mrb[0].mxu0
      %v5010 = vadd.f32 0.0, %v5009
      %v5011 = vpop.f32.mrb[0].mxu0
      %5012 = vmatprep.mubr.f32.mxu0 0.0
      %5013 = vmatmul.mubr.f32.gmra.mrb[0].mxu0 %v4724
      %v5014 = vpop.f32.mrb[0].mxu0
      %v5015 = vadd.f32 0.0, %v5014
      %v5016 = vpop.f32.mrb[0].mxu0
      %5017 = vmatprep.mubr.f32.mxu0 0.0
      %5018 = vmatmul.mubr.f32.gmra.mrb[0].mxu0 %v4725
      %v5019 = vpop.f32.mrb[0].mxu0
      %v5020 = vadd.f32 0.0, %v5019
      %v5021 = vpop.f32.mrb[0].mxu0
      %5022 = vmatprep.mubr.f32.mxu0 0.0
      %5023 = vmatmul.mubr.f32.gmra.mrb[0].mxu0 %v4726
      %v5024 = vpop.f32.mrb[0].mxu0
      %v5025 = vadd.f32 0.0, %v5024
      %v5026 = vpop.f32.mrb[0].mxu0
      %5027 = vmatprep.mubr.f32.mxu0 0.0
      %5028 = vmatmul.mubr.f32.gmra.mrb[0].mxu0 %v4727
      %v5029 = vpop.f32.mrb[0].mxu0
      %v5030 = vadd.f32 0.0, %v5029
      %v5031 = vpop.f32.mrb[0].mxu0
      %5032 = vmatprep.mubr.f32.mxu0 0.0
      %5033 = vmatmul.mubr.f32.gmra.mrb[0].mxu0 %v4728
      %v5034 = vpop.f32.mrb[0].mxu0
      %v5035 = vadd.f32 0.0, %v5034
      %v5036 = vpop.f32.mrb[0].mxu0
      %5037 = vmatprep.mubr.f32.mxu0 0.0
      %5038 = vmatmul.mubr.f32.gmra.mrb[0].mxu0 %v4729
      %v5039 = vpop.f32.mrb[0].mxu0
      %v5040 = vadd.f32 0.0, %v5039
      %v5041 = vpop.f32.mrb[0].mxu0
      %5042 = vmatprep.mubr.f32.mxu0 0.0
      %5043 = vmatmul.mubr.f32.gmra.mrb[0].mxu0 %v4730
      %v5044 = vpop.f32.mrb[0].mxu0
      %v5045 = vadd.f32 0.0, %v5044
      %v5046 = vpop.f32.mrb[0].mxu0
      %5047 = vmatprep.mubr.f32.mxu0 0.0
      %5048 = vmatmul.mubr.f32.gmra.mrb[0].mxu0 %v4731
      %v5049 = vpop.f32.mrb[0].mxu0
      %v5050 = vadd.f32 0.0, %v5049
      %v5051 = vpop.f32.mrb[0].mxu0
      %5052 = vmatprep.mubr.f32.mxu0 0.0
      %5053 = vmatmul.mubr.f32.gmra.mrb[0].mxu0 %v4732
      %v5054 = vpop.f32.mrb[0].mxu0
      %v5055 = vadd.f32 0.0, %v5054
      %v5056 = vpop.f32.mrb[0].mxu0
      %5057 = vmatprep.mubr.f32.mxu0 0.0
      %5058 = vmatmul.mubr.f32.gmra.mrb[0].mxu0 %v4733
      %v5059 = vpop.f32.mrb[0].mxu0
      %v5060 = vadd.f32 0.0, %v5059
      %v5061 = vpop.f32.mrb[0].mxu0
      %5062 = vmatprep.mubr.f32.mxu0 0.0
      %5063 = vmatmul.mubr.f32.gmra.mrb[0].mxu0 %v4734
      %v5064 = vpop.f32.mrb[0].mxu0
      %v5065 = vadd.f32 0.0, %v5064
      %v5066 = vpop.f32.mrb[0].mxu0
      %5067 = vmatprep.mubr.f32.mxu0 0.0
      %5068 = vmatmul.mubr.f32.gmra.mrb[0].mxu0 %v4735
      %v5069 = vpop.f32.mrb[0].mxu0
      %v5070 = vadd.f32 0.0, %v5069
      %v5071 = vpop.f32.mrb[0].mxu0
      %5072 = vmatprep.mubr.f32.mxu0 0.0
      %5073 = vmatmul.mubr.f32.gmra.mrb[0].mxu0 %v4736
      %v5074 = vpop.f32.mrb[0].mxu0
      %v5075 = vadd.f32 0.0, %v5074
      %v5076 = vpop.f32.mrb[0].mxu0
      %5077 = vmatprep.mubr.f32.mxu0 0.0
      %5078 = vmatmul.mubr.f32.gmra.mrb[0].mxu0 %v4737
      %v5079 = vpop.f32.mrb[0].mxu0
      %v5080 = vadd.f32 0.0, %v5079
      %v5081 = vpop.f32.mrb[0].mxu0
      %5082 = vmatprep.mubr.f32.mxu0 0.0
      %5083 = vmatmul.mubr.f32.gmra.mrb[0].mxu0 %v4738
      %v5084 = vpop.f32.mrb[0].mxu0
      %v5085 = vadd.f32 0.0, %v5084
      %v5086 = vpop.f32.mrb[0].mxu0
      %5087 = vmatprep.mubr.f32.mxu0 0.0
      %5088 = vmatmul.mubr.f32.gmra.mrb[0].mxu0 %v4739
      %v5089 = vpop.f32.mrb[0].mxu0
      %v5090 = vadd.f32 0.0, %v5089
      %v5091 = vpop.f32.mrb[0].mxu0
      %5092 = vmatprep.mubr.f32.mxu0 0.0
      %5093 = vmatmul.mubr.f32.gmra.mrb[0].mxu0 %v4740
      %v5094 = vpop.f32.mrb[0].mxu0
      %v5095 = vadd.f32 0.0, %v5094
      %v5096 = vpop.f32.mrb[0].mxu0
      %5097 = vmatprep.mubr.f32.mxu0 0.0
      %5098 = vmatmul.mubr.f32.gmra.mrb[0].mxu0 %v4741
      %v5099 = vpop.f32.mrb[0].mxu0
      %v5100 = vadd.f32 0.0, %v5099
      %v5101 = vpop.f32.mrb[0].mxu0
      %5102 = vmatprep.mubr.f32.mxu0 0.0
      %5103 = vmatmul.mubr.f32.gmra.mrb[0].mxu0 %v4742
      %v5104 = vpop.f32.mrb[0].mxu0
      %v5105 = vadd.f32 0.0, %v5104
      %v5106 = vpop.f32.mrb[0].mxu0
      %5107 = vmatprep.mubr.f32.mxu0 0.0
      %5108 = vmatmul.mubr.f32.gmra.mrb[0].mxu0 %v4743
      %v5109 = vpop.f32.mrb[0].mxu0
      %v5110 = vadd.f32 0.0, %v5109
      %v5111 = vpop.f32.mrb[0].mxu0
      %5112 = vmatprep.mubr.f32.mxu0 0.0
      %5113 = vmatmul.mubr.f32.gmra.mrb[0].mxu0 %v4744
      %v5114 = vpop.f32.mrb[0].mxu0
      %v5115 = vadd.f32 0.0, %v5114
      %v5116 = vpop.f32.mrb[0].mxu0
      %5117 = vmatprep.mubr.f32.mxu0 0.0
      %5118 = vmatmul.mubr.f32.gmra.mrb[0].mxu0 %v4745
      %v5119 = vpop.f32.mrb[0].mxu0
      %v5120 = vadd.f32 0.0, %v5119
      %v5121 = vpop.f32.mrb[0].mxu0
      %5122 = vmatprep.mubr.f32.mxu0 0.0
      %5123 = vmatmul.mubr.f32.gmra.mrb[0].mxu0 %v4746
      %v5124 = vpop.f32.mrb[0].mxu0
      %v5125 = vadd.f32 0.0, %v5124
      %v5126 = vpop.f32.mrb[0].mxu0
      %5127 = vmatprep.mubr.f32.mxu0 0.0
      %5128 = vmatmul.mubr.f32.gmra.mrb[0].mxu0 %v4747
      %v5129 = vpop.f32.mrb[0].mxu0
      %v5130 = vadd.f32 0.0, %v5129
      %v5131 = vpop.f32.mrb[0].mxu0
      %5132 = vdwg.mxu0
      %v5133 = vadd.f32 %v4108, %v4815
      %v5134 = vadd.f32 %v4109, %v4820
      %v5135 = vadd.f32 %v4110, %v4825
      %v5136 = vadd.f32 %v4111, %v4830
      %v5137 = vadd.f32 %v4112, %v4835
      %v5138 = vadd.f32 %v4113, %v4840
      %v5139 = vadd.f32 %v4114, %v4845
      %v5140 = vadd.f32 %v4115, %v4850
      %v5141 = vadd.f32 %v4116, %v4855
      %v5142 = vadd.f32 %v4117, %v4860
      %v5143 = vadd.f32 %v4118, %v4865
      %v5144 = vadd.f32 %v4119, %v4870
      %v5145 = vadd.f32 %v4120, %v4875
      %v5146 = vadd.f32 %v4121, %v4880
      %v5147 = vadd.f32 %v4122, %v4885
      %v5148 = vadd.f32 %v4123, %v4890
      %v5149 = vadd.f32 %v4124, %v4895
      %v5150 = vadd.f32 %v4125, %v4900
      %v5151 = vadd.f32 %v4126, %v4905
      %v5152 = vadd.f32 %v4127, %v4910
      %v5153 = vadd.f32 %v4128, %v4915
      %v5154 = vadd.f32 %v4129, %v4920
      %v5155 = vadd.f32 %v4130, %v4925
      %v5156 = vadd.f32 %v4131, %v4930
      %v5157 = vadd.f32 %v4132, %v4935
      %v5158 = vadd.f32 %v4133, %v4940
      %v5159 = vadd.f32 %v4134, %v4945
      %v5160 = vadd.f32 %v4135, %v4950
      %v5161 = vadd.f32 %v4136, %v4955
      %v5162 = vadd.f32 %v4137, %v4960
      %v5163 = vadd.f32 %v4138, %v4965
      %v5164 = vadd.f32 %v4139, %v4970
      %v5165 = vadd.f32 %v4140, %v4975
      %v5166 = vadd.f32 %v4141, %v4980
      %v5167 = vadd.f32 %v4142, %v4985
      %v5168 = vadd.f32 %v4143, %v4990
      %v5169 = vadd.f32 %v4144, %v4995
      %v5170 = vadd.f32 %v4145, %v5000
      %v5171 = vadd.f32 %v4146, %v5005
      %v5172 = vadd.f32 %v4147, %v5010
      %v5173 = vadd.f32 %v4148, %v5015
      %v5174 = vadd.f32 %v4149, %v5020
      %v5175 = vadd.f32 %v4150, %v5025
      %v5176 = vadd.f32 %v4151, %v5030
      %v5177 = vadd.f32 %v4152, %v5035
      %v5178 = vadd.f32 %v4153, %v5040
      %v5179 = vadd.f32 %v4154, %v5045
      %v5180 = vadd.f32 %v4155, %v5050
      %v5181 = vadd.f32 %v4156, %v5055
      %v5182 = vadd.f32 %v4157, %v5060
      %v5183 = vadd.f32 %v4158, %v5065
      %v5184 = vadd.f32 %v4159, %v5070
      %v5185 = vadd.f32 %v4160, %v5075
      %v5186 = vadd.f32 %v4161, %v5080
      %v5187 = vadd.f32 %v4162, %v5085
      %v5188 = vadd.f32 %v4163, %v5090
      %v5189 = vadd.f32 %v4164, %v5095
      %v5190 = vadd.f32 %v4165, %v5100
      %v5191 = vadd.f32 %v4166, %v5105
      %v5192 = vadd.f32 %v4167, %v5110
      %v5193 = vadd.f32 %v4168, %v5115
      %v5194 = vadd.f32 %v4169, %v5120
      %v5195 = vadd.f32 %v4170, %v5125
      %v5196 = vadd.f32 %v4171, %v5130
      %5197 = vset.pattern.permute.xlu0 4
      %5198 = vperm.xlu0 %5197, %v246
      %v5199 = vpop.permute.xlu0 %5198
      %5200 = vset.pattern.permute.xlu0 4
      %5201 = vperm.xlu0 %5200, %v247
      %v5202 = vpop.permute.xlu0 %5201
      %5203 = vset.pattern.permute.xlu0 4
      %5204 = vperm.xlu0 %5203, %v248
      %v5205 = vpop.permute.xlu0 %5204
      %5206 = vset.pattern.permute.xlu0 4
      %5207 = vperm.xlu0 %5206, %v249
      %v5208 = vpop.permute.xlu0 %5207
      %5209 = vset.pattern.permute.xlu0 4
      %5210 = vperm.xlu0 %5209, %v250
      %v5211 = vpop.permute.xlu0 %5210
      %5212 = vset.pattern.permute.xlu0 4
      %5213 = vperm.xlu0 %5212, %v251
      %v5214 = vpop.permute.xlu0 %5213
      %5215 = vset.pattern.permute.xlu0 4
      %5216 = vperm.xlu0 %5215, %v252
      %v5217 = vpop.permute.xlu0 %5216
      %5218 = vset.pattern.permute.xlu0 4
      %5219 = vperm.xlu0 %5218, %v253
      %v5220 = vpop.permute.xlu0 %5219
      %5221 = vset.pattern.permute.xlu0 4
      %5222 = vperm.xlu0 %5221, %v254
      %v5223 = vpop.permute.xlu0 %5222
      %5224 = vset.pattern.permute.xlu0 4
      %5225 = vperm.xlu0 %5224, %v255
      %v5226 = vpop.permute.xlu0 %5225
      %5227 = vset.pattern.permute.xlu0 4
      %5228 = vperm.xlu0 %5227, %v256
      %v5229 = vpop.permute.xlu0 %5228
      %5230 = vset.pattern.permute.xlu0 4
      %5231 = vperm.xlu0 %5230, %v257
      %v5232 = vpop.permute.xlu0 %5231
      %5233 = vset.pattern.permute.xlu0 4
      %5234 = vperm.xlu0 %5233, %v258
      %v5235 = vpop.permute.xlu0 %5234
      %5236 = vset.pattern.permute.xlu0 4
      %5237 = vperm.xlu0 %5236, %v259
      %v5238 = vpop.permute.xlu0 %5237
      %5239 = vset.pattern.permute.xlu0 4
      %5240 = vperm.xlu0 %5239, %v260
      %v5241 = vpop.permute.xlu0 %5240
      %5242 = vset.pattern.permute.xlu0 4
      %5243 = vperm.xlu0 %5242, %v261
      %v5244 = vpop.permute.xlu0 %5243
      %5245 = vset.pattern.permute.xlu0 4
      %5246 = vperm.xlu0 %5245, %v262
      %v5247 = vpop.permute.xlu0 %5246
      %5248 = vset.pattern.permute.xlu0 4
      %5249 = vperm.xlu0 %5248, %v263
      %v5250 = vpop.permute.xlu0 %5249
      %5251 = vset.pattern.permute.xlu0 4
      %5252 = vperm.xlu0 %5251, %v264
      %v5253 = vpop.permute.xlu0 %5252
      %5254 = vset.pattern.permute.xlu0 4
      %5255 = vperm.xlu0 %5254, %v265
      %v5256 = vpop.permute.xlu0 %5255
      %5257 = vset.pattern.permute.xlu0 4
      %5258 = vperm.xlu0 %5257, %v266
      %v5259 = vpop.permute.xlu0 %5258
      %5260 = vset.pattern.permute.xlu0 4
      %5261 = vperm.xlu0 %5260, %v267
      %v5262 = vpop.permute.xlu0 %5261
      %5263 = vset.pattern.permute.xlu0 4
      %5264 = vperm.xlu0 %5263, %v268
      %v5265 = vpop.permute.xlu0 %5264
      %5266 = vset.pattern.permute.xlu0 4
      %5267 = vperm.xlu0 %5266, %v269
      %v5268 = vpop.permute.xlu0 %5267
      %5269 = vset.pattern.permute.xlu0 4
      %5270 = vperm.xlu0 %5269, %v270
      %v5271 = vpop.permute.xlu0 %5270
      %5272 = vset.pattern.permute.xlu0 4
      %5273 = vperm.xlu0 %5272, %v271
      %v5274 = vpop.permute.xlu0 %5273
      %5275 = vset.pattern.permute.xlu0 4
      %5276 = vperm.xlu0 %5275, %v272
      %v5277 = vpop.permute.xlu0 %5276
      %5278 = vset.pattern.permute.xlu0 4
      %5279 = vperm.xlu0 %5278, %v273
      %v5280 = vpop.permute.xlu0 %5279
      %5281 = vset.pattern.permute.xlu0 4
      %5282 = vperm.xlu0 %5281, %v274
      %v5283 = vpop.permute.xlu0 %5282
      %5284 = vset.pattern.permute.xlu0 4
      %5285 = vperm.xlu0 %5284, %v275
      %v5286 = vpop.permute.xlu0 %5285
      %5287 = vset.pattern.permute.xlu0 4
      %5288 = vperm.xlu0 %5287, %v276
      %v5289 = vpop.permute.xlu0 %5288
      %5290 = vset.pattern.permute.xlu0 4
      %5291 = vperm.xlu0 %5290, %v277
      %v5292 = vpop.permute.xlu0 %5291
      %5293 = vset.pattern.permute.xlu0 4
      %5294 = vperm.xlu0 %5293, %v278
      %v5295 = vpop.permute.xlu0 %5294
      %5296 = vset.pattern.permute.xlu0 4
      %5297 = vperm.xlu0 %5296, %v279
      %v5298 = vpop.permute.xlu0 %5297
      %5299 = vset.pattern.permute.xlu0 4
      %5300 = vperm.xlu0 %5299, %v280
      %v5301 = vpop.permute.xlu0 %5300
      %5302 = vset.pattern.permute.xlu0 4
      %5303 = vperm.xlu0 %5302, %v281
      %v5304 = vpop.permute.xlu0 %5303
      %5305 = vset.pattern.permute.xlu0 4
      %5306 = vperm.xlu0 %5305, %v282
      %v5307 = vpop.permute.xlu0 %5306
      %5308 = vset.pattern.permute.xlu0 4
      %5309 = vperm.xlu0 %5308, %v283
      %v5310 = vpop.permute.xlu0 %5309
      %5311 = vset.pattern.permute.xlu0 4
      %5312 = vperm.xlu0 %5311, %v284
      %v5313 = vpop.permute.xlu0 %5312
      %5314 = vset.pattern.permute.xlu0 4
      %5315 = vperm.xlu0 %5314, %v285
      %v5316 = vpop.permute.xlu0 %5315
      %5317 = vset.pattern.permute.xlu0 4
      %5318 = vperm.xlu0 %5317, %v286
      %v5319 = vpop.permute.xlu0 %5318
      %5320 = vset.pattern.permute.xlu0 4
      %5321 = vperm.xlu0 %5320, %v287
      %v5322 = vpop.permute.xlu0 %5321
      %5323 = vset.pattern.permute.xlu0 4
      %5324 = vperm.xlu0 %5323, %v288
      %v5325 = vpop.permute.xlu0 %5324
      %5326 = vset.pattern.permute.xlu0 4
      %5327 = vperm.xlu0 %5326, %v289
      %v5328 = vpop.permute.xlu0 %5327
      %5329 = vset.pattern.permute.xlu0 4
      %5330 = vperm.xlu0 %5329, %v290
      %v5331 = vpop.permute.xlu0 %5330
      %5332 = vset.pattern.permute.xlu0 4
      %5333 = vperm.xlu0 %5332, %v291
      %v5334 = vpop.permute.xlu0 %5333
      %5335 = vset.pattern.permute.xlu0 4
      %5336 = vperm.xlu0 %5335, %v292
      %v5337 = vpop.permute.xlu0 %5336
      %5338 = vset.pattern.permute.xlu0 4
      %5339 = vperm.xlu0 %5338, %v293
      %v5340 = vpop.permute.xlu0 %5339
      %5341 = vset.pattern.permute.xlu0 4
      %5342 = vperm.xlu0 %5341, %v294
      %v5343 = vpop.permute.xlu0 %5342
      %5344 = vset.pattern.permute.xlu0 4
      %5345 = vperm.xlu0 %5344, %v295
      %v5346 = vpop.permute.xlu0 %5345
      %5347 = vset.pattern.permute.xlu0 4
      %5348 = vperm.xlu0 %5347, %v296
      %v5349 = vpop.permute.xlu0 %5348
      %5350 = vset.pattern.permute.xlu0 4
      %5351 = vperm.xlu0 %5350, %v297
      %v5352 = vpop.permute.xlu0 %5351
      %5353 = vset.pattern.permute.xlu0 4
      %5354 = vperm.xlu0 %5353, %v298
      %v5355 = vpop.permute.xlu0 %5354
      %5356 = vset.pattern.permute.xlu0 4
      %5357 = vperm.xlu0 %5356, %v299
      %v5358 = vpop.permute.xlu0 %5357
      %5359 = vset.pattern.permute.xlu0 4
      %5360 = vperm.xlu0 %5359, %v300
      %v5361 = vpop.permute.xlu0 %5360
      %5362 = vset.pattern.permute.xlu0 4
      %5363 = vperm.xlu0 %5362, %v301
      %v5364 = vpop.permute.xlu0 %5363
      %5365 = vset.pattern.permute.xlu0 4
      %5366 = vperm.xlu0 %5365, %v302
      %v5367 = vpop.permute.xlu0 %5366
      %5368 = vset.pattern.permute.xlu0 4
      %5369 = vperm.xlu0 %5368, %v303
      %v5370 = vpop.permute.xlu0 %5369
      %5371 = vset.pattern.permute.xlu0 4
      %5372 = vperm.xlu0 %5371, %v304
      %v5373 = vpop.permute.xlu0 %5372
      %5374 = vset.pattern.permute.xlu0 4
      %5375 = vperm.xlu0 %5374, %v305
      %v5376 = vpop.permute.xlu0 %5375
      %5377 = vset.pattern.permute.xlu0 4
      %5378 = vperm.xlu0 %5377, %v306
      %v5379 = vpop.permute.xlu0 %5378
      %5380 = vset.pattern.permute.xlu0 4
      %5381 = vperm.xlu0 %5380, %v307
      %v5382 = vpop.permute.xlu0 %5381
      %5383 = vset.pattern.permute.xlu0 4
      %5384 = vperm.xlu0 %5383, %v308
      %v5385 = vpop.permute.xlu0 %5384
      %5386 = vset.pattern.permute.xlu0 4
      %5387 = vperm.xlu0 %5386, %v309
      %v5388 = vpop.permute.xlu0 %5387
      %vm5389 = vcmp.eq.s32.totalorder %v5199, %v1144
      %vm5390 = vcmp.eq.s32.totalorder %v5202, %v1144
      %vm5391 = vcmp.eq.s32.totalorder %v5205, %v1144
      %vm5392 = vcmp.eq.s32.totalorder %v5208, %v1144
      %vm5393 = vcmp.eq.s32.totalorder %v5211, %v1144
      %vm5394 = vcmp.eq.s32.totalorder %v5214, %v1144
      %vm5395 = vcmp.eq.s32.totalorder %v5217, %v1144
      %vm5396 = vcmp.eq.s32.totalorder %v5220, %v1144
      %vm5397 = vcmp.eq.s32.totalorder %v5223, %v1144
      %vm5398 = vcmp.eq.s32.totalorder %v5226, %v1144
      %vm5399 = vcmp.eq.s32.totalorder %v5229, %v1144
      %vm5400 = vcmp.eq.s32.totalorder %v5232, %v1144
      %vm5401 = vcmp.eq.s32.totalorder %v5235, %v1144
      %vm5402 = vcmp.eq.s32.totalorder %v5238, %v1144
      %vm5403 = vcmp.eq.s32.totalorder %v5241, %v1144
      %vm5404 = vcmp.eq.s32.totalorder %v5244, %v1144
      %vm5405 = vcmp.eq.s32.totalorder %v5247, %v1144
      %vm5406 = vcmp.eq.s32.totalorder %v5250, %v1144
      %vm5407 = vcmp.eq.s32.totalorder %v5253, %v1144
      %vm5408 = vcmp.eq.s32.totalorder %v5256, %v1144
      %vm5409 = vcmp.eq.s32.totalorder %v5259, %v1144
      %vm5410 = vcmp.eq.s32.totalorder %v5262, %v1144
      %vm5411 = vcmp.eq.s32.totalorder %v5265, %v1144
      %vm5412 = vcmp.eq.s32.totalorder %v5268, %v1144
      %vm5413 = vcmp.eq.s32.totalorder %v5271, %v1144
      %vm5414 = vcmp.eq.s32.totalorder %v5274, %v1144
      %vm5415 = vcmp.eq.s32.totalorder %v5277, %v1144
      %vm5416 = vcmp.eq.s32.totalorder %v5280, %v1144
      %vm5417 = vcmp.eq.s32.totalorder %v5283, %v1144
      %vm5418 = vcmp.eq.s32.totalorder %v5286, %v1144
      %vm5419 = vcmp.eq.s32.totalorder %v5289, %v1144
      %vm5420 = vcmp.eq.s32.totalorder %v5292, %v1144
      %vm5421 = vcmp.eq.s32.totalorder %v5295, %v1144
      %vm5422 = vcmp.eq.s32.totalorder %v5298, %v1144
      %vm5423 = vcmp.eq.s32.totalorder %v5301, %v1144
      %vm5424 = vcmp.eq.s32.totalorder %v5304, %v1144
      %vm5425 = vcmp.eq.s32.totalorder %v5307, %v1144
      %vm5426 = vcmp.eq.s32.totalorder %v5310, %v1144
      %vm5427 = vcmp.eq.s32.totalorder %v5313, %v1144
      %vm5428 = vcmp.eq.s32.totalorder %v5316, %v1144
      %vm5429 = vcmp.eq.s32.totalorder %v5319, %v1144
      %vm5430 = vcmp.eq.s32.totalorder %v5322, %v1144
      %vm5431 = vcmp.eq.s32.totalorder %v5325, %v1144
      %vm5432 = vcmp.eq.s32.totalorder %v5328, %v1144
      %vm5433 = vcmp.eq.s32.totalorder %v5331, %v1144
      %vm5434 = vcmp.eq.s32.totalorder %v5334, %v1144
      %vm5435 = vcmp.eq.s32.totalorder %v5337, %v1144
      %vm5436 = vcmp.eq.s32.totalorder %v5340, %v1144
      %vm5437 = vcmp.eq.s32.totalorder %v5343, %v1144
      %vm5438 = vcmp.eq.s32.totalorder %v5346, %v1144
      %vm5439 = vcmp.eq.s32.totalorder %v5349, %v1144
      %vm5440 = vcmp.eq.s32.totalorder %v5352, %v1144
      %vm5441 = vcmp.eq.s32.totalorder %v5355, %v1144
      %vm5442 = vcmp.eq.s32.totalorder %v5358, %v1144
      %vm5443 = vcmp.eq.s32.totalorder %v5361, %v1144
      %vm5444 = vcmp.eq.s32.totalorder %v5364, %v1144
      %vm5445 = vcmp.eq.s32.totalorder %v5367, %v1144
      %vm5446 = vcmp.eq.s32.totalorder %v5370, %v1144
      %vm5447 = vcmp.eq.s32.totalorder %v5373, %v1144
      %vm5448 = vcmp.eq.s32.totalorder %v5376, %v1144
      %vm5449 = vcmp.eq.s32.totalorder %v5379, %v1144
      %vm5450 = vcmp.eq.s32.totalorder %v5382, %v1144
      %vm5451 = vcmp.eq.s32.totalorder %v5385, %v1144
      %vm5452 = vcmp.eq.s32.totalorder %v5388, %v1144
      %5453 = vset.pattern.permute.xlu0 4
      %5454 = vperm.xlu0 %5453, %v566
      %v5455 = vpop.permute.xlu0 %5454
      %5457 = vset.pattern.permute.xlu0 4
      %5458 = vperm.xlu0 %5457, %v567
      %v5459 = vpop.permute.xlu0 %5458
      %5461 = vset.pattern.permute.xlu0 4
      %5462 = vperm.xlu0 %5461, %v568
      %v5463 = vpop.permute.xlu0 %5462
      %5465 = vset.pattern.permute.xlu0 4
      %5466 = vperm.xlu0 %5465, %v569
      %v5467 = vpop.permute.xlu0 %5466
      %5469 = vset.pattern.permute.xlu0 4
      %5470 = vperm.xlu0 %5469, %v570
      %v5471 = vpop.permute.xlu0 %5470
      %5473 = vset.pattern.permute.xlu0 4
      %5474 = vperm.xlu0 %5473, %v571
      %v5475 = vpop.permute.xlu0 %5474
      %5477 = vset.pattern.permute.xlu0 4
      %5478 = vperm.xlu0 %5477, %v572
      %v5479 = vpop.permute.xlu0 %5478
      %5481 = vset.pattern.permute.xlu0 4
      %5482 = vperm.xlu0 %5481, %v573
      %v5483 = vpop.permute.xlu0 %5482
      %5485 = vset.pattern.permute.xlu0 4
      %5486 = vperm.xlu0 %5485, %v574
      %v5487 = vpop.permute.xlu0 %5486
      %5489 = vset.pattern.permute.xlu0 4
      %5490 = vperm.xlu0 %5489, %v575
      %v5491 = vpop.permute.xlu0 %5490
      %5493 = vset.pattern.permute.xlu0 4
      %5494 = vperm.xlu0 %5493, %v576
      %v5495 = vpop.permute.xlu0 %5494
      %5497 = vset.pattern.permute.xlu0 4
      %5498 = vperm.xlu0 %5497, %v577
      %v5499 = vpop.permute.xlu0 %5498
      %5501 = vset.pattern.permute.xlu0 4
      %5502 = vperm.xlu0 %5501, %v578
      %v5503 = vpop.permute.xlu0 %5502
      %5505 = vset.pattern.permute.xlu0 4
      %5506 = vperm.xlu0 %5505, %v579
      %v5507 = vpop.permute.xlu0 %5506
      %5509 = vset.pattern.permute.xlu0 4
      %5510 = vperm.xlu0 %5509, %v580
      %v5511 = vpop.permute.xlu0 %5510
      %5513 = vset.pattern.permute.xlu0 4
      %5514 = vperm.xlu0 %5513, %v581
      %v5515 = vpop.permute.xlu0 %5514
      %5517 = vset.pattern.permute.xlu0 4
      %5518 = vperm.xlu0 %5517, %v582
      %v5519 = vpop.permute.xlu0 %5518
      %5521 = vset.pattern.permute.xlu0 4
      %5522 = vperm.xlu0 %5521, %v583
      %v5523 = vpop.permute.xlu0 %5522
      %5525 = vset.pattern.permute.xlu0 4
      %5526 = vperm.xlu0 %5525, %v584
      %v5527 = vpop.permute.xlu0 %5526
      %5529 = vset.pattern.permute.xlu0 4
      %5530 = vperm.xlu0 %5529, %v585
      %v5531 = vpop.permute.xlu0 %5530
      %5533 = vset.pattern.permute.xlu0 4
      %5534 = vperm.xlu0 %5533, %v586
      %v5535 = vpop.permute.xlu0 %5534
      %5537 = vset.pattern.permute.xlu0 4
      %5538 = vperm.xlu0 %5537, %v587
      %v5539 = vpop.permute.xlu0 %5538
      %5541 = vset.pattern.permute.xlu0 4
      %5542 = vperm.xlu0 %5541, %v588
      %v5543 = vpop.permute.xlu0 %5542
      %5545 = vset.pattern.permute.xlu0 4
      %5546 = vperm.xlu0 %5545, %v589
      %v5547 = vpop.permute.xlu0 %5546
      %5549 = vset.pattern.permute.xlu0 4
      %5550 = vperm.xlu0 %5549, %v590
      %v5551 = vpop.permute.xlu0 %5550
      %5553 = vset.pattern.permute.xlu0 4
      %5554 = vperm.xlu0 %5553, %v591
      %v5555 = vpop.permute.xlu0 %5554
      %5557 = vset.pattern.permute.xlu0 4
      %5558 = vperm.xlu0 %5557, %v592
      %v5559 = vpop.permute.xlu0 %5558
      %5561 = vset.pattern.permute.xlu0 4
      %5562 = vperm.xlu0 %5561, %v593
      %v5563 = vpop.permute.xlu0 %5562
      %5565 = vset.pattern.permute.xlu0 4
      %5566 = vperm.xlu0 %5565, %v594
      %v5567 = vpop.permute.xlu0 %5566
      %5569 = vset.pattern.permute.xlu0 4
      %5570 = vperm.xlu0 %5569, %v595
      %v5571 = vpop.permute.xlu0 %5570
      %5573 = vset.pattern.permute.xlu0 4
      %5574 = vperm.xlu0 %5573, %v596
      %v5575 = vpop.permute.xlu0 %5574
      %5577 = vset.pattern.permute.xlu0 4
      %5578 = vperm.xlu0 %5577, %v597
      %v5579 = vpop.permute.xlu0 %5578
      %5581 = vset.pattern.permute.xlu0 4
      %5582 = vperm.xlu0 %5581, %v598
      %v5583 = vpop.permute.xlu0 %5582
      %5585 = vset.pattern.permute.xlu0 4
      %5586 = vperm.xlu0 %5585, %v599
      %v5587 = vpop.permute.xlu0 %5586
      %5589 = vset.pattern.permute.xlu0 4
      %5590 = vperm.xlu0 %5589, %v600
      %v5591 = vpop.permute.xlu0 %5590
      %5593 = vset.pattern.permute.xlu0 4
      %5594 = vperm.xlu0 %5593, %v601
      %v5595 = vpop.permute.xlu0 %5594
      %5597 = vset.pattern.permute.xlu0 4
      %5598 = vperm.xlu0 %5597, %v602
      %v5599 = vpop.permute.xlu0 %5598
      %5601 = vset.pattern.permute.xlu0 4
      %5602 = vperm.xlu0 %5601, %v603
      %v5603 = vpop.permute.xlu0 %5602
      %5605 = vset.pattern.permute.xlu0 4
      %5606 = vperm.xlu0 %5605, %v604
      %v5607 = vpop.permute.xlu0 %5606
      %5609 = vset.pattern.permute.xlu0 4
      %5610 = vperm.xlu0 %5609, %v605
      %v5611 = vpop.permute.xlu0 %5610
      %5613 = vset.pattern.permute.xlu0 4
      %5614 = vperm.xlu0 %5613, %v606
      %v5615 = vpop.permute.xlu0 %5614
      %5617 = vset.pattern.permute.xlu0 4
      %5618 = vperm.xlu0 %5617, %v607
      %v5619 = vpop.permute.xlu0 %5618
      %5621 = vset.pattern.permute.xlu0 4
      %5622 = vperm.xlu0 %5621, %v608
      %v5623 = vpop.permute.xlu0 %5622
      %5625 = vset.pattern.permute.xlu0 4
      %5626 = vperm.xlu0 %5625, %v609
      %v5627 = vpop.permute.xlu0 %5626
      %5629 = vset.pattern.permute.xlu0 4
      %5630 = vperm.xlu0 %5629, %v610
      %v5631 = vpop.permute.xlu0 %5630
      %5633 = vset.pattern.permute.xlu0 4
      %5634 = vperm.xlu0 %5633, %v611
      %v5635 = vpop.permute.xlu0 %5634
      %5637 = vset.pattern.permute.xlu0 4
      %5638 = vperm.xlu0 %5637, %v612
      %v5639 = vpop.permute.xlu0 %5638
      %5641 = vset.pattern.permute.xlu0 4
      %5642 = vperm.xlu0 %5641, %v613
      %v5643 = vpop.permute.xlu0 %5642
      %5645 = vset.pattern.permute.xlu0 4
      %5646 = vperm.xlu0 %5645, %v614
      %v5647 = vpop.permute.xlu0 %5646
      %5649 = vset.pattern.permute.xlu0 4
      %5650 = vperm.xlu0 %5649, %v615
      %v5651 = vpop.permute.xlu0 %5650
      %5653 = vset.pattern.permute.xlu0 4
      %5654 = vperm.xlu0 %5653, %v616
      %v5655 = vpop.permute.xlu0 %5654
      %5657 = vset.pattern.permute.xlu0 4
      %5658 = vperm.xlu0 %5657, %v617
      %v5659 = vpop.permute.xlu0 %5658
      %5661 = vset.pattern.permute.xlu0 4
      %5662 = vperm.xlu0 %5661, %v618
      %v5663 = vpop.permute.xlu0 %5662
      %5665 = vset.pattern.permute.xlu0 4
      %5666 = vperm.xlu0 %5665, %v619
      %v5667 = vpop.permute.xlu0 %5666
      %5669 = vset.pattern.permute.xlu0 4
      %5670 = vperm.xlu0 %5669, %v620
      %v5671 = vpop.permute.xlu0 %5670
      %5673 = vset.pattern.permute.xlu0 4
      %5674 = vperm.xlu0 %5673, %v621
      %v5675 = vpop.permute.xlu0 %5674
      %5677 = vset.pattern.permute.xlu0 4
      %5678 = vperm.xlu0 %5677, %v622
      %v5679 = vpop.permute.xlu0 %5678
      %5681 = vset.pattern.permute.xlu0 4
      %5682 = vperm.xlu0 %5681, %v623
      %v5683 = vpop.permute.xlu0 %5682
      %5685 = vset.pattern.permute.xlu0 4
      %5686 = vperm.xlu0 %5685, %v624
      %v5687 = vpop.permute.xlu0 %5686
      %5689 = vset.pattern.permute.xlu0 4
      %5690 = vperm.xlu0 %5689, %v625
      %v5691 = vpop.permute.xlu0 %5690
      %5693 = vset.pattern.permute.xlu0 4
      %5694 = vperm.xlu0 %5693, %v626
      %v5695 = vpop.permute.xlu0 %5694
      %5697 = vset.pattern.permute.xlu0 4
      %5698 = vperm.xlu0 %5697, %v627
      %v5699 = vpop.permute.xlu0 %5698
      %5701 = vset.pattern.permute.xlu0 4
      %5702 = vperm.xlu0 %5701, %v628
      %v5703 = vpop.permute.xlu0 %5702
      %5705 = vset.pattern.permute.xlu0 4
      %5706 = vperm.xlu0 %5705, %v629
      %v5707 = vpop.permute.xlu0 %5706
      %v5709 = vsel %vm5389, %v5455, 0.0
      %v5710 = vsel %vm5390, %v5459, 0.0
      %v5711 = vsel %vm5391, %v5463, 0.0
      %v5712 = vsel %vm5392, %v5467, 0.0
      %v5713 = vsel %vm5393, %v5471, 0.0
      %v5714 = vsel %vm5394, %v5475, 0.0
      %v5715 = vsel %vm5395, %v5479, 0.0
      %v5716 = vsel %vm5396, %v5483, 0.0
      %v5717 = vsel %vm5397, %v5487, 0.0
      %v5718 = vsel %vm5398, %v5491, 0.0
      %v5719 = vsel %vm5399, %v5495, 0.0
      %v5720 = vsel %vm5400, %v5499, 0.0
      %v5721 = vsel %vm5401, %v5503, 0.0
      %v5722 = vsel %vm5402, %v5507, 0.0
      %v5723 = vsel %vm5403, %v5511, 0.0
      %v5724 = vsel %vm5404, %v5515, 0.0
      %v5725 = vsel %vm5405, %v5519, 0.0
      %v5726 = vsel %vm5406, %v5523, 0.0
      %v5727 = vsel %vm5407, %v5527, 0.0
      %v5728 = vsel %vm5408, %v5531, 0.0
      %v5729 = vsel %vm5409, %v5535, 0.0
      %v5730 = vsel %vm5410, %v5539, 0.0
      %v5731 = vsel %vm5411, %v5543, 0.0
      %v5732 = vsel %vm5412, %v5547, 0.0
      %v5733 = vsel %vm5413, %v5551, 0.0
      %v5734 = vsel %vm5414, %v5555, 0.0
      %v5735 = vsel %vm5415, %v5559, 0.0
      %v5736 = vsel %vm5416, %v5563, 0.0
      %v5737 = vsel %vm5417, %v5567, 0.0
      %v5738 = vsel %vm5418, %v5571, 0.0
      %v5739 = vsel %vm5419, %v5575, 0.0
      %v5740 = vsel %vm5420, %v5579, 0.0
      %v5741 = vsel %vm5421, %v5583, 0.0
      %v5742 = vsel %vm5422, %v5587, 0.0
      %v5743 = vsel %vm5423, %v5591, 0.0
      %v5744 = vsel %vm5424, %v5595, 0.0
      %v5745 = vsel %vm5425, %v5599, 0.0
      %v5746 = vsel %vm5426, %v5603, 0.0
      %v5747 = vsel %vm5427, %v5607, 0.0
      %v5748 = vsel %vm5428, %v5611, 0.0
      %v5749 = vsel %vm5429, %v5615, 0.0
      %v5750 = vsel %vm5430, %v5619, 0.0
      %v5751 = vsel %vm5431, %v5623, 0.0
      %v5752 = vsel %vm5432, %v5627, 0.0
      %v5753 = vsel %vm5433, %v5631, 0.0
      %v5754 = vsel %vm5434, %v5635, 0.0
      %v5755 = vsel %vm5435, %v5639, 0.0
      %v5756 = vsel %vm5436, %v5643, 0.0
      %v5757 = vsel %vm5437, %v5647, 0.0
      %v5758 = vsel %vm5438, %v5651, 0.0
      %v5759 = vsel %vm5439, %v5655, 0.0
      %v5760 = vsel %vm5440, %v5659, 0.0
      %v5761 = vsel %vm5441, %v5663, 0.0
      %v5762 = vsel %vm5442, %v5667, 0.0
      %v5763 = vsel %vm5443, %v5671, 0.0
      %v5764 = vsel %vm5444, %v5675, 0.0
      %v5765 = vsel %vm5445, %v5679, 0.0
      %v5766 = vsel %vm5446, %v5683, 0.0
      %v5767 = vsel %vm5447, %v5687, 0.0
      %v5768 = vsel %vm5448, %v5691, 0.0
      %v5769 = vsel %vm5449, %v5695, 0.0
      %v5770 = vsel %vm5450, %v5699, 0.0
      %v5771 = vsel %vm5451, %v5703, 0.0
      %v5772 = vsel %vm5452, %v5707, 0.0
      %5773 = vmatprep.subr.mxu0 0.0
      %5774 = vmatpush1.msra.mxu0 %v1145
      %5775 = vmatprep.subr.mxu0 0.0
      %5776 = vmatpush1.msra.mxu0 %v1146
      %5777 = vmatprep.subr.mxu0 0.0
      %5778 = vmatpush1.msra.mxu0 %v1147
      %5779 = vmatprep.subr.mxu0 0.0
      %5780 = vmatpush1.msra.mxu0 %v1148
      %5781 = vmatprep.subr.mxu0 0.0
      %5782 = vmatpush1.msra.mxu0 %v1149
      %5783 = vmatprep.subr.mxu0 0.0
      %5784 = vmatpush1.msra.mxu0 %v1150
      %5785 = vmatprep.subr.mxu0 0.0
      %5786 = vmatpush1.msra.mxu0 %v1151
      %5787 = vmatprep.subr.mxu0 0.0
      %5788 = vmatpush1.msra.mxu0 %v1152
      %5789 = vmatprep.subr.mxu0 0.0
      %5790 = vmatpush1.msra.mxu0 %v1153
      %5791 = vmatprep.subr.mxu0 0.0
      %5792 = vmatpush1.msra.mxu0 %v1154
      %5793 = vmatprep.subr.mxu0 0.0
      %5794 = vmatpush1.msra.mxu0 %v1155
      %5795 = vmatprep.subr.mxu0 0.0
      %5796 = vmatpush1.msra.mxu0 %v1156
      %5797 = vmatprep.subr.mxu0 0.0
      %5798 = vmatpush1.msra.mxu0 %v1157
      %5799 = vmatprep.subr.mxu0 0.0
      %5800 = vmatpush1.msra.mxu0 %v1158
      %5801 = vmatprep.subr.mxu0 0.0
      %5802 = vmatpush1.msra.mxu0 %v1159
      %5803 = vmatprep.subr.mxu0 0.0
      %5804 = vmatpush1.msra.mxu0 %v1160
      %5805 = vmatprep.subr.mxu0 0.0
      %5806 = vmatpush1.msra.mxu0 0.0
      %5807 = vmatprep.subr.mxu0 0.0
      %5808 = vmatpush1.msra.mxu0 0.0
      %5809 = vmatprep.subr.mxu0 0.0
      %5810 = vmatpush1.msra.mxu0 0.0
      %5811 = vmatprep.subr.mxu0 0.0
      %5812 = vmatpush1.msra.mxu0 0.0
      %5813 = vmatprep.subr.mxu0 0.0
      %5814 = vmatpush1.msra.mxu0 0.0
      %5815 = vmatprep.subr.mxu0 0.0
      %5816 = vmatpush1.msra.mxu0 0.0
      %5817 = vmatprep.subr.mxu0 0.0
      %5818 = vmatpush1.msra.mxu0 0.0
      %5819 = vmatprep.subr.mxu0 0.0
      %5820 = vmatpush1.msra.mxu0 0.0
      %5821 = vmatprep.subr.mxu0 0.0
      %5822 = vmatpush1.msra.mxu0 0.0
      %5823 = vmatprep.subr.mxu0 0.0
      %5824 = vmatpush1.msra.mxu0 0.0
      %5825 = vmatprep.subr.mxu0 0.0
      %5826 = vmatpush1.msra.mxu0 0.0
      %5827 = vmatprep.subr.mxu0 0.0
      %5828 = vmatpush1.msra.mxu0 0.0
      %5829 = vmatprep.subr.mxu0 0.0
      %5830 = vmatpush1.msra.mxu0 0.0
      %5831 = vmatprep.subr.mxu0 0.0
      %5832 = vmatpush1.msra.mxu0 0.0
      %5833 = vmatprep.subr.mxu0 0.0
      %5834 = vmatpush1.msra.mxu0 0.0
      %5835 = vmatprep.subr.mxu0 0.0
      %5836 = vmatpush1.msra.mxu0 0.0
      %5837 = vmatprep.mubr.f32.mxu0 0.0
      %5838 = vmatmul.mubr.f32.gmra.mrb[0].mxu0 %v5709
      %v5839 = vpop.f32.mrb[0].mxu0
      %v5840 = vadd.f32 0.0, %v5839
      %v5841 = vpop.f32.mrb[0].mxu0
      %5842 = vmatprep.mubr.f32.mxu0 0.0
      %5843 = vmatmul.mubr.f32.gmra.mrb[0].mxu0 %v5710
      %v5844 = vpop.f32.mrb[0].mxu0
      %v5845 = vadd.f32 0.0, %v5844
      %v5846 = vpop.f32.mrb[0].mxu0
      %5847 = vmatprep.mubr.f32.mxu0 0.0
      %5848 = vmatmul.mubr.f32.gmra.mrb[0].mxu0 %v5711
      %v5849 = vpop.f32.mrb[0].mxu0
      %v5850 = vadd.f32 0.0, %v5849
      %v5851 = vpop.f32.mrb[0].mxu0
      %5852 = vmatprep.mubr.f32.mxu0 0.0
      %5853 = vmatmul.mubr.f32.gmra.mrb[0].mxu0 %v5712
      %v5854 = vpop.f32.mrb[0].mxu0
      %v5855 = vadd.f32 0.0, %v5854
      %v5856 = vpop.f32.mrb[0].mxu0
      %5857 = vmatprep.mubr.f32.mxu0 0.0
      %5858 = vmatmul.mubr.f32.gmra.mrb[0].mxu0 %v5713
      %v5859 = vpop.f32.mrb[0].mxu0
      %v5860 = vadd.f32 0.0, %v5859
      %v5861 = vpop.f32.mrb[0].mxu0
      %5862 = vmatprep.mubr.f32.mxu0 0.0
      %5863 = vmatmul.mubr.f32.gmra.mrb[0].mxu0 %v5714
      %v5864 = vpop.f32.mrb[0].mxu0
      %v5865 = vadd.f32 0.0, %v5864
      %v5866 = vpop.f32.mrb[0].mxu0
      %5867 = vmatprep.mubr.f32.mxu0 0.0
      %5868 = vmatmul.mubr.f32.gmra.mrb[0].mxu0 %v5715
      %v5869 = vpop.f32.mrb[0].mxu0
      %v5870 = vadd.f32 0.0, %v5869
      %v5871 = vpop.f32.mrb[0].mxu0
      %5872 = vmatprep.mubr.f32.mxu0 0.0
      %5873 = vmatmul.mubr.f32.gmra.mrb[0].mxu0 %v5716
      %v5874 = vpop.f32.mrb[0].mxu0
      %v5875 = vadd.f32 0.0, %v5874
      %v5876 = vpop.f32.mrb[0].mxu0
      %5877 = vmatprep.mubr.f32.mxu0 0.0
      %5878 = vmatmul.mubr.f32.gmra.mrb[0].mxu0 %v5717
      %v5879 = vpop.f32.mrb[0].mxu0
      %v5880 = vadd.f32 0.0, %v5879
      %v5881 = vpop.f32.mrb[0].mxu0
      %5882 = vmatprep.mubr.f32.mxu0 0.0
      %5883 = vmatmul.mubr.f32.gmra.mrb[0].mxu0 %v5718
      %v5884 = vpop.f32.mrb[0].mxu0
      %v5885 = vadd.f32 0.0, %v5884
      %v5886 = vpop.f32.mrb[0].mxu0
      %5887 = vmatprep.mubr.f32.mxu0 0.0
      %5888 = vmatmul.mubr.f32.gmra.mrb[0].mxu0 %v5719
      %v5889 = vpop.f32.mrb[0].mxu0
      %v5890 = vadd.f32 0.0, %v5889
      %v5891 = vpop.f32.mrb[0].mxu0
      %5892 = vmatprep.mubr.f32.mxu0 0.0
      %5893 = vmatmul.mubr.f32.gmra.mrb[0].mxu0 %v5720
      %v5894 = vpop.f32.mrb[0].mxu0
      %v5895 = vadd.f32 0.0, %v5894
      %v5896 = vpop.f32.mrb[0].mxu0
      %5897 = vmatprep.mubr.f32.mxu0 0.0
      %5898 = vmatmul.mubr.f32.gmra.mrb[0].mxu0 %v5721
      %v5899 = vpop.f32.mrb[0].mxu0
      %v5900 = vadd.f32 0.0, %v5899
      %v5901 = vpop.f32.mrb[0].mxu0
      %5902 = vmatprep.mubr.f32.mxu0 0.0
      %5903 = vmatmul.mubr.f32.gmra.mrb[0].mxu0 %v5722
      %v5904 = vpop.f32.mrb[0].mxu0
      %v5905 = vadd.f32 0.0, %v5904
      %v5906 = vpop.f32.mrb[0].mxu0
      %5907 = vmatprep.mubr.f32.mxu0 0.0
      %5908 = vmatmul.mubr.f32.gmra.mrb[0].mxu0 %v5723
      %v5909 = vpop.f32.mrb[0].mxu0
      %v5910 = vadd.f32 0.0, %v5909
      %v5911 = vpop.f32.mrb[0].mxu0
      %5912 = vmatprep.mubr.f32.mxu0 0.0
      %5913 = vmatmul.mubr.f32.gmra.mrb[0].mxu0 %v5724
      %v5914 = vpop.f32.mrb[0].mxu0
      %v5915 = vadd.f32 0.0, %v5914
      %v5916 = vpop.f32.mrb[0].mxu0
      %5917 = vmatprep.mubr.f32.mxu0 0.0
      %5918 = vmatmul.mubr.f32.gmra.mrb[0].mxu0 %v5725
      %v5919 = vpop.f32.mrb[0].mxu0
      %v5920 = vadd.f32 0.0, %v5919
      %v5921 = vpop.f32.mrb[0].mxu0
      %5922 = vmatprep.mubr.f32.mxu0 0.0
      %5923 = vmatmul.mubr.f32.gmra.mrb[0].mxu0 %v5726
      %v5924 = vpop.f32.mrb[0].mxu0
      %v5925 = vadd.f32 0.0, %v5924
      %v5926 = vpop.f32.mrb[0].mxu0
      %5927 = vmatprep.mubr.f32.mxu0 0.0
      %5928 = vmatmul.mubr.f32.gmra.mrb[0].mxu0 %v5727
      %v5929 = vpop.f32.mrb[0].mxu0
      %v5930 = vadd.f32 0.0, %v5929
      %v5931 = vpop.f32.mrb[0].mxu0
      %5932 = vmatprep.mubr.f32.mxu0 0.0
      %5933 = vmatmul.mubr.f32.gmra.mrb[0].mxu0 %v5728
      %v5934 = vpop.f32.mrb[0].mxu0
      %v5935 = vadd.f32 0.0, %v5934
      %v5936 = vpop.f32.mrb[0].mxu0
      %5937 = vmatprep.mubr.f32.mxu0 0.0
      %5938 = vmatmul.mubr.f32.gmra.mrb[0].mxu0 %v5729
      %v5939 = vpop.f32.mrb[0].mxu0
      %v5940 = vadd.f32 0.0, %v5939
      %v5941 = vpop.f32.mrb[0].mxu0
      %5942 = vmatprep.mubr.f32.mxu0 0.0
      %5943 = vmatmul.mubr.f32.gmra.mrb[0].mxu0 %v5730
      %v5944 = vpop.f32.mrb[0].mxu0
      %v5945 = vadd.f32 0.0, %v5944
      %v5946 = vpop.f32.mrb[0].mxu0
      %5947 = vmatprep.mubr.f32.mxu0 0.0
      %5948 = vmatmul.mubr.f32.gmra.mrb[0].mxu0 %v5731
      %v5949 = vpop.f32.mrb[0].mxu0
      %v5950 = vadd.f32 0.0, %v5949
      %v5951 = vpop.f32.mrb[0].mxu0
      %5952 = vmatprep.mubr.f32.mxu0 0.0
      %5953 = vmatmul.mubr.f32.gmra.mrb[0].mxu0 %v5732
      %v5954 = vpop.f32.mrb[0].mxu0
      %v5955 = vadd.f32 0.0, %v5954
      %v5956 = vpop.f32.mrb[0].mxu0
      %5957 = vmatprep.mubr.f32.mxu0 0.0
      %5958 = vmatmul.mubr.f32.gmra.mrb[0].mxu0 %v5733
      %v5959 = vpop.f32.mrb[0].mxu0
      %v5960 = vadd.f32 0.0, %v5959
      %v5961 = vpop.f32.mrb[0].mxu0
      %5962 = vmatprep.mubr.f32.mxu0 0.0
      %5963 = vmatmul.mubr.f32.gmra.mrb[0].mxu0 %v5734
      %v5964 = vpop.f32.mrb[0].mxu0
      %v5965 = vadd.f32 0.0, %v5964
      %v5966 = vpop.f32.mrb[0].mxu0
      %5967 = vmatprep.mubr.f32.mxu0 0.0
      %5968 = vmatmul.mubr.f32.gmra.mrb[0].mxu0 %v5735
      %v5969 = vpop.f32.mrb[0].mxu0
      %v5970 = vadd.f32 0.0, %v5969
      %v5971 = vpop.f32.mrb[0].mxu0
      %5972 = vmatprep.mubr.f32.mxu0 0.0
      %5973 = vmatmul.mubr.f32.gmra.mrb[0].mxu0 %v5736
      %v5974 = vpop.f32.mrb[0].mxu0
      %v5975 = vadd.f32 0.0, %v5974
      %v5976 = vpop.f32.mrb[0].mxu0
      %5977 = vmatprep.mubr.f32.mxu0 0.0
      %5978 = vmatmul.mubr.f32.gmra.mrb[0].mxu0 %v5737
      %v5979 = vpop.f32.mrb[0].mxu0
      %v5980 = vadd.f32 0.0, %v5979
      %v5981 = vpop.f32.mrb[0].mxu0
      %5982 = vmatprep.mubr.f32.mxu0 0.0
      %5983 = vmatmul.mubr.f32.gmra.mrb[0].mxu0 %v5738
      %v5984 = vpop.f32.mrb[0].mxu0
      %v5985 = vadd.f32 0.0, %v5984
      %v5986 = vpop.f32.mrb[0].mxu0
      %5987 = vmatprep.mubr.f32.mxu0 0.0
      %5988 = vmatmul.mubr.f32.gmra.mrb[0].mxu0 %v5739
      %v5989 = vpop.f32.mrb[0].mxu0
      %v5990 = vadd.f32 0.0, %v5989
      %v5991 = vpop.f32.mrb[0].mxu0
      %5992 = vmatprep.mubr.f32.mxu0 0.0
      %5993 = vmatmul.mubr.f32.gmra.mrb[0].mxu0 %v5740
      %v5994 = vpop.f32.mrb[0].mxu0
      %v5995 = vadd.f32 0.0, %v5994
      %v5996 = vpop.f32.mrb[0].mxu0
      %5997 = vmatprep.mubr.f32.mxu0 0.0
      %5998 = vmatmul.mubr.f32.gmra.mrb[0].mxu0 %v5741
      %v5999 = vpop.f32.mrb[0].mxu0
      %v6000 = vadd.f32 0.0, %v5999
      %v6001 = vpop.f32.mrb[0].mxu0
      %6002 = vmatprep.mubr.f32.mxu0 0.0
      %6003 = vmatmul.mubr.f32.gmra.mrb[0].mxu0 %v5742
      %v6004 = vpop.f32.mrb[0].mxu0
      %v6005 = vadd.f32 0.0, %v6004
      %v6006 = vpop.f32.mrb[0].mxu0
      %6007 = vmatprep.mubr.f32.mxu0 0.0
      %6008 = vmatmul.mubr.f32.gmra.mrb[0].mxu0 %v5743
      %v6009 = vpop.f32.mrb[0].mxu0
      %v6010 = vadd.f32 0.0, %v6009
      %v6011 = vpop.f32.mrb[0].mxu0
      %6012 = vmatprep.mubr.f32.mxu0 0.0
      %6013 = vmatmul.mubr.f32.gmra.mrb[0].mxu0 %v5744
      %v6014 = vpop.f32.mrb[0].mxu0
      %v6015 = vadd.f32 0.0, %v6014
      %v6016 = vpop.f32.mrb[0].mxu0
      %6017 = vmatprep.mubr.f32.mxu0 0.0
      %6018 = vmatmul.mubr.f32.gmra.mrb[0].mxu0 %v5745
      %v6019 = vpop.f32.mrb[0].mxu0
      %v6020 = vadd.f32 0.0, %v6019
      %v6021 = vpop.f32.mrb[0].mxu0
      %6022 = vmatprep.mubr.f32.mxu0 0.0
      %6023 = vmatmul.mubr.f32.gmra.mrb[0].mxu0 %v5746
      %v6024 = vpop.f32.mrb[0].mxu0
      %v6025 = vadd.f32 0.0, %v6024
      %v6026 = vpop.f32.mrb[0].mxu0
      %6027 = vmatprep.mubr.f32.mxu0 0.0
      %6028 = vmatmul.mubr.f32.gmra.mrb[0].mxu0 %v5747
      %v6029 = vpop.f32.mrb[0].mxu0
      %v6030 = vadd.f32 0.0, %v6029
      %v6031 = vpop.f32.mrb[0].mxu0
      %6032 = vmatprep.mubr.f32.mxu0 0.0
      %6033 = vmatmul.mubr.f32.gmra.mrb[0].mxu0 %v5748
      %v6034 = vpop.f32.mrb[0].mxu0
      %v6035 = vadd.f32 0.0, %v6034
      %v6036 = vpop.f32.mrb[0].mxu0
      %6037 = vmatprep.mubr.f32.mxu0 0.0
      %6038 = vmatmul.mubr.f32.gmra.mrb[0].mxu0 %v5749
      %v6039 = vpop.f32.mrb[0].mxu0
      %v6040 = vadd.f32 0.0, %v6039
      %v6041 = vpop.f32.mrb[0].mxu0
      %6042 = vmatprep.mubr.f32.mxu0 0.0
      %6043 = vmatmul.mubr.f32.gmra.mrb[0].mxu0 %v5750
      %v6044 = vpop.f32.mrb[0].mxu0
      %v6045 = vadd.f32 0.0, %v6044
      %v6046 = vpop.f32.mrb[0].mxu0
      %6047 = vmatprep.mubr.f32.mxu0 0.0
      %6048 = vmatmul.mubr.f32.gmra.mrb[0].mxu0 %v5751
      %v6049 = vpop.f32.mrb[0].mxu0
      %v6050 = vadd.f32 0.0, %v6049
      %v6051 = vpop.f32.mrb[0].mxu0
      %6052 = vmatprep.mubr.f32.mxu0 0.0
      %6053 = vmatmul.mubr.f32.gmra.mrb[0].mxu0 %v5752
      %v6054 = vpop.f32.mrb[0].mxu0
      %v6055 = vadd.f32 0.0, %v6054
      %v6056 = vpop.f32.mrb[0].mxu0
      %6057 = vmatprep.mubr.f32.mxu0 0.0
      %6058 = vmatmul.mubr.f32.gmra.mrb[0].mxu0 %v5753
      %v6059 = vpop.f32.mrb[0].mxu0
      %v6060 = vadd.f32 0.0, %v6059
      %v6061 = vpop.f32.mrb[0].mxu0
      %6062 = vmatprep.mubr.f32.mxu0 0.0
      %6063 = vmatmul.mubr.f32.gmra.mrb[0].mxu0 %v5754
      %v6064 = vpop.f32.mrb[0].mxu0
      %v6065 = vadd.f32 0.0, %v6064
      %v6066 = vpop.f32.mrb[0].mxu0
      %6067 = vmatprep.mubr.f32.mxu0 0.0
      %6068 = vmatmul.mubr.f32.gmra.mrb[0].mxu0 %v5755
      %v6069 = vpop.f32.mrb[0].mxu0
      %v6070 = vadd.f32 0.0, %v6069
      %v6071 = vpop.f32.mrb[0].mxu0
      %6072 = vmatprep.mubr.f32.mxu0 0.0
      %6073 = vmatmul.mubr.f32.gmra.mrb[0].mxu0 %v5756
      %v6074 = vpop.f32.mrb[0].mxu0
      %v6075 = vadd.f32 0.0, %v6074
      %v6076 = vpop.f32.mrb[0].mxu0
      %6077 = vmatprep.mubr.f32.mxu0 0.0
      %6078 = vmatmul.mubr.f32.gmra.mrb[0].mxu0 %v5757
      %v6079 = vpop.f32.mrb[0].mxu0
      %v6080 = vadd.f32 0.0, %v6079
      %v6081 = vpop.f32.mrb[0].mxu0
      %6082 = vmatprep.mubr.f32.mxu0 0.0
      %6083 = vmatmul.mubr.f32.gmra.mrb[0].mxu0 %v5758
      %v6084 = vpop.f32.mrb[0].mxu0
      %v6085 = vadd.f32 0.0, %v6084
      %v6086 = vpop.f32.mrb[0].mxu0
      %6087 = vmatprep.mubr.f32.mxu0 0.0
      %6088 = vmatmul.mubr.f32.gmra.mrb[0].mxu0 %v5759
      %v6089 = vpop.f32.mrb[0].mxu0
      %v6090 = vadd.f32 0.0, %v6089
      %v6091 = vpop.f32.mrb[0].mxu0
      %6092 = vmatprep.mubr.f32.mxu0 0.0
      %6093 = vmatmul.mubr.f32.gmra.mrb[0].mxu0 %v5760
      %v6094 = vpop.f32.mrb[0].mxu0
      %v6095 = vadd.f32 0.0, %v6094
      %v6096 = vpop.f32.mrb[0].mxu0
      %6097 = vmatprep.mubr.f32.mxu0 0.0
      %6098 = vmatmul.mubr.f32.gmra.mrb[0].mxu0 %v5761
      %v6099 = vpop.f32.mrb[0].mxu0
      %v6100 = vadd.f32 0.0, %v6099
      %v6101 = vpop.f32.mrb[0].mxu0
      %6102 = vmatprep.mubr.f32.mxu0 0.0
      %6103 = vmatmul.mubr.f32.gmra.mrb[0].mxu0 %v5762
      %v6104 = vpop.f32.mrb[0].mxu0
      %v6105 = vadd.f32 0.0, %v6104
      %v6106 = vpop.f32.mrb[0].mxu0
      %6107 = vmatprep.mubr.f32.mxu0 0.0
      %6108 = vmatmul.mubr.f32.gmra.mrb[0].mxu0 %v5763
      %v6109 = vpop.f32.mrb[0].mxu0
      %v6110 = vadd.f32 0.0, %v6109
      %v6111 = vpop.f32.mrb[0].mxu0
      %6112 = vmatprep.mubr.f32.mxu0 0.0
      %6113 = vmatmul.mubr.f32.gmra.mrb[0].mxu0 %v5764
      %v6114 = vpop.f32.mrb[0].mxu0
      %v6115 = vadd.f32 0.0, %v6114
      %v6116 = vpop.f32.mrb[0].mxu0
      %6117 = vmatprep.mubr.f32.mxu0 0.0
      %6118 = vmatmul.mubr.f32.gmra.mrb[0].mxu0 %v5765
      %v6119 = vpop.f32.mrb[0].mxu0
      %v6120 = vadd.f32 0.0, %v6119
      %v6121 = vpop.f32.mrb[0].mxu0
      %6122 = vmatprep.mubr.f32.mxu0 0.0
      %6123 = vmatmul.mubr.f32.gmra.mrb[0].mxu0 %v5766
      %v6124 = vpop.f32.mrb[0].mxu0
      %v6125 = vadd.f32 0.0, %v6124
      %v6126 = vpop.f32.mrb[0].mxu0
      %6127 = vmatprep.mubr.f32.mxu0 0.0
      %6128 = vmatmul.mubr.f32.gmra.mrb[0].mxu0 %v5767
      %v6129 = vpop.f32.mrb[0].mxu0
      %v6130 = vadd.f32 0.0, %v6129
      %v6131 = vpop.f32.mrb[0].mxu0
      %6132 = vmatprep.mubr.f32.mxu0 0.0
      %6133 = vmatmul.mubr.f32.gmra.mrb[0].mxu0 %v5768
      %v6134 = vpop.f32.mrb[0].mxu0
      %v6135 = vadd.f32 0.0, %v6134
      %v6136 = vpop.f32.mrb[0].mxu0
      %6137 = vmatprep.mubr.f32.mxu0 0.0
      %6138 = vmatmul.mubr.f32.gmra.mrb[0].mxu0 %v5769
      %v6139 = vpop.f32.mrb[0].mxu0
      %v6140 = vadd.f32 0.0, %v6139
      %v6141 = vpop.f32.mrb[0].mxu0
      %6142 = vmatprep.mubr.f32.mxu0 0.0
      %6143 = vmatmul.mubr.f32.gmra.mrb[0].mxu0 %v5770
      %v6144 = vpop.f32.mrb[0].mxu0
      %v6145 = vadd.f32 0.0, %v6144
      %v6146 = vpop.f32.mrb[0].mxu0
      %6147 = vmatprep.mubr.f32.mxu0 0.0
      %6148 = vmatmul.mubr.f32.gmra.mrb[0].mxu0 %v5771
      %v6149 = vpop.f32.mrb[0].mxu0
      %v6150 = vadd.f32 0.0, %v6149
      %v6151 = vpop.f32.mrb[0].mxu0
      %6152 = vmatprep.mubr.f32.mxu0 0.0
      %6153 = vmatmul.mubr.f32.gmra.mrb[0].mxu0 %v5772
      %v6154 = vpop.f32.mrb[0].mxu0
      %v6155 = vadd.f32 0.0, %v6154
      %v6156 = vpop.f32.mrb[0].mxu0
      %6157 = vdwg.mxu0
      %v6158 = vadd.f32 %v5133, %v5840
      %v6159 = vadd.f32 %v5134, %v5845
      %v6160 = vadd.f32 %v5135, %v5850
      %v6161 = vadd.f32 %v5136, %v5855
      %v6162 = vadd.f32 %v5137, %v5860
      %v6163 = vadd.f32 %v5138, %v5865
      %v6164 = vadd.f32 %v5139, %v5870
      %v6165 = vadd.f32 %v5140, %v5875
      %v6166 = vadd.f32 %v5141, %v5880
      %v6167 = vadd.f32 %v5142, %v5885
      %v6168 = vadd.f32 %v5143, %v5890
      %v6169 = vadd.f32 %v5144, %v5895
      %v6170 = vadd.f32 %v5145, %v5900
      %v6171 = vadd.f32 %v5146, %v5905
      %v6172 = vadd.f32 %v5147, %v5910
      %v6173 = vadd.f32 %v5148, %v5915
      %v6174 = vadd.f32 %v5149, %v5920
      %v6175 = vadd.f32 %v5150, %v5925
      %v6176 = vadd.f32 %v5151, %v5930
      %v6177 = vadd.f32 %v5152, %v5935
      %v6178 = vadd.f32 %v5153, %v5940
      %v6179 = vadd.f32 %v5154, %v5945
      %v6180 = vadd.f32 %v5155, %v5950
      %v6181 = vadd.f32 %v5156, %v5955
      %v6182 = vadd.f32 %v5157, %v5960
      %v6183 = vadd.f32 %v5158, %v5965
      %v6184 = vadd.f32 %v5159, %v5970
      %v6185 = vadd.f32 %v5160, %v5975
      %v6186 = vadd.f32 %v5161, %v5980
      %v6187 = vadd.f32 %v5162, %v5985
      %v6188 = vadd.f32 %v5163, %v5990
      %v6189 = vadd.f32 %v5164, %v5995
      %v6190 = vadd.f32 %v5165, %v6000
      %v6191 = vadd.f32 %v5166, %v6005
      %v6192 = vadd.f32 %v5167, %v6010
      %v6193 = vadd.f32 %v5168, %v6015
      %v6194 = vadd.f32 %v5169, %v6020
      %v6195 = vadd.f32 %v5170, %v6025
      %v6196 = vadd.f32 %v5171, %v6030
      %v6197 = vadd.f32 %v5172, %v6035
      %v6198 = vadd.f32 %v5173, %v6040
      %v6199 = vadd.f32 %v5174, %v6045
      %v6200 = vadd.f32 %v5175, %v6050
      %v6201 = vadd.f32 %v5176, %v6055
      %v6202 = vadd.f32 %v5177, %v6060
      %v6203 = vadd.f32 %v5178, %v6065
      %v6204 = vadd.f32 %v5179, %v6070
      %v6205 = vadd.f32 %v5180, %v6075
      %v6206 = vadd.f32 %v5181, %v6080
      %v6207 = vadd.f32 %v5182, %v6085
      %v6208 = vadd.f32 %v5183, %v6090
      %v6209 = vadd.f32 %v5184, %v6095
      %v6210 = vadd.f32 %v5185, %v6100
      %v6211 = vadd.f32 %v5186, %v6105
      %v6212 = vadd.f32 %v5187, %v6110
      %v6213 = vadd.f32 %v5188, %v6115
      %v6214 = vadd.f32 %v5189, %v6120
      %v6215 = vadd.f32 %v5190, %v6125
      %v6216 = vadd.f32 %v5191, %v6130
      %v6217 = vadd.f32 %v5192, %v6135
      %v6218 = vadd.f32 %v5193, %v6140
      %v6219 = vadd.f32 %v5194, %v6145
      %v6220 = vadd.f32 %v5195, %v6150
      %v6221 = vadd.f32 %v5196, %v6155
      %6222 = vset.pattern.permute.xlu0 5
      %6223 = vperm.xlu0 %6222, %v246
      %v6224 = vpop.permute.xlu0 %6223
      %6225 = vset.pattern.permute.xlu0 5
      %6226 = vperm.xlu0 %6225, %v247
      %v6227 = vpop.permute.xlu0 %6226
      %6228 = vset.pattern.permute.xlu0 5
      %6229 = vperm.xlu0 %6228, %v248
      %v6230 = vpop.permute.xlu0 %6229
      %6231 = vset.pattern.permute.xlu0 5
      %6232 = vperm.xlu0 %6231, %v249
      %v6233 = vpop.permute.xlu0 %6232
      %6234 = vset.pattern.permute.xlu0 5
      %6235 = vperm.xlu0 %6234, %v250
      %v6236 = vpop.permute.xlu0 %6235
      %6237 = vset.pattern.permute.xlu0 5
      %6238 = vperm.xlu0 %6237, %v251
      %v6239 = vpop.permute.xlu0 %6238
      %6240 = vset.pattern.permute.xlu0 5
      %6241 = vperm.xlu0 %6240, %v252
      %v6242 = vpop.permute.xlu0 %6241
      %6243 = vset.pattern.permute.xlu0 5
      %6244 = vperm.xlu0 %6243, %v253
      %v6245 = vpop.permute.xlu0 %6244
      %6246 = vset.pattern.permute.xlu0 5
      %6247 = vperm.xlu0 %6246, %v254
      %v6248 = vpop.permute.xlu0 %6247
      %6249 = vset.pattern.permute.xlu0 5
      %6250 = vperm.xlu0 %6249, %v255
      %v6251 = vpop.permute.xlu0 %6250
      %6252 = vset.pattern.permute.xlu0 5
      %6253 = vperm.xlu0 %6252, %v256
      %v6254 = vpop.permute.xlu0 %6253
      %6255 = vset.pattern.permute.xlu0 5
      %6256 = vperm.xlu0 %6255, %v257
      %v6257 = vpop.permute.xlu0 %6256
      %6258 = vset.pattern.permute.xlu0 5
      %6259 = vperm.xlu0 %6258, %v258
      %v6260 = vpop.permute.xlu0 %6259
      %6261 = vset.pattern.permute.xlu0 5
      %6262 = vperm.xlu0 %6261, %v259
      %v6263 = vpop.permute.xlu0 %6262
      %6264 = vset.pattern.permute.xlu0 5
      %6265 = vperm.xlu0 %6264, %v260
      %v6266 = vpop.permute.xlu0 %6265
      %6267 = vset.pattern.permute.xlu0 5
      %6268 = vperm.xlu0 %6267, %v261
      %v6269 = vpop.permute.xlu0 %6268
      %6270 = vset.pattern.permute.xlu0 5
      %6271 = vperm.xlu0 %6270, %v262
      %v6272 = vpop.permute.xlu0 %6271
      %6273 = vset.pattern.permute.xlu0 5
      %6274 = vperm.xlu0 %6273, %v263
      %v6275 = vpop.permute.xlu0 %6274
      %6276 = vset.pattern.permute.xlu0 5
      %6277 = vperm.xlu0 %6276, %v264
      %v6278 = vpop.permute.xlu0 %6277
      %6279 = vset.pattern.permute.xlu0 5
      %6280 = vperm.xlu0 %6279, %v265
      %v6281 = vpop.permute.xlu0 %6280
      %6282 = vset.pattern.permute.xlu0 5
      %6283 = vperm.xlu0 %6282, %v266
      %v6284 = vpop.permute.xlu0 %6283
      %6285 = vset.pattern.permute.xlu0 5
      %6286 = vperm.xlu0 %6285, %v267
      %v6287 = vpop.permute.xlu0 %6286
      %6288 = vset.pattern.permute.xlu0 5
      %6289 = vperm.xlu0 %6288, %v268
      %v6290 = vpop.permute.xlu0 %6289
      %6291 = vset.pattern.permute.xlu0 5
      %6292 = vperm.xlu0 %6291, %v269
      %v6293 = vpop.permute.xlu0 %6292
      %6294 = vset.pattern.permute.xlu0 5
      %6295 = vperm.xlu0 %6294, %v270
      %v6296 = vpop.permute.xlu0 %6295
      %6297 = vset.pattern.permute.xlu0 5
      %6298 = vperm.xlu0 %6297, %v271
      %v6299 = vpop.permute.xlu0 %6298
      %6300 = vset.pattern.permute.xlu0 5
      %6301 = vperm.xlu0 %6300, %v272
      %v6302 = vpop.permute.xlu0 %6301
      %6303 = vset.pattern.permute.xlu0 5
      %6304 = vperm.xlu0 %6303, %v273
      %v6305 = vpop.permute.xlu0 %6304
      %6306 = vset.pattern.permute.xlu0 5
      %6307 = vperm.xlu0 %6306, %v274
      %v6308 = vpop.permute.xlu0 %6307
      %6309 = vset.pattern.permute.xlu0 5
      %6310 = vperm.xlu0 %6309, %v275
      %v6311 = vpop.permute.xlu0 %6310
      %6312 = vset.pattern.permute.xlu0 5
      %6313 = vperm.xlu0 %6312, %v276
      %v6314 = vpop.permute.xlu0 %6313
      %6315 = vset.pattern.permute.xlu0 5
      %6316 = vperm.xlu0 %6315, %v277
      %v6317 = vpop.permute.xlu0 %6316
      %6318 = vset.pattern.permute.xlu0 5
      %6319 = vperm.xlu0 %6318, %v278
      %v6320 = vpop.permute.xlu0 %6319
      %6321 = vset.pattern.permute.xlu0 5
      %6322 = vperm.xlu0 %6321, %v279
      %v6323 = vpop.permute.xlu0 %6322
      %6324 = vset.pattern.permute.xlu0 5
      %6325 = vperm.xlu0 %6324, %v280
      %v6326 = vpop.permute.xlu0 %6325
      %6327 = vset.pattern.permute.xlu0 5
      %6328 = vperm.xlu0 %6327, %v281
      %v6329 = vpop.permute.xlu0 %6328
      %6330 = vset.pattern.permute.xlu0 5
      %6331 = vperm.xlu0 %6330, %v282
      %v6332 = vpop.permute.xlu0 %6331
      %6333 = vset.pattern.permute.xlu0 5
      %6334 = vperm.xlu0 %6333, %v283
      %v6335 = vpop.permute.xlu0 %6334
      %6336 = vset.pattern.permute.xlu0 5
      %6337 = vperm.xlu0 %6336, %v284
      %v6338 = vpop.permute.xlu0 %6337
      %6339 = vset.pattern.permute.xlu0 5
      %6340 = vperm.xlu0 %6339, %v285
      %v6341 = vpop.permute.xlu0 %6340
      %6342 = vset.pattern.permute.xlu0 5
      %6343 = vperm.xlu0 %6342, %v286
      %v6344 = vpop.permute.xlu0 %6343
      %6345 = vset.pattern.permute.xlu0 5
      %6346 = vperm.xlu0 %6345, %v287
      %v6347 = vpop.permute.xlu0 %6346
      %6348 = vset.pattern.permute.xlu0 5
      %6349 = vperm.xlu0 %6348, %v288
      %v6350 = vpop.permute.xlu0 %6349
      %6351 = vset.pattern.permute.xlu0 5
      %6352 = vperm.xlu0 %6351, %v289
      %v6353 = vpop.permute.xlu0 %6352
      %6354 = vset.pattern.permute.xlu0 5
      %6355 = vperm.xlu0 %6354, %v290
      %v6356 = vpop.permute.xlu0 %6355
      %6357 = vset.pattern.permute.xlu0 5
      %6358 = vperm.xlu0 %6357, %v291
      %v6359 = vpop.permute.xlu0 %6358
      %6360 = vset.pattern.permute.xlu0 5
      %6361 = vperm.xlu0 %6360, %v292
      %v6362 = vpop.permute.xlu0 %6361
      %6363 = vset.pattern.permute.xlu0 5
      %6364 = vperm.xlu0 %6363, %v293
      %v6365 = vpop.permute.xlu0 %6364
      %6366 = vset.pattern.permute.xlu0 5
      %6367 = vperm.xlu0 %6366, %v294
      %v6368 = vpop.permute.xlu0 %6367
      %6369 = vset.pattern.permute.xlu0 5
      %6370 = vperm.xlu0 %6369, %v295
      %v6371 = vpop.permute.xlu0 %6370
      %6372 = vset.pattern.permute.xlu0 5
      %6373 = vperm.xlu0 %6372, %v296
      %v6374 = vpop.permute.xlu0 %6373
      %6375 = vset.pattern.permute.xlu0 5
      %6376 = vperm.xlu0 %6375, %v297
      %v6377 = vpop.permute.xlu0 %6376
      %6378 = vset.pattern.permute.xlu0 5
      %6379 = vperm.xlu0 %6378, %v298
      %v6380 = vpop.permute.xlu0 %6379
      %6381 = vset.pattern.permute.xlu0 5
      %6382 = vperm.xlu0 %6381, %v299
      %v6383 = vpop.permute.xlu0 %6382
      %6384 = vset.pattern.permute.xlu0 5
      %6385 = vperm.xlu0 %6384, %v300
      %v6386 = vpop.permute.xlu0 %6385
      %6387 = vset.pattern.permute.xlu0 5
      %6388 = vperm.xlu0 %6387, %v301
      %v6389 = vpop.permute.xlu0 %6388
      %6390 = vset.pattern.permute.xlu0 5
      %6391 = vperm.xlu0 %6390, %v302
      %v6392 = vpop.permute.xlu0 %6391
      %6393 = vset.pattern.permute.xlu0 5
      %6394 = vperm.xlu0 %6393, %v303
      %v6395 = vpop.permute.xlu0 %6394
      %6396 = vset.pattern.permute.xlu0 5
      %6397 = vperm.xlu0 %6396, %v304
      %v6398 = vpop.permute.xlu0 %6397
      %6399 = vset.pattern.permute.xlu0 5
      %6400 = vperm.xlu0 %6399, %v305
      %v6401 = vpop.permute.xlu0 %6400
      %6402 = vset.pattern.permute.xlu0 5
      %6403 = vperm.xlu0 %6402, %v306
      %v6404 = vpop.permute.xlu0 %6403
      %6405 = vset.pattern.permute.xlu0 5
      %6406 = vperm.xlu0 %6405, %v307
      %v6407 = vpop.permute.xlu0 %6406
      %6408 = vset.pattern.permute.xlu0 5
      %6409 = vperm.xlu0 %6408, %v308
      %v6410 = vpop.permute.xlu0 %6409
      %6411 = vset.pattern.permute.xlu0 5
      %6412 = vperm.xlu0 %6411, %v309
      %v6413 = vpop.permute.xlu0 %6412
      %vm6414 = vcmp.eq.s32.totalorder %v6224, %v1144
      %vm6415 = vcmp.eq.s32.totalorder %v6227, %v1144
      %vm6416 = vcmp.eq.s32.totalorder %v6230, %v1144
      %vm6417 = vcmp.eq.s32.totalorder %v6233, %v1144
      %vm6418 = vcmp.eq.s32.totalorder %v6236, %v1144
      %vm6419 = vcmp.eq.s32.totalorder %v6239, %v1144
      %vm6420 = vcmp.eq.s32.totalorder %v6242, %v1144
      %vm6421 = vcmp.eq.s32.totalorder %v6245, %v1144
      %vm6422 = vcmp.eq.s32.totalorder %v6248, %v1144
      %vm6423 = vcmp.eq.s32.totalorder %v6251, %v1144
      %vm6424 = vcmp.eq.s32.totalorder %v6254, %v1144
      %vm6425 = vcmp.eq.s32.totalorder %v6257, %v1144
      %vm6426 = vcmp.eq.s32.totalorder %v6260, %v1144
      %vm6427 = vcmp.eq.s32.totalorder %v6263, %v1144
      %vm6428 = vcmp.eq.s32.totalorder %v6266, %v1144
      %vm6429 = vcmp.eq.s32.totalorder %v6269, %v1144
      %vm6430 = vcmp.eq.s32.totalorder %v6272, %v1144
      %vm6431 = vcmp.eq.s32.totalorder %v6275, %v1144
      %vm6432 = vcmp.eq.s32.totalorder %v6278, %v1144
      %vm6433 = vcmp.eq.s32.totalorder %v6281, %v1144
      %vm6434 = vcmp.eq.s32.totalorder %v6284, %v1144
      %vm6435 = vcmp.eq.s32.totalorder %v6287, %v1144
      %vm6436 = vcmp.eq.s32.totalorder %v6290, %v1144
      %vm6437 = vcmp.eq.s32.totalorder %v6293, %v1144
      %vm6438 = vcmp.eq.s32.totalorder %v6296, %v1144
      %vm6439 = vcmp.eq.s32.totalorder %v6299, %v1144
      %vm6440 = vcmp.eq.s32.totalorder %v6302, %v1144
      %vm6441 = vcmp.eq.s32.totalorder %v6305, %v1144
      %vm6442 = vcmp.eq.s32.totalorder %v6308, %v1144
      %vm6443 = vcmp.eq.s32.totalorder %v6311, %v1144
      %vm6444 = vcmp.eq.s32.totalorder %v6314, %v1144
      %vm6445 = vcmp.eq.s32.totalorder %v6317, %v1144
      %vm6446 = vcmp.eq.s32.totalorder %v6320, %v1144
      %vm6447 = vcmp.eq.s32.totalorder %v6323, %v1144
      %vm6448 = vcmp.eq.s32.totalorder %v6326, %v1144
      %vm6449 = vcmp.eq.s32.totalorder %v6329, %v1144
      %vm6450 = vcmp.eq.s32.totalorder %v6332, %v1144
      %vm6451 = vcmp.eq.s32.totalorder %v6335, %v1144
      %vm6452 = vcmp.eq.s32.totalorder %v6338, %v1144
      %vm6453 = vcmp.eq.s32.totalorder %v6341, %v1144
      %vm6454 = vcmp.eq.s32.totalorder %v6344, %v1144
      %vm6455 = vcmp.eq.s32.totalorder %v6347, %v1144
      %vm6456 = vcmp.eq.s32.totalorder %v6350, %v1144
      %vm6457 = vcmp.eq.s32.totalorder %v6353, %v1144
      %vm6458 = vcmp.eq.s32.totalorder %v6356, %v1144
      %vm6459 = vcmp.eq.s32.totalorder %v6359, %v1144
      %vm6460 = vcmp.eq.s32.totalorder %v6362, %v1144
      %vm6461 = vcmp.eq.s32.totalorder %v6365, %v1144
      %vm6462 = vcmp.eq.s32.totalorder %v6368, %v1144
      %vm6463 = vcmp.eq.s32.totalorder %v6371, %v1144
      %vm6464 = vcmp.eq.s32.totalorder %v6374, %v1144
      %vm6465 = vcmp.eq.s32.totalorder %v6377, %v1144
      %vm6466 = vcmp.eq.s32.totalorder %v6380, %v1144
      %vm6467 = vcmp.eq.s32.totalorder %v6383, %v1144
      %vm6468 = vcmp.eq.s32.totalorder %v6386, %v1144
      %vm6469 = vcmp.eq.s32.totalorder %v6389, %v1144
      %vm6470 = vcmp.eq.s32.totalorder %v6392, %v1144
      %vm6471 = vcmp.eq.s32.totalorder %v6395, %v1144
      %vm6472 = vcmp.eq.s32.totalorder %v6398, %v1144
      %vm6473 = vcmp.eq.s32.totalorder %v6401, %v1144
      %vm6474 = vcmp.eq.s32.totalorder %v6404, %v1144
      %vm6475 = vcmp.eq.s32.totalorder %v6407, %v1144
      %vm6476 = vcmp.eq.s32.totalorder %v6410, %v1144
      %vm6477 = vcmp.eq.s32.totalorder %v6413, %v1144
      %6478 = vset.pattern.permute.xlu0 5
      %6479 = vperm.xlu0 %6478, %v566
      %v6480 = vpop.permute.xlu0 %6479
      %6482 = vset.pattern.permute.xlu0 5
      %6483 = vperm.xlu0 %6482, %v567
      %v6484 = vpop.permute.xlu0 %6483
      %6486 = vset.pattern.permute.xlu0 5
      %6487 = vperm.xlu0 %6486, %v568
      %v6488 = vpop.permute.xlu0 %6487
      %6490 = vset.pattern.permute.xlu0 5
      %6491 = vperm.xlu0 %6490, %v569
      %v6492 = vpop.permute.xlu0 %6491
      %6494 = vset.pattern.permute.xlu0 5
      %6495 = vperm.xlu0 %6494, %v570
      %v6496 = vpop.permute.xlu0 %6495
      %6498 = vset.pattern.permute.xlu0 5
      %6499 = vperm.xlu0 %6498, %v571
      %v6500 = vpop.permute.xlu0 %6499
      %6502 = vset.pattern.permute.xlu0 5
      %6503 = vperm.xlu0 %6502, %v572
      %v6504 = vpop.permute.xlu0 %6503
      %6506 = vset.pattern.permute.xlu0 5
      %6507 = vperm.xlu0 %6506, %v573
      %v6508 = vpop.permute.xlu0 %6507
      %6510 = vset.pattern.permute.xlu0 5
      %6511 = vperm.xlu0 %6510, %v574
      %v6512 = vpop.permute.xlu0 %6511
      %6514 = vset.pattern.permute.xlu0 5
      %6515 = vperm.xlu0 %6514, %v575
      %v6516 = vpop.permute.xlu0 %6515
      %6518 = vset.pattern.permute.xlu0 5
      %6519 = vperm.xlu0 %6518, %v576
      %v6520 = vpop.permute.xlu0 %6519
      %6522 = vset.pattern.permute.xlu0 5
      %6523 = vperm.xlu0 %6522, %v577
      %v6524 = vpop.permute.xlu0 %6523
      %6526 = vset.pattern.permute.xlu0 5
      %6527 = vperm.xlu0 %6526, %v578
      %v6528 = vpop.permute.xlu0 %6527
      %6530 = vset.pattern.permute.xlu0 5
      %6531 = vperm.xlu0 %6530, %v579
      %v6532 = vpop.permute.xlu0 %6531
      %6534 = vset.pattern.permute.xlu0 5
      %6535 = vperm.xlu0 %6534, %v580
      %v6536 = vpop.permute.xlu0 %6535
      %6538 = vset.pattern.permute.xlu0 5
      %6539 = vperm.xlu0 %6538, %v581
      %v6540 = vpop.permute.xlu0 %6539
      %6542 = vset.pattern.permute.xlu0 5
      %6543 = vperm.xlu0 %6542, %v582
      %v6544 = vpop.permute.xlu0 %6543
      %6546 = vset.pattern.permute.xlu0 5
      %6547 = vperm.xlu0 %6546, %v583
      %v6548 = vpop.permute.xlu0 %6547
      %6550 = vset.pattern.permute.xlu0 5
      %6551 = vperm.xlu0 %6550, %v584
      %v6552 = vpop.permute.xlu0 %6551
      %6554 = vset.pattern.permute.xlu0 5
      %6555 = vperm.xlu0 %6554, %v585
      %v6556 = vpop.permute.xlu0 %6555
      %6558 = vset.pattern.permute.xlu0 5
      %6559 = vperm.xlu0 %6558, %v586
      %v6560 = vpop.permute.xlu0 %6559
      %6562 = vset.pattern.permute.xlu0 5
      %6563 = vperm.xlu0 %6562, %v587
      %v6564 = vpop.permute.xlu0 %6563
      %6566 = vset.pattern.permute.xlu0 5
      %6567 = vperm.xlu0 %6566, %v588
      %v6568 = vpop.permute.xlu0 %6567
      %6570 = vset.pattern.permute.xlu0 5
      %6571 = vperm.xlu0 %6570, %v589
      %v6572 = vpop.permute.xlu0 %6571
      %6574 = vset.pattern.permute.xlu0 5
      %6575 = vperm.xlu0 %6574, %v590
      %v6576 = vpop.permute.xlu0 %6575
      %6578 = vset.pattern.permute.xlu0 5
      %6579 = vperm.xlu0 %6578, %v591
      %v6580 = vpop.permute.xlu0 %6579
      %6582 = vset.pattern.permute.xlu0 5
      %6583 = vperm.xlu0 %6582, %v592
      %v6584 = vpop.permute.xlu0 %6583
      %6586 = vset.pattern.permute.xlu0 5
      %6587 = vperm.xlu0 %6586, %v593
      %v6588 = vpop.permute.xlu0 %6587
      %6590 = vset.pattern.permute.xlu0 5
      %6591 = vperm.xlu0 %6590, %v594
      %v6592 = vpop.permute.xlu0 %6591
      %6594 = vset.pattern.permute.xlu0 5
      %6595 = vperm.xlu0 %6594, %v595
      %v6596 = vpop.permute.xlu0 %6595
      %6598 = vset.pattern.permute.xlu0 5
      %6599 = vperm.xlu0 %6598, %v596
      %v6600 = vpop.permute.xlu0 %6599
      %6602 = vset.pattern.permute.xlu0 5
      %6603 = vperm.xlu0 %6602, %v597
      %v6604 = vpop.permute.xlu0 %6603
      %6606 = vset.pattern.permute.xlu0 5
      %6607 = vperm.xlu0 %6606, %v598
      %v6608 = vpop.permute.xlu0 %6607
      %6610 = vset.pattern.permute.xlu0 5
      %6611 = vperm.xlu0 %6610, %v599
      %v6612 = vpop.permute.xlu0 %6611
      %6614 = vset.pattern.permute.xlu0 5
      %6615 = vperm.xlu0 %6614, %v600
      %v6616 = vpop.permute.xlu0 %6615
      %6618 = vset.pattern.permute.xlu0 5
      %6619 = vperm.xlu0 %6618, %v601
      %v6620 = vpop.permute.xlu0 %6619
      %6622 = vset.pattern.permute.xlu0 5
      %6623 = vperm.xlu0 %6622, %v602
      %v6624 = vpop.permute.xlu0 %6623
      %6626 = vset.pattern.permute.xlu0 5
      %6627 = vperm.xlu0 %6626, %v603
      %v6628 = vpop.permute.xlu0 %6627
      %6630 = vset.pattern.permute.xlu0 5
      %6631 = vperm.xlu0 %6630, %v604
      %v6632 = vpop.permute.xlu0 %6631
      %6634 = vset.pattern.permute.xlu0 5
      %6635 = vperm.xlu0 %6634, %v605
      %v6636 = vpop.permute.xlu0 %6635
      %6638 = vset.pattern.permute.xlu0 5
      %6639 = vperm.xlu0 %6638, %v606
      %v6640 = vpop.permute.xlu0 %6639
      %6642 = vset.pattern.permute.xlu0 5
      %6643 = vperm.xlu0 %6642, %v607
      %v6644 = vpop.permute.xlu0 %6643
      %6646 = vset.pattern.permute.xlu0 5
      %6647 = vperm.xlu0 %6646, %v608
      %v6648 = vpop.permute.xlu0 %6647
      %6650 = vset.pattern.permute.xlu0 5
      %6651 = vperm.xlu0 %6650, %v609
      %v6652 = vpop.permute.xlu0 %6651
      %6654 = vset.pattern.permute.xlu0 5
      %6655 = vperm.xlu0 %6654, %v610
      %v6656 = vpop.permute.xlu0 %6655
      %6658 = vset.pattern.permute.xlu0 5
      %6659 = vperm.xlu0 %6658, %v611
      %v6660 = vpop.permute.xlu0 %6659
      %6662 = vset.pattern.permute.xlu0 5
      %6663 = vperm.xlu0 %6662, %v612
      %v6664 = vpop.permute.xlu0 %6663
      %6666 = vset.pattern.permute.xlu0 5
      %6667 = vperm.xlu0 %6666, %v613
      %v6668 = vpop.permute.xlu0 %6667
      %6670 = vset.pattern.permute.xlu0 5
      %6671 = vperm.xlu0 %6670, %v614
      %v6672 = vpop.permute.xlu0 %6671
      %6674 = vset.pattern.permute.xlu0 5
      %6675 = vperm.xlu0 %6674, %v615
      %v6676 = vpop.permute.xlu0 %6675
      %6678 = vset.pattern.permute.xlu0 5
      %6679 = vperm.xlu0 %6678, %v616
      %v6680 = vpop.permute.xlu0 %6679
      %6682 = vset.pattern.permute.xlu0 5
      %6683 = vperm.xlu0 %6682, %v617
      %v6684 = vpop.permute.xlu0 %6683
      %6686 = vset.pattern.permute.xlu0 5
      %6687 = vperm.xlu0 %6686, %v618
      %v6688 = vpop.permute.xlu0 %6687
      %6690 = vset.pattern.permute.xlu0 5
      %6691 = vperm.xlu0 %6690, %v619
      %v6692 = vpop.permute.xlu0 %6691
      %6694 = vset.pattern.permute.xlu0 5
      %6695 = vperm.xlu0 %6694, %v620
      %v6696 = vpop.permute.xlu0 %6695
      %6698 = vset.pattern.permute.xlu0 5
      %6699 = vperm.xlu0 %6698, %v621
      %v6700 = vpop.permute.xlu0 %6699
      %6702 = vset.pattern.permute.xlu0 5
      %6703 = vperm.xlu0 %6702, %v622
      %v6704 = vpop.permute.xlu0 %6703
      %6706 = vset.pattern.permute.xlu0 5
      %6707 = vperm.xlu0 %6706, %v623
      %v6708 = vpop.permute.xlu0 %6707
      %6710 = vset.pattern.permute.xlu0 5
      %6711 = vperm.xlu0 %6710, %v624
      %v6712 = vpop.permute.xlu0 %6711
      %6714 = vset.pattern.permute.xlu0 5
      %6715 = vperm.xlu0 %6714, %v625
      %v6716 = vpop.permute.xlu0 %6715
      %6718 = vset.pattern.permute.xlu0 5
      %6719 = vperm.xlu0 %6718, %v626
      %v6720 = vpop.permute.xlu0 %6719
      %6722 = vset.pattern.permute.xlu0 5
      %6723 = vperm.xlu0 %6722, %v627
      %v6724 = vpop.permute.xlu0 %6723
      %6726 = vset.pattern.permute.xlu0 5
      %6727 = vperm.xlu0 %6726, %v628
      %v6728 = vpop.permute.xlu0 %6727
      %6730 = vset.pattern.permute.xlu0 5
      %6731 = vperm.xlu0 %6730, %v629
      %v6732 = vpop.permute.xlu0 %6731
      %v6734 = vsel %vm6414, %v6480, 0.0
      %v6735 = vsel %vm6415, %v6484, 0.0
      %v6736 = vsel %vm6416, %v6488, 0.0
      %v6737 = vsel %vm6417, %v6492, 0.0
      %v6738 = vsel %vm6418, %v6496, 0.0
      %v6739 = vsel %vm6419, %v6500, 0.0
      %v6740 = vsel %vm6420, %v6504, 0.0
      %v6741 = vsel %vm6421, %v6508, 0.0
      %v6742 = vsel %vm6422, %v6512, 0.0
      %v6743 = vsel %vm6423, %v6516, 0.0
      %v6744 = vsel %vm6424, %v6520, 0.0
      %v6745 = vsel %vm6425, %v6524, 0.0
      %v6746 = vsel %vm6426, %v6528, 0.0
      %v6747 = vsel %vm6427, %v6532, 0.0
      %v6748 = vsel %vm6428, %v6536, 0.0
      %v6749 = vsel %vm6429, %v6540, 0.0
      %v6750 = vsel %vm6430, %v6544, 0.0
      %v6751 = vsel %vm6431, %v6548, 0.0
      %v6752 = vsel %vm6432, %v6552, 0.0
      %v6753 = vsel %vm6433, %v6556, 0.0
      %v6754 = vsel %vm6434, %v6560, 0.0
      %v6755 = vsel %vm6435, %v6564, 0.0
      %v6756 = vsel %vm6436, %v6568, 0.0
      %v6757 = vsel %vm6437, %v6572, 0.0
      %v6758 = vsel %vm6438, %v6576, 0.0
      %v6759 = vsel %vm6439, %v6580, 0.0
      %v6760 = vsel %vm6440, %v6584, 0.0
      %v6761 = vsel %vm6441, %v6588, 0.0
      %v6762 = vsel %vm6442, %v6592, 0.0
      %v6763 = vsel %vm6443, %v6596, 0.0
      %v6764 = vsel %vm6444, %v6600, 0.0
      %v6765 = vsel %vm6445, %v6604, 0.0
      %v6766 = vsel %vm6446, %v6608, 0.0
      %v6767 = vsel %vm6447, %v6612, 0.0
      %v6768 = vsel %vm6448, %v6616, 0.0
      %v6769 = vsel %vm6449, %v6620, 0.0
      %v6770 = vsel %vm6450, %v6624, 0.0
      %v6771 = vsel %vm6451, %v6628, 0.0
      %v6772 = vsel %vm6452, %v6632, 0.0
      %v6773 = vsel %vm6453, %v6636, 0.0
      %v6774 = vsel %vm6454, %v6640, 0.0
      %v6775 = vsel %vm6455, %v6644, 0.0
      %v6776 = vsel %vm6456, %v6648, 0.0
      %v6777 = vsel %vm6457, %v6652, 0.0
      %v6778 = vsel %vm6458, %v6656, 0.0
      %v6779 = vsel %vm6459, %v6660, 0.0
      %v6780 = vsel %vm6460, %v6664, 0.0
      %v6781 = vsel %vm6461, %v6668, 0.0
      %v6782 = vsel %vm6462, %v6672, 0.0
      %v6783 = vsel %vm6463, %v6676, 0.0
      %v6784 = vsel %vm6464, %v6680, 0.0
      %v6785 = vsel %vm6465, %v6684, 0.0
      %v6786 = vsel %vm6466, %v6688, 0.0
      %v6787 = vsel %vm6467, %v6692, 0.0
      %v6788 = vsel %vm6468, %v6696, 0.0
      %v6789 = vsel %vm6469, %v6700, 0.0
      %v6790 = vsel %vm6470, %v6704, 0.0
      %v6791 = vsel %vm6471, %v6708, 0.0
      %v6792 = vsel %vm6472, %v6712, 0.0
      %v6793 = vsel %vm6473, %v6716, 0.0
      %v6794 = vsel %vm6474, %v6720, 0.0
      %v6795 = vsel %vm6475, %v6724, 0.0
      %v6796 = vsel %vm6476, %v6728, 0.0
      %v6797 = vsel %vm6477, %v6732, 0.0
      %6798 = vmatprep.subr.mxu0 0.0
      %6799 = vmatpush1.msra.mxu0 %v1145
      %6800 = vmatprep.subr.mxu0 0.0
      %6801 = vmatpush1.msra.mxu0 %v1146
      %6802 = vmatprep.subr.mxu0 0.0
      %6803 = vmatpush1.msra.mxu0 %v1147
      %6804 = vmatprep.subr.mxu0 0.0
      %6805 = vmatpush1.msra.mxu0 %v1148
      %6806 = vmatprep.subr.mxu0 0.0
      %6807 = vmatpush1.msra.mxu0 %v1149
      %6808 = vmatprep.subr.mxu0 0.0
      %6809 = vmatpush1.msra.mxu0 %v1150
      %6810 = vmatprep.subr.mxu0 0.0
      %6811 = vmatpush1.msra.mxu0 %v1151
      %6812 = vmatprep.subr.mxu0 0.0
      %6813 = vmatpush1.msra.mxu0 %v1152
      %6814 = vmatprep.subr.mxu0 0.0
      %6815 = vmatpush1.msra.mxu0 %v1153
      %6816 = vmatprep.subr.mxu0 0.0
      %6817 = vmatpush1.msra.mxu0 %v1154
      %6818 = vmatprep.subr.mxu0 0.0
      %6819 = vmatpush1.msra.mxu0 %v1155
      %6820 = vmatprep.subr.mxu0 0.0
      %6821 = vmatpush1.msra.mxu0 %v1156
      %6822 = vmatprep.subr.mxu0 0.0
      %6823 = vmatpush1.msra.mxu0 %v1157
      %6824 = vmatprep.subr.mxu0 0.0
      %6825 = vmatpush1.msra.mxu0 %v1158
      %6826 = vmatprep.subr.mxu0 0.0
      %6827 = vmatpush1.msra.mxu0 %v1159
      %6828 = vmatprep.subr.mxu0 0.0
      %6829 = vmatpush1.msra.mxu0 %v1160
      %6830 = vmatprep.subr.mxu0 0.0
      %6831 = vmatpush1.msra.mxu0 0.0
      %6832 = vmatprep.subr.mxu0 0.0
      %6833 = vmatpush1.msra.mxu0 0.0
      %6834 = vmatprep.subr.mxu0 0.0
      %6835 = vmatpush1.msra.mxu0 0.0
      %6836 = vmatprep.subr.mxu0 0.0
      %6837 = vmatpush1.msra.mxu0 0.0
      %6838 = vmatprep.subr.mxu0 0.0
      %6839 = vmatpush1.msra.mxu0 0.0
      %6840 = vmatprep.subr.mxu0 0.0
      %6841 = vmatpush1.msra.mxu0 0.0
      %6842 = vmatprep.subr.mxu0 0.0
      %6843 = vmatpush1.msra.mxu0 0.0
      %6844 = vmatprep.subr.mxu0 0.0
      %6845 = vmatpush1.msra.mxu0 0.0
      %6846 = vmatprep.subr.mxu0 0.0
      %6847 = vmatpush1.msra.mxu0 0.0
      %6848 = vmatprep.subr.mxu0 0.0
      %6849 = vmatpush1.msra.mxu0 0.0
      %6850 = vmatprep.subr.mxu0 0.0
      %6851 = vmatpush1.msra.mxu0 0.0
      %6852 = vmatprep.subr.mxu0 0.0
      %6853 = vmatpush1.msra.mxu0 0.0
      %6854 = vmatprep.subr.mxu0 0.0
      %6855 = vmatpush1.msra.mxu0 0.0
      %6856 = vmatprep.subr.mxu0 0.0
      %6857 = vmatpush1.msra.mxu0 0.0
      %6858 = vmatprep.subr.mxu0 0.0
      %6859 = vmatpush1.msra.mxu0 0.0
      %6860 = vmatprep.subr.mxu0 0.0
      %6861 = vmatpush1.msra.mxu0 0.0
      %6862 = vmatprep.mubr.f32.mxu0 0.0
      %6863 = vmatmul.mubr.f32.gmra.mrb[0].mxu0 %v6734
      %v6864 = vpop.f32.mrb[0].mxu0
      %v6865 = vadd.f32 0.0, %v6864
      %v6866 = vpop.f32.mrb[0].mxu0
      %6867 = vmatprep.mubr.f32.mxu0 0.0
      %6868 = vmatmul.mubr.f32.gmra.mrb[0].mxu0 %v6735
      %v6869 = vpop.f32.mrb[0].mxu0
      %v6870 = vadd.f32 0.0, %v6869
      %v6871 = vpop.f32.mrb[0].mxu0
      %6872 = vmatprep.mubr.f32.mxu0 0.0
      %6873 = vmatmul.mubr.f32.gmra.mrb[0].mxu0 %v6736
      %v6874 = vpop.f32.mrb[0].mxu0
      %v6875 = vadd.f32 0.0, %v6874
      %v6876 = vpop.f32.mrb[0].mxu0
      %6877 = vmatprep.mubr.f32.mxu0 0.0
      %6878 = vmatmul.mubr.f32.gmra.mrb[0].mxu0 %v6737
      %v6879 = vpop.f32.mrb[0].mxu0
      %v6880 = vadd.f32 0.0, %v6879
      %v6881 = vpop.f32.mrb[0].mxu0
      %6882 = vmatprep.mubr.f32.mxu0 0.0
      %6883 = vmatmul.mubr.f32.gmra.mrb[0].mxu0 %v6738
      %v6884 = vpop.f32.mrb[0].mxu0
      %v6885 = vadd.f32 0.0, %v6884
      %v6886 = vpop.f32.mrb[0].mxu0
      %6887 = vmatprep.mubr.f32.mxu0 0.0
      %6888 = vmatmul.mubr.f32.gmra.mrb[0].mxu0 %v6739
      %v6889 = vpop.f32.mrb[0].mxu0
      %v6890 = vadd.f32 0.0, %v6889
      %v6891 = vpop.f32.mrb[0].mxu0
      %6892 = vmatprep.mubr.f32.mxu0 0.0
      %6893 = vmatmul.mubr.f32.gmra.mrb[0].mxu0 %v6740
      %v6894 = vpop.f32.mrb[0].mxu0
      %v6895 = vadd.f32 0.0, %v6894
      %v6896 = vpop.f32.mrb[0].mxu0
      %6897 = vmatprep.mubr.f32.mxu0 0.0
      %6898 = vmatmul.mubr.f32.gmra.mrb[0].mxu0 %v6741
      %v6899 = vpop.f32.mrb[0].mxu0
      %v6900 = vadd.f32 0.0, %v6899
      %v6901 = vpop.f32.mrb[0].mxu0
      %6902 = vmatprep.mubr.f32.mxu0 0.0
      %6903 = vmatmul.mubr.f32.gmra.mrb[0].mxu0 %v6742
      %v6904 = vpop.f32.mrb[0].mxu0
      %v6905 = vadd.f32 0.0, %v6904
      %v6906 = vpop.f32.mrb[0].mxu0
      %6907 = vmatprep.mubr.f32.mxu0 0.0
      %6908 = vmatmul.mubr.f32.gmra.mrb[0].mxu0 %v6743
      %v6909 = vpop.f32.mrb[0].mxu0
      %v6910 = vadd.f32 0.0, %v6909
      %v6911 = vpop.f32.mrb[0].mxu0
      %6912 = vmatprep.mubr.f32.mxu0 0.0
      %6913 = vmatmul.mubr.f32.gmra.mrb[0].mxu0 %v6744
      %v6914 = vpop.f32.mrb[0].mxu0
      %v6915 = vadd.f32 0.0, %v6914
      %v6916 = vpop.f32.mrb[0].mxu0
      %6917 = vmatprep.mubr.f32.mxu0 0.0
      %6918 = vmatmul.mubr.f32.gmra.mrb[0].mxu0 %v6745
      %v6919 = vpop.f32.mrb[0].mxu0
      %v6920 = vadd.f32 0.0, %v6919
      %v6921 = vpop.f32.mrb[0].mxu0
      %6922 = vmatprep.mubr.f32.mxu0 0.0
      %6923 = vmatmul.mubr.f32.gmra.mrb[0].mxu0 %v6746
      %v6924 = vpop.f32.mrb[0].mxu0
      %v6925 = vadd.f32 0.0, %v6924
      %v6926 = vpop.f32.mrb[0].mxu0
      %6927 = vmatprep.mubr.f32.mxu0 0.0
      %6928 = vmatmul.mubr.f32.gmra.mrb[0].mxu0 %v6747
      %v6929 = vpop.f32.mrb[0].mxu0
      %v6930 = vadd.f32 0.0, %v6929
      %v6931 = vpop.f32.mrb[0].mxu0
      %6932 = vmatprep.mubr.f32.mxu0 0.0
      %6933 = vmatmul.mubr.f32.gmra.mrb[0].mxu0 %v6748
      %v6934 = vpop.f32.mrb[0].mxu0
      %v6935 = vadd.f32 0.0, %v6934
      %v6936 = vpop.f32.mrb[0].mxu0
      %6937 = vmatprep.mubr.f32.mxu0 0.0
      %6938 = vmatmul.mubr.f32.gmra.mrb[0].mxu0 %v6749
      %v6939 = vpop.f32.mrb[0].mxu0
      %v6940 = vadd.f32 0.0, %v6939
      %v6941 = vpop.f32.mrb[0].mxu0
      %6942 = vmatprep.mubr.f32.mxu0 0.0
      %6943 = vmatmul.mubr.f32.gmra.mrb[0].mxu0 %v6750
      %v6944 = vpop.f32.mrb[0].mxu0
      %v6945 = vadd.f32 0.0, %v6944
      %v6946 = vpop.f32.mrb[0].mxu0
      %6947 = vmatprep.mubr.f32.mxu0 0.0
      %6948 = vmatmul.mubr.f32.gmra.mrb[0].mxu0 %v6751
      %v6949 = vpop.f32.mrb[0].mxu0
      %v6950 = vadd.f32 0.0, %v6949
      %v6951 = vpop.f32.mrb[0].mxu0
      %6952 = vmatprep.mubr.f32.mxu0 0.0
      %6953 = vmatmul.mubr.f32.gmra.mrb[0].mxu0 %v6752
      %v6954 = vpop.f32.mrb[0].mxu0
      %v6955 = vadd.f32 0.0, %v6954
      %v6956 = vpop.f32.mrb[0].mxu0
      %6957 = vmatprep.mubr.f32.mxu0 0.0
      %6958 = vmatmul.mubr.f32.gmra.mrb[0].mxu0 %v6753
      %v6959 = vpop.f32.mrb[0].mxu0
      %v6960 = vadd.f32 0.0, %v6959
      %v6961 = vpop.f32.mrb[0].mxu0
      %6962 = vmatprep.mubr.f32.mxu0 0.0
      %6963 = vmatmul.mubr.f32.gmra.mrb[0].mxu0 %v6754
      %v6964 = vpop.f32.mrb[0].mxu0
      %v6965 = vadd.f32 0.0, %v6964
      %v6966 = vpop.f32.mrb[0].mxu0
      %6967 = vmatprep.mubr.f32.mxu0 0.0
      %6968 = vmatmul.mubr.f32.gmra.mrb[0].mxu0 %v6755
      %v6969 = vpop.f32.mrb[0].mxu0
      %v6970 = vadd.f32 0.0, %v6969
      %v6971 = vpop.f32.mrb[0].mxu0
      %6972 = vmatprep.mubr.f32.mxu0 0.0
      %6973 = vmatmul.mubr.f32.gmra.mrb[0].mxu0 %v6756
      %v6974 = vpop.f32.mrb[0].mxu0
      %v6975 = vadd.f32 0.0, %v6974
      %v6976 = vpop.f32.mrb[0].mxu0
      %6977 = vmatprep.mubr.f32.mxu0 0.0
      %6978 = vmatmul.mubr.f32.gmra.mrb[0].mxu0 %v6757
      %v6979 = vpop.f32.mrb[0].mxu0
      %v6980 = vadd.f32 0.0, %v6979
      %v6981 = vpop.f32.mrb[0].mxu0
      %6982 = vmatprep.mubr.f32.mxu0 0.0
      %6983 = vmatmul.mubr.f32.gmra.mrb[0].mxu0 %v6758
      %v6984 = vpop.f32.mrb[0].mxu0
      %v6985 = vadd.f32 0.0, %v6984
      %v6986 = vpop.f32.mrb[0].mxu0
      %6987 = vmatprep.mubr.f32.mxu0 0.0
      %6988 = vmatmul.mubr.f32.gmra.mrb[0].mxu0 %v6759
      %v6989 = vpop.f32.mrb[0].mxu0
      %v6990 = vadd.f32 0.0, %v6989
      %v6991 = vpop.f32.mrb[0].mxu0
      %6992 = vmatprep.mubr.f32.mxu0 0.0
      %6993 = vmatmul.mubr.f32.gmra.mrb[0].mxu0 %v6760
      %v6994 = vpop.f32.mrb[0].mxu0
      %v6995 = vadd.f32 0.0, %v6994
      %v6996 = vpop.f32.mrb[0].mxu0
      %6997 = vmatprep.mubr.f32.mxu0 0.0
      %6998 = vmatmul.mubr.f32.gmra.mrb[0].mxu0 %v6761
      %v6999 = vpop.f32.mrb[0].mxu0
      %v7000 = vadd.f32 0.0, %v6999
      %v7001 = vpop.f32.mrb[0].mxu0
      %7002 = vmatprep.mubr.f32.mxu0 0.0
      %7003 = vmatmul.mubr.f32.gmra.mrb[0].mxu0 %v6762
      %v7004 = vpop.f32.mrb[0].mxu0
      %v7005 = vadd.f32 0.0, %v7004
      %v7006 = vpop.f32.mrb[0].mxu0
      %7007 = vmatprep.mubr.f32.mxu0 0.0
      %7008 = vmatmul.mubr.f32.gmra.mrb[0].mxu0 %v6763
      %v7009 = vpop.f32.mrb[0].mxu0
      %v7010 = vadd.f32 0.0, %v7009
      %v7011 = vpop.f32.mrb[0].mxu0
      %7012 = vmatprep.mubr.f32.mxu0 0.0
      %7013 = vmatmul.mubr.f32.gmra.mrb[0].mxu0 %v6764
      %v7014 = vpop.f32.mrb[0].mxu0
      %v7015 = vadd.f32 0.0, %v7014
      %v7016 = vpop.f32.mrb[0].mxu0
      %7017 = vmatprep.mubr.f32.mxu0 0.0
      %7018 = vmatmul.mubr.f32.gmra.mrb[0].mxu0 %v6765
      %v7019 = vpop.f32.mrb[0].mxu0
      %v7020 = vadd.f32 0.0, %v7019
      %v7021 = vpop.f32.mrb[0].mxu0
      %7022 = vmatprep.mubr.f32.mxu0 0.0
      %7023 = vmatmul.mubr.f32.gmra.mrb[0].mxu0 %v6766
      %v7024 = vpop.f32.mrb[0].mxu0
      %v7025 = vadd.f32 0.0, %v7024
      %v7026 = vpop.f32.mrb[0].mxu0
      %7027 = vmatprep.mubr.f32.mxu0 0.0
      %7028 = vmatmul.mubr.f32.gmra.mrb[0].mxu0 %v6767
      %v7029 = vpop.f32.mrb[0].mxu0
      %v7030 = vadd.f32 0.0, %v7029
      %v7031 = vpop.f32.mrb[0].mxu0
      %7032 = vmatprep.mubr.f32.mxu0 0.0
      %7033 = vmatmul.mubr.f32.gmra.mrb[0].mxu0 %v6768
      %v7034 = vpop.f32.mrb[0].mxu0
      %v7035 = vadd.f32 0.0, %v7034
      %v7036 = vpop.f32.mrb[0].mxu0
      %7037 = vmatprep.mubr.f32.mxu0 0.0
      %7038 = vmatmul.mubr.f32.gmra.mrb[0].mxu0 %v6769
      %v7039 = vpop.f32.mrb[0].mxu0
      %v7040 = vadd.f32 0.0, %v7039
      %v7041 = vpop.f32.mrb[0].mxu0
      %7042 = vmatprep.mubr.f32.mxu0 0.0
      %7043 = vmatmul.mubr.f32.gmra.mrb[0].mxu0 %v6770
      %v7044 = vpop.f32.mrb[0].mxu0
      %v7045 = vadd.f32 0.0, %v7044
      %v7046 = vpop.f32.mrb[0].mxu0
      %7047 = vmatprep.mubr.f32.mxu0 0.0
      %7048 = vmatmul.mubr.f32.gmra.mrb[0].mxu0 %v6771
      %v7049 = vpop.f32.mrb[0].mxu0
      %v7050 = vadd.f32 0.0, %v7049
      %v7051 = vpop.f32.mrb[0].mxu0
      %7052 = vmatprep.mubr.f32.mxu0 0.0
      %7053 = vmatmul.mubr.f32.gmra.mrb[0].mxu0 %v6772
      %v7054 = vpop.f32.mrb[0].mxu0
      %v7055 = vadd.f32 0.0, %v7054
      %v7056 = vpop.f32.mrb[0].mxu0
      %7057 = vmatprep.mubr.f32.mxu0 0.0
      %7058 = vmatmul.mubr.f32.gmra.mrb[0].mxu0 %v6773
      %v7059 = vpop.f32.mrb[0].mxu0
      %v7060 = vadd.f32 0.0, %v7059
      %v7061 = vpop.f32.mrb[0].mxu0
      %7062 = vmatprep.mubr.f32.mxu0 0.0
      %7063 = vmatmul.mubr.f32.gmra.mrb[0].mxu0 %v6774
      %v7064 = vpop.f32.mrb[0].mxu0
      %v7065 = vadd.f32 0.0, %v7064
      %v7066 = vpop.f32.mrb[0].mxu0
      %7067 = vmatprep.mubr.f32.mxu0 0.0
      %7068 = vmatmul.mubr.f32.gmra.mrb[0].mxu0 %v6775
      %v7069 = vpop.f32.mrb[0].mxu0
      %v7070 = vadd.f32 0.0, %v7069
      %v7071 = vpop.f32.mrb[0].mxu0
      %7072 = vmatprep.mubr.f32.mxu0 0.0
      %7073 = vmatmul.mubr.f32.gmra.mrb[0].mxu0 %v6776
      %v7074 = vpop.f32.mrb[0].mxu0
      %v7075 = vadd.f32 0.0, %v7074
      %v7076 = vpop.f32.mrb[0].mxu0
      %7077 = vmatprep.mubr.f32.mxu0 0.0
      %7078 = vmatmul.mubr.f32.gmra.mrb[0].mxu0 %v6777
      %v7079 = vpop.f32.mrb[0].mxu0
      %v7080 = vadd.f32 0.0, %v7079
      %v7081 = vpop.f32.mrb[0].mxu0
      %7082 = vmatprep.mubr.f32.mxu0 0.0
      %7083 = vmatmul.mubr.f32.gmra.mrb[0].mxu0 %v6778
      %v7084 = vpop.f32.mrb[0].mxu0
      %v7085 = vadd.f32 0.0, %v7084
      %v7086 = vpop.f32.mrb[0].mxu0
      %7087 = vmatprep.mubr.f32.mxu0 0.0
      %7088 = vmatmul.mubr.f32.gmra.mrb[0].mxu0 %v6779
      %v7089 = vpop.f32.mrb[0].mxu0
      %v7090 = vadd.f32 0.0, %v7089
      %v7091 = vpop.f32.mrb[0].mxu0
      %7092 = vmatprep.mubr.f32.mxu0 0.0
      %7093 = vmatmul.mubr.f32.gmra.mrb[0].mxu0 %v6780
      %v7094 = vpop.f32.mrb[0].mxu0
      %v7095 = vadd.f32 0.0, %v7094
      %v7096 = vpop.f32.mrb[0].mxu0
      %7097 = vmatprep.mubr.f32.mxu0 0.0
      %7098 = vmatmul.mubr.f32.gmra.mrb[0].mxu0 %v6781
      %v7099 = vpop.f32.mrb[0].mxu0
      %v7100 = vadd.f32 0.0, %v7099
      %v7101 = vpop.f32.mrb[0].mxu0
      %7102 = vmatprep.mubr.f32.mxu0 0.0
      %7103 = vmatmul.mubr.f32.gmra.mrb[0].mxu0 %v6782
      %v7104 = vpop.f32.mrb[0].mxu0
      %v7105 = vadd.f32 0.0, %v7104
      %v7106 = vpop.f32.mrb[0].mxu0
      %7107 = vmatprep.mubr.f32.mxu0 0.0
      %7108 = vmatmul.mubr.f32.gmra.mrb[0].mxu0 %v6783
      %v7109 = vpop.f32.mrb[0].mxu0
      %v7110 = vadd.f32 0.0, %v7109
      %v7111 = vpop.f32.mrb[0].mxu0
      %7112 = vmatprep.mubr.f32.mxu0 0.0
      %7113 = vmatmul.mubr.f32.gmra.mrb[0].mxu0 %v6784
      %v7114 = vpop.f32.mrb[0].mxu0
      %v7115 = vadd.f32 0.0, %v7114
      %v7116 = vpop.f32.mrb[0].mxu0
      %7117 = vmatprep.mubr.f32.mxu0 0.0
      %7118 = vmatmul.mubr.f32.gmra.mrb[0].mxu0 %v6785
      %v7119 = vpop.f32.mrb[0].mxu0
      %v7120 = vadd.f32 0.0, %v7119
      %v7121 = vpop.f32.mrb[0].mxu0
      %7122 = vmatprep.mubr.f32.mxu0 0.0
      %7123 = vmatmul.mubr.f32.gmra.mrb[0].mxu0 %v6786
      %v7124 = vpop.f32.mrb[0].mxu0
      %v7125 = vadd.f32 0.0, %v7124
      %v7126 = vpop.f32.mrb[0].mxu0
      %7127 = vmatprep.mubr.f32.mxu0 0.0
      %7128 = vmatmul.mubr.f32.gmra.mrb[0].mxu0 %v6787
      %v7129 = vpop.f32.mrb[0].mxu0
      %v7130 = vadd.f32 0.0, %v7129
      %v7131 = vpop.f32.mrb[0].mxu0
      %7132 = vmatprep.mubr.f32.mxu0 0.0
      %7133 = vmatmul.mubr.f32.gmra.mrb[0].mxu0 %v6788
      %v7134 = vpop.f32.mrb[0].mxu0
      %v7135 = vadd.f32 0.0, %v7134
      %v7136 = vpop.f32.mrb[0].mxu0
      %7137 = vmatprep.mubr.f32.mxu0 0.0
      %7138 = vmatmul.mubr.f32.gmra.mrb[0].mxu0 %v6789
      %v7139 = vpop.f32.mrb[0].mxu0
      %v7140 = vadd.f32 0.0, %v7139
      %v7141 = vpop.f32.mrb[0].mxu0
      %7142 = vmatprep.mubr.f32.mxu0 0.0
      %7143 = vmatmul.mubr.f32.gmra.mrb[0].mxu0 %v6790
      %v7144 = vpop.f32.mrb[0].mxu0
      %v7145 = vadd.f32 0.0, %v7144
      %v7146 = vpop.f32.mrb[0].mxu0
      %7147 = vmatprep.mubr.f32.mxu0 0.0
      %7148 = vmatmul.mubr.f32.gmra.mrb[0].mxu0 %v6791
      %v7149 = vpop.f32.mrb[0].mxu0
      %v7150 = vadd.f32 0.0, %v7149
      %v7151 = vpop.f32.mrb[0].mxu0
      %7152 = vmatprep.mubr.f32.mxu0 0.0
      %7153 = vmatmul.mubr.f32.gmra.mrb[0].mxu0 %v6792
      %v7154 = vpop.f32.mrb[0].mxu0
      %v7155 = vadd.f32 0.0, %v7154
      %v7156 = vpop.f32.mrb[0].mxu0
      %7157 = vmatprep.mubr.f32.mxu0 0.0
      %7158 = vmatmul.mubr.f32.gmra.mrb[0].mxu0 %v6793
      %v7159 = vpop.f32.mrb[0].mxu0
      %v7160 = vadd.f32 0.0, %v7159
      %v7161 = vpop.f32.mrb[0].mxu0
      %7162 = vmatprep.mubr.f32.mxu0 0.0
      %7163 = vmatmul.mubr.f32.gmra.mrb[0].mxu0 %v6794
      %v7164 = vpop.f32.mrb[0].mxu0
      %v7165 = vadd.f32 0.0, %v7164
      %v7166 = vpop.f32.mrb[0].mxu0
      %7167 = vmatprep.mubr.f32.mxu0 0.0
      %7168 = vmatmul.mubr.f32.gmra.mrb[0].mxu0 %v6795
      %v7169 = vpop.f32.mrb[0].mxu0
      %v7170 = vadd.f32 0.0, %v7169
      %v7171 = vpop.f32.mrb[0].mxu0
      %7172 = vmatprep.mubr.f32.mxu0 0.0
      %7173 = vmatmul.mubr.f32.gmra.mrb[0].mxu0 %v6796
      %v7174 = vpop.f32.mrb[0].mxu0
      %v7175 = vadd.f32 0.0, %v7174
      %v7176 = vpop.f32.mrb[0].mxu0
      %7177 = vmatprep.mubr.f32.mxu0 0.0
      %7178 = vmatmul.mubr.f32.gmra.mrb[0].mxu0 %v6797
      %v7179 = vpop.f32.mrb[0].mxu0
      %v7180 = vadd.f32 0.0, %v7179
      %v7181 = vpop.f32.mrb[0].mxu0
      %7182 = vdwg.mxu0
      %v7183 = vadd.f32 %v6158, %v6865
      %v7184 = vadd.f32 %v6159, %v6870
      %v7185 = vadd.f32 %v6160, %v6875
      %v7186 = vadd.f32 %v6161, %v6880
      %v7187 = vadd.f32 %v6162, %v6885
      %v7188 = vadd.f32 %v6163, %v6890
      %v7189 = vadd.f32 %v6164, %v6895
      %v7190 = vadd.f32 %v6165, %v6900
      %v7191 = vadd.f32 %v6166, %v6905
      %v7192 = vadd.f32 %v6167, %v6910
      %v7193 = vadd.f32 %v6168, %v6915
      %v7194 = vadd.f32 %v6169, %v6920
      %v7195 = vadd.f32 %v6170, %v6925
      %v7196 = vadd.f32 %v6171, %v6930
      %v7197 = vadd.f32 %v6172, %v6935
      %v7198 = vadd.f32 %v6173, %v6940
      %v7199 = vadd.f32 %v6174, %v6945
      %v7200 = vadd.f32 %v6175, %v6950
      %v7201 = vadd.f32 %v6176, %v6955
      %v7202 = vadd.f32 %v6177, %v6960
      %v7203 = vadd.f32 %v6178, %v6965
      %v7204 = vadd.f32 %v6179, %v6970
      %v7205 = vadd.f32 %v6180, %v6975
      %v7206 = vadd.f32 %v6181, %v6980
      %v7207 = vadd.f32 %v6182, %v6985
      %v7208 = vadd.f32 %v6183, %v6990
      %v7209 = vadd.f32 %v6184, %v6995
      %v7210 = vadd.f32 %v6185, %v7000
      %v7211 = vadd.f32 %v6186, %v7005
      %v7212 = vadd.f32 %v6187, %v7010
      %v7213 = vadd.f32 %v6188, %v7015
      %v7214 = vadd.f32 %v6189, %v7020
      %v7215 = vadd.f32 %v6190, %v7025
      %v7216 = vadd.f32 %v6191, %v7030
      %v7217 = vadd.f32 %v6192, %v7035
      %v7218 = vadd.f32 %v6193, %v7040
      %v7219 = vadd.f32 %v6194, %v7045
      %v7220 = vadd.f32 %v6195, %v7050
      %v7221 = vadd.f32 %v6196, %v7055
      %v7222 = vadd.f32 %v6197, %v7060
      %v7223 = vadd.f32 %v6198, %v7065
      %v7224 = vadd.f32 %v6199, %v7070
      %v7225 = vadd.f32 %v6200, %v7075
      %v7226 = vadd.f32 %v6201, %v7080
      %v7227 = vadd.f32 %v6202, %v7085
      %v7228 = vadd.f32 %v6203, %v7090
      %v7229 = vadd.f32 %v6204, %v7095
      %v7230 = vadd.f32 %v6205, %v7100
      %v7231 = vadd.f32 %v6206, %v7105
      %v7232 = vadd.f32 %v6207, %v7110
      %v7233 = vadd.f32 %v6208, %v7115
      %v7234 = vadd.f32 %v6209, %v7120
      %v7235 = vadd.f32 %v6210, %v7125
      %v7236 = vadd.f32 %v6211, %v7130
      %v7237 = vadd.f32 %v6212, %v7135
      %v7238 = vadd.f32 %v6213, %v7140
      %v7239 = vadd.f32 %v6214, %v7145
      %v7240 = vadd.f32 %v6215, %v7150
      %v7241 = vadd.f32 %v6216, %v7155
      %v7242 = vadd.f32 %v6217, %v7160
      %v7243 = vadd.f32 %v6218, %v7165
      %v7244 = vadd.f32 %v6219, %v7170
      %v7245 = vadd.f32 %v6220, %v7175
      %v7246 = vadd.f32 %v6221, %v7180
      %7247 = vset.pattern.permute.xlu0 6
      %7248 = vperm.xlu0 %7247, %v246
      %v7249 = vpop.permute.xlu0 %7248
      %7250 = vset.pattern.permute.xlu0 6
      %7251 = vperm.xlu0 %7250, %v247
      %v7252 = vpop.permute.xlu0 %7251
      %7253 = vset.pattern.permute.xlu0 6
      %7254 = vperm.xlu0 %7253, %v248
      %v7255 = vpop.permute.xlu0 %7254
      %7256 = vset.pattern.permute.xlu0 6
      %7257 = vperm.xlu0 %7256, %v249
      %v7258 = vpop.permute.xlu0 %7257
      %7259 = vset.pattern.permute.xlu0 6
      %7260 = vperm.xlu0 %7259, %v250
      %v7261 = vpop.permute.xlu0 %7260
      %7262 = vset.pattern.permute.xlu0 6
      %7263 = vperm.xlu0 %7262, %v251
      %v7264 = vpop.permute.xlu0 %7263
      %7265 = vset.pattern.permute.xlu0 6
      %7266 = vperm.xlu0 %7265, %v252
      %v7267 = vpop.permute.xlu0 %7266
      %7268 = vset.pattern.permute.xlu0 6
      %7269 = vperm.xlu0 %7268, %v253
      %v7270 = vpop.permute.xlu0 %7269
      %7271 = vset.pattern.permute.xlu0 6
      %7272 = vperm.xlu0 %7271, %v254
      %v7273 = vpop.permute.xlu0 %7272
      %7274 = vset.pattern.permute.xlu0 6
      %7275 = vperm.xlu0 %7274, %v255
      %v7276 = vpop.permute.xlu0 %7275
      %7277 = vset.pattern.permute.xlu0 6
      %7278 = vperm.xlu0 %7277, %v256
      %v7279 = vpop.permute.xlu0 %7278
      %7280 = vset.pattern.permute.xlu0 6
      %7281 = vperm.xlu0 %7280, %v257
      %v7282 = vpop.permute.xlu0 %7281
      %7283 = vset.pattern.permute.xlu0 6
      %7284 = vperm.xlu0 %7283, %v258
      %v7285 = vpop.permute.xlu0 %7284
      %7286 = vset.pattern.permute.xlu0 6
      %7287 = vperm.xlu0 %7286, %v259
      %v7288 = vpop.permute.xlu0 %7287
      %7289 = vset.pattern.permute.xlu0 6
      %7290 = vperm.xlu0 %7289, %v260
      %v7291 = vpop.permute.xlu0 %7290
      %7292 = vset.pattern.permute.xlu0 6
      %7293 = vperm.xlu0 %7292, %v261
      %v7294 = vpop.permute.xlu0 %7293
      %7295 = vset.pattern.permute.xlu0 6
      %7296 = vperm.xlu0 %7295, %v262
      %v7297 = vpop.permute.xlu0 %7296
      %7298 = vset.pattern.permute.xlu0 6
      %7299 = vperm.xlu0 %7298, %v263
      %v7300 = vpop.permute.xlu0 %7299
      %7301 = vset.pattern.permute.xlu0 6
      %7302 = vperm.xlu0 %7301, %v264
      %v7303 = vpop.permute.xlu0 %7302
      %7304 = vset.pattern.permute.xlu0 6
      %7305 = vperm.xlu0 %7304, %v265
      %v7306 = vpop.permute.xlu0 %7305
      %7307 = vset.pattern.permute.xlu0 6
      %7308 = vperm.xlu0 %7307, %v266
      %v7309 = vpop.permute.xlu0 %7308
      %7310 = vset.pattern.permute.xlu0 6
      %7311 = vperm.xlu0 %7310, %v267
      %v7312 = vpop.permute.xlu0 %7311
      %7313 = vset.pattern.permute.xlu0 6
      %7314 = vperm.xlu0 %7313, %v268
      %v7315 = vpop.permute.xlu0 %7314
      %7316 = vset.pattern.permute.xlu0 6
      %7317 = vperm.xlu0 %7316, %v269
      %v7318 = vpop.permute.xlu0 %7317
      %7319 = vset.pattern.permute.xlu0 6
      %7320 = vperm.xlu0 %7319, %v270
      %v7321 = vpop.permute.xlu0 %7320
      %7322 = vset.pattern.permute.xlu0 6
      %7323 = vperm.xlu0 %7322, %v271
      %v7324 = vpop.permute.xlu0 %7323
      %7325 = vset.pattern.permute.xlu0 6
      %7326 = vperm.xlu0 %7325, %v272
      %v7327 = vpop.permute.xlu0 %7326
      %7328 = vset.pattern.permute.xlu0 6
      %7329 = vperm.xlu0 %7328, %v273
      %v7330 = vpop.permute.xlu0 %7329
      %7331 = vset.pattern.permute.xlu0 6
      %7332 = vperm.xlu0 %7331, %v274
      %v7333 = vpop.permute.xlu0 %7332
      %7334 = vset.pattern.permute.xlu0 6
      %7335 = vperm.xlu0 %7334, %v275
      %v7336 = vpop.permute.xlu0 %7335
      %7337 = vset.pattern.permute.xlu0 6
      %7338 = vperm.xlu0 %7337, %v276
      %v7339 = vpop.permute.xlu0 %7338
      %7340 = vset.pattern.permute.xlu0 6
      %7341 = vperm.xlu0 %7340, %v277
      %v7342 = vpop.permute.xlu0 %7341
      %7343 = vset.pattern.permute.xlu0 6
      %7344 = vperm.xlu0 %7343, %v278
      %v7345 = vpop.permute.xlu0 %7344
      %7346 = vset.pattern.permute.xlu0 6
      %7347 = vperm.xlu0 %7346, %v279
      %v7348 = vpop.permute.xlu0 %7347
      %7349 = vset.pattern.permute.xlu0 6
      %7350 = vperm.xlu0 %7349, %v280
      %v7351 = vpop.permute.xlu0 %7350
      %7352 = vset.pattern.permute.xlu0 6
      %7353 = vperm.xlu0 %7352, %v281
      %v7354 = vpop.permute.xlu0 %7353
      %7355 = vset.pattern.permute.xlu0 6
      %7356 = vperm.xlu0 %7355, %v282
      %v7357 = vpop.permute.xlu0 %7356
      %7358 = vset.pattern.permute.xlu0 6
      %7359 = vperm.xlu0 %7358, %v283
      %v7360 = vpop.permute.xlu0 %7359
      %7361 = vset.pattern.permute.xlu0 6
      %7362 = vperm.xlu0 %7361, %v284
      %v7363 = vpop.permute.xlu0 %7362
      %7364 = vset.pattern.permute.xlu0 6
      %7365 = vperm.xlu0 %7364, %v285
      %v7366 = vpop.permute.xlu0 %7365
      %7367 = vset.pattern.permute.xlu0 6
      %7368 = vperm.xlu0 %7367, %v286
      %v7369 = vpop.permute.xlu0 %7368
      %7370 = vset.pattern.permute.xlu0 6
      %7371 = vperm.xlu0 %7370, %v287
      %v7372 = vpop.permute.xlu0 %7371
      %7373 = vset.pattern.permute.xlu0 6
      %7374 = vperm.xlu0 %7373, %v288
      %v7375 = vpop.permute.xlu0 %7374
      %7376 = vset.pattern.permute.xlu0 6
      %7377 = vperm.xlu0 %7376, %v289
      %v7378 = vpop.permute.xlu0 %7377
      %7379 = vset.pattern.permute.xlu0 6
      %7380 = vperm.xlu0 %7379, %v290
      %v7381 = vpop.permute.xlu0 %7380
      %7382 = vset.pattern.permute.xlu0 6
      %7383 = vperm.xlu0 %7382, %v291
      %v7384 = vpop.permute.xlu0 %7383
      %7385 = vset.pattern.permute.xlu0 6
      %7386 = vperm.xlu0 %7385, %v292
      %v7387 = vpop.permute.xlu0 %7386
      %7388 = vset.pattern.permute.xlu0 6
      %7389 = vperm.xlu0 %7388, %v293
      %v7390 = vpop.permute.xlu0 %7389
      %7391 = vset.pattern.permute.xlu0 6
      %7392 = vperm.xlu0 %7391, %v294
      %v7393 = vpop.permute.xlu0 %7392
      %7394 = vset.pattern.permute.xlu0 6
      %7395 = vperm.xlu0 %7394, %v295
      %v7396 = vpop.permute.xlu0 %7395
      %7397 = vset.pattern.permute.xlu0 6
      %7398 = vperm.xlu0 %7397, %v296
      %v7399 = vpop.permute.xlu0 %7398
      %7400 = vset.pattern.permute.xlu0 6
      %7401 = vperm.xlu0 %7400, %v297
      %v7402 = vpop.permute.xlu0 %7401
      %7403 = vset.pattern.permute.xlu0 6
      %7404 = vperm.xlu0 %7403, %v298
      %v7405 = vpop.permute.xlu0 %7404
      %7406 = vset.pattern.permute.xlu0 6
      %7407 = vperm.xlu0 %7406, %v299
      %v7408 = vpop.permute.xlu0 %7407
      %7409 = vset.pattern.permute.xlu0 6
      %7410 = vperm.xlu0 %7409, %v300
      %v7411 = vpop.permute.xlu0 %7410
      %7412 = vset.pattern.permute.xlu0 6
      %7413 = vperm.xlu0 %7412, %v301
      %v7414 = vpop.permute.xlu0 %7413
      %7415 = vset.pattern.permute.xlu0 6
      %7416 = vperm.xlu0 %7415, %v302
      %v7417 = vpop.permute.xlu0 %7416
      %7418 = vset.pattern.permute.xlu0 6
      %7419 = vperm.xlu0 %7418, %v303
      %v7420 = vpop.permute.xlu0 %7419
      %7421 = vset.pattern.permute.xlu0 6
      %7422 = vperm.xlu0 %7421, %v304
      %v7423 = vpop.permute.xlu0 %7422
      %7424 = vset.pattern.permute.xlu0 6
      %7425 = vperm.xlu0 %7424, %v305
      %v7426 = vpop.permute.xlu0 %7425
      %7427 = vset.pattern.permute.xlu0 6
      %7428 = vperm.xlu0 %7427, %v306
      %v7429 = vpop.permute.xlu0 %7428
      %7430 = vset.pattern.permute.xlu0 6
      %7431 = vperm.xlu0 %7430, %v307
      %v7432 = vpop.permute.xlu0 %7431
      %7433 = vset.pattern.permute.xlu0 6
      %7434 = vperm.xlu0 %7433, %v308
      %v7435 = vpop.permute.xlu0 %7434
      %7436 = vset.pattern.permute.xlu0 6
      %7437 = vperm.xlu0 %7436, %v309
      %v7438 = vpop.permute.xlu0 %7437
      %vm7439 = vcmp.eq.s32.totalorder %v7249, %v1144
      %vm7440 = vcmp.eq.s32.totalorder %v7252, %v1144
      %vm7441 = vcmp.eq.s32.totalorder %v7255, %v1144
      %vm7442 = vcmp.eq.s32.totalorder %v7258, %v1144
      %vm7443 = vcmp.eq.s32.totalorder %v7261, %v1144
      %vm7444 = vcmp.eq.s32.totalorder %v7264, %v1144
      %vm7445 = vcmp.eq.s32.totalorder %v7267, %v1144
      %vm7446 = vcmp.eq.s32.totalorder %v7270, %v1144
      %vm7447 = vcmp.eq.s32.totalorder %v7273, %v1144
      %vm7448 = vcmp.eq.s32.totalorder %v7276, %v1144
      %vm7449 = vcmp.eq.s32.totalorder %v7279, %v1144
      %vm7450 = vcmp.eq.s32.totalorder %v7282, %v1144
      %vm7451 = vcmp.eq.s32.totalorder %v7285, %v1144
      %vm7452 = vcmp.eq.s32.totalorder %v7288, %v1144
      %vm7453 = vcmp.eq.s32.totalorder %v7291, %v1144
      %vm7454 = vcmp.eq.s32.totalorder %v7294, %v1144
      %vm7455 = vcmp.eq.s32.totalorder %v7297, %v1144
      %vm7456 = vcmp.eq.s32.totalorder %v7300, %v1144
      %vm7457 = vcmp.eq.s32.totalorder %v7303, %v1144
      %vm7458 = vcmp.eq.s32.totalorder %v7306, %v1144
      %vm7459 = vcmp.eq.s32.totalorder %v7309, %v1144
      %vm7460 = vcmp.eq.s32.totalorder %v7312, %v1144
      %vm7461 = vcmp.eq.s32.totalorder %v7315, %v1144
      %vm7462 = vcmp.eq.s32.totalorder %v7318, %v1144
      %vm7463 = vcmp.eq.s32.totalorder %v7321, %v1144
      %vm7464 = vcmp.eq.s32.totalorder %v7324, %v1144
      %vm7465 = vcmp.eq.s32.totalorder %v7327, %v1144
      %vm7466 = vcmp.eq.s32.totalorder %v7330, %v1144
      %vm7467 = vcmp.eq.s32.totalorder %v7333, %v1144
      %vm7468 = vcmp.eq.s32.totalorder %v7336, %v1144
      %vm7469 = vcmp.eq.s32.totalorder %v7339, %v1144
      %vm7470 = vcmp.eq.s32.totalorder %v7342, %v1144
      %vm7471 = vcmp.eq.s32.totalorder %v7345, %v1144
      %vm7472 = vcmp.eq.s32.totalorder %v7348, %v1144
      %vm7473 = vcmp.eq.s32.totalorder %v7351, %v1144
      %vm7474 = vcmp.eq.s32.totalorder %v7354, %v1144
      %vm7475 = vcmp.eq.s32.totalorder %v7357, %v1144
      %vm7476 = vcmp.eq.s32.totalorder %v7360, %v1144
      %vm7477 = vcmp.eq.s32.totalorder %v7363, %v1144
      %vm7478 = vcmp.eq.s32.totalorder %v7366, %v1144
      %vm7479 = vcmp.eq.s32.totalorder %v7369, %v1144
      %vm7480 = vcmp.eq.s32.totalorder %v7372, %v1144
      %vm7481 = vcmp.eq.s32.totalorder %v7375, %v1144
      %vm7482 = vcmp.eq.s32.totalorder %v7378, %v1144
      %vm7483 = vcmp.eq.s32.totalorder %v7381, %v1144
      %vm7484 = vcmp.eq.s32.totalorder %v7384, %v1144
      %vm7485 = vcmp.eq.s32.totalorder %v7387, %v1144
      %vm7486 = vcmp.eq.s32.totalorder %v7390, %v1144
      %vm7487 = vcmp.eq.s32.totalorder %v7393, %v1144
      %vm7488 = vcmp.eq.s32.totalorder %v7396, %v1144
      %vm7489 = vcmp.eq.s32.totalorder %v7399, %v1144
      %vm7490 = vcmp.eq.s32.totalorder %v7402, %v1144
      %vm7491 = vcmp.eq.s32.totalorder %v7405, %v1144
      %vm7492 = vcmp.eq.s32.totalorder %v7408, %v1144
      %vm7493 = vcmp.eq.s32.totalorder %v7411, %v1144
      %vm7494 = vcmp.eq.s32.totalorder %v7414, %v1144
      %vm7495 = vcmp.eq.s32.totalorder %v7417, %v1144
      %vm7496 = vcmp.eq.s32.totalorder %v7420, %v1144
      %vm7497 = vcmp.eq.s32.totalorder %v7423, %v1144
      %vm7498 = vcmp.eq.s32.totalorder %v7426, %v1144
      %vm7499 = vcmp.eq.s32.totalorder %v7429, %v1144
      %vm7500 = vcmp.eq.s32.totalorder %v7432, %v1144
      %vm7501 = vcmp.eq.s32.totalorder %v7435, %v1144
      %vm7502 = vcmp.eq.s32.totalorder %v7438, %v1144
      %7503 = vset.pattern.permute.xlu0 6
      %7504 = vperm.xlu0 %7503, %v566
      %v7505 = vpop.permute.xlu0 %7504
      %7507 = vset.pattern.permute.xlu0 6
      %7508 = vperm.xlu0 %7507, %v567
      %v7509 = vpop.permute.xlu0 %7508
      %7511 = vset.pattern.permute.xlu0 6
      %7512 = vperm.xlu0 %7511, %v568
      %v7513 = vpop.permute.xlu0 %7512
      %7515 = vset.pattern.permute.xlu0 6
      %7516 = vperm.xlu0 %7515, %v569
      %v7517 = vpop.permute.xlu0 %7516
      %7519 = vset.pattern.permute.xlu0 6
      %7520 = vperm.xlu0 %7519, %v570
      %v7521 = vpop.permute.xlu0 %7520
      %7523 = vset.pattern.permute.xlu0 6
      %7524 = vperm.xlu0 %7523, %v571
      %v7525 = vpop.permute.xlu0 %7524
      %7527 = vset.pattern.permute.xlu0 6
      %7528 = vperm.xlu0 %7527, %v572
      %v7529 = vpop.permute.xlu0 %7528
      %7531 = vset.pattern.permute.xlu0 6
      %7532 = vperm.xlu0 %7531, %v573
      %v7533 = vpop.permute.xlu0 %7532
      %7535 = vset.pattern.permute.xlu0 6
      %7536 = vperm.xlu0 %7535, %v574
      %v7537 = vpop.permute.xlu0 %7536
      %7539 = vset.pattern.permute.xlu0 6
      %7540 = vperm.xlu0 %7539, %v575
      %v7541 = vpop.permute.xlu0 %7540
      %7543 = vset.pattern.permute.xlu0 6
      %7544 = vperm.xlu0 %7543, %v576
      %v7545 = vpop.permute.xlu0 %7544
      %7547 = vset.pattern.permute.xlu0 6
      %7548 = vperm.xlu0 %7547, %v577
      %v7549 = vpop.permute.xlu0 %7548
      %7551 = vset.pattern.permute.xlu0 6
      %7552 = vperm.xlu0 %7551, %v578
      %v7553 = vpop.permute.xlu0 %7552
      %7555 = vset.pattern.permute.xlu0 6
      %7556 = vperm.xlu0 %7555, %v579
      %v7557 = vpop.permute.xlu0 %7556
      %7559 = vset.pattern.permute.xlu0 6
      %7560 = vperm.xlu0 %7559, %v580
      %v7561 = vpop.permute.xlu0 %7560
      %7563 = vset.pattern.permute.xlu0 6
      %7564 = vperm.xlu0 %7563, %v581
      %v7565 = vpop.permute.xlu0 %7564
      %7567 = vset.pattern.permute.xlu0 6
      %7568 = vperm.xlu0 %7567, %v582
      %v7569 = vpop.permute.xlu0 %7568
      %7571 = vset.pattern.permute.xlu0 6
      %7572 = vperm.xlu0 %7571, %v583
      %v7573 = vpop.permute.xlu0 %7572
      %7575 = vset.pattern.permute.xlu0 6
      %7576 = vperm.xlu0 %7575, %v584
      %v7577 = vpop.permute.xlu0 %7576
      %7579 = vset.pattern.permute.xlu0 6
      %7580 = vperm.xlu0 %7579, %v585
      %v7581 = vpop.permute.xlu0 %7580
      %7583 = vset.pattern.permute.xlu0 6
      %7584 = vperm.xlu0 %7583, %v586
      %v7585 = vpop.permute.xlu0 %7584
      %7587 = vset.pattern.permute.xlu0 6
      %7588 = vperm.xlu0 %7587, %v587
      %v7589 = vpop.permute.xlu0 %7588
      %7591 = vset.pattern.permute.xlu0 6
      %7592 = vperm.xlu0 %7591, %v588
      %v7593 = vpop.permute.xlu0 %7592
      %7595 = vset.pattern.permute.xlu0 6
      %7596 = vperm.xlu0 %7595, %v589
      %v7597 = vpop.permute.xlu0 %7596
      %7599 = vset.pattern.permute.xlu0 6
      %7600 = vperm.xlu0 %7599, %v590
      %v7601 = vpop.permute.xlu0 %7600
      %7603 = vset.pattern.permute.xlu0 6
      %7604 = vperm.xlu0 %7603, %v591
      %v7605 = vpop.permute.xlu0 %7604
      %7607 = vset.pattern.permute.xlu0 6
      %7608 = vperm.xlu0 %7607, %v592
      %v7609 = vpop.permute.xlu0 %7608
      %7611 = vset.pattern.permute.xlu0 6
      %7612 = vperm.xlu0 %7611, %v593
      %v7613 = vpop.permute.xlu0 %7612
      %7615 = vset.pattern.permute.xlu0 6
      %7616 = vperm.xlu0 %7615, %v594
      %v7617 = vpop.permute.xlu0 %7616
      %7619 = vset.pattern.permute.xlu0 6
      %7620 = vperm.xlu0 %7619, %v595
      %v7621 = vpop.permute.xlu0 %7620
      %7623 = vset.pattern.permute.xlu0 6
      %7624 = vperm.xlu0 %7623, %v596
      %v7625 = vpop.permute.xlu0 %7624
      %7627 = vset.pattern.permute.xlu0 6
      %7628 = vperm.xlu0 %7627, %v597
      %v7629 = vpop.permute.xlu0 %7628
      %7631 = vset.pattern.permute.xlu0 6
      %7632 = vperm.xlu0 %7631, %v598
      %v7633 = vpop.permute.xlu0 %7632
      %7635 = vset.pattern.permute.xlu0 6
      %7636 = vperm.xlu0 %7635, %v599
      %v7637 = vpop.permute.xlu0 %7636
      %7639 = vset.pattern.permute.xlu0 6
      %7640 = vperm.xlu0 %7639, %v600
      %v7641 = vpop.permute.xlu0 %7640
      %7643 = vset.pattern.permute.xlu0 6
      %7644 = vperm.xlu0 %7643, %v601
      %v7645 = vpop.permute.xlu0 %7644
      %7647 = vset.pattern.permute.xlu0 6
      %7648 = vperm.xlu0 %7647, %v602
      %v7649 = vpop.permute.xlu0 %7648
      %7651 = vset.pattern.permute.xlu0 6
      %7652 = vperm.xlu0 %7651, %v603
      %v7653 = vpop.permute.xlu0 %7652
      %7655 = vset.pattern.permute.xlu0 6
      %7656 = vperm.xlu0 %7655, %v604
      %v7657 = vpop.permute.xlu0 %7656
      %7659 = vset.pattern.permute.xlu0 6
      %7660 = vperm.xlu0 %7659, %v605
      %v7661 = vpop.permute.xlu0 %7660
      %7663 = vset.pattern.permute.xlu0 6
      %7664 = vperm.xlu0 %7663, %v606
      %v7665 = vpop.permute.xlu0 %7664
      %7667 = vset.pattern.permute.xlu0 6
      %7668 = vperm.xlu0 %7667, %v607
      %v7669 = vpop.permute.xlu0 %7668
      %7671 = vset.pattern.permute.xlu0 6
      %7672 = vperm.xlu0 %7671, %v608
      %v7673 = vpop.permute.xlu0 %7672
      %7675 = vset.pattern.permute.xlu0 6
      %7676 = vperm.xlu0 %7675, %v609
      %v7677 = vpop.permute.xlu0 %7676
      %7679 = vset.pattern.permute.xlu0 6
      %7680 = vperm.xlu0 %7679, %v610
      %v7681 = vpop.permute.xlu0 %7680
      %7683 = vset.pattern.permute.xlu0 6
      %7684 = vperm.xlu0 %7683, %v611
      %v7685 = vpop.permute.xlu0 %7684
      %7687 = vset.pattern.permute.xlu0 6
      %7688 = vperm.xlu0 %7687, %v612
      %v7689 = vpop.permute.xlu0 %7688
      %7691 = vset.pattern.permute.xlu0 6
      %7692 = vperm.xlu0 %7691, %v613
      %v7693 = vpop.permute.xlu0 %7692
      %7695 = vset.pattern.permute.xlu0 6
      %7696 = vperm.xlu0 %7695, %v614
      %v7697 = vpop.permute.xlu0 %7696
      %7699 = vset.pattern.permute.xlu0 6
      %7700 = vperm.xlu0 %7699, %v615
      %v7701 = vpop.permute.xlu0 %7700
      %7703 = vset.pattern.permute.xlu0 6
      %7704 = vperm.xlu0 %7703, %v616
      %v7705 = vpop.permute.xlu0 %7704
      %7707 = vset.pattern.permute.xlu0 6
      %7708 = vperm.xlu0 %7707, %v617
      %v7709 = vpop.permute.xlu0 %7708
      %7711 = vset.pattern.permute.xlu0 6
      %7712 = vperm.xlu0 %7711, %v618
      %v7713 = vpop.permute.xlu0 %7712
      %7715 = vset.pattern.permute.xlu0 6
      %7716 = vperm.xlu0 %7715, %v619
      %v7717 = vpop.permute.xlu0 %7716
      %7719 = vset.pattern.permute.xlu0 6
      %7720 = vperm.xlu0 %7719, %v620
      %v7721 = vpop.permute.xlu0 %7720
      %7723 = vset.pattern.permute.xlu0 6
      %7724 = vperm.xlu0 %7723, %v621
      %v7725 = vpop.permute.xlu0 %7724
      %7727 = vset.pattern.permute.xlu0 6
      %7728 = vperm.xlu0 %7727, %v622
      %v7729 = vpop.permute.xlu0 %7728
      %7731 = vset.pattern.permute.xlu0 6
      %7732 = vperm.xlu0 %7731, %v623
      %v7733 = vpop.permute.xlu0 %7732
      %7735 = vset.pattern.permute.xlu0 6
      %7736 = vperm.xlu0 %7735, %v624
      %v7737 = vpop.permute.xlu0 %7736
      %7739 = vset.pattern.permute.xlu0 6
      %7740 = vperm.xlu0 %7739, %v625
      %v7741 = vpop.permute.xlu0 %7740
      %7743 = vset.pattern.permute.xlu0 6
      %7744 = vperm.xlu0 %7743, %v626
      %v7745 = vpop.permute.xlu0 %7744
      %7747 = vset.pattern.permute.xlu0 6
      %7748 = vperm.xlu0 %7747, %v627
      %v7749 = vpop.permute.xlu0 %7748
      %7751 = vset.pattern.permute.xlu0 6
      %7752 = vperm.xlu0 %7751, %v628
      %v7753 = vpop.permute.xlu0 %7752
      %7755 = vset.pattern.permute.xlu0 6
      %7756 = vperm.xlu0 %7755, %v629
      %v7757 = vpop.permute.xlu0 %7756
      %v7759 = vsel %vm7439, %v7505, 0.0
      %v7760 = vsel %vm7440, %v7509, 0.0
      %v7761 = vsel %vm7441, %v7513, 0.0
      %v7762 = vsel %vm7442, %v7517, 0.0
      %v7763 = vsel %vm7443, %v7521, 0.0
      %v7764 = vsel %vm7444, %v7525, 0.0
      %v7765 = vsel %vm7445, %v7529, 0.0
      %v7766 = vsel %vm7446, %v7533, 0.0
      %v7767 = vsel %vm7447, %v7537, 0.0
      %v7768 = vsel %vm7448, %v7541, 0.0
      %v7769 = vsel %vm7449, %v7545, 0.0
      %v7770 = vsel %vm7450, %v7549, 0.0
      %v7771 = vsel %vm7451, %v7553, 0.0
      %v7772 = vsel %vm7452, %v7557, 0.0
      %v7773 = vsel %vm7453, %v7561, 0.0
      %v7774 = vsel %vm7454, %v7565, 0.0
      %v7775 = vsel %vm7455, %v7569, 0.0
      %v7776 = vsel %vm7456, %v7573, 0.0
      %v7777 = vsel %vm7457, %v7577, 0.0
      %v7778 = vsel %vm7458, %v7581, 0.0
      %v7779 = vsel %vm7459, %v7585, 0.0
      %v7780 = vsel %vm7460, %v7589, 0.0
      %v7781 = vsel %vm7461, %v7593, 0.0
      %v7782 = vsel %vm7462, %v7597, 0.0
      %v7783 = vsel %vm7463, %v7601, 0.0
      %v7784 = vsel %vm7464, %v7605, 0.0
      %v7785 = vsel %vm7465, %v7609, 0.0
      %v7786 = vsel %vm7466, %v7613, 0.0
      %v7787 = vsel %vm7467, %v7617, 0.0
      %v7788 = vsel %vm7468, %v7621, 0.0
      %v7789 = vsel %vm7469, %v7625, 0.0
      %v7790 = vsel %vm7470, %v7629, 0.0
      %v7791 = vsel %vm7471, %v7633, 0.0
      %v7792 = vsel %vm7472, %v7637, 0.0
      %v7793 = vsel %vm7473, %v7641, 0.0
      %v7794 = vsel %vm7474, %v7645, 0.0
      %v7795 = vsel %vm7475, %v7649, 0.0
      %v7796 = vsel %vm7476, %v7653, 0.0
      %v7797 = vsel %vm7477, %v7657, 0.0
      %v7798 = vsel %vm7478, %v7661, 0.0
      %v7799 = vsel %vm7479, %v7665, 0.0
      %v7800 = vsel %vm7480, %v7669, 0.0
      %v7801 = vsel %vm7481, %v7673, 0.0
      %v7802 = vsel %vm7482, %v7677, 0.0
      %v7803 = vsel %vm7483, %v7681, 0.0
      %v7804 = vsel %vm7484, %v7685, 0.0
      %v7805 = vsel %vm7485, %v7689, 0.0
      %v7806 = vsel %vm7486, %v7693, 0.0
      %v7807 = vsel %vm7487, %v7697, 0.0
      %v7808 = vsel %vm7488, %v7701, 0.0
      %v7809 = vsel %vm7489, %v7705, 0.0
      %v7810 = vsel %vm7490, %v7709, 0.0
      %v7811 = vsel %vm7491, %v7713, 0.0
      %v7812 = vsel %vm7492, %v7717, 0.0
      %v7813 = vsel %vm7493, %v7721, 0.0
      %v7814 = vsel %vm7494, %v7725, 0.0
      %v7815 = vsel %vm7495, %v7729, 0.0
      %v7816 = vsel %vm7496, %v7733, 0.0
      %v7817 = vsel %vm7497, %v7737, 0.0
      %v7818 = vsel %vm7498, %v7741, 0.0
      %v7819 = vsel %vm7499, %v7745, 0.0
      %v7820 = vsel %vm7500, %v7749, 0.0
      %v7821 = vsel %vm7501, %v7753, 0.0
      %v7822 = vsel %vm7502, %v7757, 0.0
      %7823 = vmatprep.subr.mxu0 0.0
      %7824 = vmatpush1.msra.mxu0 %v1145
      %7825 = vmatprep.subr.mxu0 0.0
      %7826 = vmatpush1.msra.mxu0 %v1146
      %7827 = vmatprep.subr.mxu0 0.0
      %7828 = vmatpush1.msra.mxu0 %v1147
      %7829 = vmatprep.subr.mxu0 0.0
      %7830 = vmatpush1.msra.mxu0 %v1148
      %7831 = vmatprep.subr.mxu0 0.0
      %7832 = vmatpush1.msra.mxu0 %v1149
      %7833 = vmatprep.subr.mxu0 0.0
      %7834 = vmatpush1.msra.mxu0 %v1150
      %7835 = vmatprep.subr.mxu0 0.0
      %7836 = vmatpush1.msra.mxu0 %v1151
      %7837 = vmatprep.subr.mxu0 0.0
      %7838 = vmatpush1.msra.mxu0 %v1152
      %7839 = vmatprep.subr.mxu0 0.0
      %7840 = vmatpush1.msra.mxu0 %v1153
      %7841 = vmatprep.subr.mxu0 0.0
      %7842 = vmatpush1.msra.mxu0 %v1154
      %7843 = vmatprep.subr.mxu0 0.0
      %7844 = vmatpush1.msra.mxu0 %v1155
      %7845 = vmatprep.subr.mxu0 0.0
      %7846 = vmatpush1.msra.mxu0 %v1156
      %7847 = vmatprep.subr.mxu0 0.0
      %7848 = vmatpush1.msra.mxu0 %v1157
      %7849 = vmatprep.subr.mxu0 0.0
      %7850 = vmatpush1.msra.mxu0 %v1158
      %7851 = vmatprep.subr.mxu0 0.0
      %7852 = vmatpush1.msra.mxu0 %v1159
      %7853 = vmatprep.subr.mxu0 0.0
      %7854 = vmatpush1.msra.mxu0 %v1160
      %7855 = vmatprep.subr.mxu0 0.0
      %7856 = vmatpush1.msra.mxu0 0.0
      %7857 = vmatprep.subr.mxu0 0.0
      %7858 = vmatpush1.msra.mxu0 0.0
      %7859 = vmatprep.subr.mxu0 0.0
      %7860 = vmatpush1.msra.mxu0 0.0
      %7861 = vmatprep.subr.mxu0 0.0
      %7862 = vmatpush1.msra.mxu0 0.0
      %7863 = vmatprep.subr.mxu0 0.0
      %7864 = vmatpush1.msra.mxu0 0.0
      %7865 = vmatprep.subr.mxu0 0.0
      %7866 = vmatpush1.msra.mxu0 0.0
      %7867 = vmatprep.subr.mxu0 0.0
      %7868 = vmatpush1.msra.mxu0 0.0
      %7869 = vmatprep.subr.mxu0 0.0
      %7870 = vmatpush1.msra.mxu0 0.0
      %7871 = vmatprep.subr.mxu0 0.0
      %7872 = vmatpush1.msra.mxu0 0.0
      %7873 = vmatprep.subr.mxu0 0.0
      %7874 = vmatpush1.msra.mxu0 0.0
      %7875 = vmatprep.subr.mxu0 0.0
      %7876 = vmatpush1.msra.mxu0 0.0
      %7877 = vmatprep.subr.mxu0 0.0
      %7878 = vmatpush1.msra.mxu0 0.0
      %7879 = vmatprep.subr.mxu0 0.0
      %7880 = vmatpush1.msra.mxu0 0.0
      %7881 = vmatprep.subr.mxu0 0.0
      %7882 = vmatpush1.msra.mxu0 0.0
      %7883 = vmatprep.subr.mxu0 0.0
      %7884 = vmatpush1.msra.mxu0 0.0
      %7885 = vmatprep.subr.mxu0 0.0
      %7886 = vmatpush1.msra.mxu0 0.0
      %7887 = vmatprep.mubr.f32.mxu0 0.0
      %7888 = vmatmul.mubr.f32.gmra.mrb[0].mxu0 %v7759
      %v7889 = vpop.f32.mrb[0].mxu0
      %v7890 = vadd.f32 0.0, %v7889
      %v7891 = vpop.f32.mrb[0].mxu0
      %7892 = vmatprep.mubr.f32.mxu0 0.0
      %7893 = vmatmul.mubr.f32.gmra.mrb[0].mxu0 %v7760
      %v7894 = vpop.f32.mrb[0].mxu0
      %v7895 = vadd.f32 0.0, %v7894
      %v7896 = vpop.f32.mrb[0].mxu0
      %7897 = vmatprep.mubr.f32.mxu0 0.0
      %7898 = vmatmul.mubr.f32.gmra.mrb[0].mxu0 %v7761
      %v7899 = vpop.f32.mrb[0].mxu0
      %v7900 = vadd.f32 0.0, %v7899
      %v7901 = vpop.f32.mrb[0].mxu0
      %7902 = vmatprep.mubr.f32.mxu0 0.0
      %7903 = vmatmul.mubr.f32.gmra.mrb[0].mxu0 %v7762
      %v7904 = vpop.f32.mrb[0].mxu0
      %v7905 = vadd.f32 0.0, %v7904
      %v7906 = vpop.f32.mrb[0].mxu0
      %7907 = vmatprep.mubr.f32.mxu0 0.0
      %7908 = vmatmul.mubr.f32.gmra.mrb[0].mxu0 %v7763
      %v7909 = vpop.f32.mrb[0].mxu0
      %v7910 = vadd.f32 0.0, %v7909
      %v7911 = vpop.f32.mrb[0].mxu0
      %7912 = vmatprep.mubr.f32.mxu0 0.0
      %7913 = vmatmul.mubr.f32.gmra.mrb[0].mxu0 %v7764
      %v7914 = vpop.f32.mrb[0].mxu0
      %v7915 = vadd.f32 0.0, %v7914
      %v7916 = vpop.f32.mrb[0].mxu0
      %7917 = vmatprep.mubr.f32.mxu0 0.0
      %7918 = vmatmul.mubr.f32.gmra.mrb[0].mxu0 %v7765
      %v7919 = vpop.f32.mrb[0].mxu0
      %v7920 = vadd.f32 0.0, %v7919
      %v7921 = vpop.f32.mrb[0].mxu0
      %7922 = vmatprep.mubr.f32.mxu0 0.0
      %7923 = vmatmul.mubr.f32.gmra.mrb[0].mxu0 %v7766
      %v7924 = vpop.f32.mrb[0].mxu0
      %v7925 = vadd.f32 0.0, %v7924
      %v7926 = vpop.f32.mrb[0].mxu0
      %7927 = vmatprep.mubr.f32.mxu0 0.0
      %7928 = vmatmul.mubr.f32.gmra.mrb[0].mxu0 %v7767
      %v7929 = vpop.f32.mrb[0].mxu0
      %v7930 = vadd.f32 0.0, %v7929
      %v7931 = vpop.f32.mrb[0].mxu0
      %7932 = vmatprep.mubr.f32.mxu0 0.0
      %7933 = vmatmul.mubr.f32.gmra.mrb[0].mxu0 %v7768
      %v7934 = vpop.f32.mrb[0].mxu0
      %v7935 = vadd.f32 0.0, %v7934
      %v7936 = vpop.f32.mrb[0].mxu0
      %7937 = vmatprep.mubr.f32.mxu0 0.0
      %7938 = vmatmul.mubr.f32.gmra.mrb[0].mxu0 %v7769
      %v7939 = vpop.f32.mrb[0].mxu0
      %v7940 = vadd.f32 0.0, %v7939
      %v7941 = vpop.f32.mrb[0].mxu0
      %7942 = vmatprep.mubr.f32.mxu0 0.0
      %7943 = vmatmul.mubr.f32.gmra.mrb[0].mxu0 %v7770
      %v7944 = vpop.f32.mrb[0].mxu0
      %v7945 = vadd.f32 0.0, %v7944
      %v7946 = vpop.f32.mrb[0].mxu0
      %7947 = vmatprep.mubr.f32.mxu0 0.0
      %7948 = vmatmul.mubr.f32.gmra.mrb[0].mxu0 %v7771
      %v7949 = vpop.f32.mrb[0].mxu0
      %v7950 = vadd.f32 0.0, %v7949
      %v7951 = vpop.f32.mrb[0].mxu0
      %7952 = vmatprep.mubr.f32.mxu0 0.0
      %7953 = vmatmul.mubr.f32.gmra.mrb[0].mxu0 %v7772
      %v7954 = vpop.f32.mrb[0].mxu0
      %v7955 = vadd.f32 0.0, %v7954
      %v7956 = vpop.f32.mrb[0].mxu0
      %7957 = vmatprep.mubr.f32.mxu0 0.0
      %7958 = vmatmul.mubr.f32.gmra.mrb[0].mxu0 %v7773
      %v7959 = vpop.f32.mrb[0].mxu0
      %v7960 = vadd.f32 0.0, %v7959
      %v7961 = vpop.f32.mrb[0].mxu0
      %7962 = vmatprep.mubr.f32.mxu0 0.0
      %7963 = vmatmul.mubr.f32.gmra.mrb[0].mxu0 %v7774
      %v7964 = vpop.f32.mrb[0].mxu0
      %v7965 = vadd.f32 0.0, %v7964
      %v7966 = vpop.f32.mrb[0].mxu0
      %7967 = vmatprep.mubr.f32.mxu0 0.0
      %7968 = vmatmul.mubr.f32.gmra.mrb[0].mxu0 %v7775
      %v7969 = vpop.f32.mrb[0].mxu0
      %v7970 = vadd.f32 0.0, %v7969
      %v7971 = vpop.f32.mrb[0].mxu0
      %7972 = vmatprep.mubr.f32.mxu0 0.0
      %7973 = vmatmul.mubr.f32.gmra.mrb[0].mxu0 %v7776
      %v7974 = vpop.f32.mrb[0].mxu0
      %v7975 = vadd.f32 0.0, %v7974
      %v7976 = vpop.f32.mrb[0].mxu0
      %7977 = vmatprep.mubr.f32.mxu0 0.0
      %7978 = vmatmul.mubr.f32.gmra.mrb[0].mxu0 %v7777
      %v7979 = vpop.f32.mrb[0].mxu0
      %v7980 = vadd.f32 0.0, %v7979
      %v7981 = vpop.f32.mrb[0].mxu0
      %7982 = vmatprep.mubr.f32.mxu0 0.0
      %7983 = vmatmul.mubr.f32.gmra.mrb[0].mxu0 %v7778
      %v7984 = vpop.f32.mrb[0].mxu0
      %v7985 = vadd.f32 0.0, %v7984
      %v7986 = vpop.f32.mrb[0].mxu0
      %7987 = vmatprep.mubr.f32.mxu0 0.0
      %7988 = vmatmul.mubr.f32.gmra.mrb[0].mxu0 %v7779
      %v7989 = vpop.f32.mrb[0].mxu0
      %v7990 = vadd.f32 0.0, %v7989
      %v7991 = vpop.f32.mrb[0].mxu0
      %7992 = vmatprep.mubr.f32.mxu0 0.0
      %7993 = vmatmul.mubr.f32.gmra.mrb[0].mxu0 %v7780
      %v7994 = vpop.f32.mrb[0].mxu0
      %v7995 = vadd.f32 0.0, %v7994
      %v7996 = vpop.f32.mrb[0].mxu0
      %7997 = vmatprep.mubr.f32.mxu0 0.0
      %7998 = vmatmul.mubr.f32.gmra.mrb[0].mxu0 %v7781
      %v7999 = vpop.f32.mrb[0].mxu0
      %v8000 = vadd.f32 0.0, %v7999
      %v8001 = vpop.f32.mrb[0].mxu0
      %8002 = vmatprep.mubr.f32.mxu0 0.0
      %8003 = vmatmul.mubr.f32.gmra.mrb[0].mxu0 %v7782
      %v8004 = vpop.f32.mrb[0].mxu0
      %v8005 = vadd.f32 0.0, %v8004
      %v8006 = vpop.f32.mrb[0].mxu0
      %8007 = vmatprep.mubr.f32.mxu0 0.0
      %8008 = vmatmul.mubr.f32.gmra.mrb[0].mxu0 %v7783
      %v8009 = vpop.f32.mrb[0].mxu0
      %v8010 = vadd.f32 0.0, %v8009
      %v8011 = vpop.f32.mrb[0].mxu0
      %8012 = vmatprep.mubr.f32.mxu0 0.0
      %8013 = vmatmul.mubr.f32.gmra.mrb[0].mxu0 %v7784
      %v8014 = vpop.f32.mrb[0].mxu0
      %v8015 = vadd.f32 0.0, %v8014
      %v8016 = vpop.f32.mrb[0].mxu0
      %8017 = vmatprep.mubr.f32.mxu0 0.0
      %8018 = vmatmul.mubr.f32.gmra.mrb[0].mxu0 %v7785
      %v8019 = vpop.f32.mrb[0].mxu0
      %v8020 = vadd.f32 0.0, %v8019
      %v8021 = vpop.f32.mrb[0].mxu0
      %8022 = vmatprep.mubr.f32.mxu0 0.0
      %8023 = vmatmul.mubr.f32.gmra.mrb[0].mxu0 %v7786
      %v8024 = vpop.f32.mrb[0].mxu0
      %v8025 = vadd.f32 0.0, %v8024
      %v8026 = vpop.f32.mrb[0].mxu0
      %8027 = vmatprep.mubr.f32.mxu0 0.0
      %8028 = vmatmul.mubr.f32.gmra.mrb[0].mxu0 %v7787
      %v8029 = vpop.f32.mrb[0].mxu0
      %v8030 = vadd.f32 0.0, %v8029
      %v8031 = vpop.f32.mrb[0].mxu0
      %8032 = vmatprep.mubr.f32.mxu0 0.0
      %8033 = vmatmul.mubr.f32.gmra.mrb[0].mxu0 %v7788
      %v8034 = vpop.f32.mrb[0].mxu0
      %v8035 = vadd.f32 0.0, %v8034
      %v8036 = vpop.f32.mrb[0].mxu0
      %8037 = vmatprep.mubr.f32.mxu0 0.0
      %8038 = vmatmul.mubr.f32.gmra.mrb[0].mxu0 %v7789
      %v8039 = vpop.f32.mrb[0].mxu0
      %v8040 = vadd.f32 0.0, %v8039
      %v8041 = vpop.f32.mrb[0].mxu0
      %8042 = vmatprep.mubr.f32.mxu0 0.0
      %8043 = vmatmul.mubr.f32.gmra.mrb[0].mxu0 %v7790
      %v8044 = vpop.f32.mrb[0].mxu0
      %v8045 = vadd.f32 0.0, %v8044
      %v8046 = vpop.f32.mrb[0].mxu0
      %8047 = vmatprep.mubr.f32.mxu0 0.0
      %8048 = vmatmul.mubr.f32.gmra.mrb[0].mxu0 %v7791
      %v8049 = vpop.f32.mrb[0].mxu0
      %v8050 = vadd.f32 0.0, %v8049
      %v8051 = vpop.f32.mrb[0].mxu0
      %8052 = vmatprep.mubr.f32.mxu0 0.0
      %8053 = vmatmul.mubr.f32.gmra.mrb[0].mxu0 %v7792
      %v8054 = vpop.f32.mrb[0].mxu0
      %v8055 = vadd.f32 0.0, %v8054
      %v8056 = vpop.f32.mrb[0].mxu0
      %8057 = vmatprep.mubr.f32.mxu0 0.0
      %8058 = vmatmul.mubr.f32.gmra.mrb[0].mxu0 %v7793
      %v8059 = vpop.f32.mrb[0].mxu0
      %v8060 = vadd.f32 0.0, %v8059
      %v8061 = vpop.f32.mrb[0].mxu0
      %8062 = vmatprep.mubr.f32.mxu0 0.0
      %8063 = vmatmul.mubr.f32.gmra.mrb[0].mxu0 %v7794
      %v8064 = vpop.f32.mrb[0].mxu0
      %v8065 = vadd.f32 0.0, %v8064
      %v8066 = vpop.f32.mrb[0].mxu0
      %8067 = vmatprep.mubr.f32.mxu0 0.0
      %8068 = vmatmul.mubr.f32.gmra.mrb[0].mxu0 %v7795
      %v8069 = vpop.f32.mrb[0].mxu0
      %v8070 = vadd.f32 0.0, %v8069
      %v8071 = vpop.f32.mrb[0].mxu0
      %8072 = vmatprep.mubr.f32.mxu0 0.0
      %8073 = vmatmul.mubr.f32.gmra.mrb[0].mxu0 %v7796
      %v8074 = vpop.f32.mrb[0].mxu0
      %v8075 = vadd.f32 0.0, %v8074
      %v8076 = vpop.f32.mrb[0].mxu0
      %8077 = vmatprep.mubr.f32.mxu0 0.0
      %8078 = vmatmul.mubr.f32.gmra.mrb[0].mxu0 %v7797
      %v8079 = vpop.f32.mrb[0].mxu0
      %v8080 = vadd.f32 0.0, %v8079
      %v8081 = vpop.f32.mrb[0].mxu0
      %8082 = vmatprep.mubr.f32.mxu0 0.0
      %8083 = vmatmul.mubr.f32.gmra.mrb[0].mxu0 %v7798
      %v8084 = vpop.f32.mrb[0].mxu0
      %v8085 = vadd.f32 0.0, %v8084
      %v8086 = vpop.f32.mrb[0].mxu0
      %8087 = vmatprep.mubr.f32.mxu0 0.0
      %8088 = vmatmul.mubr.f32.gmra.mrb[0].mxu0 %v7799
      %v8089 = vpop.f32.mrb[0].mxu0
      %v8090 = vadd.f32 0.0, %v8089
      %v8091 = vpop.f32.mrb[0].mxu0
      %8092 = vmatprep.mubr.f32.mxu0 0.0
      %8093 = vmatmul.mubr.f32.gmra.mrb[0].mxu0 %v7800
      %v8094 = vpop.f32.mrb[0].mxu0
      %v8095 = vadd.f32 0.0, %v8094
      %v8096 = vpop.f32.mrb[0].mxu0
      %8097 = vmatprep.mubr.f32.mxu0 0.0
      %8098 = vmatmul.mubr.f32.gmra.mrb[0].mxu0 %v7801
      %v8099 = vpop.f32.mrb[0].mxu0
      %v8100 = vadd.f32 0.0, %v8099
      %v8101 = vpop.f32.mrb[0].mxu0
      %8102 = vmatprep.mubr.f32.mxu0 0.0
      %8103 = vmatmul.mubr.f32.gmra.mrb[0].mxu0 %v7802
      %v8104 = vpop.f32.mrb[0].mxu0
      %v8105 = vadd.f32 0.0, %v8104
      %v8106 = vpop.f32.mrb[0].mxu0
      %8107 = vmatprep.mubr.f32.mxu0 0.0
      %8108 = vmatmul.mubr.f32.gmra.mrb[0].mxu0 %v7803
      %v8109 = vpop.f32.mrb[0].mxu0
      %v8110 = vadd.f32 0.0, %v8109
      %v8111 = vpop.f32.mrb[0].mxu0
      %8112 = vmatprep.mubr.f32.mxu0 0.0
      %8113 = vmatmul.mubr.f32.gmra.mrb[0].mxu0 %v7804
      %v8114 = vpop.f32.mrb[0].mxu0
      %v8115 = vadd.f32 0.0, %v8114
      %v8116 = vpop.f32.mrb[0].mxu0
      %8117 = vmatprep.mubr.f32.mxu0 0.0
      %8118 = vmatmul.mubr.f32.gmra.mrb[0].mxu0 %v7805
      %v8119 = vpop.f32.mrb[0].mxu0
      %v8120 = vadd.f32 0.0, %v8119
      %v8121 = vpop.f32.mrb[0].mxu0
      %8122 = vmatprep.mubr.f32.mxu0 0.0
      %8123 = vmatmul.mubr.f32.gmra.mrb[0].mxu0 %v7806
      %v8124 = vpop.f32.mrb[0].mxu0
      %v8125 = vadd.f32 0.0, %v8124
      %v8126 = vpop.f32.mrb[0].mxu0
      %8127 = vmatprep.mubr.f32.mxu0 0.0
      %8128 = vmatmul.mubr.f32.gmra.mrb[0].mxu0 %v7807
      %v8129 = vpop.f32.mrb[0].mxu0
      %v8130 = vadd.f32 0.0, %v8129
      %v8131 = vpop.f32.mrb[0].mxu0
      %8132 = vmatprep.mubr.f32.mxu0 0.0
      %8133 = vmatmul.mubr.f32.gmra.mrb[0].mxu0 %v7808
      %v8134 = vpop.f32.mrb[0].mxu0
      %v8135 = vadd.f32 0.0, %v8134
      %v8136 = vpop.f32.mrb[0].mxu0
      %8137 = vmatprep.mubr.f32.mxu0 0.0
      %8138 = vmatmul.mubr.f32.gmra.mrb[0].mxu0 %v7809
      %v8139 = vpop.f32.mrb[0].mxu0
      %v8140 = vadd.f32 0.0, %v8139
      %v8141 = vpop.f32.mrb[0].mxu0
      %8142 = vmatprep.mubr.f32.mxu0 0.0
      %8143 = vmatmul.mubr.f32.gmra.mrb[0].mxu0 %v7810
      %v8144 = vpop.f32.mrb[0].mxu0
      %v8145 = vadd.f32 0.0, %v8144
      %v8146 = vpop.f32.mrb[0].mxu0
      %8147 = vmatprep.mubr.f32.mxu0 0.0
      %8148 = vmatmul.mubr.f32.gmra.mrb[0].mxu0 %v7811
      %v8149 = vpop.f32.mrb[0].mxu0
      %v8150 = vadd.f32 0.0, %v8149
      %v8151 = vpop.f32.mrb[0].mxu0
      %8152 = vmatprep.mubr.f32.mxu0 0.0
      %8153 = vmatmul.mubr.f32.gmra.mrb[0].mxu0 %v7812
      %v8154 = vpop.f32.mrb[0].mxu0
      %v8155 = vadd.f32 0.0, %v8154
      %v8156 = vpop.f32.mrb[0].mxu0
      %8157 = vmatprep.mubr.f32.mxu0 0.0
      %8158 = vmatmul.mubr.f32.gmra.mrb[0].mxu0 %v7813
      %v8159 = vpop.f32.mrb[0].mxu0
      %v8160 = vadd.f32 0.0, %v8159
      %v8161 = vpop.f32.mrb[0].mxu0
      %8162 = vmatprep.mubr.f32.mxu0 0.0
      %8163 = vmatmul.mubr.f32.gmra.mrb[0].mxu0 %v7814
      %v8164 = vpop.f32.mrb[0].mxu0
      %v8165 = vadd.f32 0.0, %v8164
      %v8166 = vpop.f32.mrb[0].mxu0
      %8167 = vmatprep.mubr.f32.mxu0 0.0
      %8168 = vmatmul.mubr.f32.gmra.mrb[0].mxu0 %v7815
      %v8169 = vpop.f32.mrb[0].mxu0
      %v8170 = vadd.f32 0.0, %v8169
      %v8171 = vpop.f32.mrb[0].mxu0
      %8172 = vmatprep.mubr.f32.mxu0 0.0
      %8173 = vmatmul.mubr.f32.gmra.mrb[0].mxu0 %v7816
      %v8174 = vpop.f32.mrb[0].mxu0
      %v8175 = vadd.f32 0.0, %v8174
      %v8176 = vpop.f32.mrb[0].mxu0
      %8177 = vmatprep.mubr.f32.mxu0 0.0
      %8178 = vmatmul.mubr.f32.gmra.mrb[0].mxu0 %v7817
      %v8179 = vpop.f32.mrb[0].mxu0
      %v8180 = vadd.f32 0.0, %v8179
      %v8181 = vpop.f32.mrb[0].mxu0
      %8182 = vmatprep.mubr.f32.mxu0 0.0
      %8183 = vmatmul.mubr.f32.gmra.mrb[0].mxu0 %v7818
      %v8184 = vpop.f32.mrb[0].mxu0
      %v8185 = vadd.f32 0.0, %v8184
      %v8186 = vpop.f32.mrb[0].mxu0
      %8187 = vmatprep.mubr.f32.mxu0 0.0
      %8188 = vmatmul.mubr.f32.gmra.mrb[0].mxu0 %v7819
      %v8189 = vpop.f32.mrb[0].mxu0
      %v8190 = vadd.f32 0.0, %v8189
      %v8191 = vpop.f32.mrb[0].mxu0
      %8192 = vmatprep.mubr.f32.mxu0 0.0
      %8193 = vmatmul.mubr.f32.gmra.mrb[0].mxu0 %v7820
      %v8194 = vpop.f32.mrb[0].mxu0
      %v8195 = vadd.f32 0.0, %v8194
      %v8196 = vpop.f32.mrb[0].mxu0
      %8197 = vmatprep.mubr.f32.mxu0 0.0
      %8198 = vmatmul.mubr.f32.gmra.mrb[0].mxu0 %v7821
      %v8199 = vpop.f32.mrb[0].mxu0
      %v8200 = vadd.f32 0.0, %v8199
      %v8201 = vpop.f32.mrb[0].mxu0
      %8202 = vmatprep.mubr.f32.mxu0 0.0
      %8203 = vmatmul.mubr.f32.gmra.mrb[0].mxu0 %v7822
      %v8204 = vpop.f32.mrb[0].mxu0
      %v8205 = vadd.f32 0.0, %v8204
      %v8206 = vpop.f32.mrb[0].mxu0
      %8207 = vdwg.mxu0
      %v8208 = vadd.f32 %v7183, %v7890
      %v8209 = vadd.f32 %v7184, %v7895
      %v8210 = vadd.f32 %v7185, %v7900
      %v8211 = vadd.f32 %v7186, %v7905
      %v8212 = vadd.f32 %v7187, %v7910
      %v8213 = vadd.f32 %v7188, %v7915
      %v8214 = vadd.f32 %v7189, %v7920
      %v8215 = vadd.f32 %v7190, %v7925
      %v8216 = vadd.f32 %v7191, %v7930
      %v8217 = vadd.f32 %v7192, %v7935
      %v8218 = vadd.f32 %v7193, %v7940
      %v8219 = vadd.f32 %v7194, %v7945
      %v8220 = vadd.f32 %v7195, %v7950
      %v8221 = vadd.f32 %v7196, %v7955
      %v8222 = vadd.f32 %v7197, %v7960
      %v8223 = vadd.f32 %v7198, %v7965
      %v8224 = vadd.f32 %v7199, %v7970
      %v8225 = vadd.f32 %v7200, %v7975
      %v8226 = vadd.f32 %v7201, %v7980
      %v8227 = vadd.f32 %v7202, %v7985
      %v8228 = vadd.f32 %v7203, %v7990
      %v8229 = vadd.f32 %v7204, %v7995
      %v8230 = vadd.f32 %v7205, %v8000
      %v8231 = vadd.f32 %v7206, %v8005
      %v8232 = vadd.f32 %v7207, %v8010
      %v8233 = vadd.f32 %v7208, %v8015
      %v8234 = vadd.f32 %v7209, %v8020
      %v8235 = vadd.f32 %v7210, %v8025
      %v8236 = vadd.f32 %v7211, %v8030
      %v8237 = vadd.f32 %v7212, %v8035
      %v8238 = vadd.f32 %v7213, %v8040
      %v8239 = vadd.f32 %v7214, %v8045
      %v8240 = vadd.f32 %v7215, %v8050
      %v8241 = vadd.f32 %v7216, %v8055
      %v8242 = vadd.f32 %v7217, %v8060
      %v8243 = vadd.f32 %v7218, %v8065
      %v8244 = vadd.f32 %v7219, %v8070
      %v8245 = vadd.f32 %v7220, %v8075
      %v8246 = vadd.f32 %v7221, %v8080
      %v8247 = vadd.f32 %v7222, %v8085
      %v8248 = vadd.f32 %v7223, %v8090
      %v8249 = vadd.f32 %v7224, %v8095
      %v8250 = vadd.f32 %v7225, %v8100
      %v8251 = vadd.f32 %v7226, %v8105
      %v8252 = vadd.f32 %v7227, %v8110
      %v8253 = vadd.f32 %v7228, %v8115
      %v8254 = vadd.f32 %v7229, %v8120
      %v8255 = vadd.f32 %v7230, %v8125
      %v8256 = vadd.f32 %v7231, %v8130
      %v8257 = vadd.f32 %v7232, %v8135
      %v8258 = vadd.f32 %v7233, %v8140
      %v8259 = vadd.f32 %v7234, %v8145
      %v8260 = vadd.f32 %v7235, %v8150
      %v8261 = vadd.f32 %v7236, %v8155
      %v8262 = vadd.f32 %v7237, %v8160
      %v8263 = vadd.f32 %v7238, %v8165
      %v8264 = vadd.f32 %v7239, %v8170
      %v8265 = vadd.f32 %v7240, %v8175
      %v8266 = vadd.f32 %v7241, %v8180
      %v8267 = vadd.f32 %v7242, %v8185
      %v8268 = vadd.f32 %v7243, %v8190
      %v8269 = vadd.f32 %v7244, %v8195
      %v8270 = vadd.f32 %v7245, %v8200
      %v8271 = vadd.f32 %v7246, %v8205
      %8272 = vset.pattern.permute.xlu0 7
      %8273 = vperm.xlu0 %8272, %v246
      %v8274 = vpop.permute.xlu0 %8273
      %8275 = vset.pattern.permute.xlu0 7
      %8276 = vperm.xlu0 %8275, %v247
      %v8277 = vpop.permute.xlu0 %8276
      %8278 = vset.pattern.permute.xlu0 7
      %8279 = vperm.xlu0 %8278, %v248
      %v8280 = vpop.permute.xlu0 %8279
      %8281 = vset.pattern.permute.xlu0 7
      %8282 = vperm.xlu0 %8281, %v249
      %v8283 = vpop.permute.xlu0 %8282
      %8284 = vset.pattern.permute.xlu0 7
      %8285 = vperm.xlu0 %8284, %v250
      %v8286 = vpop.permute.xlu0 %8285
      %8287 = vset.pattern.permute.xlu0 7
      %8288 = vperm.xlu0 %8287, %v251
      %v8289 = vpop.permute.xlu0 %8288
      %8290 = vset.pattern.permute.xlu0 7
      %8291 = vperm.xlu0 %8290, %v252
      %v8292 = vpop.permute.xlu0 %8291
      %8293 = vset.pattern.permute.xlu0 7
      %8294 = vperm.xlu0 %8293, %v253
      %v8295 = vpop.permute.xlu0 %8294
      %8296 = vset.pattern.permute.xlu0 7
      %8297 = vperm.xlu0 %8296, %v254
      %v8298 = vpop.permute.xlu0 %8297
      %8299 = vset.pattern.permute.xlu0 7
      %8300 = vperm.xlu0 %8299, %v255
      %v8301 = vpop.permute.xlu0 %8300
      %8302 = vset.pattern.permute.xlu0 7
      %8303 = vperm.xlu0 %8302, %v256
      %v8304 = vpop.permute.xlu0 %8303
      %8305 = vset.pattern.permute.xlu0 7
      %8306 = vperm.xlu0 %8305, %v257
      %v8307 = vpop.permute.xlu0 %8306
      %8308 = vset.pattern.permute.xlu0 7
      %8309 = vperm.xlu0 %8308, %v258
      %v8310 = vpop.permute.xlu0 %8309
      %8311 = vset.pattern.permute.xlu0 7
      %8312 = vperm.xlu0 %8311, %v259
      %v8313 = vpop.permute.xlu0 %8312
      %8314 = vset.pattern.permute.xlu0 7
      %8315 = vperm.xlu0 %8314, %v260
      %v8316 = vpop.permute.xlu0 %8315
      %8317 = vset.pattern.permute.xlu0 7
      %8318 = vperm.xlu0 %8317, %v261
      %v8319 = vpop.permute.xlu0 %8318
      %8320 = vset.pattern.permute.xlu0 7
      %8321 = vperm.xlu0 %8320, %v262
      %v8322 = vpop.permute.xlu0 %8321
      %8323 = vset.pattern.permute.xlu0 7
      %8324 = vperm.xlu0 %8323, %v263
      %v8325 = vpop.permute.xlu0 %8324
      %8326 = vset.pattern.permute.xlu0 7
      %8327 = vperm.xlu0 %8326, %v264
      %v8328 = vpop.permute.xlu0 %8327
      %8329 = vset.pattern.permute.xlu0 7
      %8330 = vperm.xlu0 %8329, %v265
      %v8331 = vpop.permute.xlu0 %8330
      %8332 = vset.pattern.permute.xlu0 7
      %8333 = vperm.xlu0 %8332, %v266
      %v8334 = vpop.permute.xlu0 %8333
      %8335 = vset.pattern.permute.xlu0 7
      %8336 = vperm.xlu0 %8335, %v267
      %v8337 = vpop.permute.xlu0 %8336
      %8338 = vset.pattern.permute.xlu0 7
      %8339 = vperm.xlu0 %8338, %v268
      %v8340 = vpop.permute.xlu0 %8339
      %8341 = vset.pattern.permute.xlu0 7
      %8342 = vperm.xlu0 %8341, %v269
      %v8343 = vpop.permute.xlu0 %8342
      %8344 = vset.pattern.permute.xlu0 7
      %8345 = vperm.xlu0 %8344, %v270
      %v8346 = vpop.permute.xlu0 %8345
      %8347 = vset.pattern.permute.xlu0 7
      %8348 = vperm.xlu0 %8347, %v271
      %v8349 = vpop.permute.xlu0 %8348
      %8350 = vset.pattern.permute.xlu0 7
      %8351 = vperm.xlu0 %8350, %v272
      %v8352 = vpop.permute.xlu0 %8351
      %8353 = vset.pattern.permute.xlu0 7
      %8354 = vperm.xlu0 %8353, %v273
      %v8355 = vpop.permute.xlu0 %8354
      %8356 = vset.pattern.permute.xlu0 7
      %8357 = vperm.xlu0 %8356, %v274
      %v8358 = vpop.permute.xlu0 %8357
      %8359 = vset.pattern.permute.xlu0 7
      %8360 = vperm.xlu0 %8359, %v275
      %v8361 = vpop.permute.xlu0 %8360
      %8362 = vset.pattern.permute.xlu0 7
      %8363 = vperm.xlu0 %8362, %v276
      %v8364 = vpop.permute.xlu0 %8363
      %8365 = vset.pattern.permute.xlu0 7
      %8366 = vperm.xlu0 %8365, %v277
      %v8367 = vpop.permute.xlu0 %8366
      %8368 = vset.pattern.permute.xlu0 7
      %8369 = vperm.xlu0 %8368, %v278
      %v8370 = vpop.permute.xlu0 %8369
      %8371 = vset.pattern.permute.xlu0 7
      %8372 = vperm.xlu0 %8371, %v279
      %v8373 = vpop.permute.xlu0 %8372
      %8374 = vset.pattern.permute.xlu0 7
      %8375 = vperm.xlu0 %8374, %v280
      %v8376 = vpop.permute.xlu0 %8375
      %8377 = vset.pattern.permute.xlu0 7
      %8378 = vperm.xlu0 %8377, %v281
      %v8379 = vpop.permute.xlu0 %8378
      %8380 = vset.pattern.permute.xlu0 7
      %8381 = vperm.xlu0 %8380, %v282
      %v8382 = vpop.permute.xlu0 %8381
      %8383 = vset.pattern.permute.xlu0 7
      %8384 = vperm.xlu0 %8383, %v283
      %v8385 = vpop.permute.xlu0 %8384
      %8386 = vset.pattern.permute.xlu0 7
      %8387 = vperm.xlu0 %8386, %v284
      %v8388 = vpop.permute.xlu0 %8387
      %8389 = vset.pattern.permute.xlu0 7
      %8390 = vperm.xlu0 %8389, %v285
      %v8391 = vpop.permute.xlu0 %8390
      %8392 = vset.pattern.permute.xlu0 7
      %8393 = vperm.xlu0 %8392, %v286
      %v8394 = vpop.permute.xlu0 %8393
      %8395 = vset.pattern.permute.xlu0 7
      %8396 = vperm.xlu0 %8395, %v287
      %v8397 = vpop.permute.xlu0 %8396
      %8398 = vset.pattern.permute.xlu0 7
      %8399 = vperm.xlu0 %8398, %v288
      %v8400 = vpop.permute.xlu0 %8399
      %8401 = vset.pattern.permute.xlu0 7
      %8402 = vperm.xlu0 %8401, %v289
      %v8403 = vpop.permute.xlu0 %8402
      %8404 = vset.pattern.permute.xlu0 7
      %8405 = vperm.xlu0 %8404, %v290
      %v8406 = vpop.permute.xlu0 %8405
      %8407 = vset.pattern.permute.xlu0 7
      %8408 = vperm.xlu0 %8407, %v291
      %v8409 = vpop.permute.xlu0 %8408
      %8410 = vset.pattern.permute.xlu0 7
      %8411 = vperm.xlu0 %8410, %v292
      %v8412 = vpop.permute.xlu0 %8411
      %8413 = vset.pattern.permute.xlu0 7
      %8414 = vperm.xlu0 %8413, %v293
      %v8415 = vpop.permute.xlu0 %8414
      %8416 = vset.pattern.permute.xlu0 7
      %8417 = vperm.xlu0 %8416, %v294
      %v8418 = vpop.permute.xlu0 %8417
      %8419 = vset.pattern.permute.xlu0 7
      %8420 = vperm.xlu0 %8419, %v295
      %v8421 = vpop.permute.xlu0 %8420
      %8422 = vset.pattern.permute.xlu0 7
      %8423 = vperm.xlu0 %8422, %v296
      %v8424 = vpop.permute.xlu0 %8423
      %8425 = vset.pattern.permute.xlu0 7
      %8426 = vperm.xlu0 %8425, %v297
      %v8427 = vpop.permute.xlu0 %8426
      %8428 = vset.pattern.permute.xlu0 7
      %8429 = vperm.xlu0 %8428, %v298
      %v8430 = vpop.permute.xlu0 %8429
      %8431 = vset.pattern.permute.xlu0 7
      %8432 = vperm.xlu0 %8431, %v299
      %v8433 = vpop.permute.xlu0 %8432
      %8434 = vset.pattern.permute.xlu0 7
      %8435 = vperm.xlu0 %8434, %v300
      %v8436 = vpop.permute.xlu0 %8435
      %8437 = vset.pattern.permute.xlu0 7
      %8438 = vperm.xlu0 %8437, %v301
      %v8439 = vpop.permute.xlu0 %8438
      %8440 = vset.pattern.permute.xlu0 7
      %8441 = vperm.xlu0 %8440, %v302
      %v8442 = vpop.permute.xlu0 %8441
      %8443 = vset.pattern.permute.xlu0 7
      %8444 = vperm.xlu0 %8443, %v303
      %v8445 = vpop.permute.xlu0 %8444
      %8446 = vset.pattern.permute.xlu0 7
      %8447 = vperm.xlu0 %8446, %v304
      %v8448 = vpop.permute.xlu0 %8447
      %8449 = vset.pattern.permute.xlu0 7
      %8450 = vperm.xlu0 %8449, %v305
      %v8451 = vpop.permute.xlu0 %8450
      %8452 = vset.pattern.permute.xlu0 7
      %8453 = vperm.xlu0 %8452, %v306
      %v8454 = vpop.permute.xlu0 %8453
      %8455 = vset.pattern.permute.xlu0 7
      %8456 = vperm.xlu0 %8455, %v307
      %v8457 = vpop.permute.xlu0 %8456
      %8458 = vset.pattern.permute.xlu0 7
      %8459 = vperm.xlu0 %8458, %v308
      %v8460 = vpop.permute.xlu0 %8459
      %8461 = vset.pattern.permute.xlu0 7
      %8462 = vperm.xlu0 %8461, %v309
      %v8463 = vpop.permute.xlu0 %8462
      %vm8464 = vcmp.eq.s32.totalorder %v8274, %v1144
      %vm8465 = vcmp.eq.s32.totalorder %v8277, %v1144
      %vm8466 = vcmp.eq.s32.totalorder %v8280, %v1144
      %vm8467 = vcmp.eq.s32.totalorder %v8283, %v1144
      %vm8468 = vcmp.eq.s32.totalorder %v8286, %v1144
      %vm8469 = vcmp.eq.s32.totalorder %v8289, %v1144
      %vm8470 = vcmp.eq.s32.totalorder %v8292, %v1144
      %vm8471 = vcmp.eq.s32.totalorder %v8295, %v1144
      %vm8472 = vcmp.eq.s32.totalorder %v8298, %v1144
      %vm8473 = vcmp.eq.s32.totalorder %v8301, %v1144
      %vm8474 = vcmp.eq.s32.totalorder %v8304, %v1144
      %vm8475 = vcmp.eq.s32.totalorder %v8307, %v1144
      %vm8476 = vcmp.eq.s32.totalorder %v8310, %v1144
      %vm8477 = vcmp.eq.s32.totalorder %v8313, %v1144
      %vm8478 = vcmp.eq.s32.totalorder %v8316, %v1144
      %vm8479 = vcmp.eq.s32.totalorder %v8319, %v1144
      %vm8480 = vcmp.eq.s32.totalorder %v8322, %v1144
      %vm8481 = vcmp.eq.s32.totalorder %v8325, %v1144
      %vm8482 = vcmp.eq.s32.totalorder %v8328, %v1144
      %vm8483 = vcmp.eq.s32.totalorder %v8331, %v1144
      %vm8484 = vcmp.eq.s32.totalorder %v8334, %v1144
      %vm8485 = vcmp.eq.s32.totalorder %v8337, %v1144
      %vm8486 = vcmp.eq.s32.totalorder %v8340, %v1144
      %vm8487 = vcmp.eq.s32.totalorder %v8343, %v1144
      %vm8488 = vcmp.eq.s32.totalorder %v8346, %v1144
      %vm8489 = vcmp.eq.s32.totalorder %v8349, %v1144
      %vm8490 = vcmp.eq.s32.totalorder %v8352, %v1144
      %vm8491 = vcmp.eq.s32.totalorder %v8355, %v1144
      %vm8492 = vcmp.eq.s32.totalorder %v8358, %v1144
      %vm8493 = vcmp.eq.s32.totalorder %v8361, %v1144
      %vm8494 = vcmp.eq.s32.totalorder %v8364, %v1144
      %vm8495 = vcmp.eq.s32.totalorder %v8367, %v1144
      %vm8496 = vcmp.eq.s32.totalorder %v8370, %v1144
      %vm8497 = vcmp.eq.s32.totalorder %v8373, %v1144
      %vm8498 = vcmp.eq.s32.totalorder %v8376, %v1144
      %vm8499 = vcmp.eq.s32.totalorder %v8379, %v1144
      %vm8500 = vcmp.eq.s32.totalorder %v8382, %v1144
      %vm8501 = vcmp.eq.s32.totalorder %v8385, %v1144
      %vm8502 = vcmp.eq.s32.totalorder %v8388, %v1144
      %vm8503 = vcmp.eq.s32.totalorder %v8391, %v1144
      %vm8504 = vcmp.eq.s32.totalorder %v8394, %v1144
      %vm8505 = vcmp.eq.s32.totalorder %v8397, %v1144
      %vm8506 = vcmp.eq.s32.totalorder %v8400, %v1144
      %vm8507 = vcmp.eq.s32.totalorder %v8403, %v1144
      %vm8508 = vcmp.eq.s32.totalorder %v8406, %v1144
      %vm8509 = vcmp.eq.s32.totalorder %v8409, %v1144
      %vm8510 = vcmp.eq.s32.totalorder %v8412, %v1144
      %vm8511 = vcmp.eq.s32.totalorder %v8415, %v1144
      %vm8512 = vcmp.eq.s32.totalorder %v8418, %v1144
      %vm8513 = vcmp.eq.s32.totalorder %v8421, %v1144
      %vm8514 = vcmp.eq.s32.totalorder %v8424, %v1144
      %vm8515 = vcmp.eq.s32.totalorder %v8427, %v1144
      %vm8516 = vcmp.eq.s32.totalorder %v8430, %v1144
      %vm8517 = vcmp.eq.s32.totalorder %v8433, %v1144
      %vm8518 = vcmp.eq.s32.totalorder %v8436, %v1144
      %vm8519 = vcmp.eq.s32.totalorder %v8439, %v1144
      %vm8520 = vcmp.eq.s32.totalorder %v8442, %v1144
      %vm8521 = vcmp.eq.s32.totalorder %v8445, %v1144
      %vm8522 = vcmp.eq.s32.totalorder %v8448, %v1144
      %vm8523 = vcmp.eq.s32.totalorder %v8451, %v1144
      %vm8524 = vcmp.eq.s32.totalorder %v8454, %v1144
      %vm8525 = vcmp.eq.s32.totalorder %v8457, %v1144
      %vm8526 = vcmp.eq.s32.totalorder %v8460, %v1144
      %vm8527 = vcmp.eq.s32.totalorder %v8463, %v1144
      %8528 = vset.pattern.permute.xlu0 7
      %8529 = vperm.xlu0 %8528, %v566
      %v8530 = vpop.permute.xlu0 %8529
      %8532 = vset.pattern.permute.xlu0 7
      %8533 = vperm.xlu0 %8532, %v567
      %v8534 = vpop.permute.xlu0 %8533
      %8536 = vset.pattern.permute.xlu0 7
      %8537 = vperm.xlu0 %8536, %v568
      %v8538 = vpop.permute.xlu0 %8537
      %8540 = vset.pattern.permute.xlu0 7
      %8541 = vperm.xlu0 %8540, %v569
      %v8542 = vpop.permute.xlu0 %8541
      %8544 = vset.pattern.permute.xlu0 7
      %8545 = vperm.xlu0 %8544, %v570
      %v8546 = vpop.permute.xlu0 %8545
      %8548 = vset.pattern.permute.xlu0 7
      %8549 = vperm.xlu0 %8548, %v571
      %v8550 = vpop.permute.xlu0 %8549
      %8552 = vset.pattern.permute.xlu0 7
      %8553 = vperm.xlu0 %8552, %v572
      %v8554 = vpop.permute.xlu0 %8553
      %8556 = vset.pattern.permute.xlu0 7
      %8557 = vperm.xlu0 %8556, %v573
      %v8558 = vpop.permute.xlu0 %8557
      %8560 = vset.pattern.permute.xlu0 7
      %8561 = vperm.xlu0 %8560, %v574
      %v8562 = vpop.permute.xlu0 %8561
      %8564 = vset.pattern.permute.xlu0 7
      %8565 = vperm.xlu0 %8564, %v575
      %v8566 = vpop.permute.xlu0 %8565
      %8568 = vset.pattern.permute.xlu0 7
      %8569 = vperm.xlu0 %8568, %v576
      %v8570 = vpop.permute.xlu0 %8569
      %8572 = vset.pattern.permute.xlu0 7
      %8573 = vperm.xlu0 %8572, %v577
      %v8574 = vpop.permute.xlu0 %8573
      %8576 = vset.pattern.permute.xlu0 7
      %8577 = vperm.xlu0 %8576, %v578
      %v8578 = vpop.permute.xlu0 %8577
      %8580 = vset.pattern.permute.xlu0 7
      %8581 = vperm.xlu0 %8580, %v579
      %v8582 = vpop.permute.xlu0 %8581
      %8584 = vset.pattern.permute.xlu0 7
      %8585 = vperm.xlu0 %8584, %v580
      %v8586 = vpop.permute.xlu0 %8585
      %8588 = vset.pattern.permute.xlu0 7
      %8589 = vperm.xlu0 %8588, %v581
      %v8590 = vpop.permute.xlu0 %8589
      %8592 = vset.pattern.permute.xlu0 7
      %8593 = vperm.xlu0 %8592, %v582
      %v8594 = vpop.permute.xlu0 %8593
      %8596 = vset.pattern.permute.xlu0 7
      %8597 = vperm.xlu0 %8596, %v583
      %v8598 = vpop.permute.xlu0 %8597
      %8600 = vset.pattern.permute.xlu0 7
      %8601 = vperm.xlu0 %8600, %v584
      %v8602 = vpop.permute.xlu0 %8601
      %8604 = vset.pattern.permute.xlu0 7
      %8605 = vperm.xlu0 %8604, %v585
      %v8606 = vpop.permute.xlu0 %8605
      %8608 = vset.pattern.permute.xlu0 7
      %8609 = vperm.xlu0 %8608, %v586
      %v8610 = vpop.permute.xlu0 %8609
      %8612 = vset.pattern.permute.xlu0 7
      %8613 = vperm.xlu0 %8612, %v587
      %v8614 = vpop.permute.xlu0 %8613
      %8616 = vset.pattern.permute.xlu0 7
      %8617 = vperm.xlu0 %8616, %v588
      %v8618 = vpop.permute.xlu0 %8617
      %8620 = vset.pattern.permute.xlu0 7
      %8621 = vperm.xlu0 %8620, %v589
      %v8622 = vpop.permute.xlu0 %8621
      %8624 = vset.pattern.permute.xlu0 7
      %8625 = vperm.xlu0 %8624, %v590
      %v8626 = vpop.permute.xlu0 %8625
      %8628 = vset.pattern.permute.xlu0 7
      %8629 = vperm.xlu0 %8628, %v591
      %v8630 = vpop.permute.xlu0 %8629
      %8632 = vset.pattern.permute.xlu0 7
      %8633 = vperm.xlu0 %8632, %v592
      %v8634 = vpop.permute.xlu0 %8633
      %8636 = vset.pattern.permute.xlu0 7
      %8637 = vperm.xlu0 %8636, %v593
      %v8638 = vpop.permute.xlu0 %8637
      %8640 = vset.pattern.permute.xlu0 7
      %8641 = vperm.xlu0 %8640, %v594
      %v8642 = vpop.permute.xlu0 %8641
      %8644 = vset.pattern.permute.xlu0 7
      %8645 = vperm.xlu0 %8644, %v595
      %v8646 = vpop.permute.xlu0 %8645
      %8648 = vset.pattern.permute.xlu0 7
      %8649 = vperm.xlu0 %8648, %v596
      %v8650 = vpop.permute.xlu0 %8649
      %8652 = vset.pattern.permute.xlu0 7
      %8653 = vperm.xlu0 %8652, %v597
      %v8654 = vpop.permute.xlu0 %8653
      %8656 = vset.pattern.permute.xlu0 7
      %8657 = vperm.xlu0 %8656, %v598
      %v8658 = vpop.permute.xlu0 %8657
      %8660 = vset.pattern.permute.xlu0 7
      %8661 = vperm.xlu0 %8660, %v599
      %v8662 = vpop.permute.xlu0 %8661
      %8664 = vset.pattern.permute.xlu0 7
      %8665 = vperm.xlu0 %8664, %v600
      %v8666 = vpop.permute.xlu0 %8665
      %8668 = vset.pattern.permute.xlu0 7
      %8669 = vperm.xlu0 %8668, %v601
      %v8670 = vpop.permute.xlu0 %8669
      %8672 = vset.pattern.permute.xlu0 7
      %8673 = vperm.xlu0 %8672, %v602
      %v8674 = vpop.permute.xlu0 %8673
      %8676 = vset.pattern.permute.xlu0 7
      %8677 = vperm.xlu0 %8676, %v603
      %v8678 = vpop.permute.xlu0 %8677
      %8680 = vset.pattern.permute.xlu0 7
      %8681 = vperm.xlu0 %8680, %v604
      %v8682 = vpop.permute.xlu0 %8681
      %8684 = vset.pattern.permute.xlu0 7
      %8685 = vperm.xlu0 %8684, %v605
      %v8686 = vpop.permute.xlu0 %8685
      %8688 = vset.pattern.permute.xlu0 7
      %8689 = vperm.xlu0 %8688, %v606
      %v8690 = vpop.permute.xlu0 %8689
      %8692 = vset.pattern.permute.xlu0 7
      %8693 = vperm.xlu0 %8692, %v607
      %v8694 = vpop.permute.xlu0 %8693
      %8696 = vset.pattern.permute.xlu0 7
      %8697 = vperm.xlu0 %8696, %v608
      %v8698 = vpop.permute.xlu0 %8697
      %8700 = vset.pattern.permute.xlu0 7
      %8701 = vperm.xlu0 %8700, %v609
      %v8702 = vpop.permute.xlu0 %8701
      %8704 = vset.pattern.permute.xlu0 7
      %8705 = vperm.xlu0 %8704, %v610
      %v8706 = vpop.permute.xlu0 %8705
      %8708 = vset.pattern.permute.xlu0 7
      %8709 = vperm.xlu0 %8708, %v611
      %v8710 = vpop.permute.xlu0 %8709
      %8712 = vset.pattern.permute.xlu0 7
      %8713 = vperm.xlu0 %8712, %v612
      %v8714 = vpop.permute.xlu0 %8713
      %8716 = vset.pattern.permute.xlu0 7
      %8717 = vperm.xlu0 %8716, %v613
      %v8718 = vpop.permute.xlu0 %8717
      %8720 = vset.pattern.permute.xlu0 7
      %8721 = vperm.xlu0 %8720, %v614
      %v8722 = vpop.permute.xlu0 %8721
      %8724 = vset.pattern.permute.xlu0 7
      %8725 = vperm.xlu0 %8724, %v615
      %v8726 = vpop.permute.xlu0 %8725
      %8728 = vset.pattern.permute.xlu0 7
      %8729 = vperm.xlu0 %8728, %v616
      %v8730 = vpop.permute.xlu0 %8729
      %8732 = vset.pattern.permute.xlu0 7
      %8733 = vperm.xlu0 %8732, %v617
      %v8734 = vpop.permute.xlu0 %8733
      %8736 = vset.pattern.permute.xlu0 7
      %8737 = vperm.xlu0 %8736, %v618
      %v8738 = vpop.permute.xlu0 %8737
      %8740 = vset.pattern.permute.xlu0 7
      %8741 = vperm.xlu0 %8740, %v619
      %v8742 = vpop.permute.xlu0 %8741
      %8744 = vset.pattern.permute.xlu0 7
      %8745 = vperm.xlu0 %8744, %v620
      %v8746 = vpop.permute.xlu0 %8745
      %8748 = vset.pattern.permute.xlu0 7
      %8749 = vperm.xlu0 %8748, %v621
      %v8750 = vpop.permute.xlu0 %8749
      %8752 = vset.pattern.permute.xlu0 7
      %8753 = vperm.xlu0 %8752, %v622
      %v8754 = vpop.permute.xlu0 %8753
      %8756 = vset.pattern.permute.xlu0 7
      %8757 = vperm.xlu0 %8756, %v623
      %v8758 = vpop.permute.xlu0 %8757
      %8760 = vset.pattern.permute.xlu0 7
      %8761 = vperm.xlu0 %8760, %v624
      %v8762 = vpop.permute.xlu0 %8761
      %8764 = vset.pattern.permute.xlu0 7
      %8765 = vperm.xlu0 %8764, %v625
      %v8766 = vpop.permute.xlu0 %8765
      %8768 = vset.pattern.permute.xlu0 7
      %8769 = vperm.xlu0 %8768, %v626
      %v8770 = vpop.permute.xlu0 %8769
      %8772 = vset.pattern.permute.xlu0 7
      %8773 = vperm.xlu0 %8772, %v627
      %v8774 = vpop.permute.xlu0 %8773
      %8776 = vset.pattern.permute.xlu0 7
      %8777 = vperm.xlu0 %8776, %v628
      %v8778 = vpop.permute.xlu0 %8777
      %8780 = vset.pattern.permute.xlu0 7
      %8781 = vperm.xlu0 %8780, %v629
      %v8782 = vpop.permute.xlu0 %8781
      %v8784 = vsel %vm8464, %v8530, 0.0
      %v8785 = vsel %vm8465, %v8534, 0.0
      %v8786 = vsel %vm8466, %v8538, 0.0
      %v8787 = vsel %vm8467, %v8542, 0.0
      %v8788 = vsel %vm8468, %v8546, 0.0
      %v8789 = vsel %vm8469, %v8550, 0.0
      %v8790 = vsel %vm8470, %v8554, 0.0
      %v8791 = vsel %vm8471, %v8558, 0.0
      %v8792 = vsel %vm8472, %v8562, 0.0
      %v8793 = vsel %vm8473, %v8566, 0.0
      %v8794 = vsel %vm8474, %v8570, 0.0
      %v8795 = vsel %vm8475, %v8574, 0.0
      %v8796 = vsel %vm8476, %v8578, 0.0
      %v8797 = vsel %vm8477, %v8582, 0.0
      %v8798 = vsel %vm8478, %v8586, 0.0
      %v8799 = vsel %vm8479, %v8590, 0.0
      %v8800 = vsel %vm8480, %v8594, 0.0
      %v8801 = vsel %vm8481, %v8598, 0.0
      %v8802 = vsel %vm8482, %v8602, 0.0
      %v8803 = vsel %vm8483, %v8606, 0.0
      %v8804 = vsel %vm8484, %v8610, 0.0
      %v8805 = vsel %vm8485, %v8614, 0.0
      %v8806 = vsel %vm8486, %v8618, 0.0
      %v8807 = vsel %vm8487, %v8622, 0.0
      %v8808 = vsel %vm8488, %v8626, 0.0
      %v8809 = vsel %vm8489, %v8630, 0.0
      %v8810 = vsel %vm8490, %v8634, 0.0
      %v8811 = vsel %vm8491, %v8638, 0.0
      %v8812 = vsel %vm8492, %v8642, 0.0
      %v8813 = vsel %vm8493, %v8646, 0.0
      %v8814 = vsel %vm8494, %v8650, 0.0
      %v8815 = vsel %vm8495, %v8654, 0.0
      %v8816 = vsel %vm8496, %v8658, 0.0
      %v8817 = vsel %vm8497, %v8662, 0.0
      %v8818 = vsel %vm8498, %v8666, 0.0
      %v8819 = vsel %vm8499, %v8670, 0.0
      %v8820 = vsel %vm8500, %v8674, 0.0
      %v8821 = vsel %vm8501, %v8678, 0.0
      %v8822 = vsel %vm8502, %v8682, 0.0
      %v8823 = vsel %vm8503, %v8686, 0.0
      %v8824 = vsel %vm8504, %v8690, 0.0
      %v8825 = vsel %vm8505, %v8694, 0.0
      %v8826 = vsel %vm8506, %v8698, 0.0
      %v8827 = vsel %vm8507, %v8702, 0.0
      %v8828 = vsel %vm8508, %v8706, 0.0
      %v8829 = vsel %vm8509, %v8710, 0.0
      %v8830 = vsel %vm8510, %v8714, 0.0
      %v8831 = vsel %vm8511, %v8718, 0.0
      %v8832 = vsel %vm8512, %v8722, 0.0
      %v8833 = vsel %vm8513, %v8726, 0.0
      %v8834 = vsel %vm8514, %v8730, 0.0
      %v8835 = vsel %vm8515, %v8734, 0.0
      %v8836 = vsel %vm8516, %v8738, 0.0
      %v8837 = vsel %vm8517, %v8742, 0.0
      %v8838 = vsel %vm8518, %v8746, 0.0
      %v8839 = vsel %vm8519, %v8750, 0.0
      %v8840 = vsel %vm8520, %v8754, 0.0
      %v8841 = vsel %vm8521, %v8758, 0.0
      %v8842 = vsel %vm8522, %v8762, 0.0
      %v8843 = vsel %vm8523, %v8766, 0.0
      %v8844 = vsel %vm8524, %v8770, 0.0
      %v8845 = vsel %vm8525, %v8774, 0.0
      %v8846 = vsel %vm8526, %v8778, 0.0
      %v8847 = vsel %vm8527, %v8782, 0.0
      %8848 = vmatprep.subr.mxu0 0.0
      %8849 = vmatpush1.msra.mxu0 %v1145
      %8850 = vmatprep.subr.mxu0 0.0
      %8851 = vmatpush1.msra.mxu0 %v1146
      %8852 = vmatprep.subr.mxu0 0.0
      %8853 = vmatpush1.msra.mxu0 %v1147
      %8854 = vmatprep.subr.mxu0 0.0
      %8855 = vmatpush1.msra.mxu0 %v1148
      %8856 = vmatprep.subr.mxu0 0.0
      %8857 = vmatpush1.msra.mxu0 %v1149
      %8858 = vmatprep.subr.mxu0 0.0
      %8859 = vmatpush1.msra.mxu0 %v1150
      %8860 = vmatprep.subr.mxu0 0.0
      %8861 = vmatpush1.msra.mxu0 %v1151
      %8862 = vmatprep.subr.mxu0 0.0
      %8863 = vmatpush1.msra.mxu0 %v1152
      %8864 = vmatprep.subr.mxu0 0.0
      %8865 = vmatpush1.msra.mxu0 %v1153
      %8866 = vmatprep.subr.mxu0 0.0
      %8867 = vmatpush1.msra.mxu0 %v1154
      %8868 = vmatprep.subr.mxu0 0.0
      %8869 = vmatpush1.msra.mxu0 %v1155
      %8870 = vmatprep.subr.mxu0 0.0
      %8871 = vmatpush1.msra.mxu0 %v1156
      %8872 = vmatprep.subr.mxu0 0.0
      %8873 = vmatpush1.msra.mxu0 %v1157
      %8874 = vmatprep.subr.mxu0 0.0
      %8875 = vmatpush1.msra.mxu0 %v1158
      %8876 = vmatprep.subr.mxu0 0.0
      %8877 = vmatpush1.msra.mxu0 %v1159
      %8878 = vmatprep.subr.mxu0 0.0
      %8879 = vmatpush1.msra.mxu0 %v1160
      %8880 = vmatprep.subr.mxu0 0.0
      %8881 = vmatpush1.msra.mxu0 0.0
      %8882 = vmatprep.subr.mxu0 0.0
      %8883 = vmatpush1.msra.mxu0 0.0
      %8884 = vmatprep.subr.mxu0 0.0
      %8885 = vmatpush1.msra.mxu0 0.0
      %8886 = vmatprep.subr.mxu0 0.0
      %8887 = vmatpush1.msra.mxu0 0.0
      %8888 = vmatprep.subr.mxu0 0.0
      %8889 = vmatpush1.msra.mxu0 0.0
      %8890 = vmatprep.subr.mxu0 0.0
      %8891 = vmatpush1.msra.mxu0 0.0
      %8892 = vmatprep.subr.mxu0 0.0
      %8893 = vmatpush1.msra.mxu0 0.0
      %8894 = vmatprep.subr.mxu0 0.0
      %8895 = vmatpush1.msra.mxu0 0.0
      %8896 = vmatprep.subr.mxu0 0.0
      %8897 = vmatpush1.msra.mxu0 0.0
      %8898 = vmatprep.subr.mxu0 0.0
      %8899 = vmatpush1.msra.mxu0 0.0
      %8900 = vmatprep.subr.mxu0 0.0
      %8901 = vmatpush1.msra.mxu0 0.0
      %8902 = vmatprep.subr.mxu0 0.0
      %8903 = vmatpush1.msra.mxu0 0.0
      %8904 = vmatprep.subr.mxu0 0.0
      %8905 = vmatpush1.msra.mxu0 0.0
      %8906 = vmatprep.subr.mxu0 0.0
      %8907 = vmatpush1.msra.mxu0 0.0
      %8908 = vmatprep.subr.mxu0 0.0
      %8909 = vmatpush1.msra.mxu0 0.0
      %8910 = vmatprep.subr.mxu0 0.0
      %8911 = vmatpush1.msra.mxu0 0.0
      %8912 = vmatprep.mubr.f32.mxu0 0.0
      %8913 = vmatmul.mubr.f32.gmra.mrb[0].mxu0 %v8784
      %v8914 = vpop.f32.mrb[0].mxu0
      %v8915 = vadd.f32 0.0, %v8914
      %v8916 = vpop.f32.mrb[0].mxu0
      %8917 = vmatprep.mubr.f32.mxu0 0.0
      %8918 = vmatmul.mubr.f32.gmra.mrb[0].mxu0 %v8785
      %v8919 = vpop.f32.mrb[0].mxu0
      %v8920 = vadd.f32 0.0, %v8919
      %v8921 = vpop.f32.mrb[0].mxu0
      %8922 = vmatprep.mubr.f32.mxu0 0.0
      %8923 = vmatmul.mubr.f32.gmra.mrb[0].mxu0 %v8786
      %v8924 = vpop.f32.mrb[0].mxu0
      %v8925 = vadd.f32 0.0, %v8924
      %v8926 = vpop.f32.mrb[0].mxu0
      %8927 = vmatprep.mubr.f32.mxu0 0.0
      %8928 = vmatmul.mubr.f32.gmra.mrb[0].mxu0 %v8787
      %v8929 = vpop.f32.mrb[0].mxu0
      %v8930 = vadd.f32 0.0, %v8929
      %v8931 = vpop.f32.mrb[0].mxu0
      %8932 = vmatprep.mubr.f32.mxu0 0.0
      %8933 = vmatmul.mubr.f32.gmra.mrb[0].mxu0 %v8788
      %v8934 = vpop.f32.mrb[0].mxu0
      %v8935 = vadd.f32 0.0, %v8934
      %v8936 = vpop.f32.mrb[0].mxu0
      %8937 = vmatprep.mubr.f32.mxu0 0.0
      %8938 = vmatmul.mubr.f32.gmra.mrb[0].mxu0 %v8789
      %v8939 = vpop.f32.mrb[0].mxu0
      %v8940 = vadd.f32 0.0, %v8939
      %v8941 = vpop.f32.mrb[0].mxu0
      %8942 = vmatprep.mubr.f32.mxu0 0.0
      %8943 = vmatmul.mubr.f32.gmra.mrb[0].mxu0 %v8790
      %v8944 = vpop.f32.mrb[0].mxu0
      %v8945 = vadd.f32 0.0, %v8944
      %v8946 = vpop.f32.mrb[0].mxu0
      %8947 = vmatprep.mubr.f32.mxu0 0.0
      %8948 = vmatmul.mubr.f32.gmra.mrb[0].mxu0 %v8791
      %v8949 = vpop.f32.mrb[0].mxu0
      %v8950 = vadd.f32 0.0, %v8949
      %v8951 = vpop.f32.mrb[0].mxu0
      %8952 = vmatprep.mubr.f32.mxu0 0.0
      %8953 = vmatmul.mubr.f32.gmra.mrb[0].mxu0 %v8792
      %v8954 = vpop.f32.mrb[0].mxu0
      %v8955 = vadd.f32 0.0, %v8954
      %v8956 = vpop.f32.mrb[0].mxu0
      %8957 = vmatprep.mubr.f32.mxu0 0.0
      %8958 = vmatmul.mubr.f32.gmra.mrb[0].mxu0 %v8793
      %v8959 = vpop.f32.mrb[0].mxu0
      %v8960 = vadd.f32 0.0, %v8959
      %v8961 = vpop.f32.mrb[0].mxu0
      %8962 = vmatprep.mubr.f32.mxu0 0.0
      %8963 = vmatmul.mubr.f32.gmra.mrb[0].mxu0 %v8794
      %v8964 = vpop.f32.mrb[0].mxu0
      %v8965 = vadd.f32 0.0, %v8964
      %v8966 = vpop.f32.mrb[0].mxu0
      %8967 = vmatprep.mubr.f32.mxu0 0.0
      %8968 = vmatmul.mubr.f32.gmra.mrb[0].mxu0 %v8795
      %v8969 = vpop.f32.mrb[0].mxu0
      %v8970 = vadd.f32 0.0, %v8969
      %v8971 = vpop.f32.mrb[0].mxu0
      %8972 = vmatprep.mubr.f32.mxu0 0.0
      %8973 = vmatmul.mubr.f32.gmra.mrb[0].mxu0 %v8796
      %v8974 = vpop.f32.mrb[0].mxu0
      %v8975 = vadd.f32 0.0, %v8974
      %v8976 = vpop.f32.mrb[0].mxu0
      %8977 = vmatprep.mubr.f32.mxu0 0.0
      %8978 = vmatmul.mubr.f32.gmra.mrb[0].mxu0 %v8797
      %v8979 = vpop.f32.mrb[0].mxu0
      %v8980 = vadd.f32 0.0, %v8979
      %v8981 = vpop.f32.mrb[0].mxu0
      %8982 = vmatprep.mubr.f32.mxu0 0.0
      %8983 = vmatmul.mubr.f32.gmra.mrb[0].mxu0 %v8798
      %v8984 = vpop.f32.mrb[0].mxu0
      %v8985 = vadd.f32 0.0, %v8984
      %v8986 = vpop.f32.mrb[0].mxu0
      %8987 = vmatprep.mubr.f32.mxu0 0.0
      %8988 = vmatmul.mubr.f32.gmra.mrb[0].mxu0 %v8799
      %v8989 = vpop.f32.mrb[0].mxu0
      %v8990 = vadd.f32 0.0, %v8989
      %v8991 = vpop.f32.mrb[0].mxu0
      %8992 = vmatprep.mubr.f32.mxu0 0.0
      %8993 = vmatmul.mubr.f32.gmra.mrb[0].mxu0 %v8800
      %v8994 = vpop.f32.mrb[0].mxu0
      %v8995 = vadd.f32 0.0, %v8994
      %v8996 = vpop.f32.mrb[0].mxu0
      %8997 = vmatprep.mubr.f32.mxu0 0.0
      %8998 = vmatmul.mubr.f32.gmra.mrb[0].mxu0 %v8801
      %v8999 = vpop.f32.mrb[0].mxu0
      %v9000 = vadd.f32 0.0, %v8999
      %v9001 = vpop.f32.mrb[0].mxu0
      %9002 = vmatprep.mubr.f32.mxu0 0.0
      %9003 = vmatmul.mubr.f32.gmra.mrb[0].mxu0 %v8802
      %v9004 = vpop.f32.mrb[0].mxu0
      %v9005 = vadd.f32 0.0, %v9004
      %v9006 = vpop.f32.mrb[0].mxu0
      %9007 = vmatprep.mubr.f32.mxu0 0.0
      %9008 = vmatmul.mubr.f32.gmra.mrb[0].mxu0 %v8803
      %v9009 = vpop.f32.mrb[0].mxu0
      %v9010 = vadd.f32 0.0, %v9009
      %v9011 = vpop.f32.mrb[0].mxu0
      %9012 = vmatprep.mubr.f32.mxu0 0.0
      %9013 = vmatmul.mubr.f32.gmra.mrb[0].mxu0 %v8804
      %v9014 = vpop.f32.mrb[0].mxu0
      %v9015 = vadd.f32 0.0, %v9014
      %v9016 = vpop.f32.mrb[0].mxu0
      %9017 = vmatprep.mubr.f32.mxu0 0.0
      %9018 = vmatmul.mubr.f32.gmra.mrb[0].mxu0 %v8805
      %v9019 = vpop.f32.mrb[0].mxu0
      %v9020 = vadd.f32 0.0, %v9019
      %v9021 = vpop.f32.mrb[0].mxu0
      %9022 = vmatprep.mubr.f32.mxu0 0.0
      %9023 = vmatmul.mubr.f32.gmra.mrb[0].mxu0 %v8806
      %v9024 = vpop.f32.mrb[0].mxu0
      %v9025 = vadd.f32 0.0, %v9024
      %v9026 = vpop.f32.mrb[0].mxu0
      %9027 = vmatprep.mubr.f32.mxu0 0.0
      %9028 = vmatmul.mubr.f32.gmra.mrb[0].mxu0 %v8807
      %v9029 = vpop.f32.mrb[0].mxu0
      %v9030 = vadd.f32 0.0, %v9029
      %v9031 = vpop.f32.mrb[0].mxu0
      %9032 = vmatprep.mubr.f32.mxu0 0.0
      %9033 = vmatmul.mubr.f32.gmra.mrb[0].mxu0 %v8808
      %v9034 = vpop.f32.mrb[0].mxu0
      %v9035 = vadd.f32 0.0, %v9034
      %v9036 = vpop.f32.mrb[0].mxu0
      %9037 = vmatprep.mubr.f32.mxu0 0.0
      %9038 = vmatmul.mubr.f32.gmra.mrb[0].mxu0 %v8809
      %v9039 = vpop.f32.mrb[0].mxu0
      %v9040 = vadd.f32 0.0, %v9039
      %v9041 = vpop.f32.mrb[0].mxu0
      %9042 = vmatprep.mubr.f32.mxu0 0.0
      %9043 = vmatmul.mubr.f32.gmra.mrb[0].mxu0 %v8810
      %v9044 = vpop.f32.mrb[0].mxu0
      %v9045 = vadd.f32 0.0, %v9044
      %v9046 = vpop.f32.mrb[0].mxu0
      %9047 = vmatprep.mubr.f32.mxu0 0.0
      %9048 = vmatmul.mubr.f32.gmra.mrb[0].mxu0 %v8811
      %v9049 = vpop.f32.mrb[0].mxu0
      %v9050 = vadd.f32 0.0, %v9049
      %v9051 = vpop.f32.mrb[0].mxu0
      %9052 = vmatprep.mubr.f32.mxu0 0.0
      %9053 = vmatmul.mubr.f32.gmra.mrb[0].mxu0 %v8812
      %v9054 = vpop.f32.mrb[0].mxu0
      %v9055 = vadd.f32 0.0, %v9054
      %v9056 = vpop.f32.mrb[0].mxu0
      %9057 = vmatprep.mubr.f32.mxu0 0.0
      %9058 = vmatmul.mubr.f32.gmra.mrb[0].mxu0 %v8813
      %v9059 = vpop.f32.mrb[0].mxu0
      %v9060 = vadd.f32 0.0, %v9059
      %v9061 = vpop.f32.mrb[0].mxu0
      %9062 = vmatprep.mubr.f32.mxu0 0.0
      %9063 = vmatmul.mubr.f32.gmra.mrb[0].mxu0 %v8814
      %v9064 = vpop.f32.mrb[0].mxu0
      %v9065 = vadd.f32 0.0, %v9064
      %v9066 = vpop.f32.mrb[0].mxu0
      %9067 = vmatprep.mubr.f32.mxu0 0.0
      %9068 = vmatmul.mubr.f32.gmra.mrb[0].mxu0 %v8815
      %v9069 = vpop.f32.mrb[0].mxu0
      %v9070 = vadd.f32 0.0, %v9069
      %v9071 = vpop.f32.mrb[0].mxu0
      %9072 = vmatprep.mubr.f32.mxu0 0.0
      %9073 = vmatmul.mubr.f32.gmra.mrb[0].mxu0 %v8816
      %v9074 = vpop.f32.mrb[0].mxu0
      %v9075 = vadd.f32 0.0, %v9074
      %v9076 = vpop.f32.mrb[0].mxu0
      %9077 = vmatprep.mubr.f32.mxu0 0.0
      %9078 = vmatmul.mubr.f32.gmra.mrb[0].mxu0 %v8817
      %v9079 = vpop.f32.mrb[0].mxu0
      %v9080 = vadd.f32 0.0, %v9079
      %v9081 = vpop.f32.mrb[0].mxu0
      %9082 = vmatprep.mubr.f32.mxu0 0.0
      %9083 = vmatmul.mubr.f32.gmra.mrb[0].mxu0 %v8818
      %v9084 = vpop.f32.mrb[0].mxu0
      %v9085 = vadd.f32 0.0, %v9084
      %v9086 = vpop.f32.mrb[0].mxu0
      %9087 = vmatprep.mubr.f32.mxu0 0.0
      %9088 = vmatmul.mubr.f32.gmra.mrb[0].mxu0 %v8819
      %v9089 = vpop.f32.mrb[0].mxu0
      %v9090 = vadd.f32 0.0, %v9089
      %v9091 = vpop.f32.mrb[0].mxu0
      %9092 = vmatprep.mubr.f32.mxu0 0.0
      %9093 = vmatmul.mubr.f32.gmra.mrb[0].mxu0 %v8820
      %v9094 = vpop.f32.mrb[0].mxu0
      %v9095 = vadd.f32 0.0, %v9094
      %v9096 = vpop.f32.mrb[0].mxu0
      %9097 = vmatprep.mubr.f32.mxu0 0.0
      %9098 = vmatmul.mubr.f32.gmra.mrb[0].mxu0 %v8821
      %v9099 = vpop.f32.mrb[0].mxu0
      %v9100 = vadd.f32 0.0, %v9099
      %v9101 = vpop.f32.mrb[0].mxu0
      %9102 = vmatprep.mubr.f32.mxu0 0.0
      %9103 = vmatmul.mubr.f32.gmra.mrb[0].mxu0 %v8822
      %v9104 = vpop.f32.mrb[0].mxu0
      %v9105 = vadd.f32 0.0, %v9104
      %v9106 = vpop.f32.mrb[0].mxu0
      %9107 = vmatprep.mubr.f32.mxu0 0.0
      %9108 = vmatmul.mubr.f32.gmra.mrb[0].mxu0 %v8823
      %v9109 = vpop.f32.mrb[0].mxu0
      %v9110 = vadd.f32 0.0, %v9109
      %v9111 = vpop.f32.mrb[0].mxu0
      %9112 = vmatprep.mubr.f32.mxu0 0.0
      %9113 = vmatmul.mubr.f32.gmra.mrb[0].mxu0 %v8824
      %v9114 = vpop.f32.mrb[0].mxu0
      %v9115 = vadd.f32 0.0, %v9114
      %v9116 = vpop.f32.mrb[0].mxu0
      %9117 = vmatprep.mubr.f32.mxu0 0.0
      %9118 = vmatmul.mubr.f32.gmra.mrb[0].mxu0 %v8825
      %v9119 = vpop.f32.mrb[0].mxu0
      %v9120 = vadd.f32 0.0, %v9119
      %v9121 = vpop.f32.mrb[0].mxu0
      %9122 = vmatprep.mubr.f32.mxu0 0.0
      %9123 = vmatmul.mubr.f32.gmra.mrb[0].mxu0 %v8826
      %v9124 = vpop.f32.mrb[0].mxu0
      %v9125 = vadd.f32 0.0, %v9124
      %v9126 = vpop.f32.mrb[0].mxu0
      %9127 = vmatprep.mubr.f32.mxu0 0.0
      %9128 = vmatmul.mubr.f32.gmra.mrb[0].mxu0 %v8827
      %v9129 = vpop.f32.mrb[0].mxu0
      %v9130 = vadd.f32 0.0, %v9129
      %v9131 = vpop.f32.mrb[0].mxu0
      %9132 = vmatprep.mubr.f32.mxu0 0.0
      %9133 = vmatmul.mubr.f32.gmra.mrb[0].mxu0 %v8828
      %v9134 = vpop.f32.mrb[0].mxu0
      %v9135 = vadd.f32 0.0, %v9134
      %v9136 = vpop.f32.mrb[0].mxu0
      %9137 = vmatprep.mubr.f32.mxu0 0.0
      %9138 = vmatmul.mubr.f32.gmra.mrb[0].mxu0 %v8829
      %v9139 = vpop.f32.mrb[0].mxu0
      %v9140 = vadd.f32 0.0, %v9139
      %v9141 = vpop.f32.mrb[0].mxu0
      %9142 = vmatprep.mubr.f32.mxu0 0.0
      %9143 = vmatmul.mubr.f32.gmra.mrb[0].mxu0 %v8830
      %v9144 = vpop.f32.mrb[0].mxu0
      %v9145 = vadd.f32 0.0, %v9144
      %v9146 = vpop.f32.mrb[0].mxu0
      %9147 = vmatprep.mubr.f32.mxu0 0.0
      %9148 = vmatmul.mubr.f32.gmra.mrb[0].mxu0 %v8831
      %v9149 = vpop.f32.mrb[0].mxu0
      %v9150 = vadd.f32 0.0, %v9149
      %v9151 = vpop.f32.mrb[0].mxu0
      %9152 = vmatprep.mubr.f32.mxu0 0.0
      %9153 = vmatmul.mubr.f32.gmra.mrb[0].mxu0 %v8832
      %v9154 = vpop.f32.mrb[0].mxu0
      %v9155 = vadd.f32 0.0, %v9154
      %v9156 = vpop.f32.mrb[0].mxu0
      %9157 = vmatprep.mubr.f32.mxu0 0.0
      %9158 = vmatmul.mubr.f32.gmra.mrb[0].mxu0 %v8833
      %v9159 = vpop.f32.mrb[0].mxu0
      %v9160 = vadd.f32 0.0, %v9159
      %v9161 = vpop.f32.mrb[0].mxu0
      %9162 = vmatprep.mubr.f32.mxu0 0.0
      %9163 = vmatmul.mubr.f32.gmra.mrb[0].mxu0 %v8834
      %v9164 = vpop.f32.mrb[0].mxu0
      %v9165 = vadd.f32 0.0, %v9164
      %v9166 = vpop.f32.mrb[0].mxu0
      %9167 = vmatprep.mubr.f32.mxu0 0.0
      %9168 = vmatmul.mubr.f32.gmra.mrb[0].mxu0 %v8835
      %v9169 = vpop.f32.mrb[0].mxu0
      %v9170 = vadd.f32 0.0, %v9169
      %v9171 = vpop.f32.mrb[0].mxu0
      %9172 = vmatprep.mubr.f32.mxu0 0.0
      %9173 = vmatmul.mubr.f32.gmra.mrb[0].mxu0 %v8836
      %v9174 = vpop.f32.mrb[0].mxu0
      %v9175 = vadd.f32 0.0, %v9174
      %v9176 = vpop.f32.mrb[0].mxu0
      %9177 = vmatprep.mubr.f32.mxu0 0.0
      %9178 = vmatmul.mubr.f32.gmra.mrb[0].mxu0 %v8837
      %v9179 = vpop.f32.mrb[0].mxu0
      %v9180 = vadd.f32 0.0, %v9179
      %v9181 = vpop.f32.mrb[0].mxu0
      %9182 = vmatprep.mubr.f32.mxu0 0.0
      %9183 = vmatmul.mubr.f32.gmra.mrb[0].mxu0 %v8838
      %v9184 = vpop.f32.mrb[0].mxu0
      %v9185 = vadd.f32 0.0, %v9184
      %v9186 = vpop.f32.mrb[0].mxu0
      %9187 = vmatprep.mubr.f32.mxu0 0.0
      %9188 = vmatmul.mubr.f32.gmra.mrb[0].mxu0 %v8839
      %v9189 = vpop.f32.mrb[0].mxu0
      %v9190 = vadd.f32 0.0, %v9189
      %v9191 = vpop.f32.mrb[0].mxu0
      %9192 = vmatprep.mubr.f32.mxu0 0.0
      %9193 = vmatmul.mubr.f32.gmra.mrb[0].mxu0 %v8840
      %v9194 = vpop.f32.mrb[0].mxu0
      %v9195 = vadd.f32 0.0, %v9194
      %v9196 = vpop.f32.mrb[0].mxu0
      %9197 = vmatprep.mubr.f32.mxu0 0.0
      %9198 = vmatmul.mubr.f32.gmra.mrb[0].mxu0 %v8841
      %v9199 = vpop.f32.mrb[0].mxu0
      %v9200 = vadd.f32 0.0, %v9199
      %v9201 = vpop.f32.mrb[0].mxu0
      %9202 = vmatprep.mubr.f32.mxu0 0.0
      %9203 = vmatmul.mubr.f32.gmra.mrb[0].mxu0 %v8842
      %v9204 = vpop.f32.mrb[0].mxu0
      %v9205 = vadd.f32 0.0, %v9204
      %v9206 = vpop.f32.mrb[0].mxu0
      %9207 = vmatprep.mubr.f32.mxu0 0.0
      %9208 = vmatmul.mubr.f32.gmra.mrb[0].mxu0 %v8843
      %v9209 = vpop.f32.mrb[0].mxu0
      %v9210 = vadd.f32 0.0, %v9209
      %v9211 = vpop.f32.mrb[0].mxu0
      %9212 = vmatprep.mubr.f32.mxu0 0.0
      %9213 = vmatmul.mubr.f32.gmra.mrb[0].mxu0 %v8844
      %v9214 = vpop.f32.mrb[0].mxu0
      %v9215 = vadd.f32 0.0, %v9214
      %v9216 = vpop.f32.mrb[0].mxu0
      %9217 = vmatprep.mubr.f32.mxu0 0.0
      %9218 = vmatmul.mubr.f32.gmra.mrb[0].mxu0 %v8845
      %v9219 = vpop.f32.mrb[0].mxu0
      %v9220 = vadd.f32 0.0, %v9219
      %v9221 = vpop.f32.mrb[0].mxu0
      %9222 = vmatprep.mubr.f32.mxu0 0.0
      %9223 = vmatmul.mubr.f32.gmra.mrb[0].mxu0 %v8846
      %v9224 = vpop.f32.mrb[0].mxu0
      %v9225 = vadd.f32 0.0, %v9224
      %v9226 = vpop.f32.mrb[0].mxu0
      %9227 = vmatprep.mubr.f32.mxu0 0.0
      %9228 = vmatmul.mubr.f32.gmra.mrb[0].mxu0 %v8847
      %v9229 = vpop.f32.mrb[0].mxu0
      %v9230 = vadd.f32 0.0, %v9229
      %v9231 = vpop.f32.mrb[0].mxu0
      %9232 = vdwg.mxu0
      %v9233 = vadd.f32 %v8208, %v8915
      %v9234 = vadd.f32 %v8209, %v8920
      %v9235 = vadd.f32 %v8210, %v8925
      %v9236 = vadd.f32 %v8211, %v8930
      %v9237 = vadd.f32 %v8212, %v8935
      %v9238 = vadd.f32 %v8213, %v8940
      %v9239 = vadd.f32 %v8214, %v8945
      %v9240 = vadd.f32 %v8215, %v8950
      %v9241 = vadd.f32 %v8216, %v8955
      %v9242 = vadd.f32 %v8217, %v8960
      %v9243 = vadd.f32 %v8218, %v8965
      %v9244 = vadd.f32 %v8219, %v8970
      %v9245 = vadd.f32 %v8220, %v8975
      %v9246 = vadd.f32 %v8221, %v8980
      %v9247 = vadd.f32 %v8222, %v8985
      %v9248 = vadd.f32 %v8223, %v8990
      %v9249 = vadd.f32 %v8224, %v8995
      %v9250 = vadd.f32 %v8225, %v9000
      %v9251 = vadd.f32 %v8226, %v9005
      %v9252 = vadd.f32 %v8227, %v9010
      %v9253 = vadd.f32 %v8228, %v9015
      %v9254 = vadd.f32 %v8229, %v9020
      %v9255 = vadd.f32 %v8230, %v9025
      %v9256 = vadd.f32 %v8231, %v9030
      %v9257 = vadd.f32 %v8232, %v9035
      %v9258 = vadd.f32 %v8233, %v9040
      %v9259 = vadd.f32 %v8234, %v9045
      %v9260 = vadd.f32 %v8235, %v9050
      %v9261 = vadd.f32 %v8236, %v9055
      %v9262 = vadd.f32 %v8237, %v9060
      %v9263 = vadd.f32 %v8238, %v9065
      %v9264 = vadd.f32 %v8239, %v9070
      %v9265 = vadd.f32 %v8240, %v9075
      %v9266 = vadd.f32 %v8241, %v9080
      %v9267 = vadd.f32 %v8242, %v9085
      %v9268 = vadd.f32 %v8243, %v9090
      %v9269 = vadd.f32 %v8244, %v9095
      %v9270 = vadd.f32 %v8245, %v9100
      %v9271 = vadd.f32 %v8246, %v9105
      %v9272 = vadd.f32 %v8247, %v9110
      %v9273 = vadd.f32 %v8248, %v9115
      %v9274 = vadd.f32 %v8249, %v9120
      %v9275 = vadd.f32 %v8250, %v9125
      %v9276 = vadd.f32 %v8251, %v9130
      %v9277 = vadd.f32 %v8252, %v9135
      %v9278 = vadd.f32 %v8253, %v9140
      %v9279 = vadd.f32 %v8254, %v9145
      %v9280 = vadd.f32 %v8255, %v9150
      %v9281 = vadd.f32 %v8256, %v9155
      %v9282 = vadd.f32 %v8257, %v9160
      %v9283 = vadd.f32 %v8258, %v9165
      %v9284 = vadd.f32 %v8259, %v9170
      %v9285 = vadd.f32 %v8260, %v9175
      %v9286 = vadd.f32 %v8261, %v9180
      %v9287 = vadd.f32 %v8262, %v9185
      %v9288 = vadd.f32 %v8263, %v9190
      %v9289 = vadd.f32 %v8264, %v9195
      %v9290 = vadd.f32 %v8265, %v9200
      %v9291 = vadd.f32 %v8266, %v9205
      %v9292 = vadd.f32 %v8267, %v9210
      %v9293 = vadd.f32 %v8268, %v9215
      %v9294 = vadd.f32 %v8269, %v9220
      %v9295 = vadd.f32 %v8270, %v9225
      %v9296 = vadd.f32 %v8271, %v9230
      %v9297 = vmul.f32 %v9233, %v1079
      %v9298 = vmul.f32 %v9234, %v1080
      %v9299 = vmul.f32 %v9235, %v1081
      %v9300 = vmul.f32 %v9236, %v1082
      %v9301 = vmul.f32 %v9237, %v1083
      %v9302 = vmul.f32 %v9238, %v1084
      %v9303 = vmul.f32 %v9239, %v1085
      %v9304 = vmul.f32 %v9240, %v1086
      %v9305 = vmul.f32 %v9241, %v1087
      %v9306 = vmul.f32 %v9242, %v1088
      %v9307 = vmul.f32 %v9243, %v1089
      %v9308 = vmul.f32 %v9244, %v1090
      %v9309 = vmul.f32 %v9245, %v1091
      %v9310 = vmul.f32 %v9246, %v1092
      %v9311 = vmul.f32 %v9247, %v1093
      %v9312 = vmul.f32 %v9248, %v1094
      %v9313 = vmul.f32 %v9249, %v1095
      %v9314 = vmul.f32 %v9250, %v1096
      %v9315 = vmul.f32 %v9251, %v1097
      %v9316 = vmul.f32 %v9252, %v1098
      %v9317 = vmul.f32 %v9253, %v1099
      %v9318 = vmul.f32 %v9254, %v1100
      %v9319 = vmul.f32 %v9255, %v1101
      %v9320 = vmul.f32 %v9256, %v1102
      %v9321 = vmul.f32 %v9257, %v1103
      %v9322 = vmul.f32 %v9258, %v1104
      %v9323 = vmul.f32 %v9259, %v1105
      %v9324 = vmul.f32 %v9260, %v1106
      %v9325 = vmul.f32 %v9261, %v1107
      %v9326 = vmul.f32 %v9262, %v1108
      %v9327 = vmul.f32 %v9263, %v1109
      %v9328 = vmul.f32 %v9264, %v1110
      %v9329 = vmul.f32 %v9265, %v1111
      %v9330 = vmul.f32 %v9266, %v1112
      %v9331 = vmul.f32 %v9267, %v1113
      %v9332 = vmul.f32 %v9268, %v1114
      %v9333 = vmul.f32 %v9269, %v1115
      %v9334 = vmul.f32 %v9270, %v1116
      %v9335 = vmul.f32 %v9271, %v1117
      %v9336 = vmul.f32 %v9272, %v1118
      %v9337 = vmul.f32 %v9273, %v1119
      %v9338 = vmul.f32 %v9274, %v1120
      %v9339 = vmul.f32 %v9275, %v1121
      %v9340 = vmul.f32 %v9276, %v1122
      %v9341 = vmul.f32 %v9277, %v1123
      %v9342 = vmul.f32 %v9278, %v1124
      %v9343 = vmul.f32 %v9279, %v1125
      %v9344 = vmul.f32 %v9280, %v1126
      %v9345 = vmul.f32 %v9281, %v1127
      %v9346 = vmul.f32 %v9282, %v1128
      %v9347 = vmul.f32 %v9283, %v1129
      %v9348 = vmul.f32 %v9284, %v1130
      %v9349 = vmul.f32 %v9285, %v1131
      %v9350 = vmul.f32 %v9286, %v1132
      %v9351 = vmul.f32 %v9287, %v1133
      %v9352 = vmul.f32 %v9288, %v1134
      %v9353 = vmul.f32 %v9289, %v1135
      %v9354 = vmul.f32 %v9290, %v1136
      %v9355 = vmul.f32 %v9291, %v1137
      %v9356 = vmul.f32 %v9292, %v1138
      %v9357 = vmul.f32 %v9293, %v1139
      %v9358 = vmul.f32 %v9294, %v1140
      %v9359 = vmul.f32 %v9295, %v1141
      %v9360 = vmul.f32 %v9296, %v1142
      %vm9361 = vcmask 31744
      %9362 = vst.msk [vmem:[%s244] sm:$0xff] %vm9361, %v9297
      %9363 = vst.msk [vmem:[%s244 + $0x8] sm:$0xff] %vm9361, %v9298
      %9364 = vst.msk [vmem:[%s244 + $0x10] sm:$0xff] %vm9361, %v9299
      %9365 = vst.msk [vmem:[%s244 + $0x18] sm:$0xff] %vm9361, %v9300
      %9366 = vst.msk [vmem:[%s244 + $0x20] sm:$0xff] %vm9361, %v9301
      %9367 = vst.msk [vmem:[%s244 + $0x28] sm:$0xff] %vm9361, %v9302
      %9368 = vst.msk [vmem:[%s244 + $0x30] sm:$0xff] %vm9361, %v9303
      %9369 = vst.msk [vmem:[%s244 + $0x38] sm:$0xff] %vm9361, %v9304
      %9370 = vst.msk [vmem:[%s244 + $0x40] sm:$0xff] %vm9361, %v9305
      %9371 = vst.msk [vmem:[%s244 + $0x48] sm:$0xff] %vm9361, %v9306
      %9372 = vst.msk [vmem:[%s244 + $0x50] sm:$0xff] %vm9361, %v9307
      %9373 = vst.msk [vmem:[%s244 + $0x58] sm:$0xff] %vm9361, %v9308
      %9374 = vst.msk [vmem:[%s244 + $0x60] sm:$0xff] %vm9361, %v9309
      %9375 = vst.msk [vmem:[%s244 + $0x68] sm:$0xff] %vm9361, %v9310
      %9376 = vst.msk [vmem:[%s244 + $0x70] sm:$0xff] %vm9361, %v9311
      %9377 = vst.msk [vmem:[%s244 + $0x78] sm:$0xff] %vm9361, %v9312
      %9378 = vst.msk [vmem:[%s244 + $0x80] sm:$0xff] %vm9361, %v9313
      %9379 = vst.msk [vmem:[%s244 + $0x88] sm:$0xff] %vm9361, %v9314
      %9380 = vst.msk [vmem:[%s244 + $0x90] sm:$0xff] %vm9361, %v9315
      %9381 = vst.msk [vmem:[%s244 + $0x98] sm:$0xff] %vm9361, %v9316
      %9382 = vst.msk [vmem:[%s244 + $0xa0] sm:$0xff] %vm9361, %v9317
      %9383 = vst.msk [vmem:[%s244 + $0xa8] sm:$0xff] %vm9361, %v9318
      %9384 = vst.msk [vmem:[%s244 + $0xb0] sm:$0xff] %vm9361, %v9319
      %9385 = vst.msk [vmem:[%s244 + $0xb8] sm:$0xff] %vm9361, %v9320
      %9386 = vst.msk [vmem:[%s244 + $0xc0] sm:$0xff] %vm9361, %v9321
      %9387 = vst.msk [vmem:[%s244 + $0xc8] sm:$0xff] %vm9361, %v9322
      %9388 = vst.msk [vmem:[%s244 + $0xd0] sm:$0xff] %vm9361, %v9323
      %9389 = vst.msk [vmem:[%s244 + $0xd8] sm:$0xff] %vm9361, %v9324
      %9390 = vst.msk [vmem:[%s244 + $0xe0] sm:$0xff] %vm9361, %v9325
      %9391 = vst.msk [vmem:[%s244 + $0xe8] sm:$0xff] %vm9361, %v9326
      %9392 = vst.msk [vmem:[%s244 + $0xf0] sm:$0xff] %vm9361, %v9327
      %9393 = vst.msk [vmem:[%s244 + $0xf8] sm:$0xff] %vm9361, %v9328
      %9394 = vst.msk [vmem:[%s244 + $0x100] sm:$0xff] %vm9361, %v9329
      %9395 = vst.msk [vmem:[%s244 + $0x108] sm:$0xff] %vm9361, %v9330
      %9396 = vst.msk [vmem:[%s244 + $0x110] sm:$0xff] %vm9361, %v9331
      %9397 = vst.msk [vmem:[%s244 + $0x118] sm:$0xff] %vm9361, %v9332
      %9398 = vst.msk [vmem:[%s244 + $0x120] sm:$0xff] %vm9361, %v9333
      %9399 = vst.msk [vmem:[%s244 + $0x128] sm:$0xff] %vm9361, %v9334
      %9400 = vst.msk [vmem:[%s244 + $0x130] sm:$0xff] %vm9361, %v9335
      %9401 = vst.msk [vmem:[%s244 + $0x138] sm:$0xff] %vm9361, %v9336
      %9402 = vst.msk [vmem:[%s244 + $0x140] sm:$0xff] %vm9361, %v9337
      %9403 = vst.msk [vmem:[%s244 + $0x148] sm:$0xff] %vm9361, %v9338
      %9404 = vst.msk [vmem:[%s244 + $0x150] sm:$0xff] %vm9361, %v9339
      %9405 = vst.msk [vmem:[%s244 + $0x158] sm:$0xff] %vm9361, %v9340
      %9406 = vst.msk [vmem:[%s244 + $0x160] sm:$0xff] %vm9361, %v9341
      %9407 = vst.msk [vmem:[%s244 + $0x168] sm:$0xff] %vm9361, %v9342
      %9408 = vst.msk [vmem:[%s244 + $0x170] sm:$0xff] %vm9361, %v9343
      %9409 = vst.msk [vmem:[%s244 + $0x178] sm:$0xff] %vm9361, %v9344
      %9410 = vst.msk [vmem:[%s244 + $0x180] sm:$0xff] %vm9361, %v9345
      %9411 = vst.msk [vmem:[%s244 + $0x188] sm:$0xff] %vm9361, %v9346
      %9412 = vst.msk [vmem:[%s244 + $0x190] sm:$0xff] %vm9361, %v9347
      %9413 = vst.msk [vmem:[%s244 + $0x198] sm:$0xff] %vm9361, %v9348
      %9414 = vst.msk [vmem:[%s244 + $0x1a0] sm:$0xff] %vm9361, %v9349
      %9415 = vst.msk [vmem:[%s244 + $0x1a8] sm:$0xff] %vm9361, %v9350
      %9416 = vst.msk [vmem:[%s244 + $0x1b0] sm:$0xff] %vm9361, %v9351
      %9417 = vst.msk [vmem:[%s244 + $0x1b8] sm:$0xff] %vm9361, %v9352
      %9418 = vst.msk [vmem:[%s244 + $0x1c0] sm:$0xff] %vm9361, %v9353
      %9419 = vst.msk [vmem:[%s244 + $0x1c8] sm:$0xff] %vm9361, %v9354
      %9420 = vst.msk [vmem:[%s244 + $0x1d0] sm:$0xff] %vm9361, %v9355
      %9421 = vst.msk [vmem:[%s244 + $0x1d8] sm:$0xff] %vm9361, %v9356
      %9422 = vst.msk [vmem:[%s244 + $0x1e0] sm:$0xff] %vm9361, %v9357
      %9423 = vst.msk [vmem:[%s244 + $0x1e8] sm:$0xff] %vm9361, %v9358
      %9424 = vst.msk [vmem:[%s244 + $0x1f0] sm:$0xff] %vm9361, %v9359
      %9425 = vst.msk [vmem:[%s244 + $0x1f8] sm:$0xff] %vm9361, %v9360
      %s9426 = smul.u32 64, %s19
      %p9427 = scmp.lt.s32.totalorder %s18, 1
      %s9428 = scalar_select %p9427, %s18, 1
      %p9429 = scmp.lt.s32.totalorder %s9426, 127
      %s9430 = scalar_select %p9429, %s9426, 127
      %s9431 = smul.addr %s9428, 128
      %s9432 = sadd.s32 %s9430, %s9431
      %s9433 = smul.addr %s9432, 8
      %s9434 = scalar_lea.vmem %s3, %s9433
      // Predicated region
      $region33: #{tpu_custom_call.1} parent=31 // pred_check
        %p9435 = pneg %p123
      $region34: #{tpu_custom_call.1} parent=31 // pred_check_branch
        %9437 = sbr.rel (%p9435) target = $region36
      $region35: #{tpu_custom_call.1} parent=31 // pred_region
        %s9438 = smul.u32 64, %s19
      $region36: #{tpu_custom_call.1} parent=31 // pred_fallthru
        _
    $region32: #{tpu_custom_call.1} parent=5 // pred_fallthru
      _
    %p9439 = scmp.le.s32.totalorder 2, %s9
    // Predicated region
    $region37: #{tpu_custom_call.1} parent=5 // pred_check
      %p9440 = pneg %p9439
    $region38: #{tpu_custom_call.1} parent=5 // pred_check_branch
      %9442 = sbr.rel (%p9440) target = $region40
    $region39: #{tpu_custom_call.1} parent=5 // pred_region
      %s9443 = ssub.s32 %s9, 2
      // Predicated region
      $region41: #{tpu_custom_call.1} parent=39 // pred_check
        %p9444 = pneg %p129
      $region42: #{tpu_custom_call.1} parent=39 // pred_check_branch
        %9446 = sbr.rel (%p9444) target = $region44
      $region43: #{tpu_custom_call.1} parent=39 // pred_region
        %s9447 = smul.u32 64, %s21
        %p9448 = scmp.lt.s32.totalorder %s20, 1
        %s9449 = scalar_select %p9448, %s20, 1
        %p9450 = scmp.lt.s32.totalorder %s9447, 127
        %s9451 = scalar_select %p9450, %s9447, 127
        %s9452 = smul.addr %s9449, 128
        %s9453 = sadd.s32 %s9451, %s9452
        %s9454 = smul.addr %s9453, 8
        %s9455 = scalar_lea.vmem %s3, %s9454
      $region44: #{tpu_custom_call.1} parent=39 // pred_fallthru
        _
    $region40: #{tpu_custom_call.1} parent=5 // pred_fallthru
      _
  $region6: #{tpu_custom_call.1} parent=0 // loop_footer
    %s13 = sadd.s32 1, %s9
  $region7: #{tpu_custom_call.1} parent=0 // loop_footer_branch
    %8 = sbr.rel target = $region3
  $region8: #{tpu_custom_call.1} parent=0 // loop_exit
    _

</llo_original>
